<compile_context>
chip_gen: v7x
topology: tpu7x:2x2x1
jax: 0.10.0
libtpu: 0.0.40
codegen_flags: <defaults>
</compile_context>

<pallas_src>
import math
import functools

import jax
import jax.numpy as jnp
from jax.experimental import pallas as pl
from jax.experimental.pallas import tpu as pltpu

_MXU_DTYPE = jnp.bfloat16          # MXU inputs; accumulation stays f32
_NEG_BIG = -1e30                   # plain Python float: no captured constants


@functools.lru_cache(maxsize=None)
def _hw_config():
    """(vmem_limit_bytes, pref_mn_tile, pref_k_tile) per TPU generation."""
    try:
        cap = int(pltpu.get_tpu_info().vmem_capacity_bytes)
    except Exception:
        cap = 64 * 1024 * 1024
    vmem_limit = min(96 * 1024 * 1024, max(32 * 1024 * 1024, (cap * 3) // 4))
    if cap >= 100 * 1024 * 1024:   # v5e / v6e: 128 MiB physical VMEM
        return vmem_limit, 512, 1024
    # v7x: 64 MiB per TensorCore -> keep tiles at 256 / 512
    return vmem_limit, 256, 512


def _pick_tile(dim, pref):
    """Largest MXU/lane-friendly tile <= pref that divides dim (or full dim)."""
    if dim <= pref:
        return dim
    for t in (1024, 512, 256, 128):
        if t <= pref and dim % t == 0:
            return t
    return dim  # fall back to a full-dim block


# ------------------- fused LayerNorm + matmul + epilogue --------------------

def _make_linear_kernel(has_ln, has_res, activation, multi_k):
    def kernel(*refs):
        it = iter(refs)
        x_ref, w_ref, b_ref = next(it), next(it), next(it)
        g_ref = beta_ref = r_ref = None
        if has_ln:
            g_ref, beta_ref = next(it), next(it)
        if has_res:
            r_ref = next(it)
        o_ref = next(it)
        xln_ref = next(it) if has_ln else None
        acc_ref = next(it) if multi_k else None

        j = pl.program_id(1)

        if has_ln:
            # LN prologue computed once per row-tile (j == 0), reused for all
            # output-column tiles (VPU/EUP work not redone gn times).
            @pl.when(j == 0)
            def _():
                xf = x_ref[...].astype(jnp.float32)
                mu = jnp.mean(xf, axis=-1, keepdims=True)
                var = jnp.mean(jnp.square(xf - mu), axis=-1, keepdims=True)
                xn = (xf - mu) * jax.lax.rsqrt(var + 1e-5)
                xn = xn * g_ref[...] + beta_ref[...]
                xln_ref[...] = xn.astype(xln_ref.dtype)
            x_in = xln_ref[...]
        else:
            x_in = x_ref[...]           # bf16 straight to the MXU, no casts

        contrib = jnp.dot(x_in, w_ref[...], preferred_element_type=jnp.float32)

        def epilogue(val):
            out = val + b_ref[...].astype(jnp.float32)   # bias added once
            if activation == "gelu":
                # TODO(synk): PyTorch nn.GELU default is exact erf; tanh
                # approximation used here for guaranteed Mosaic lowering.
                out = jax.nn.gelu(out, approximate=True)
            if has_res:
                out = out + r_ref[...].astype(jnp.float32)
            o_ref[...] = out.astype(o_ref.dtype)

        if multi_k:
            k = pl.program_id(2)

            @pl.when(k == 0)
            def _():
                acc_ref[...] = jnp.zeros_like(acc_ref)

            acc_ref[...] += contrib

            @pl.when(k == pl.num_programs(2) - 1)
            def _():
                epilogue(acc_ref[...])
        else:
            epilogue(contrib)

    return kernel


def fused_linear(x, w, b, *, ln_g=None, ln_b=None, activation=None,
                 residual=None, out_dtype=None):
    """y = [residual +] act( LN?(x) @ w + b ).  Tiled + pipelined matmul."""
    M, K = x.shape
    K2, N = w.shape
    assert K == K2
    has_ln = ln_g is not None
    has_res = residual is not None
    out_dtype = out_dtype or x.dtype

    vmem_limit, pref_mn, pref_k = _hw_config()
    tm = _pick_tile(M, pref_mn)
    tn = _pick_tile(N, pref_mn)
    tk = K if has_ln else _pick_tile(K, pref_k)  # LN prologue needs full rows
    gm, gn, gk = M // tm, N // tn, K // tk
    multi_k = gk > 1
    assert not (has_ln and multi_k)

    in_specs = [
        pl.BlockSpec((tm, tk), lambda i, j, k: (i, k)),
        pl.BlockSpec((tk, tn), lambda i, j, k: (k, j)),
        pl.BlockSpec((1, tn), lambda i, j, k: (0, j)),
    ]
    inputs = [x, w, b.reshape(1, N)]
    if has_ln:
        ln_spec = pl.BlockSpec((1, tk), lambda i, j, k: (0, k))
        in_specs += [ln_spec, ln_spec]
        inputs += [ln_g.reshape(1, K).astype(jnp.float32),
                   ln_b.reshape(1, K).astype(jnp.float32)]
    if has_res:
        in_specs.append(pl.BlockSpec((tm, tn), lambda i, j, k: (i, j)))
        inputs.append(residual)

    scratch_shapes = []
    if has_ln:
        scratch_shapes.append(pltpu.VMEM((tm, K), _MXU_DTYPE))   # cached LN(x)
    if multi_k:
        scratch_shapes.append(pltpu.VMEM((tm, tn), jnp.float32))  # f32 acc

    # When the LN cache is live, j must stay sequential per row-tile.
    dim_sem = (("parallel", "arbitrary", "arbitrary") if has_ln
               else ("parallel", "parallel", "arbitrary"))

    return pl.pallas_call(
        _make_linear_kernel(has_ln, has_res, activation, multi_k),
        out_shape=jax.ShapeDtypeStruct((M, N), out_dtype),
        grid=(gm, gn, gk),
        in_specs=in_specs,
        out_specs=pl.BlockSpec((tm, tn), lambda i, j, k: (i, j)),
        scratch_shapes=scratch_shapes,
        compiler_params=pltpu.CompilerParams(
            dimension_semantics=dim_sem,
            vmem_limit_bytes=vmem_limit),
    )(*inputs)


# ---------- fused RoPE + causal multi-head attention (flash-style) ----------

def _attention_kernel(q_ref, k_ref, v_ref, cosq_ref, sinq_ref, cosk_ref,
                      sink_ref, o_ref, qrot_ref, m_ref, l_ref, acc_ref,
                      *, scale, tkv):
    """One (batch, head) pair; kv blocks streamed along grid axis 2."""
    kv = pl.program_id(2)
    nkv = pl.num_programs(2)
    S, Dh = q_ref.shape
    half = Dh // 2

    @pl.when(kv == 0)
    def _():
        # RoPE + scale folded into q once per head; online-softmax state init.
        q = q_ref[...].astype(jnp.float32)
        q = q * cosq_ref[...] + pltpu.roll(q, shift=half, axis=1) * sinq_ref[...]
        qrot_ref[...] = (q * scale).astype(qrot_ref.dtype)
        m_ref[...] = jnp.full_like(m_ref, _NEG_BIG)
        l_ref[...] = jnp.zeros_like(l_ref)
        acc_ref[...] = jnp.zeros_like(acc_ref)

    # RoPE on this kv block (XLU roll rides under the MXU work).
    k = k_ref[...].astype(jnp.float32)
    k = k * cosk_ref[...] + pltpu.roll(k, shift=half, axis=1) * sink_ref[...]

    s = jax.lax.dot_general(
        qrot_ref[...], k.astype(_MXU_DTYPE),
        (((1,), (1,)), ((), ())),                     # q @ k^T, no transpose
        preferred_element_type=jnp.float32)

    row = jax.lax.broadcasted_iota(jnp.int32, (S, tkv), 0)
    col = jax.lax.broadcasted_iota(jnp.int32, (S, tkv), 1) + kv * tkv
    s = jnp.where(col <= row, s, _NEG_BIG)

    m_prev = m_ref[...]
    m_new = jnp.maximum(m_prev, jnp.max(s, axis=-1, keepdims=True))
    alpha = jnp.exp(m_prev - m_new)
    p = jnp.exp(s - m_new)
    l_ref[...] = alpha * l_ref[...] + jnp.sum(p, axis=-1, keepdims=True)
    acc_ref[...] = alpha * acc_ref[...] + jnp.dot(
        p.astype(v_ref.dtype), v_ref[...], preferred_element_type=jnp.float32)
    m_ref[...] = m_new

    @pl.when(kv == nkv - 1)
    def _():
        o_ref[...] = (acc_ref[...] / l_ref[...]).astype(o_ref.dtype)


def pallas_attention(qkv3, cos, sin_signed, H):
    """qkv3: (B, S, 3*D) with column layout [q|k|v], heads-major within each.

    Returns (B, S, D) causal RoPE attention (heads concatenated on the last
    dim, matching torch MHA layout before the output projection).
    """
    B, S, threeD = qkv3.shape
    D = threeD // 3
    Dh = D // H
    vmem_limit, _, _ = _hw_config()
    tkv = _pick_tile(S, 512)
    nkv = S // tkv
    scale = 1.0 / math.sqrt(Dh)

    kernel = functools.partial(_attention_kernel, scale=scale, tkv=tkv)

    def col_spec(c, blk):
        # column block index into the (B, S, 3*D) array: c*H + head
        return pl.BlockSpec((None, blk, Dh), lambda b, h, kv, c=c: (b, kv if blk != S or c == 0 else kv, c * H + h)) \
            if False else pl.BlockSpec((None, blk, Dh),
                                       (lambda b, h, kv, c=c: (b, 0, c * H + h)) if blk == S
                                       else (lambda b, h, kv, c=c: (b, kv, c * H + h)))

    q_spec = pl.BlockSpec((None, S, Dh), lambda b, h, kv: (b, 0, 0 * H + h))
    k_spec = pl.BlockSpec((None, tkv, Dh), lambda b, h, kv: (b, kv, 1 * H + h))
    v_spec = pl.BlockSpec((None, tkv, Dh), lambda b, h, kv: (b, kv, 2 * H + h))
    cosq_spec = pl.BlockSpec((S, Dh), lambda b, h, kv: (0, 0))
    cosk_spec = pl.BlockSpec((tkv, Dh), lambda b, h, kv: (kv, 0))

    return pl.pallas_call(
        kernel,
        out_shape=jax.ShapeDtypeStruct((B, S, D), qkv3.dtype),
        grid=(B, H, nkv),
        in_specs=[q_spec, k_spec, v_spec,
                  cosq_spec, cosq_spec, cosk_spec, cosk_spec],
        out_specs=pl.BlockSpec((None, S, Dh), lambda b, h, kv: (b, 0, h)),
        scratch_shapes=[
            pltpu.VMEM((S, Dh), _MXU_DTYPE),    # rotated + scaled q cache
            pltpu.VMEM((S, 1), jnp.float32),    # running max
            pltpu.VMEM((S, 1), jnp.float32),    # running denominator
            pltpu.VMEM((S, Dh), jnp.float32),   # f32 output accumulator
        ],
        compiler_params=pltpu.CompilerParams(
            dimension_semantics=("parallel", "parallel", "arbitrary"),
            vmem_limit_bytes=vmem_limit),
    )(qkv3, qkv3, qkv3, cos, sin_signed, cos, sin_signed)


# ------------------------------ RoPE tables ---------------------------------

def rope_tables(S, Dh):
    inv = 1.0 / (10000.0 ** (jnp.arange(0, Dh, 2, dtype=jnp.float32) / Dh))
    t = jnp.arange(S, dtype=jnp.float32)
    freqs = jnp.outer(t, inv)                              # (S, Dh/2)
    emb = jnp.concatenate([freqs, freqs], axis=-1)         # (S, Dh)
    cos = jnp.cos(emb)
    sin = jnp.sin(emb)
    # fold the [-x2, x1] sign into sin so the kernel only needs a roll:
    sign = jnp.concatenate([-jnp.ones((Dh // 2,), jnp.float32),
                            jnp.ones((Dh // 2,), jnp.float32)])
    return cos, sin * sign


# ------------------------------ Model forward -------------------------------

def block_forward(x2d, p, B, S, D, H, cos, sin_signed):
    # attention sub-block: LN fused into qkv matmul, residual fused into wo
    qkv = fused_linear(x2d, p["wqkv"], p["bqkv"],
                       ln_g=p["ln1_g"], ln_b=p["ln1_b"])       # (B*S, 3D) bf16
    attn = pallas_attention(qkv.reshape(B, S, 3 * D), cos, sin_signed, H)
    x2d = fused_linear(attn.reshape(B * S, D), p["wo"], p["bo"], residual=x2d)

    # MLP sub-block: LN + GELU fused into w1, residual fused into w2
    h = fused_linear(x2d, p["w1"], p["b1"],
                     ln_g=p["ln2_g"], ln_b=p["ln2_b"], activation="gelu")
    x2d = fused_linear(h, p["w2"], p["b2"], residual=x2d)
    return x2d


def cot_forward(params, input_ids, answer_ids, cfg):
    """Equivalent of CoT.forward: concat ids, embed, decoder, ln_f, lm_head."""
    ids = jnp.concatenate([input_ids, answer_ids], axis=1)     # (B, S)
    x = jnp.take(params["embed"], ids, axis=0)                 # (B, S, D) gather: XLA glue
    B, S, D = x.shape
    H = cfg["heads"]
    Dh = D // H
    cos, sin_signed = rope_tables(S, Dh)

    x2d = x.reshape(B * S, D)
    for lp in params["layers"]:
        x2d = block_forward(x2d, lp, B, S, D, H, cos, sin_signed)

    # ln_f fused into the lm_head matmul; logits emitted in f32
    logits = fused_linear(x2d, params["w_lm"], params["b_lm"],
                          ln_g=params["lnf_g"], ln_b=params["lnf_b"],
                          out_dtype=jnp.float32)
    return logits.reshape(B, S, cfg["vocab"])


# ----------------------------- Parameter init -------------------------------

def init_params(key, cfg):
    D, V, L = cfg["hidden"], cfg["vocab"], cfg["layers"]
    Dff = 4 * D
    keys = iter(jax.random.split(key, 2 + L * 4))

    def w(k, shape):
        # weights stored bf16: half the HBM/VMEM streaming bytes, no MXU casts
        return (0.02 * jax.random.normal(k, shape)).astype(_MXU_DTYPE)

    params = {
        "embed": w(next(keys), (V, D)),
        "lnf_g": jnp.ones((D,), jnp.float32),
        "lnf_b": jnp.zeros((D,), jnp.float32),
        "w_lm": w(next(keys), (D, V)),
        "b_lm": jnp.zeros((V,), jnp.float32),
        "layers": [],
    }
    for _ in range(L):
        params["layers"].append({
            "ln1_g": jnp.ones((D,), jnp.float32),
            "ln1_b": jnp.zeros((D,), jnp.float32),
            "wqkv": w(next(keys), (D, 3 * D)),   # columns: [q | k | v], heads-major
            "bqkv": jnp.zeros((3 * D,), jnp.float32),
            "wo": w(next(keys), (D, D)),
            "bo": jnp.zeros((D,), jnp.float32),
            "ln2_g": jnp.ones((D,), jnp.float32),
            "ln2_b": jnp.zeros((D,), jnp.float32),
            "w1": w(next(keys), (D, Dff)),
            "b1": jnp.zeros((Dff,), jnp.float32),
            "w2": w(next(keys), (Dff, D)),
            "b2": jnp.zeros((D,), jnp.float32),
        })
    return params


# ---------------------------------- main ------------------------------------

if __name__ == "__main__":
    # Lane-dense config: D, Dh, 3D, 4D, vocab are all multiples of 128.
    cfg = {"hidden": 256, "heads": 2, "layers": 2, "vocab": 256}

    root = jax.random.PRNGKey(0)
    k_param, k_in, k_ans = jax.random.split(root, 3)
    params = init_params(k_param, cfg)

    B, Tin, Tans = 2, 8, 8
    input_ids = jax.random.randint(k_in, (B, Tin), 0, cfg["vocab"], dtype=jnp.int32)
    answer_ids = jax.random.randint(k_ans, (B, Tans), 0, cfg["vocab"], dtype=jnp.int32)

    fwd = jax.jit(functools.partial(cot_forward, cfg=cfg))
    logits = jax.block_until_ready(fwd(params, input_ids, answer_ids))

    assert logits.shape == (B, Tin + Tans, cfg["vocab"]), logits.shape
    assert bool(jnp.all(jnp.isfinite(logits)))
    print("KERNEL_OK")
</pallas_src>

<mosaic_0001>
module attributes {stable_mosaic.version = 11 : i64} {
  func.func @kernel(%arg0: i32, %arg1: i32, %arg2: i32, %arg3: memref<32x256xbf16, #tpu.memory_space<vmem>>, %arg4: memref<256x256xbf16, #tpu.memory_space<vmem>>, %arg5: memref<1x256xf32, #tpu.memory_space<vmem>>, %arg6: memref<1x256xf32, #tpu.memory_space<vmem>>, %arg7: memref<1x256xf32, #tpu.memory_space<vmem>>, %arg8: memref<32x256xbf16, #tpu.memory_space<vmem>>, %arg9: memref<32x256xbf16, #tpu.memory_space<vmem>>) attributes {dimension_semantics = [#tpu.dimension_semantics<parallel>, #tpu.dimension_semantics<arbitrary>, #tpu.dimension_semantics<arbitrary>], iteration_bounds = array<i64: 1, 3, 1>, scalar_prefetch = 0 : i64, scratch_operands = 1 : i64, tpu.core_type = #tpu.core_type<tc>, window_params = [{transform_indices = @transform_0, window_bounds = array<i64: 32, 256>}, {transform_indices = @transform_1, window_bounds = array<i64: 256, 256>}, {transform_indices = @transform_2, window_bounds = array<i64: 1, 256>}, {transform_indices = @transform_3, window_bounds = array<i64: 1, 256>}, {transform_indices = @transform_4, window_bounds = array<i64: 1, 256>}, {transform_indices = @transform_5, window_bounds = array<i64: 32, 256>}]} {
    %c0_i32 = arith.constant 0 : i32
    %0 = arith.cmpi eq, %arg1, %c0_i32 : i32
    %1 = arith.extui %0 : i1 to i32
    %c0_i32_0 = arith.constant 0 : i32
    %2 = arith.cmpi ne, %1, %c0_i32_0 : i32
    scf.if %2 {
      %c0_8 = arith.constant 0 : index
      %c0_9 = arith.constant 0 : index
      %11 = vector.load %arg3[%c0_8, %c0_9] : memref<32x256xbf16, #tpu.memory_space<vmem>>, vector<32x256xbf16>
      %12 = arith.extf %11 : vector<32x256xbf16> to vector<32x256xf32>
      %cst_10 = arith.constant dense<0.000000e+00> : vector<32xf32>
      %13 = vector.multi_reduction <add>, %12, %cst_10 [1] : vector<32x256xf32> to vector<32xf32>
      %14 = vector.shape_cast %13 : vector<32xf32> to vector<32x1xf32>
      %cst_11 = arith.constant 2.560000e+02 : f32
      %15 = vector.broadcast %cst_11 : f32 to vector<32x1xf32>
      %16 = arith.divf %14, %15 : vector<32x1xf32>
      %17 = vector.broadcast %16 : vector<32x1xf32> to vector<32x256xf32>
      %18 = arith.subf %12, %17 : vector<32x256xf32>
      %19 = arith.mulf %18, %18 : vector<32x256xf32>
      %cst_12 = arith.constant dense<0.000000e+00> : vector<32xf32>
      %20 = vector.multi_reduction <add>, %19, %cst_12 [1] : vector<32x256xf32> to vector<32xf32>
      %21 = vector.shape_cast %20 : vector<32xf32> to vector<32x1xf32>
      %cst_13 = arith.constant 2.560000e+02 : f32
      %22 = vector.broadcast %cst_13 : f32 to vector<32x1xf32>
      %23 = arith.divf %21, %22 : vector<32x1xf32>
      %24 = vector.broadcast %16 : vector<32x1xf32> to vector<32x256xf32>
      %25 = arith.subf %12, %24 : vector<32x256xf32>
      %cst_14 = arith.constant 9.99999974E-6 : f32
      %26 = vector.broadcast %cst_14 : f32 to vector<32x1xf32>
      %27 = arith.addf %23, %26 : vector<32x1xf32>
      %28 = math.rsqrt %27 : vector<32x1xf32>
      %29 = vector.broadcast %28 : vector<32x1xf32> to vector<32x256xf32>
      %30 = arith.mulf %25, %29 : vector<32x256xf32>
      %c0_15 = arith.constant 0 : index
      %c0_16 = arith.constant 0 : index
      %31 = vector.load %arg6[%c0_15, %c0_16] : memref<1x256xf32, #tpu.memory_space<vmem>>, vector<1x256xf32>
      %32 = vector.broadcast %31 : vector<1x256xf32> to vector<32x256xf32>
      %33 = arith.mulf %30, %32 : vector<32x256xf32>
      %c0_17 = arith.constant 0 : index
      %c0_18 = arith.constant 0 : index
      %34 = vector.load %arg7[%c0_17, %c0_18] : memref<1x256xf32, #tpu.memory_space<vmem>>, vector<1x256xf32>
      %35 = vector.broadcast %34 : vector<1x256xf32> to vector<32x256xf32>
      %36 = arith.addf %33, %35 : vector<32x256xf32>
      %37 = arith.truncf %36 : vector<32x256xf32> to vector<32x256xbf16>
      %c0_19 = arith.constant 0 : index
      %c0_20 = arith.constant 0 : index
      %38 = vector.load %arg9[%c0_19, %c0_20] : memref<32x256xbf16, #tpu.memory_space<vmem>>, vector<32x256xbf16>
      tpu.vector_store %arg9[%c0_19, %c0_20], %37 {strides = array<i32>} : memref<32x256xbf16, #tpu.memory_space<vmem>>, vector<32x256xbf16>,
    } else {
    }
    %c0 = arith.constant 0 : index
    %c0_1 = arith.constant 0 : index
    %3 = vector.load %arg9[%c0, %c0_1] : memref<32x256xbf16, #tpu.memory_space<vmem>>, vector<32x256xbf16>
    %c0_2 = arith.constant 0 : index
    %c0_3 = arith.constant 0 : index
    %4 = vector.load %arg4[%c0_2, %c0_3] : memref<256x256xbf16, #tpu.memory_space<vmem>>, vector<256x256xbf16>
    %cst = arith.constant dense<0.000000e+00> : vector<32x256xf32>
    %5 = tpu.matmul %3, %4, %cst {dimension_numbers = #tpu.dot_dimension_numbers<[1], [0], [0], [1], [0, 0, 1, 1], [], []>} : vector<32x256xbf16>, vector<256x256xbf16>, vector<32x256xf32> -> vector<32x256xf32>
    %c0_4 = arith.constant 0 : index
    %c0_5 = arith.constant 0 : index
    %6 = vector.load %arg5[%c0_4, %c0_5] : memref<1x256xf32, #tpu.memory_space<vmem>>, vector<1x256xf32>
    %7 = vector.broadcast %6 : vector<1x256xf32> to vector<32x256xf32>
    %8 = arith.addf %5, %7 : vector<32x256xf32>
    %9 = arith.truncf %8 : vector<32x256xf32> to vector<32x256xbf16>
    %c0_6 = arith.constant 0 : index
    %c0_7 = arith.constant 0 : index
    %10 = vector.load %arg8[%c0_6, %c0_7] : memref<32x256xbf16, #tpu.memory_space<vmem>>, vector<32x256xbf16>
    tpu.vector_store %arg8[%c0_6, %c0_7], %9 {strides = array<i32>} : memref<32x256xbf16, #tpu.memory_space<vmem>>, vector<32x256xbf16>,
    return
  }
  func.func @transform_0(%arg0: i32, %arg1: i32, %arg2: i32) -> (i32, i32) {
    %c0_i32 = arith.constant 0 : i32
    return %arg0, %arg2 : i32, i32
  }
  func.func @transform_1(%arg0: i32, %arg1: i32, %arg2: i32) -> (i32, i32) {
    %c0_i32 = arith.constant 0 : i32
    return %arg2, %arg1 : i32, i32
  }
  func.func @transform_2(%arg0: i32, %arg1: i32, %arg2: i32) -> (i32, i32) {
    %c0_i32 = arith.constant 0 : i32
    %c0_i32_0 = arith.constant 0 : i32
    return %c0_i32, %arg1 : i32, i32
  }
  func.func @transform_3(%arg0: i32, %arg1: i32, %arg2: i32) -> (i32, i32) {
    %c0_i32 = arith.constant 0 : i32
    %c0_i32_0 = arith.constant 0 : i32
    return %c0_i32, %arg2 : i32, i32
  }
  func.func @transform_4(%arg0: i32, %arg1: i32, %arg2: i32) -> (i32, i32) {
    %c0_i32 = arith.constant 0 : i32
    %c0_i32_0 = arith.constant 0 : i32
    return %c0_i32, %arg2 : i32, i32
  }
  func.func @transform_5(%arg0: i32, %arg1: i32, %arg2: i32) -> (i32, i32) {
    %c0_i32 = arith.constant 0 : i32
    return %arg0, %arg1 : i32, i32
  }
}

module attributes {stable_mosaic.version = 11 : i64} {
  func.func @kernel(%arg0: i32, %arg1: i32, %arg2: i32, %arg3: memref<32x256xbf16, #tpu.memory_space<vmem>>, %arg4: memref<256x256xbf16, #tpu.memory_space<vmem>>, %arg5: memref<1x256xf32, #tpu.memory_space<vmem>>, %arg6: memref<32x256xbf16, #tpu.memory_space<vmem>>, %arg7: memref<32x256xbf16, #tpu.memory_space<vmem>>) attributes {dimension_semantics = [#tpu.dimension_semantics<parallel>, #tpu.dimension_semantics<parallel>, #tpu.dimension_semantics<arbitrary>], iteration_bounds = array<i64: 1, 1, 1>, scalar_prefetch = 0 : i64, scratch_operands = 0 : i64, tpu.core_type = #tpu.core_type<tc>, window_params = [{transform_indices = @transform_0, window_bounds = array<i64: 32, 256>}, {transform_indices = @transform_1, window_bounds = array<i64: 256, 256>}, {transform_indices = @transform_2, window_bounds = array<i64: 1, 256>}, {transform_indices = @transform_3, window_bounds = array<i64: 32, 256>}, {transform_indices = @transform_4, window_bounds = array<i64: 32, 256>}]} {
    %c0 = arith.constant 0 : index
    %c0_0 = arith.constant 0 : index
    %0 = vector.load %arg3[%c0, %c0_0] : memref<32x256xbf16, #tpu.memory_space<vmem>>, vector<32x256xbf16>
    %c0_1 = arith.constant 0 : index
    %c0_2 = arith.constant 0 : index
    %1 = vector.load %arg4[%c0_1, %c0_2] : memref<256x256xbf16, #tpu.memory_space<vmem>>, vector<256x256xbf16>
    %cst = arith.constant dense<0.000000e+00> : vector<32x256xf32>
    %2 = tpu.matmul %0, %1, %cst {dimension_numbers = #tpu.dot_dimension_numbers<[1], [0], [0], [1], [0, 0, 1, 1], [], []>} : vector<32x256xbf16>, vector<256x256xbf16>, vector<32x256xf32> -> vector<32x256xf32>
    %c0_3 = arith.constant 0 : index
    %c0_4 = arith.constant 0 : index
    %3 = vector.load %arg5[%c0_3, %c0_4] : memref<1x256xf32, #tpu.memory_space<vmem>>, vector<1x256xf32>
    %4 = vector.broadcast %3 : vector<1x256xf32> to vector<32x256xf32>
    %5 = arith.addf %2, %4 : vector<32x256xf32>
    %c0_5 = arith.constant 0 : index
    %c0_6 = arith.constant 0 : index
    %6 = vector.load %arg6[%c0_5, %c0_6] : memref<32x256xbf16, #tpu.memory_space<vmem>>, vector<32x256xbf16>
    %7 = arith.extf %6 : vector<32x256xbf16> to vector<32x256xf32>
    %8 = arith.addf %5, %7 : vector<32x256xf32>
    %9 = arith.truncf %8 : vector<32x256xf32> to vector<32x256xbf16>
    %c0_7 = arith.constant 0 : index
    %c0_8 = arith.constant 0 : index
    %10 = vector.load %arg7[%c0_7, %c0_8] : memref<32x256xbf16, #tpu.memory_space<vmem>>, vector<32x256xbf16>
    tpu.vector_store %arg7[%c0_7, %c0_8], %9 {strides = array<i32>} : memref<32x256xbf16, #tpu.memory_space<vmem>>, vector<32x256xbf16>,
    return
  }
  func.func @transform_0(%arg0: i32, %arg1: i32, %arg2: i32) -> (i32, i32) {
    %c0_i32 = arith.constant 0 : i32
    return %arg0, %arg2 : i32, i32
  }
  func.func @transform_1(%arg0: i32, %arg1: i32, %arg2: i32) -> (i32, i32) {
    %c0_i32 = arith.constant 0 : i32
    return %arg2, %arg1 : i32, i32
  }
  func.func @transform_2(%arg0: i32, %arg1: i32, %arg2: i32) -> (i32, i32) {
    %c0_i32 = arith.constant 0 : i32
    %c0_i32_0 = arith.constant 0 : i32
    return %c0_i32, %arg1 : i32, i32
  }
  func.func @transform_3(%arg0: i32, %arg1: i32, %arg2: i32) -> (i32, i32) {
    %c0_i32 = arith.constant 0 : i32
    return %arg0, %arg1 : i32, i32
  }
  func.func @transform_4(%arg0: i32, %arg1: i32, %arg2: i32) -> (i32, i32) {
    %c0_i32 = arith.constant 0 : i32
    return %arg0, %arg1 : i32, i32
  }
}

module attributes {stable_mosaic.version = 11 : i64} {
  func.func @_attention_kernel(%arg0: i32, %arg1: i32, %arg2: i32, %arg3: memref<1x16x128xbf16, #tpu.memory_space<vmem>>, %arg4: memref<1x16x128xbf16, #tpu.memory_space<vmem>>, %arg5: memref<1x16x128xbf16, #tpu.memory_space<vmem>>, %arg6: memref<16x128xf32, #tpu.memory_space<vmem>>, %arg7: memref<16x128xf32, #tpu.memory_space<vmem>>, %arg8: memref<16x128xf32, #tpu.memory_space<vmem>>, %arg9: memref<16x128xf32, #tpu.memory_space<vmem>>, %arg10: memref<1x16x128xbf16, #tpu.memory_space<vmem>>, %arg11: memref<16x128xbf16, #tpu.memory_space<vmem>>, %arg12: memref<16x1xf32, #tpu.memory_space<vmem>>, %arg13: memref<16x1xf32, #tpu.memory_space<vmem>>, %arg14: memref<16x128xf32, #tpu.memory_space<vmem>>) attributes {dimension_semantics = [#tpu.dimension_semantics<parallel>, #tpu.dimension_semantics<parallel>, #tpu.dimension_semantics<arbitrary>], iteration_bounds = array<i64: 2, 2, 1>, scalar_prefetch = 0 : i64, scratch_operands = 4 : i64, tpu.core_type = #tpu.core_type<tc>, window_params = [{transform_indices = @transform_0, window_bounds = array<i64: 1, 16, 128>}, {transform_indices = @transform_1, window_bounds = array<i64: 1, 16, 128>}, {transform_indices = @transform_2, window_bounds = array<i64: 1, 16, 128>}, {pipeline_mode = #tpu.pipeline_mode<synchronous>, transform_indices = @transform_3, window_bounds = array<i64: 16, 128>}, {pipeline_mode = #tpu.pipeline_mode<synchronous>, transform_indices = @transform_4, window_bounds = array<i64: 16, 128>}, {transform_indices = @transform_5, window_bounds = array<i64: 16, 128>}, {transform_indices = @transform_6, window_bounds = array<i64: 16, 128>}, {transform_indices = @transform_7, window_bounds = array<i64: 1, 16, 128>}]} {
    %c0_i32 = arith.constant 0 : i32
    %0 = arith.cmpi eq, %arg2, %c0_i32 : i32
    %1 = arith.extui %0 : i1 to i32
    %c0_i32_0 = arith.constant 0 : i32
    %2 = arith.cmpi ne, %1, %c0_i32_0 : i32
    scf.if %2 {
      %c0_30 = arith.constant 0 : index
      %c0_31 = arith.constant 0 : index
      %c0_32 = arith.constant 0 : index
      %51 = vector.load %arg3[%c0_30, %c0_31, %c0_32] : memref<1x16x128xbf16, #tpu.memory_space<vmem>>, vector<1x16x128xbf16>
      %52 = vector.shape_cast %51 : vector<1x16x128xbf16> to vector<16x128xbf16>
      %53 = arith.extf %52 : vector<16x128xbf16> to vector<16x128xf32>
      %c0_33 = arith.constant 0 : index
      %c0_34 = arith.constant 0 : index
      %54 = vector.load %arg6[%c0_33, %c0_34] : memref<16x128xf32, #tpu.memory_space<vmem>>, vector<16x128xf32>
      %55 = arith.mulf %53, %54 : vector<16x128xf32>
      %c64_i32_35 = arith.constant 64 : i32
      %56 = tpu.dynamic_rotate %53 by %c64_i32_35 dim 1 : vector<16x128xf32>, i32 -> vector<16x128xf32>
      %c0_36 = arith.constant 0 : index
      %c0_37 = arith.constant 0 : index
      %57 = vector.load %arg7[%c0_36, %c0_37] : memref<16x128xf32, #tpu.memory_space<vmem>>, vector<16x128xf32>
      %58 = arith.mulf %56, %57 : vector<16x128xf32>
      %59 = arith.addf %55, %58 : vector<16x128xf32>
      %cst_38 = arith.constant 0.0883883461 : f32
      %60 = vector.broadcast %cst_38 : f32 to vector<16x128xf32>
      %61 = arith.mulf %59, %60 : vector<16x128xf32>
      %62 = arith.truncf %61 : vector<16x128xf32> to vector<16x128xbf16>
      %c0_39 = arith.constant 0 : index
      %c0_40 = arith.constant 0 : index
      %63 = vector.load %arg11[%c0_39, %c0_40] : memref<16x128xbf16, #tpu.memory_space<vmem>>, vector<16x128xbf16>
      tpu.vector_store %arg11[%c0_39, %c0_40], %62 {strides = array<i32>} : memref<16x128xbf16, #tpu.memory_space<vmem>>, vector<16x128xbf16>,
      %cst_41 = arith.constant -1.000000e+30 : f32
      %64 = vector.broadcast %cst_41 : f32 to vector<16x1xf32>
      %c0_42 = arith.constant 0 : index
      %c0_43 = arith.constant 0 : index
      %65 = vector.load %arg12[%c0_42, %c0_43] : memref<16x1xf32, #tpu.memory_space<vmem>>, vector<16x1xf32>
      tpu.vector_store %arg12[%c0_42, %c0_43], %64 {strides = array<i32>} : memref<16x1xf32, #tpu.memory_space<vmem>>, vector<16x1xf32>,
      %cst_44 = arith.constant 0.000000e+00 : f32
      %66 = vector.broadcast %cst_44 : f32 to vector<16x1xf32>
      %c0_45 = arith.constant 0 : index
      %c0_46 = arith.constant 0 : index
      %67 = vector.load %arg13[%c0_45, %c0_46] : memref<16x1xf32, #tpu.memory_space<vmem>>, vector<16x1xf32>
      tpu.vector_store %arg13[%c0_45, %c0_46], %66 {strides = array<i32>} : memref<16x1xf32, #tpu.memory_space<vmem>>, vector<16x1xf32>,
      %cst_47 = arith.constant 0.000000e+00 : f32
      %68 = vector.broadcast %cst_47 : f32 to vector<16x128xf32>
      %c0_48 = arith.constant 0 : index
      %c0_49 = arith.constant 0 : index
      %69 = vector.load %arg14[%c0_48, %c0_49] : memref<16x128xf32, #tpu.memory_space<vmem>>, vector<16x128xf32>
      tpu.vector_store %arg14[%c0_48, %c0_49], %68 {strides = array<i32>} : memref<16x128xf32, #tpu.memory_space<vmem>>, vector<16x128xf32>,
    } else {
    }
    %c0 = arith.constant 0 : index
    %c0_1 = arith.constant 0 : index
    %c0_2 = arith.constant 0 : index
    %3 = vector.load %arg4[%c0, %c0_1, %c0_2] : memref<1x16x128xbf16, #tpu.memory_space<vmem>>, vector<1x16x128xbf16>
    %4 = vector.shape_cast %3 : vector<1x16x128xbf16> to vector<16x128xbf16>
    %5 = arith.extf %4 : vector<16x128xbf16> to vector<16x128xf32>
    %c0_3 = arith.constant 0 : index
    %c0_4 = arith.constant 0 : index
    %6 = vector.load %arg8[%c0_3, %c0_4] : memref<16x128xf32, #tpu.memory_space<vmem>>, vector<16x128xf32>
    %7 = arith.mulf %5, %6 : vector<16x128xf32>
    %c64_i32 = arith.constant 64 : i32
    %8 = tpu.dynamic_rotate %5 by %c64_i32 dim 1 : vector<16x128xf32>, i32 -> vector<16x128xf32>
    %c0_5 = arith.constant 0 : index
    %c0_6 = arith.constant 0 : index
    %9 = vector.load %arg9[%c0_5, %c0_6] : memref<16x128xf32, #tpu.memory_space<vmem>>, vector<16x128xf32>
    %10 = arith.mulf %8, %9 : vector<16x128xf32>
    %11 = arith.addf %7, %10 : vector<16x128xf32>
    %c0_7 = arith.constant 0 : index
    %c0_8 = arith.constant 0 : index
    %12 = vector.load %arg11[%c0_7, %c0_8] : memref<16x128xbf16, #tpu.memory_space<vmem>>, vector<16x128xbf16>
    %13 = arith.truncf %11 : vector<16x128xf32> to vector<16x128xbf16>
    %cst = arith.constant dense<0.000000e+00> : vector<16x16xf32>
    %14 = tpu.matmul %12, %13, %cst {dimension_numbers = #tpu.dot_dimension_numbers<[1], [1], [0], [0], [0, 0, 1, 0], [], []>} : vector<16x128xbf16>, vector<16x128xbf16>, vector<16x16xf32> -> vector<16x16xf32>
    %15 = tpu.iota {dimensions = array<i32: 0>} : vector<16x16xi32>
    %16 = tpu.iota {dimensions = array<i32: 1>} : vector<16x16xi32>
    %c16_i32 = arith.constant 16 : i32
    %17 = arith.muli %arg2, %c16_i32 : i32
    %18 = vector.broadcast %17 : i32 to vector<16x16xi32>
    %19 = arith.addi %16, %18 : vector<16x16xi32>
    %20 = arith.cmpi sle, %19, %15 : vector<16x16xi32>
    %cst_9 = arith.constant -1.000000e+30 : f32
    %21 = vector.broadcast %cst_9 : f32 to vector<16x16xf32>
    %22 = arith.select %20, %14, %21 : vector<16x16xi1>, vector<16x16xf32>
    %c0_10 = arith.constant 0 : index
    %c0_11 = arith.constant 0 : index
    %23 = vector.load %arg12[%c0_10, %c0_11] : memref<16x1xf32, #tpu.memory_space<vmem>>, vector<16x1xf32>
    %cst_12 = arith.constant dense<0xFF800000> : vector<16xf32>
    %24 = vector.multi_reduction <maximumf>, %22, %cst_12 [1] : vector<16x16xf32> to vector<16xf32>
    %25 = vector.shape_cast %24 : vector<16xf32> to vector<16x1xf32>
    %26 = arith.maximumf %23, %25 : vector<16x1xf32>
    %27 = arith.subf %23, %26 : vector<16x1xf32>
    %28 = math.exp %27 : vector<16x1xf32>
    %29 = vector.broadcast %26 : vector<16x1xf32> to vector<16x16xf32>
    %30 = arith.subf %22, %29 : vector<16x16xf32>
    %31 = math.exp %30 : vector<16x16xf32>
    %c0_13 = arith.constant 0 : index
    %c0_14 = arith.constant 0 : index
    %32 = vector.load %arg13[%c0_13, %c0_14] : memref<16x1xf32, #tpu.memory_space<vmem>>, vector<16x1xf32>
    %33 = arith.mulf %28, %32 : vector<16x1xf32>
    %cst_15 = arith.constant dense<0.000000e+00> : vector<16xf32>
    %34 = vector.multi_reduction <add>, %31, %cst_15 [1] : vector<16x16xf32> to vector<16xf32>
    %35 = vector.shape_cast %34 : vector<16xf32> to vector<16x1xf32>
    %36 = arith.addf %33, %35 : vector<16x1xf32>
    %c0_16 = arith.constant 0 : index
    %c0_17 = arith.constant 0 : index
    %37 = vector.load %arg13[%c0_16, %c0_17] : memref<16x1xf32, #tpu.memory_space<vmem>>, vector<16x1xf32>
    tpu.vector_store %arg13[%c0_16, %c0_17], %36 {strides = array<i32>} : memref<16x1xf32, #tpu.memory_space<vmem>>, vector<16x1xf32>,
    %c0_18 = arith.constant 0 : index
    %c0_19 = arith.constant 0 : index
    %38 = vector.load %arg14[%c0_18, %c0_19] : memref<16x128xf32, #tpu.memory_space<vmem>>, vector<16x128xf32>
    %39 = vector.broadcast %28 : vector<16x1xf32> to vector<16x128xf32>
    %40 = arith.mulf %39, %38 : vector<16x128xf32>
    %41 = arith.truncf %31 : vector<16x16xf32> to vector<16x16xbf16>
    %c0_20 = arith.constant 0 : index
    %c0_21 = arith.constant 0 : index
    %c0_22 = arith.constant 0 : index
    %42 = vector.load %arg5[%c0_20, %c0_21, %c0_22] : memref<1x16x128xbf16, #tpu.memory_space<vmem>>, vector<1x16x128xbf16>
    %43 = vector.shape_cast %42 : vector<1x16x128xbf16> to vector<16x128xbf16>
    %cst_23 = arith.constant dense<0.000000e+00> : vector<16x128xf32>
    %44 = tpu.matmul %41, %43, %cst_23 {dimension_numbers = #tpu.dot_dimension_numbers<[1], [0], [0], [1], [0, 0, 1, 1], [], []>} : vector<16x16xbf16>, vector<16x128xbf16>, vector<16x128xf32> -> vector<16x128xf32>
    %45 = arith.addf %40, %44 : vector<16x128xf32>
    %c0_24 = arith.constant 0 : index
    %c0_25 = arith.constant 0 : index
    %46 = vector.load %arg14[%c0_24, %c0_25] : memref<16x128xf32, #tpu.memory_space<vmem>>, vector<16x128xf32>
    tpu.vector_store %arg14[%c0_24, %c0_25], %45 {strides = array<i32>} : memref<16x128xf32, #tpu.memory_space<vmem>>, vector<16x128xf32>,
    %c0_26 = arith.constant 0 : index
    %c0_27 = arith.constant 0 : index
    %47 = vector.load %arg12[%c0_26, %c0_27] : memref<16x1xf32, #tpu.memory_space<vmem>>, vector<16x1xf32>
    tpu.vector_store %arg12[%c0_26, %c0_27], %26 {strides = array<i32>} : memref<16x1xf32, #tpu.memory_space<vmem>>, vector<16x1xf32>,
    %c0_i32_28 = arith.constant 0 : i32
    %48 = arith.cmpi eq, %arg2, %c0_i32_28 : i32
    %49 = arith.extui %48 : i1 to i32
    %c0_i32_29 = arith.constant 0 : i32
    %50 = arith.cmpi ne, %49, %c0_i32_29 : i32
    scf.if %50 {
      %c0_30 = arith.constant 0 : index
      %c0_31 = arith.constant 0 : index
      %51 = vector.load %arg14[%c0_30, %c0_31] : memref<16x128xf32, #tpu.memory_space<vmem>>, vector<16x128xf32>
      %c0_32 = arith.constant 0 : index
      %c0_33 = arith.constant 0 : index
      %52 = vector.load %arg13[%c0_32, %c0_33] : memref<16x1xf32, #tpu.memory_space<vmem>>, vector<16x1xf32>
      %53 = vector.broadcast %52 : vector<16x1xf32> to vector<16x128xf32>
      %54 = arith.divf %51, %53 : vector<16x128xf32>
      %55 = arith.truncf %54 : vector<16x128xf32> to vector<16x128xbf16>
      %c0_34 = arith.constant 0 : index
      %c0_35 = arith.constant 0 : index
      %c0_36 = arith.constant 0 : index
      %56 = vector.load %arg10[%c0_34, %c0_35, %c0_36] : memref<1x16x128xbf16, #tpu.memory_space<vmem>>, vector<1x16x128xbf16>
      %57 = vector.shape_cast %56 : vector<1x16x128xbf16> to vector<16x128xbf16>
      %58 = vector.shape_cast %55 : vector<16x128xbf16> to vector<1x16x128xbf16>
      tpu.vector_store %arg10[%c0_34, %c0_35, %c0_36], %58 {strides = array<i32>} : memref<1x16x128xbf16, #tpu.memory_space<vmem>>, vector<1x16x128xbf16>,
    } else {
    }
    return
  }
  func.func @transform_0(%arg0: i32, %arg1: i32, %arg2: i32) -> (i32, i32, i32) {
    %c0_i32 = arith.constant 0 : i32
    %0 = arith.addi %c0_i32, %arg1 : i32
    %c0_i32_0 = arith.constant 0 : i32
    %c0_i32_1 = arith.constant 0 : i32
    return %arg0, %c0_i32_0, %0 : i32, i32, i32
  }
  func.func @transform_1(%arg0: i32, %arg1: i32, %arg2: i32) -> (i32, i32, i32) {
    %c2_i32 = arith.constant 2 : i32
    %0 = arith.addi %c2_i32, %arg1 : i32
    %c0_i32 = arith.constant 0 : i32
    return %arg0, %arg2, %0 : i32, i32, i32
  }
  func.func @transform_2(%arg0: i32, %arg1: i32, %arg2: i32) -> (i32, i32, i32) {
    %c4_i32 = arith.constant 4 : i32
    %0 = arith.addi %c4_i32, %arg1 : i32
    %c0_i32 = arith.constant 0 : i32
    return %arg0, %arg2, %0 : i32, i32, i32
  }
  func.func @transform_3(%arg0: i32, %arg1: i32, %arg2: i32) -> (i32, i32) {
    %c0_i32 = arith.constant 0 : i32
    %c0_i32_0 = arith.constant 0 : i32
    %c0_i32_1 = arith.constant 0 : i32
    return %c0_i32, %c0_i32_0 : i32, i32
  }
  func.func @transform_4(%arg0: i32, %arg1: i32, %arg2: i32) -> (i32, i32) {
    %c0_i32 = arith.constant 0 : i32
    %c0_i32_0 = arith.constant 0 : i32
    %c0_i32_1 = arith.constant 0 : i32
    return %c0_i32, %c0_i32_0 : i32, i32
  }
  func.func @transform_5(%arg0: i32, %arg1: i32, %arg2: i32) -> (i32, i32) {
    %c0_i32 = arith.constant 0 : i32
    %c0_i32_0 = arith.constant 0 : i32
    return %arg2, %c0_i32 : i32, i32
  }
  func.func @transform_6(%arg0: i32, %arg1: i32, %arg2: i32) -> (i32, i32) {
    %c0_i32 = arith.constant 0 : i32
    %c0_i32_0 = arith.constant 0 : i32
    return %arg2, %c0_i32 : i32, i32
  }
  func.func @transform_7(%arg0: i32, %arg1: i32, %arg2: i32) -> (i32, i32, i32) {
    %c0_i32 = arith.constant 0 : i32
    %c0_i32_0 = arith.constant 0 : i32
    return %arg0, %c0_i32, %arg1 : i32, i32, i32
  }
}

module attributes {stable_mosaic.version = 11 : i64} {
  func.func @kernel(%arg0: i32, %arg1: i32, %arg2: i32, %arg3: memref<32x256xbf16, #tpu.memory_space<vmem>>, %arg4: memref<256x256xbf16, #tpu.memory_space<vmem>>, %arg5: memref<1x256xf32, #tpu.memory_space<vmem>>, %arg6: memref<1x256xf32, #tpu.memory_space<vmem>>, %arg7: memref<1x256xf32, #tpu.memory_space<vmem>>, %arg8: memref<32x256xbf16, #tpu.memory_space<vmem>>, %arg9: memref<32x256xbf16, #tpu.memory_space<vmem>>) attributes {dimension_semantics = [#tpu.dimension_semantics<parallel>, #tpu.dimension_semantics<arbitrary>, #tpu.dimension_semantics<arbitrary>], iteration_bounds = array<i64: 1, 4, 1>, scalar_prefetch = 0 : i64, scratch_operands = 1 : i64, tpu.core_type = #tpu.core_type<tc>, window_params = [{transform_indices = @transform_0, window_bounds = array<i64: 32, 256>}, {transform_indices = @transform_1, window_bounds = array<i64: 256, 256>}, {transform_indices = @transform_2, window_bounds = array<i64: 1, 256>}, {transform_indices = @transform_3, window_bounds = array<i64: 1, 256>}, {transform_indices = @transform_4, window_bounds = array<i64: 1, 256>}, {transform_indices = @transform_5, window_bounds = array<i64: 32, 256>}]} {
    %c0_i32 = arith.constant 0 : i32
    %0 = arith.cmpi eq, %arg1, %c0_i32 : i32
    %1 = arith.extui %0 : i1 to i32
    %c0_i32_0 = arith.constant 0 : i32
    %2 = arith.cmpi ne, %1, %c0_i32_0 : i32
    scf.if %2 {
      %c0_12 = arith.constant 0 : index
      %c0_13 = arith.constant 0 : index
      %24 = vector.load %arg3[%c0_12, %c0_13] : memref<32x256xbf16, #tpu.memory_space<vmem>>, vector<32x256xbf16>
      %25 = arith.extf %24 : vector<32x256xbf16> to vector<32x256xf32>
      %cst_14 = arith.constant dense<0.000000e+00> : vector<32xf32>
      %26 = vector.multi_reduction <add>, %25, %cst_14 [1] : vector<32x256xf32> to vector<32xf32>
      %27 = vector.shape_cast %26 : vector<32xf32> to vector<32x1xf32>
      %cst_15 = arith.constant 2.560000e+02 : f32
      %28 = vector.broadcast %cst_15 : f32 to vector<32x1xf32>
      %29 = arith.divf %27, %28 : vector<32x1xf32>
      %30 = vector.broadcast %29 : vector<32x1xf32> to vector<32x256xf32>
      %31 = arith.subf %25, %30 : vector<32x256xf32>
      %32 = arith.mulf %31, %31 : vector<32x256xf32>
      %cst_16 = arith.constant dense<0.000000e+00> : vector<32xf32>
      %33 = vector.multi_reduction <add>, %32, %cst_16 [1] : vector<32x256xf32> to vector<32xf32>
      %34 = vector.shape_cast %33 : vector<32xf32> to vector<32x1xf32>
      %cst_17 = arith.constant 2.560000e+02 : f32
      %35 = vector.broadcast %cst_17 : f32 to vector<32x1xf32>
      %36 = arith.divf %34, %35 : vector<32x1xf32>
      %37 = vector.broadcast %29 : vector<32x1xf32> to vector<32x256xf32>
      %38 = arith.subf %25, %37 : vector<32x256xf32>
      %cst_18 = arith.constant 9.99999974E-6 : f32
      %39 = vector.broadcast %cst_18 : f32 to vector<32x1xf32>
      %40 = arith.addf %36, %39 : vector<32x1xf32>
      %41 = math.rsqrt %40 : vector<32x1xf32>
      %42 = vector.broadcast %41 : vector<32x1xf32> to vector<32x256xf32>
      %43 = arith.mulf %38, %42 : vector<32x256xf32>
      %c0_19 = arith.constant 0 : index
      %c0_20 = arith.constant 0 : index
      %44 = vector.load %arg6[%c0_19, %c0_20] : memref<1x256xf32, #tpu.memory_space<vmem>>, vector<1x256xf32>
      %45 = vector.broadcast %44 : vector<1x256xf32> to vector<32x256xf32>
      %46 = arith.mulf %43, %45 : vector<32x256xf32>
      %c0_21 = arith.constant 0 : index
      %c0_22 = arith.constant 0 : index
      %47 = vector.load %arg7[%c0_21, %c0_22] : memref<1x256xf32, #tpu.memory_space<vmem>>, vector<1x256xf32>
      %48 = vector.broadcast %47 : vector<1x256xf32> to vector<32x256xf32>
      %49 = arith.addf %46, %48 : vector<32x256xf32>
      %50 = arith.truncf %49 : vector<32x256xf32> to vector<32x256xbf16>
      %c0_23 = arith.constant 0 : index
      %c0_24 = arith.constant 0 : index
      %51 = vector.load %arg9[%c0_23, %c0_24] : memref<32x256xbf16, #tpu.memory_space<vmem>>, vector<32x256xbf16>
      tpu.vector_store %arg9[%c0_23, %c0_24], %50 {strides = array<i32>} : memref<32x256xbf16, #tpu.memory_space<vmem>>, vector<32x256xbf16>,
    } else {
    }
    %c0 = arith.constant 0 : index
    %c0_1 = arith.constant 0 : index
    %3 = vector.load %arg9[%c0, %c0_1] : memref<32x256xbf16, #tpu.memory_space<vmem>>, vector<32x256xbf16>
    %c0_2 = arith.constant 0 : index
    %c0_3 = arith.constant 0 : index
    %4 = vector.load %arg4[%c0_2, %c0_3] : memref<256x256xbf16, #tpu.memory_space<vmem>>, vector<256x256xbf16>
    %cst = arith.constant dense<0.000000e+00> : vector<32x256xf32>
    %5 = tpu.matmul %3, %4, %cst {dimension_numbers = #tpu.dot_dimension_numbers<[1], [0], [0], [1], [0, 0, 1, 1], [], []>} : vector<32x256xbf16>, vector<256x256xbf16>, vector<32x256xf32> -> vector<32x256xf32>
    %c0_4 = arith.constant 0 : index
    %c0_5 = arith.constant 0 : index
    %6 = vector.load %arg5[%c0_4, %c0_5] : memref<1x256xf32, #tpu.memory_space<vmem>>, vector<1x256xf32>
    %7 = vector.broadcast %6 : vector<1x256xf32> to vector<32x256xf32>
    %8 = arith.addf %5, %7 : vector<32x256xf32>
    %9 = arith.mulf %8, %8 : vector<32x256xf32>
    %10 = arith.mulf %8, %9 : vector<32x256xf32>
    %cst_6 = arith.constant 4.471500e-02 : f32
    %11 = vector.broadcast %cst_6 : f32 to vector<32x256xf32>
    %12 = arith.mulf %11, %10 : vector<32x256xf32>
    %13 = arith.addf %8, %12 : vector<32x256xf32>
    %cst_7 = arith.constant 0.797884583 : f32
    %14 = vector.broadcast %cst_7 : f32 to vector<32x256xf32>
    %15 = arith.mulf %14, %13 : vector<32x256xf32>
    %16 = math.tanh %15 : vector<32x256xf32>
    %cst_8 = arith.constant 1.000000e+00 : f32
    %17 = vector.broadcast %cst_8 : f32 to vector<32x256xf32>
    %18 = arith.addf %17, %16 : vector<32x256xf32>
    %cst_9 = arith.constant 5.000000e-01 : f32
    %19 = vector.broadcast %cst_9 : f32 to vector<32x256xf32>
    %20 = arith.mulf %19, %18 : vector<32x256xf32>
    %21 = arith.mulf %8, %20 : vector<32x256xf32>
    %22 = arith.truncf %21 : vector<32x256xf32> to vector<32x256xbf16>
    %c0_10 = arith.constant 0 : index
    %c0_11 = arith.constant 0 : index
    %23 = vector.load %arg8[%c0_10, %c0_11] : memref<32x256xbf16, #tpu.memory_space<vmem>>, vector<32x256xbf16>
    tpu.vector_store %arg8[%c0_10, %c0_11], %22 {strides = array<i32>} : memref<32x256xbf16, #tpu.memory_space<vmem>>, vector<32x256xbf16>,
    return
  }
  func.func @transform_0(%arg0: i32, %arg1: i32, %arg2: i32) -> (i32, i32) {
    %c0_i32 = arith.constant 0 : i32
    return %arg0, %arg2 : i32, i32
  }
  func.func @transform_1(%arg0: i32, %arg1: i32, %arg2: i32) -> (i32, i32) {
    %c0_i32 = arith.constant 0 : i32
    return %arg2, %arg1 : i32, i32
  }
  func.func @transform_2(%arg0: i32, %arg1: i32, %arg2: i32) -> (i32, i32) {
    %c0_i32 = arith.constant 0 : i32
    %c0_i32_0 = arith.constant 0 : i32
    return %c0_i32, %arg1 : i32, i32
  }
  func.func @transform_3(%arg0: i32, %arg1: i32, %arg2: i32) -> (i32, i32) {
    %c0_i32 = arith.constant 0 : i32
    %c0_i32_0 = arith.constant 0 : i32
    return %c0_i32, %arg2 : i32, i32
  }
  func.func @transform_4(%arg0: i32, %arg1: i32, %arg2: i32) -> (i32, i32) {
    %c0_i32 = arith.constant 0 : i32
    %c0_i32_0 = arith.constant 0 : i32
    return %c0_i32, %arg2 : i32, i32
  }
  func.func @transform_5(%arg0: i32, %arg1: i32, %arg2: i32) -> (i32, i32) {
    %c0_i32 = arith.constant 0 : i32
    return %arg0, %arg1 : i32, i32
  }
}

module attributes {stable_mosaic.version = 11 : i64} {
  func.func @kernel(%arg0: i32, %arg1: i32, %arg2: i32, %arg3: memref<32x512xbf16, #tpu.memory_space<vmem>>, %arg4: memref<512x256xbf16, #tpu.memory_space<vmem>>, %arg5: memref<1x256xf32, #tpu.memory_space<vmem>>, %arg6: memref<32x256xbf16, #tpu.memory_space<vmem>>, %arg7: memref<32x256xbf16, #tpu.memory_space<vmem>>, %arg8: memref<32x256xf32, #tpu.memory_space<vmem>>) attributes {dimension_semantics = [#tpu.dimension_semantics<parallel>, #tpu.dimension_semantics<parallel>, #tpu.dimension_semantics<arbitrary>], iteration_bounds = array<i64: 1, 1, 2>, scalar_prefetch = 0 : i64, scratch_operands = 1 : i64, tpu.core_type = #tpu.core_type<tc>, window_params = [{transform_indices = @transform_0, window_bounds = array<i64: 32, 512>}, {transform_indices = @transform_1, window_bounds = array<i64: 512, 256>}, {transform_indices = @transform_2, window_bounds = array<i64: 1, 256>}, {transform_indices = @transform_3, window_bounds = array<i64: 32, 256>}, {transform_indices = @transform_4, window_bounds = array<i64: 32, 256>}]} {
    %c0 = arith.constant 0 : index
    %c0_0 = arith.constant 0 : index
    %0 = vector.load %arg3[%c0, %c0_0] : memref<32x512xbf16, #tpu.memory_space<vmem>>, vector<32x512xbf16>
    %c0_1 = arith.constant 0 : index
    %c0_2 = arith.constant 0 : index
    %1 = vector.load %arg4[%c0_1, %c0_2] : memref<512x256xbf16, #tpu.memory_space<vmem>>, vector<512x256xbf16>
    %cst = arith.constant dense<0.000000e+00> : vector<32x256xf32>
    %2 = tpu.matmul %0, %1, %cst {dimension_numbers = #tpu.dot_dimension_numbers<[1], [0], [0], [1], [0, 0, 1, 1], [], []>} : vector<32x512xbf16>, vector<512x256xbf16>, vector<32x256xf32> -> vector<32x256xf32>
    %c0_i32 = arith.constant 0 : i32
    %3 = arith.cmpi eq, %arg2, %c0_i32 : i32
    %4 = arith.extui %3 : i1 to i32
    %c0_i32_3 = arith.constant 0 : i32
    %5 = arith.cmpi ne, %4, %c0_i32_3 : i32
    scf.if %5 {
      %cst_9 = arith.constant 0.000000e+00 : f32
      %12 = vector.broadcast %cst_9 : f32 to vector<32x256xf32>
      %c0_10 = arith.constant 0 : index
      %c0_11 = arith.constant 0 : index
      %13 = vector.load %arg8[%c0_10, %c0_11] : memref<32x256xf32, #tpu.memory_space<vmem>>, vector<32x256xf32>
      tpu.vector_store %arg8[%c0_10, %c0_11], %12 {strides = array<i32>} : memref<32x256xf32, #tpu.memory_space<vmem>>, vector<32x256xf32>,
    } else {
    }
    %c0_4 = arith.constant 0 : index
    %c0_5 = arith.constant 0 : index
    %6 = vector.load %arg8[%c0_4, %c0_5] : memref<32x256xf32, #tpu.memory_space<vmem>>, vector<32x256xf32>
    %7 = arith.addf %6, %2 : vector<32x256xf32>
    %c0_6 = arith.constant 0 : index
    %c0_7 = arith.constant 0 : index
    %8 = vector.load %arg8[%c0_6, %c0_7] : memref<32x256xf32, #tpu.memory_space<vmem>>, vector<32x256xf32>
    tpu.vector_store %arg8[%c0_6, %c0_7], %7 {strides = array<i32>} : memref<32x256xf32, #tpu.memory_space<vmem>>, vector<32x256xf32>,
    %c1_i32 = arith.constant 1 : i32
    %9 = arith.cmpi eq, %arg2, %c1_i32 : i32
    %10 = arith.extui %9 : i1 to i32
    %c0_i32_8 = arith.constant 0 : i32
    %11 = arith.cmpi ne, %10, %c0_i32_8 : i32
    scf.if %11 {
      %c0_9 = arith.constant 0 : index
      %c0_10 = arith.constant 0 : index
      %12 = vector.load %arg8[%c0_9, %c0_10] : memref<32x256xf32, #tpu.memory_space<vmem>>, vector<32x256xf32>
      %c0_11 = arith.constant 0 : index
      %c0_12 = arith.constant 0 : index
      %13 = vector.load %arg5[%c0_11, %c0_12] : memref<1x256xf32, #tpu.memory_space<vmem>>, vector<1x256xf32>
      %14 = vector.broadcast %13 : vector<1x256xf32> to vector<32x256xf32>
      %15 = arith.addf %12, %14 : vector<32x256xf32>
      %c0_13 = arith.constant 0 : index
      %c0_14 = arith.constant 0 : index
      %16 = vector.load %arg6[%c0_13, %c0_14] : memref<32x256xbf16, #tpu.memory_space<vmem>>, vector<32x256xbf16>
      %17 = arith.extf %16 : vector<32x256xbf16> to vector<32x256xf32>
      %18 = arith.addf %15, %17 : vector<32x256xf32>
      %19 = arith.truncf %18 : vector<32x256xf32> to vector<32x256xbf16>
      %c0_15 = arith.constant 0 : index
      %c0_16 = arith.constant 0 : index
      %20 = vector.load %arg7[%c0_15, %c0_16] : memref<32x256xbf16, #tpu.memory_space<vmem>>, vector<32x256xbf16>
      tpu.vector_store %arg7[%c0_15, %c0_16], %19 {strides = array<i32>} : memref<32x256xbf16, #tpu.memory_space<vmem>>, vector<32x256xbf16>,
    } else {
    }
    return
  }
  func.func @transform_0(%arg0: i32, %arg1: i32, %arg2: i32) -> (i32, i32) {
    %c0_i32 = arith.constant 0 : i32
    return %arg0, %arg2 : i32, i32
  }
  func.func @transform_1(%arg0: i32, %arg1: i32, %arg2: i32) -> (i32, i32) {
    %c0_i32 = arith.constant 0 : i32
    return %arg2, %arg1 : i32, i32
  }
  func.func @transform_2(%arg0: i32, %arg1: i32, %arg2: i32) -> (i32, i32) {
    %c0_i32 = arith.constant 0 : i32
    %c0_i32_0 = arith.constant 0 : i32
    return %c0_i32, %arg1 : i32, i32
  }
  func.func @transform_3(%arg0: i32, %arg1: i32, %arg2: i32) -> (i32, i32) {
    %c0_i32 = arith.constant 0 : i32
    return %arg0, %arg1 : i32, i32
  }
  func.func @transform_4(%arg0: i32, %arg1: i32, %arg2: i32) -> (i32, i32) {
    %c0_i32 = arith.constant 0 : i32
    return %arg0, %arg1 : i32, i32
  }
}

module attributes {stable_mosaic.version = 11 : i64} {
  func.func @kernel(%arg0: i32, %arg1: i32, %arg2: i32, %arg3: memref<32x256xbf16, #tpu.memory_space<vmem>>, %arg4: memref<256x256xbf16, #tpu.memory_space<vmem>>, %arg5: memref<1x256xf32, #tpu.memory_space<vmem>>, %arg6: memref<1x256xf32, #tpu.memory_space<vmem>>, %arg7: memref<1x256xf32, #tpu.memory_space<vmem>>, %arg8: memref<32x256xbf16, #tpu.memory_space<vmem>>, %arg9: memref<32x256xbf16, #tpu.memory_space<vmem>>) attributes {dimension_semantics = [#tpu.dimension_semantics<parallel>, #tpu.dimension_semantics<arbitrary>, #tpu.dimension_semantics<arbitrary>], iteration_bounds = array<i64: 1, 3, 1>, scalar_prefetch = 0 : i64, scratch_operands = 1 : i64, tpu.core_type = #tpu.core_type<tc>, window_params = [{transform_indices = @transform_0, window_bounds = array<i64: 32, 256>}, {transform_indices = @transform_1, window_bounds = array<i64: 256, 256>}, {transform_indices = @transform_2, window_bounds = array<i64: 1, 256>}, {transform_indices = @transform_3, window_bounds = array<i64: 1, 256>}, {transform_indices = @transform_4, window_bounds = array<i64: 1, 256>}, {transform_indices = @transform_5, window_bounds = array<i64: 32, 256>}]} {
    %c0_i32 = arith.constant 0 : i32
    %0 = arith.cmpi eq, %arg1, %c0_i32 : i32
    %1 = arith.extui %0 : i1 to i32
    %c0_i32_0 = arith.constant 0 : i32
    %2 = arith.cmpi ne, %1, %c0_i32_0 : i32
    scf.if %2 {
      %c0_8 = arith.constant 0 : index
      %c0_9 = arith.constant 0 : index
      %11 = vector.load %arg3[%c0_8, %c0_9] : memref<32x256xbf16, #tpu.memory_space<vmem>>, vector<32x256xbf16>
      %12 = arith.extf %11 : vector<32x256xbf16> to vector<32x256xf32>
      %cst_10 = arith.constant dense<0.000000e+00> : vector<32xf32>
      %13 = vector.multi_reduction <add>, %12, %cst_10 [1] : vector<32x256xf32> to vector<32xf32>
      %14 = vector.shape_cast %13 : vector<32xf32> to vector<32x1xf32>
      %cst_11 = arith.constant 2.560000e+02 : f32
      %15 = vector.broadcast %cst_11 : f32 to vector<32x1xf32>
      %16 = arith.divf %14, %15 : vector<32x1xf32>
      %17 = vector.broadcast %16 : vector<32x1xf32> to vector<32x256xf32>
      %18 = arith.subf %12, %17 : vector<32x256xf32>
      %19 = arith.mulf %18, %18 : vector<32x256xf32>
      %cst_12 = arith.constant dense<0.000000e+00> : vector<32xf32>
      %20 = vector.multi_reduction <add>, %19, %cst_12 [1] : vector<32x256xf32> to vector<32xf32>
      %21 = vector.shape_cast %20 : vector<32xf32> to vector<32x1xf32>
      %cst_13 = arith.constant 2.560000e+02 : f32
      %22 = vector.broadcast %cst_13 : f32 to vector<32x1xf32>
      %23 = arith.divf %21, %22 : vector<32x1xf32>
      %24 = vector.broadcast %16 : vector<32x1xf32> to vector<32x256xf32>
      %25 = arith.subf %12, %24 : vector<32x256xf32>
      %cst_14 = arith.constant 9.99999974E-6 : f32
      %26 = vector.broadcast %cst_14 : f32 to vector<32x1xf32>
      %27 = arith.addf %23, %26 : vector<32x1xf32>
      %28 = math.rsqrt %27 : vector<32x1xf32>
      %29 = vector.broadcast %28 : vector<32x1xf32> to vector<32x256xf32>
      %30 = arith.mulf %25, %29 : vector<32x256xf32>
      %c0_15 = arith.constant 0 : index
      %c0_16 = arith.constant 0 : index
      %31 = vector.load %arg6[%c0_15, %c0_16] : memref<1x256xf32, #tpu.memory_space<vmem>>, vector<1x256xf32>
      %32 = vector.broadcast %31 : vector<1x256xf32> to vector<32x256xf32>
      %33 = arith.mulf %30, %32 : vector<32x256xf32>
      %c0_17 = arith.constant 0 : index
      %c0_18 = arith.constant 0 : index
      %34 = vector.load %arg7[%c0_17, %c0_18] : memref<1x256xf32, #tpu.memory_space<vmem>>, vector<1x256xf32>
      %35 = vector.broadcast %34 : vector<1x256xf32> to vector<32x256xf32>
      %36 = arith.addf %33, %35 : vector<32x256xf32>
      %37 = arith.truncf %36 : vector<32x256xf32> to vector<32x256xbf16>
      %c0_19 = arith.constant 0 : index
      %c0_20 = arith.constant 0 : index
      %38 = vector.load %arg9[%c0_19, %c0_20] : memref<32x256xbf16, #tpu.memory_space<vmem>>, vector<32x256xbf16>
      tpu.vector_store %arg9[%c0_19, %c0_20], %37 {strides = array<i32>} : memref<32x256xbf16, #tpu.memory_space<vmem>>, vector<32x256xbf16>,
    } else {
    }
    %c0 = arith.constant 0 : index
    %c0_1 = arith.constant 0 : index
    %3 = vector.load %arg9[%c0, %c0_1] : memref<32x256xbf16, #tpu.memory_space<vmem>>, vector<32x256xbf16>
    %c0_2 = arith.constant 0 : index
    %c0_3 = arith.constant 0 : index
    %4 = vector.load %arg4[%c0_2, %c0_3] : memref<256x256xbf16, #tpu.memory_space<vmem>>, vector<256x256xbf16>
    %cst = arith.constant dense<0.000000e+00> : vector<32x256xf32>
    %5 = tpu.matmul %3, %4, %cst {dimension_numbers = #tpu.dot_dimension_numbers<[1], [0], [0], [1], [0, 0, 1, 1], [], []>} : vector<32x256xbf16>, vector<256x256xbf16>, vector<32x256xf32> -> vector<32x256xf32>
    %c0_4 = arith.constant 0 : index
    %c0_5 = arith.constant 0 : index
    %6 = vector.load %arg5[%c0_4, %c0_5] : memref<1x256xf32, #tpu.memory_space<vmem>>, vector<1x256xf32>
    %7 = vector.broadcast %6 : vector<1x256xf32> to vector<32x256xf32>
    %8 = arith.addf %5, %7 : vector<32x256xf32>
    %9 = arith.truncf %8 : vector<32x256xf32> to vector<32x256xbf16>
    %c0_6 = arith.constant 0 : index
    %c0_7 = arith.constant 0 : index
    %10 = vector.load %arg8[%c0_6, %c0_7] : memref<32x256xbf16, #tpu.memory_space<vmem>>, vector<32x256xbf16>
    tpu.vector_store %arg8[%c0_6, %c0_7], %9 {strides = array<i32>} : memref<32x256xbf16, #tpu.memory_space<vmem>>, vector<32x256xbf16>,
    return
  }
  func.func @transform_0(%arg0: i32, %arg1: i32, %arg2: i32) -> (i32, i32) {
    %c0_i32 = arith.constant 0 : i32
    return %arg0, %arg2 : i32, i32
  }
  func.func @transform_1(%arg0: i32, %arg1: i32, %arg2: i32) -> (i32, i32) {
    %c0_i32 = arith.constant 0 : i32
    return %arg2, %arg1 : i32, i32
  }
  func.func @transform_2(%arg0: i32, %arg1: i32, %arg2: i32) -> (i32, i32) {
    %c0_i32 = arith.constant 0 : i32
    %c0_i32_0 = arith.constant 0 : i32
    return %c0_i32, %arg1 : i32, i32
  }
  func.func @transform_3(%arg0: i32, %arg1: i32, %arg2: i32) -> (i32, i32) {
    %c0_i32 = arith.constant 0 : i32
    %c0_i32_0 = arith.constant 0 : i32
    return %c0_i32, %arg2 : i32, i32
  }
  func.func @transform_4(%arg0: i32, %arg1: i32, %arg2: i32) -> (i32, i32) {
    %c0_i32 = arith.constant 0 : i32
    %c0_i32_0 = arith.constant 0 : i32
    return %c0_i32, %arg2 : i32, i32
  }
  func.func @transform_5(%arg0: i32, %arg1: i32, %arg2: i32) -> (i32, i32) {
    %c0_i32 = arith.constant 0 : i32
    return %arg0, %arg1 : i32, i32
  }
}

module attributes {stable_mosaic.version = 11 : i64} {
  func.func @kernel(%arg0: i32, %arg1: i32, %arg2: i32, %arg3: memref<32x256xbf16, #tpu.memory_space<vmem>>, %arg4: memref<256x256xbf16, #tpu.memory_space<vmem>>, %arg5: memref<1x256xf32, #tpu.memory_space<vmem>>, %arg6: memref<1x256xf32, #tpu.memory_space<vmem>>, %arg7: memref<1x256xf32, #tpu.memory_space<vmem>>, %arg8: memref<32x256xf32, #tpu.memory_space<vmem>>, %arg9: memref<32x256xbf16, #tpu.memory_space<vmem>>) attributes {dimension_semantics = [#tpu.dimension_semantics<parallel>, #tpu.dimension_semantics<arbitrary>, #tpu.dimension_semantics<arbitrary>], iteration_bounds = array<i64: 1, 1, 1>, scalar_prefetch = 0 : i64, scratch_operands = 1 : i64, tpu.core_type = #tpu.core_type<tc>, window_params = [{transform_indices = @transform_0, window_bounds = array<i64: 32, 256>}, {transform_indices = @transform_1, window_bounds = array<i64: 256, 256>}, {transform_indices = @transform_2, window_bounds = array<i64: 1, 256>}, {transform_indices = @transform_3, window_bounds = array<i64: 1, 256>}, {transform_indices = @transform_4, window_bounds = array<i64: 1, 256>}, {transform_indices = @transform_5, window_bounds = array<i64: 32, 256>}]} {
    %c0_i32 = arith.constant 0 : i32
    %0 = arith.cmpi eq, %arg1, %c0_i32 : i32
    %1 = arith.extui %0 : i1 to i32
    %c0_i32_0 = arith.constant 0 : i32
    %2 = arith.cmpi ne, %1, %c0_i32_0 : i32
    scf.if %2 {
      %c0_8 = arith.constant 0 : index
      %c0_9 = arith.constant 0 : index
      %10 = vector.load %arg3[%c0_8, %c0_9] : memref<32x256xbf16, #tpu.memory_space<vmem>>, vector<32x256xbf16>
      %11 = arith.extf %10 : vector<32x256xbf16> to vector<32x256xf32>
      %cst_10 = arith.constant dense<0.000000e+00> : vector<32xf32>
      %12 = vector.multi_reduction <add>, %11, %cst_10 [1] : vector<32x256xf32> to vector<32xf32>
      %13 = vector.shape_cast %12 : vector<32xf32> to vector<32x1xf32>
      %cst_11 = arith.constant 2.560000e+02 : f32
      %14 = vector.broadcast %cst_11 : f32 to vector<32x1xf32>
      %15 = arith.divf %13, %14 : vector<32x1xf32>
      %16 = vector.broadcast %15 : vector<32x1xf32> to vector<32x256xf32>
      %17 = arith.subf %11, %16 : vector<32x256xf32>
      %18 = arith.mulf %17, %17 : vector<32x256xf32>
      %cst_12 = arith.constant dense<0.000000e+00> : vector<32xf32>
      %19 = vector.multi_reduction <add>, %18, %cst_12 [1] : vector<32x256xf32> to vector<32xf32>
      %20 = vector.shape_cast %19 : vector<32xf32> to vector<32x1xf32>
      %cst_13 = arith.constant 2.560000e+02 : f32
      %21 = vector.broadcast %cst_13 : f32 to vector<32x1xf32>
      %22 = arith.divf %20, %21 : vector<32x1xf32>
      %23 = vector.broadcast %15 : vector<32x1xf32> to vector<32x256xf32>
      %24 = arith.subf %11, %23 : vector<32x256xf32>
      %cst_14 = arith.constant 9.99999974E-6 : f32
      %25 = vector.broadcast %cst_14 : f32 to vector<32x1xf32>
      %26 = arith.addf %22, %25 : vector<32x1xf32>
      %27 = math.rsqrt %26 : vector<32x1xf32>
      %28 = vector.broadcast %27 : vector<32x1xf32> to vector<32x256xf32>
      %29 = arith.mulf %24, %28 : vector<32x256xf32>
      %c0_15 = arith.constant 0 : index
      %c0_16 = arith.constant 0 : index
      %30 = vector.load %arg6[%c0_15, %c0_16] : memref<1x256xf32, #tpu.memory_space<vmem>>, vector<1x256xf32>
      %31 = vector.broadcast %30 : vector<1x256xf32> to vector<32x256xf32>
      %32 = arith.mulf %29, %31 : vector<32x256xf32>
      %c0_17 = arith.constant 0 : index
      %c0_18 = arith.constant 0 : index
      %33 = vector.load %arg7[%c0_17, %c0_18] : memref<1x256xf32, #tpu.memory_space<vmem>>, vector<1x256xf32>
      %34 = vector.broadcast %33 : vector<1x256xf32> to vector<32x256xf32>
      %35 = arith.addf %32, %34 : vector<32x256xf32>
      %36 = arith.truncf %35 : vector<32x256xf32> to vector<32x256xbf16>
      %c0_19 = arith.constant 0 : index
      %c0_20 = arith.constant 0 : index
      %37 = vector.load %arg9[%c0_19, %c0_20] : memref<32x256xbf16, #tpu.memory_space<vmem>>, vector<32x256xbf16>
      tpu.vector_store %arg9[%c0_19, %c0_20], %36 {strides = array<i32>} : memref<32x256xbf16, #tpu.memory_space<vmem>>, vector<32x256xbf16>,
    } else {
    }
    %c0 = arith.constant 0 : index
    %c0_1 = arith.constant 0 : index
    %3 = vector.load %arg9[%c0, %c0_1] : memref<32x256xbf16, #tpu.memory_space<vmem>>, vector<32x256xbf16>
    %c0_2 = arith.constant 0 : index
    %c0_3 = arith.constant 0 : index
    %4 = vector.load %arg4[%c0_2, %c0_3] : memref<256x256xbf16, #tpu.memory_space<vmem>>, vector<256x256xbf16>
    %cst = arith.constant dense<0.000000e+00> : vector<32x256xf32>
    %5 = tpu.matmul %3, %4, %cst {dimension_numbers = #tpu.dot_dimension_numbers<[1], [0], [0], [1], [0, 0, 1, 1], [], []>} : vector<32x256xbf16>, vector<256x256xbf16>, vector<32x256xf32> -> vector<32x256xf32>
    %c0_4 = arith.constant 0 : index
    %c0_5 = arith.constant 0 : index
    %6 = vector.load %arg5[%c0_4, %c0_5] : memref<1x256xf32, #tpu.memory_space<vmem>>, vector<1x256xf32>
    %7 = vector.broadcast %6 : vector<1x256xf32> to vector<32x256xf32>
    %8 = arith.addf %5, %7 : vector<32x256xf32>
    %c0_6 = arith.constant 0 : index
    %c0_7 = arith.constant 0 : index
    %9 = vector.load %arg8[%c0_6, %c0_7] : memref<32x256xf32, #tpu.memory_space<vmem>>, vector<32x256xf32>
    tpu.vector_store %arg8[%c0_6, %c0_7], %8 {strides = array<i32>} : memref<32x256xf32, #tpu.memory_space<vmem>>, vector<32x256xf32>,
    return
  }
  func.func @transform_0(%arg0: i32, %arg1: i32, %arg2: i32) -> (i32, i32) {
    %c0_i32 = arith.constant 0 : i32
    return %arg0, %arg2 : i32, i32
  }
  func.func @transform_1(%arg0: i32, %arg1: i32, %arg2: i32) -> (i32, i32) {
    %c0_i32 = arith.constant 0 : i32
    return %arg2, %arg1 : i32, i32
  }
  func.func @transform_2(%arg0: i32, %arg1: i32, %arg2: i32) -> (i32, i32) {
    %c0_i32 = arith.constant 0 : i32
    %c0_i32_0 = arith.constant 0 : i32
    return %c0_i32, %arg1 : i32, i32
  }
  func.func @transform_3(%arg0: i32, %arg1: i32, %arg2: i32) -> (i32, i32) {
    %c0_i32 = arith.constant 0 : i32
    %c0_i32_0 = arith.constant 0 : i32
    return %c0_i32, %arg2 : i32, i32
  }
  func.func @transform_4(%arg0: i32, %arg1: i32, %arg2: i32) -> (i32, i32) {
    %c0_i32 = arith.constant 0 : i32
    %c0_i32_0 = arith.constant 0 : i32
    return %c0_i32, %arg2 : i32, i32
  }
  func.func @transform_5(%arg0: i32, %arg1: i32, %arg2: i32) -> (i32, i32) {
    %c0_i32 = arith.constant 0 : i32
    return %arg0, %arg1 : i32, i32
  }
}

</mosaic_0001>

<llo_original>
// kernel: cot_forward.11
$region0: #{cot_forward.11}
  #allocation0 [shape = 'u32[]', space=smem, size = 0x4, offset = 0x4, fixed_abs, tag = 'smem constant byte address 0x4 - core index']
  #allocation1 [shape = 'u32[144,128]{1,0:T(1,128)}', space=vmem, size = 0x12000, scoped, tag = 'internal scratch']
  #allocation2 [shape = 'bf16[32,256]{1,0:T(16,128)(2,1)}', space=vmem, size = 0x4000, scoped, tag = 'scratch operand']
  %s0 = inlined_call_operand.vmem [shape: bf16[32,256], index: 0, kind: input, shape index: {}]
  %s1 = inlined_call_operand.hbm [shape: bf16[256,768], index: 1, kind: input, shape index: {}]
  %s2 = inlined_call_operand.vmem [shape: f32[1,768], index: 2, kind: input, shape index: {}]
  %s3 = inlined_call_operand.vmem [shape: f32[1,256], index: 3, kind: input, shape index: {}]
  %s4 = inlined_call_operand.vmem [shape: f32[1,256], index: 4, kind: input, shape index: {}]
  %s5 = inlined_call_operand.vmem [shape: bf16[32,768], index: 5, kind: output, shape index: {}]
  %s6 = sld [smem:[#allocation0]]
  $region95: #{cot_forward.11} parent=0
    _
  %s8 = ssub.s32 1, %s6
  %s9 = scalar_select 0, %s8, %s6
  $region1: #{cot_forward.11} parent=0
    #allocation3 [shape = 'u8[262144]{0}', space=vmem, size = 0x40000, scoped, tag = 'input window, operand 1']
    #allocation4 [shape = 's32[2]{0}', space=sflag, size = 0x8, scoped, tag = 'scoped memory for cot_forward.11']
    #allocation5 [shape = 'u8[32768]{0}', space=vmem, size = 0x8000, scoped, tag = 'output window, operand 0']
    %10 = vsyncpa [#allocation4], 0
    %s11 = scalar_lea.sflag [#allocation4], 1
    %12 = vsyncpa %s11, 0
    loop: start=0, step=1, limit=5
    $region2: #{cot_forward.11} parent=1 // loop_pre_header
      _
    $region3: #{cot_forward.11} parent=1 // loop_header
      %s14 = sphi 0, %s18
      %p15 = scmp.ge.s32.totalorder %s14, 5
      %s21 = sphi 0, %s40
      %s22 = sphi 0, %s36
      %s23 = sphi 0, %s32
      %s24 = sphi 0, %s21
      %s25 = sphi 0, %s22
      %s26 = sphi 0, %s23
      %s27 = sphi 0, %s24
      %s28 = sphi 0, %s25
      %s29 = sphi 0, %s26
      %s45 = sphi 0, %s47
      %s48 = sphi 0, %s45
      %s49 = sphi 0, %s48
      %s65 = sphi 0, %s49
      %s73 = sphi 0, %s75
      %s76 = sphi 0, %s73
      %s77 = sphi 0, %s76
      %s93 = sphi 0, %s77
      %s99 = sphi 0, %s101
      %s102 = sphi 0, %s99
      %s103 = sphi 0, %s102
      %s119 = sphi 0, %s103
      %s125 = sphi 0, %s127
      %s128 = sphi 0, %s125
      %s129 = sphi 0, %s128
      %s145 = sphi 0, %s129
      %s151 = sphi 0, %s153
      %s154 = sphi 0, %s151
      %s155 = sphi 0, %s154
      %s171 = sphi 0, %s155
      %s179 = sphi 0, %s181
      %s182 = sphi 0, %s179
      %s183 = sphi 0, %s182
      %s199 = sphi 0, %s183
    $region4: #{cot_forward.11} parent=1 // loop_header_branch
      %17 = sbr.rel (%p15) target = $region8
    $region5: #{cot_forward.11} parent=1 // loop_body
      %s19 = ssub.s32 %s14, 1
      %s20 = ssub.s32 %s14, 2
      %s30 = sadd.s32 1, %s23
      %p31 = scmp.ge.s32.totalorder %s30, 1
      %s32 = scalar_select %p31, 0, %s30
      %s33 = sadd.s32 1, %s22
      %s34 = scalar_select %p31, %s33, %s22
      %p35 = scmp.ge.s32.totalorder %s34, 3
      %s36 = scalar_select %p35, 0, %s34
      %s37 = sadd.s32 1, %s21
      %s38 = scalar_select %p35, %s37, %s21
      %p39 = scmp.ge.s32.totalorder %s38, 1
      %s40 = scalar_select %p39, 0, %s38
      %s41 = ssub.s32 %s21, %s40
      %s42 = ssub.s32 %s23, %s32
      %s43 = sor.u32 %s41, %s42
      %p44 = scmp.eq.s32.totalorder %s43, 0
      %s46 = sadd.s32 %s45, 1
      %s47 = scalar_select %p44, %s45, %s46
      %p50 = pneg %p44
      %p51 = scmp.eq.s32.totalorder %s14, 2
      %p52 = por %p50, %p51
      %p53 = scmp.ne.s32.totalorder %s45, %s48
      %p54 = scmp.eq.s32.totalorder %s14, 0
      %p55 = por %p53, %p54
      %p56 = scmp.ne.s32.totalorder %s45, %s48
      %p57 = scmp.eq.s32.totalorder %s19, 2
      %p58 = por %p56, %p57
      %p59 = scmp.ne.s32.totalorder %s48, %s49
      %p60 = scmp.eq.s32.totalorder %s19, 0
      %p61 = por %p59, %p60
      %p62 = scmp.ne.s32.totalorder %s48, %s49
      %p63 = scmp.eq.s32.totalorder %s20, 2
      %p64 = por %p62, %p63
      %p66 = scmp.ne.s32.totalorder %s49, %s65
      %p67 = scmp.eq.s32.totalorder %s20, 0
      %p68 = por %p66, %p67
      %s69 = ssub.s32 %s23, %s32
      %s70 = ssub.s32 %s22, %s36
      %s71 = sor.u32 %s69, %s70
      %p72 = scmp.eq.s32.totalorder %s71, 0
      %s74 = sadd.s32 %s73, 1
      %s75 = scalar_select %p72, %s73, %s74
      %p78 = pneg %p72
      %p79 = scmp.eq.s32.totalorder %s14, 2
      %p80 = por %p78, %p79
      %p81 = scmp.ne.s32.totalorder %s73, %s76
      %p82 = scmp.eq.s32.totalorder %s14, 0
      %p83 = por %p81, %p82
      %p84 = scmp.ne.s32.totalorder %s73, %s76
      %p85 = scmp.eq.s32.totalorder %s19, 2
      %p86 = por %p84, %p85
      %p87 = scmp.ne.s32.totalorder %s76, %s77
      %p88 = scmp.eq.s32.totalorder %s19, 0
      %p89 = por %p87, %p88
      %p90 = scmp.ne.s32.totalorder %s76, %s77
      %p91 = scmp.eq.s32.totalorder %s20, 2
      %p92 = por %p90, %p91
      %p94 = scmp.ne.s32.totalorder %s77, %s93
      %p95 = scmp.eq.s32.totalorder %s20, 0
      %p96 = por %p94, %p95
      %s97 = ssub.s32 %s22, %s36
      %p98 = scmp.eq.s32.totalorder %s97, 0
      %s100 = sadd.s32 %s99, 1
      %s101 = scalar_select %p98, %s99, %s100
      %p104 = pneg %p98
      %p105 = scmp.eq.s32.totalorder %s14, 2
      %p106 = por %p104, %p105
      %p107 = scmp.ne.s32.totalorder %s99, %s102
      %p108 = scmp.eq.s32.totalorder %s14, 0
      %p109 = por %p107, %p108
      %p110 = scmp.ne.s32.totalorder %s99, %s102
      %p111 = scmp.eq.s32.totalorder %s19, 2
      %p112 = por %p110, %p111
      %p113 = scmp.ne.s32.totalorder %s102, %s103
      %p114 = scmp.eq.s32.totalorder %s19, 0
      %p115 = por %p113, %p114
      %p116 = scmp.ne.s32.totalorder %s102, %s103
      %p117 = scmp.eq.s32.totalorder %s20, 2
      %p118 = por %p116, %p117
      %p120 = scmp.ne.s32.totalorder %s103, %s119
      %p121 = scmp.eq.s32.totalorder %s20, 0
      %p122 = por %p120, %p121
      %s123 = ssub.s32 %s23, %s32
      %p124 = scmp.eq.s32.totalorder %s123, 0
      %s126 = sadd.s32 %s125, 1
      %s127 = scalar_select %p124, %s125, %s126
      %p130 = pneg %p124
      %p131 = scmp.eq.s32.totalorder %s14, 2
      %p132 = por %p130, %p131
      %p133 = scmp.ne.s32.totalorder %s125, %s128
      %p134 = scmp.eq.s32.totalorder %s14, 0
      %p135 = por %p133, %p134
      %p136 = scmp.ne.s32.totalorder %s125, %s128
      %p137 = scmp.eq.s32.totalorder %s19, 2
      %p138 = por %p136, %p137
      %p139 = scmp.ne.s32.totalorder %s128, %s129
      %p140 = scmp.eq.s32.totalorder %s19, 0
      %p141 = por %p139, %p140
      %p142 = scmp.ne.s32.totalorder %s128, %s129
      %p143 = scmp.eq.s32.totalorder %s20, 2
      %p144 = por %p142, %p143
      %p146 = scmp.ne.s32.totalorder %s129, %s145
      %p147 = scmp.eq.s32.totalorder %s20, 0
      %p148 = por %p146, %p147
      %s149 = ssub.s32 %s23, %s32
      %p150 = scmp.eq.s32.totalorder %s149, 0
      %s152 = sadd.s32 %s151, 1
      %s153 = scalar_select %p150, %s151, %s152
      %p156 = pneg %p150
      %p157 = scmp.eq.s32.totalorder %s14, 2
      %p158 = por %p156, %p157
      %p159 = scmp.ne.s32.totalorder %s151, %s154
      %p160 = scmp.eq.s32.totalorder %s14, 0
      %p161 = por %p159, %p160
      %p162 = scmp.ne.s32.totalorder %s151, %s154
      %p163 = scmp.eq.s32.totalorder %s19, 2
      %p164 = por %p162, %p163
      %p165 = scmp.ne.s32.totalorder %s154, %s155
      %p166 = scmp.eq.s32.totalorder %s19, 0
      %p167 = por %p165, %p166
      %p168 = scmp.ne.s32.totalorder %s154, %s155
      %p169 = scmp.eq.s32.totalorder %s20, 2
      %p170 = por %p168, %p169
      %p172 = scmp.ne.s32.totalorder %s155, %s171
      %p173 = scmp.eq.s32.totalorder %s20, 0
      %p174 = por %p172, %p173
      %s175 = ssub.s32 %s21, %s40
      %s176 = ssub.s32 %s22, %s36
      %s177 = sor.u32 %s175, %s176
      %p178 = scmp.eq.s32.totalorder %s177, 0
      %s180 = sadd.s32 %s179, 1
      %s181 = scalar_select %p178, %s179, %s180
      %p184 = pneg %p178
      %p185 = scmp.eq.s32.totalorder %s14, 2
      %p186 = por %p184, %p185
      %p187 = scmp.ne.s32.totalorder %s179, %s182
      %p188 = scmp.eq.s32.totalorder %s14, 0
      %p189 = por %p187, %p188
      %p190 = scmp.ne.s32.totalorder %s179, %s182
      %p191 = scmp.eq.s32.totalorder %s19, 2
      %p192 = por %p190, %p191
      %p193 = scmp.ne.s32.totalorder %s182, %s183
      %p194 = scmp.eq.s32.totalorder %s19, 0
      %p195 = por %p193, %p194
      %p196 = scmp.ne.s32.totalorder %s182, %s183
      %p197 = scmp.eq.s32.totalorder %s20, 2
      %p198 = por %p196, %p197
      %p200 = scmp.ne.s32.totalorder %s183, %s199
      %p201 = scmp.eq.s32.totalorder %s20, 0
      %p202 = por %p200, %p201
      %p203 = scmp.le.s32.totalorder 1, %s14
      %p204 = scmp.lt.s32.totalorder %s14, 4
      %p205 = pnand %p203, %p204
      %p206 = pneg %p205
      // Predicated region
      $region9: #{cot_forward.11} parent=5 // pred_check
        _
      $region10: #{cot_forward.11} parent=5 // pred_check_branch
        %208 = sbr.rel (%p205) target = $region12
      $region11: #{cot_forward.11} parent=5 // pred_region
        %s209 = ssub.s32 %s14, 1
        // Predicated region
        $region13: #{cot_forward.11} parent=11 // pred_check
          %p210 = pneg %p61
        $region14: #{cot_forward.11} parent=11 // pred_check_branch
          %212 = sbr.rel (%p210) target = $region16
        $region15: #{cot_forward.11} parent=11 // pred_region
          %s213 = smul.u32 4, %s24
          %s214 = smul.u32 2, %s26
          %p215 = scmp.lt.s32.totalorder %s213, 3
          %s216 = scalar_select %p215, %s213, 3
          %p217 = scmp.lt.s32.totalorder %s214, 1
          %s218 = scalar_select %p217, %s214, 1
          %s219 = smul.addr %s216, 2
          %s220 = sadd.s32 %s218, %s219
          %s221 = smul.addr %s220, 4
          %s222 = scalar_lea.vmem %s0, %s221
          %s223 = smul.u32 4, %s24
          %s224 = smul.u32 2, %s26
        $region16: #{cot_forward.11} parent=11 // pred_fallthru
          _
        // Predicated region
        $region17: #{cot_forward.11} parent=11 // pred_check
          %p225 = pneg %p141
        $region18: #{cot_forward.11} parent=11 // pred_check_branch
          %227 = sbr.rel (%p225) target = $region20
        $region19: #{cot_forward.11} parent=11 // pred_region
          %s228 = smul.u32 2, %s26
          %p229 = scmp.lt.s32.totalorder %s228, 1
          %s230 = scalar_select %p229, %s228, 1
          %s231 = scalar_lea.vmem %s3, %s230
          %s232 = smul.u32 2, %s26
        $region20: #{cot_forward.11} parent=11 // pred_fallthru
          _
        // Predicated region
        $region21: #{cot_forward.11} parent=11 // pred_check
          %p233 = pneg %p167
        $region22: #{cot_forward.11} parent=11 // pred_check_branch
          %235 = sbr.rel (%p233) target = $region24
        $region23: #{cot_forward.11} parent=11 // pred_region
          %s236 = smul.u32 2, %s26
          %p237 = scmp.lt.s32.totalorder %s236, 1
          %s238 = scalar_select %p237, %s236, 1
          %s239 = scalar_lea.vmem %s4, %s238
          %s240 = smul.u32 2, %s26
        $region24: #{cot_forward.11} parent=11 // pred_fallthru
          _
      $region12: #{cot_forward.11} parent=5 // pred_fallthru
        _
      %p241 = scmp.lt.s32.totalorder %s14, 3
      // Predicated region
      $region25: #{cot_forward.11} parent=5 // pred_check
        %p242 = pneg %p241
      $region26: #{cot_forward.11} parent=5 // pred_check_branch
        %244 = sbr.rel (%p242) target = $region28
      $region27: #{cot_forward.11} parent=5 // pred_region
        // Predicated region
        $region29: #{cot_forward.11} parent=27 // pred_check
          %p245 = pneg %p83
        $region30: #{cot_forward.11} parent=27 // pred_check_branch
          %247 = sbr.rel (%p245) target = $region32
        $region31: #{cot_forward.11} parent=27 // pred_region
          %s248 = sand.u32 %s73, 1
          %s249 = scalar_lea.sflag [#allocation4], %s248
          %s250 = sand.u32 %s73, 1
          %s251 = smul.addr %s250, 256
          %s252 = scalar_lea.vmem [#allocation3], %s251
          %s253 = smul.u32 32, %s23
          %s254 = smul.u32 2, %s22
          %s256 = ssub.s32 4096, 4096
          %257 = vsyncadd %s249, %s256
          %s258 = smul.addr %s253, 6
          %s259 = sadd.s32 %s254, %s258
          %s260 = smul.addr %s259, 64
          %s261 = scalar_lea.hbm %s1, %s260
          %s262 = sshll.u32 %s252, 4
          %s263 = int_to_ptr.vmem [resolvable:$true] %s262
          %268 = dma.hbm_to_vmem [thread:$0]  %s261, 4096, %s263, %s249, 384, 128, 8
        $region32: #{cot_forward.11} parent=27 // pred_fallthru
          _
        // Predicated region
        $region33: #{cot_forward.11} parent=27 // pred_check
          %p269 = pneg %p109
        $region34: #{cot_forward.11} parent=27 // pred_check_branch
          %271 = sbr.rel (%p269) target = $region36
        $region35: #{cot_forward.11} parent=27 // pred_region
          %s272 = smul.u32 2, %s22
          %p273 = scmp.lt.s32.totalorder %s272, 5
          %s274 = scalar_select %p273, %s272, 5
          %s275 = scalar_lea.vmem %s2, %s274
          %s276 = smul.u32 2, %s22
        $region36: #{cot_forward.11} parent=27 // pred_fallthru
          _
      $region28: #{cot_forward.11} parent=5 // pred_fallthru
        _
      %p277 = scmp.le.s32.totalorder 1, %s14
      %p278 = scmp.lt.s32.totalorder %s14, 4
      %p279 = pnand %p277, %p278
      %p280 = pneg %p279
      // Predicated region
      $region37: #{cot_forward.11} parent=5 // pred_check
        _
      $region38: #{cot_forward.11} parent=5 // pred_check_branch
        %282 = sbr.rel (%p279) target = $region40
      $region39: #{cot_forward.11} parent=5 // pred_region
        %s283 = ssub.s32 %s14, 1
        %s284 = sand.u32 %s76, 1
        %s285 = scalar_lea.sflag [#allocation4], %s284
        %s286 = sand.u32 %s76, 1
        %s287 = smul.addr %s286, 256
        %s288 = scalar_lea.vmem [#allocation3], %s287
        // Predicated region
        $region41: #{cot_forward.11} parent=39 // pred_check
          %p289 = pneg %p89
        $region42: #{cot_forward.11} parent=39 // pred_check_branch
          %291 = sbr.rel (%p289) target = $region44
        $region43: #{cot_forward.11} parent=39 // pred_region
          %292 = dma.done %s285, 4096
        $region44: #{cot_forward.11} parent=39 // pred_fallthru
          _
        %s293 = smul.u32 4, %s24
        %s294 = smul.u32 2, %s26
        %p295 = scmp.lt.s32.totalorder %s293, 3
        %s296 = scalar_select %p295, %s293, 3
        %p297 = scmp.lt.s32.totalorder %s294, 1
        %s298 = scalar_select %p297, %s294, 1
        %s299 = smul.addr %s296, 2
        %s300 = sadd.s32 %s298, %s299
        %s301 = smul.addr %s300, 4
        %s302 = scalar_lea.vmem %s0, %s301
        %p303 = pneg %p61
        %p304 = pneg %p58
        %s305 = sand.u32 %s76, 1
        %s306 = scalar_lea.sflag [#allocation4], %s305
        %s307 = sand.u32 %s76, 1
        %s308 = smul.addr %s307, 256
        %s309 = scalar_lea.vmem [#allocation3], %s308
        %p310 = pneg %p89
        %p311 = pneg %p86
        %s312 = smul.u32 2, %s25
        %p313 = scmp.lt.s32.totalorder %s312, 5
        %s314 = scalar_select %p313, %s312, 5
        %s315 = scalar_lea.vmem %s2, %s314
        %p316 = pneg %p115
        %p317 = pneg %p112
        %s318 = smul.u32 2, %s26
        %p319 = scmp.lt.s32.totalorder %s318, 1
        %s320 = scalar_select %p319, %s318, 1
        %s321 = scalar_lea.vmem %s3, %s320
        %p322 = pneg %p141
        %p323 = pneg %p138
        %s324 = smul.u32 2, %s26
        %p325 = scmp.lt.s32.totalorder %s324, 1
        %s326 = scalar_select %p325, %s324, 1
        %s327 = scalar_lea.vmem %s4, %s326
        %p328 = pneg %p167
        %p329 = pneg %p164
        %p330 = pneg %p195
        %p331 = pneg %p192
        %s332 = sand.u32 %s182, 1
        %s333 = sand.u32 %s182, 1
        %s334 = smul.addr %s333, 32
        %s335 = scalar_lea.vmem [#allocation5], %s334
        %s336 = smul.u32 4, %s24
        %s337 = smul.u32 2, %s26
        %p338 = scmp.lt.s32.totalorder %s336, 3
        %s339 = scalar_select %p338, %s336, 3
        %p340 = scmp.lt.s32.totalorder %s337, 1
        %s341 = scalar_select %p340, %s337, 1
        %s342 = smul.addr %s339, 2
        %s343 = sadd.s32 %s341, %s342
        %s344 = smul.addr %s343, 4
        %s345 = scalar_lea.vmem %s0, %s344
        %s346 = smul.u32 4, %s24
        %s347 = smul.u32 2, %s26
        %s348 = smul.u32 32, %s26
        %s349 = smul.u32 2, %s25
        %s350 = smul.u32 2, %s25
        %p351 = scmp.lt.s32.totalorder %s350, 5
        %s352 = scalar_select %p351, %s350, 5
        %s353 = scalar_lea.vmem %s2, %s352
        %s354 = smul.u32 2, %s25
        %s355 = smul.u32 2, %s26
        %p356 = scmp.lt.s32.totalorder %s355, 1
        %s357 = scalar_select %p356, %s355, 1
        %s358 = scalar_lea.vmem %s3, %s357
        %s359 = smul.u32 2, %s26
        %s360 = smul.u32 2, %s26
        %p361 = scmp.lt.s32.totalorder %s360, 1
        %s362 = scalar_select %p361, %s360, 1
        %s363 = scalar_lea.vmem %s4, %s362
        %s364 = smul.u32 2, %s26
        %s365 = smul.u32 4, %s24
        %s366 = smul.u32 2, %s25
        %p367 = scmp.eq.s32.totalorder %s25, 0
        // Predicated region
        $region45: #{cot_forward.11} parent=39 // pred_check
          %p368 = pneg %p367
        $region46: #{cot_forward.11} parent=39 // pred_check_branch
          %370 = sbr.rel (%p368) target = $region48
        $region47: #{cot_forward.11} parent=39 // pred_region
          %v371 = vld [vmem:[%s345] sm:$0xff]
          %v372 = vld [vmem:[%s345 + $0x8] sm:$0xff]
          %v373 = vld [vmem:[%s345 + $0x10] sm:$0xff]
          %v374 = vld [vmem:[%s345 + $0x18] sm:$0xff]
          %v375 = vunpack.c.l.bf16 %v371
          %v376 = vunpack.c.h.bf16 %v371
          %v377 = vunpack.c.l.bf16 %v372
          %v378 = vunpack.c.h.bf16 %v372
          %v379 = vunpack.c.l.bf16 %v373
          %v380 = vunpack.c.h.bf16 %v373
          %v381 = vunpack.c.l.bf16 %v374
          %v382 = vunpack.c.h.bf16 %v374
          %v383 = vadd.f32 %v375, %v376
          %384 = vadd.xlane.f32.xlu0 %v383
          %v385 = vpop.xlane.xlu0 %384
          %v386 = vadd.f32 %v377, %v378
          %387 = vadd.xlane.f32.xlu0 %v386
          %v388 = vpop.xlane.xlu0 %387
          %v389 = vadd.f32 %v379, %v380
          %390 = vadd.xlane.f32.xlu0 %v389
          %v391 = vpop.xlane.xlu0 %390
          %v392 = vadd.f32 %v381, %v382
          %393 = vadd.xlane.f32.xlu0 %v392
          %v394 = vpop.xlane.xlu0 %393
          %v395 = vrcp.pop 256.0
          %v396 = vmul.f32 %v385, %v395
          %v397 = vmul.f32 %v388, %v395
          %v398 = vmul.f32 %v391, %v395
          %v399 = vmul.f32 %v394, %v395
          %v400 = vsub.f32 %v375, %v396
          %v401 = vsub.f32 %v376, %v396
          %v402 = vsub.f32 %v377, %v397
          %v403 = vsub.f32 %v378, %v397
          %v404 = vsub.f32 %v379, %v398
          %v405 = vsub.f32 %v380, %v398
          %v406 = vsub.f32 %v381, %v399
          %v407 = vsub.f32 %v382, %v399
          %v408 = vmul.f32 %v400, %v400
          %v409 = vmul.f32 %v401, %v401
          %v410 = vmul.f32 %v402, %v402
          %v411 = vmul.f32 %v403, %v403
          %v412 = vmul.f32 %v404, %v404
          %v413 = vmul.f32 %v405, %v405
          %v414 = vmul.f32 %v406, %v406
          %v415 = vmul.f32 %v407, %v407
          %v416 = vadd.f32 %v408, %v409
          %417 = vadd.xlane.f32.xlu0 %v416
          %v418 = vpop.xlane.xlu0 %417
          %v419 = vadd.f32 %v410, %v411
          %420 = vadd.xlane.f32.xlu0 %v419
          %v421 = vpop.xlane.xlu0 %420
          %v422 = vadd.f32 %v412, %v413
          %423 = vadd.xlane.f32.xlu0 %v422
          %v424 = vpop.xlane.xlu0 %423
          %v425 = vadd.f32 %v414, %v415
          %426 = vadd.xlane.f32.xlu0 %v425
          %v427 = vpop.xlane.xlu0 %426
          %v428 = vmul.f32 %v418, %v395
          %v429 = vmul.f32 %v421, %v395
          %v430 = vmul.f32 %v424, %v395
          %v431 = vmul.f32 %v427, %v395
          %v432 = vadd.f32 %v428, 1e-05
          %v433 = vadd.f32 %v429, 1e-05
          %v434 = vadd.f32 %v430, 1e-05
          %v435 = vadd.f32 %v431, 1e-05
          %v436 = vrsqrt.pop %v432
          %v437 = vrsqrt.pop %v433
          %v438 = vrsqrt.pop %v434
          %v439 = vrsqrt.pop %v435
          %v440 = vmul.f32 %v400, %v436
          %v441 = vmul.f32 %v401, %v436
          %v442 = vmul.f32 %v402, %v437
          %v443 = vmul.f32 %v403, %v437
          %v444 = vmul.f32 %v404, %v438
          %v445 = vmul.f32 %v405, %v438
          %v446 = vmul.f32 %v406, %v439
          %v447 = vmul.f32 %v407, %v439
          %v448 = vld [vmem:[%s358] sm:$0x3]
          %v450 = vlaneseq
          %v451 = vshrl.u32 %v450, 7
          %v452 = vsub.s32 0, %v451
          %v453 = vrot.slane %v448, %v452
          %v454 = vlaneseq
          %v455 = vshrl.u32 %v454, 7
          %v456 = vsub.s32 1, %v455
          %v457 = vrot.slane %v448, %v456
          %v460 = vmul.f32 %v440, %v453
          %v461 = vmul.f32 %v441, %v457
          %v462 = vmul.f32 %v442, %v453
          %v463 = vmul.f32 %v443, %v457
          %v464 = vmul.f32 %v444, %v453
          %v465 = vmul.f32 %v445, %v457
          %v466 = vmul.f32 %v446, %v453
          %v467 = vmul.f32 %v447, %v457
          %v468 = vld [vmem:[%s363] sm:$0x3]
          %v470 = vlaneseq
          %v471 = vshrl.u32 %v470, 7
          %v472 = vsub.s32 0, %v471
          %v473 = vrot.slane %v468, %v472
          %v474 = vlaneseq
          %v475 = vshrl.u32 %v474, 7
          %v476 = vsub.s32 1, %v475
          %v477 = vrot.slane %v468, %v476
          %v480 = vadd.f32 %v460, %v473
          %v481 = vadd.f32 %v461, %v477
          %v482 = vadd.f32 %v462, %v473
          %v483 = vadd.f32 %v463, %v477
          %v484 = vadd.f32 %v464, %v473
          %v485 = vadd.f32 %v465, %v477
          %v486 = vadd.f32 %v466, %v473
          %v487 = vadd.f32 %v467, %v477
          %v488 = vpack.c.bf16 %v482, %v480
          %v489 = vpack.c.bf16 %v483, %v481
          %v490 = vpack.c.bf16 %v486, %v484
          %v491 = vpack.c.bf16 %v487, %v485
          %492 = vst [vmem:[#allocation2] sm:$0xff] %v488
          %493 = vst [vmem:[#allocation2 + $0x8] sm:$0xff] %v489
          %494 = vst [vmem:[#allocation2 + $0x10] sm:$0xff] %v490
          %495 = vst [vmem:[#allocation2 + $0x18] sm:$0xff] %v491
        $region48: #{cot_forward.11} parent=39 // pred_fallthru
          _
        %v496 = vld [vmem:[#allocation2] sm:$0xff]
        %v497 = vld [vmem:[#allocation2 + $0x8] sm:$0xff]
        %v498 = vld [vmem:[#allocation2 + $0x10] sm:$0xff]
        %v499 = vld [vmem:[#allocation2 + $0x18] sm:$0xff]
        %v500 = vld [vmem:[%s288] sm:$0xff]
        %v501 = vld [vmem:[%s288 + $0x8] sm:$0xff]
        %v502 = vld [vmem:[%s288 + $0x10] sm:$0xff]
        %v503 = vld [vmem:[%s288 + $0x18] sm:$0xff]
        %v504 = vld [vmem:[%s288 + $0x20] sm:$0xff]
        %v505 = vld [vmem:[%s288 + $0x28] sm:$0xff]
        %v506 = vld [vmem:[%s288 + $0x30] sm:$0xff]
        %v507 = vld [vmem:[%s288 + $0x38] sm:$0xff]
        %v508 = vld [vmem:[%s288 + $0x40] sm:$0xff]
        %v509 = vld [vmem:[%s288 + $0x48] sm:$0xff]
        %v510 = vld [vmem:[%s288 + $0x50] sm:$0xff]
        %v511 = vld [vmem:[%s288 + $0x58] sm:$0xff]
        %v512 = vld [vmem:[%s288 + $0x60] sm:$0xff]
        %v513 = vld [vmem:[%s288 + $0x68] sm:$0xff]
        %v514 = vld [vmem:[%s288 + $0x70] sm:$0xff]
        %v515 = vld [vmem:[%s288 + $0x78] sm:$0xff]
        %v516 = vld [vmem:[%s288 + $0x80] sm:$0xff]
        %v517 = vld [vmem:[%s288 + $0x88] sm:$0xff]
        %v518 = vld [vmem:[%s288 + $0x90] sm:$0xff]
        %v519 = vld [vmem:[%s288 + $0x98] sm:$0xff]
        %v520 = vld [vmem:[%s288 + $0xa0] sm:$0xff]
        %v521 = vld [vmem:[%s288 + $0xa8] sm:$0xff]
        %v522 = vld [vmem:[%s288 + $0xb0] sm:$0xff]
        %v523 = vld [vmem:[%s288 + $0xb8] sm:$0xff]
        %v524 = vld [vmem:[%s288 + $0xc0] sm:$0xff]
        %v525 = vld [vmem:[%s288 + $0xc8] sm:$0xff]
        %v526 = vld [vmem:[%s288 + $0xd0] sm:$0xff]
        %v527 = vld [vmem:[%s288 + $0xd8] sm:$0xff]
        %v528 = vld [vmem:[%s288 + $0xe0] sm:$0xff]
        %v529 = vld [vmem:[%s288 + $0xe8] sm:$0xff]
        %v530 = vld [vmem:[%s288 + $0xf0] sm:$0xff]
        %v531 = vld [vmem:[%s288 + $0xf8] sm:$0xff]
        %v532 = vld [vmem:[%s353] sm:$0x3]
        %v534 = vlaneseq
        %v535 = vshrl.u32 %v534, 7
        %v536 = vsub.s32 0, %v535
        %v537 = vrot.slane %v532, %v536
        %v538 = vlaneseq
        %v539 = vshrl.u32 %v538, 7
        %v540 = vsub.s32 1, %v539
        %v541 = vrot.slane %v532, %v540
        %v576 = vunpack.c.l.b16 %v500
        %v577 = vunpack.c.h.b16 %v500
        %v578 = vunpack.c.l.b16 %v501
        %v579 = vunpack.c.h.b16 %v501
        %v580 = vunpack.c.l.b16 %v502
        %v581 = vunpack.c.h.b16 %v502
        %v582 = vunpack.c.l.b16 %v503
        %v583 = vunpack.c.h.b16 %v503
        %v584 = vunpack.c.l.b16 %v504
        %v585 = vunpack.c.h.b16 %v504
        %v586 = vunpack.c.l.b16 %v505
        %v587 = vunpack.c.h.b16 %v505
        %v588 = vunpack.c.l.b16 %v506
        %v589 = vunpack.c.h.b16 %v506
        %v590 = vunpack.c.l.b16 %v507
        %v591 = vunpack.c.h.b16 %v507
        %v592 = vunpack.c.l.b16 %v508
        %v593 = vunpack.c.h.b16 %v508
        %v594 = vunpack.c.l.b16 %v509
        %v595 = vunpack.c.h.b16 %v509
        %v596 = vunpack.c.l.b16 %v510
        %v597 = vunpack.c.h.b16 %v510
        %v598 = vunpack.c.l.b16 %v511
        %v599 = vunpack.c.h.b16 %v511
        %v600 = vunpack.c.l.b16 %v512
        %v601 = vunpack.c.h.b16 %v512
        %v602 = vunpack.c.l.b16 %v513
        %v603 = vunpack.c.h.b16 %v513
        %v604 = vunpack.c.l.b16 %v514
        %v605 = vunpack.c.h.b16 %v514
        %v606 = vunpack.c.l.b16 %v515
        %v607 = vunpack.c.h.b16 %v515
        %v608 = vunpack.c.l.b16 %v516
        %v609 = vunpack.c.h.b16 %v516
        %v610 = vunpack.c.l.b16 %v517
        %v611 = vunpack.c.h.b16 %v517
        %v612 = vunpack.c.l.b16 %v518
        %v613 = vunpack.c.h.b16 %v518
        %v614 = vunpack.c.l.b16 %v519
        %v615 = vunpack.c.h.b16 %v519
        %v616 = vunpack.c.l.b16 %v520
        %v617 = vunpack.c.h.b16 %v520
        %v618 = vunpack.c.l.b16 %v521
        %v619 = vunpack.c.h.b16 %v521
        %v620 = vunpack.c.l.b16 %v522
        %v621 = vunpack.c.h.b16 %v522
        %v622 = vunpack.c.l.b16 %v523
        %v623 = vunpack.c.h.b16 %v523
        %v624 = vunpack.c.l.b16 %v524
        %v625 = vunpack.c.h.b16 %v524
        %v626 = vunpack.c.l.b16 %v525
        %v627 = vunpack.c.h.b16 %v525
        %v628 = vunpack.c.l.b16 %v526
        %v629 = vunpack.c.h.b16 %v526
        %v630 = vunpack.c.l.b16 %v527
        %v631 = vunpack.c.h.b16 %v527
        %v632 = vunpack.c.l.b16 %v528
        %v633 = vunpack.c.h.b16 %v528
        %v634 = vunpack.c.l.b16 %v529
        %v635 = vunpack.c.h.b16 %v529
        %v636 = vunpack.c.l.b16 %v530
        %v637 = vunpack.c.h.b16 %v530
        %v638 = vunpack.c.l.b16 %v531
        %v639 = vunpack.c.h.b16 %v531
        %v640 = vpack.c.b16 %v578, %v576
        %v641 = vpack.c.b16 %v579, %v577
        %v642 = vpack.c.b16 %v582, %v580
        %v643 = vpack.c.b16 %v583, %v581
        %v644 = vpack.c.b16 %v586, %v584
        %v645 = vpack.c.b16 %v587, %v585
        %v646 = vpack.c.b16 %v590, %v588
        %v647 = vpack.c.b16 %v591, %v589
        %v648 = vpack.c.b16 %v594, %v592
        %v649 = vpack.c.b16 %v595, %v593
        %v650 = vpack.c.b16 %v598, %v596
        %v651 = vpack.c.b16 %v599, %v597
        %v652 = vpack.c.b16 %v602, %v600
        %v653 = vpack.c.b16 %v603, %v601
        %v654 = vpack.c.b16 %v606, %v604
        %v655 = vpack.c.b16 %v607, %v605
        %v656 = vpack.c.b16 %v610, %v608
        %v657 = vpack.c.b16 %v611, %v609
        %v658 = vpack.c.b16 %v614, %v612
        %v659 = vpack.c.b16 %v615, %v613
        %v660 = vpack.c.b16 %v618, %v616
        %v661 = vpack.c.b16 %v619, %v617
        %v662 = vpack.c.b16 %v622, %v620
        %v663 = vpack.c.b16 %v623, %v621
        %v664 = vpack.c.b16 %v626, %v624
        %v665 = vpack.c.b16 %v627, %v625
        %v666 = vpack.c.b16 %v630, %v628
        %v667 = vpack.c.b16 %v631, %v629
        %v668 = vpack.c.b16 %v634, %v632
        %v669 = vpack.c.b16 %v635, %v633
        %v670 = vpack.c.b16 %v638, %v636
        %v671 = vpack.c.b16 %v639, %v637
        %704 = vmatprep.subr.bf16.mxu0 %v641
        %705 = vmatpush1.bf16.msra.mxu0 %v640
        %706 = vmatprep.subr.bf16.mxu0 %v643
        %707 = vmatpush1.bf16.msra.mxu0 %v642
        %708 = vmatprep.subr.bf16.mxu0 %v645
        %709 = vmatpush1.bf16.msra.mxu0 %v644
        %710 = vmatprep.subr.bf16.mxu0 %v647
        %711 = vmatpush1.bf16.msra.mxu0 %v646
        %712 = vmatprep.subr.bf16.mxu0 %v649
        %713 = vmatpush1.bf16.msra.mxu0 %v648
        %714 = vmatprep.subr.bf16.mxu0 %v651
        %715 = vmatpush1.bf16.msra.mxu0 %v650
        %716 = vmatprep.subr.bf16.mxu0 %v653
        %717 = vmatpush1.bf16.msra.mxu0 %v652
        %718 = vmatprep.subr.bf16.mxu0 %v655
        %719 = vmatpush1.bf16.msra.mxu0 %v654
        %720 = vmatprep.subr.bf16.mxu0 %v657
        %721 = vmatpush1.bf16.msra.mxu0 %v656
        %722 = vmatprep.subr.bf16.mxu0 %v659
        %723 = vmatpush1.bf16.msra.mxu0 %v658
        %724 = vmatprep.subr.bf16.mxu0 %v661
        %725 = vmatpush1.bf16.msra.mxu0 %v660
        %726 = vmatprep.subr.bf16.mxu0 %v663
        %727 = vmatpush1.bf16.msra.mxu0 %v662
        %728 = vmatprep.subr.bf16.mxu0 %v665
        %729 = vmatpush1.bf16.msra.mxu0 %v664
        %730 = vmatprep.subr.bf16.mxu0 %v667
        %731 = vmatpush1.bf16.msra.mxu0 %v666
        %732 = vmatprep.subr.bf16.mxu0 %v669
        %733 = vmatpush1.bf16.msra.mxu0 %v668
        %734 = vmatprep.subr.bf16.mxu0 %v671
        %735 = vmatpush1.bf16.msra.mxu0 %v670
        %736 = vmatprep.mubr.bf16.mxu0 %v497
        %737 = vmatmul.mubr.bf16.gmra.mrb[0].mxu0 %v496
        %v738 = vpop.f32.mrb[0].mxu0
        %v739 = vadd.f32 %v537, %v738
        %v740 = vpop.f32.mrb[0].mxu0
        %v741 = vadd.f32 %v541, %v740
        %v742 = vpop.f32.mrb[0].mxu0
        %v743 = vadd.f32 %v537, %v742
        %v744 = vpop.f32.mrb[0].mxu0
        %v745 = vadd.f32 %v541, %v744
        %746 = vmatprep.mubr.bf16.mxu0 %v499
        %747 = vmatmul.mubr.bf16.gmra.mrb[0].mxu0 %v498
        %v748 = vpop.f32.mrb[0].mxu0
        %v749 = vadd.f32 %v537, %v748
        %v750 = vpop.f32.mrb[0].mxu0
        %v751 = vadd.f32 %v541, %v750
        %v752 = vpop.f32.mrb[0].mxu0
        %v753 = vadd.f32 %v537, %v752
        %v754 = vpop.f32.mrb[0].mxu0
        %v755 = vadd.f32 %v541, %v754
        %756 = vdwg.mxu0
        %v757 = vpack.c.bf16 %v743, %v739
        %v758 = vpack.c.bf16 %v745, %v741
        %v759 = vpack.c.bf16 %v753, %v749
        %v760 = vpack.c.bf16 %v755, %v751
        %v765 = vunpack.c.l.b16 %v757
        %v766 = vunpack.c.l.b16 %v758
        %v767 = vunpack.c.h.b16 %v757
        %v768 = vunpack.c.h.b16 %v758
        %v769 = vunpack.c.l.b16 %v759
        %v770 = vunpack.c.l.b16 %v760
        %v771 = vunpack.c.h.b16 %v759
        %v772 = vunpack.c.h.b16 %v760
        %v773 = vpack.c.b16 %v766, %v765
        %v774 = vpack.c.b16 %v768, %v767
        %v775 = vpack.c.b16 %v770, %v769
        %v776 = vpack.c.b16 %v772, %v771
        %781 = vst [vmem:[%s335] sm:$0xff] %v773
        %782 = vst [vmem:[%s335 + $0x8] sm:$0xff] %v774
        %783 = vst [vmem:[%s335 + $0x10] sm:$0xff] %v775
        %784 = vst [vmem:[%s335 + $0x18] sm:$0xff] %v776
        %s785 = sand.u32 %s182, 1
        %s786 = sand.u32 %s182, 1
        %s787 = smul.addr %s786, 32
        %s788 = scalar_lea.vmem [#allocation5], %s787
        // Predicated region
        $region49: #{cot_forward.11} parent=39 // pred_check
          %p789 = pneg %p192
        $region50: #{cot_forward.11} parent=39 // pred_check_branch
          %791 = sbr.rel (%p789) target = $region52
        $region51: #{cot_forward.11} parent=39 // pred_region
          %s792 = smul.u32 4, %s24
          %s793 = smul.u32 2, %s25
          %s794 = smul.addr %s792, 6
          %s795 = sadd.s32 %s793, %s794
          %s796 = smul.addr %s795, 4
          %s797 = scalar_lea.vmem %s5, %s796
          // Predicated region
          $region53: #{cot_forward.11} parent=51 // pred_check
            _
          $region54: #{cot_forward.11} parent=51 // pred_check_branch
            %799 = sbr.rel (0) target = $region56
          $region55: #{cot_forward.11} parent=51 // pred_region
            // Predicated region
            $region57: #{cot_forward.11} parent=55 // pred_check
              _
            $region58: #{cot_forward.11} parent=55 // pred_check_branch
              %801 = sbr.rel (0) target = $region60
            $region59: #{cot_forward.11} parent=55 // pred_region
              // Predicated region
              $region72: #{cot_forward.11} parent=59 // pred_check
                _
              $region73: #{cot_forward.11} parent=59 // pred_check_branch
                %822 = sbr.rel (0) target = $region75
              $region74: #{cot_forward.11} parent=59 // pred_region
                loop: start=0, step=1, limit=1
                $region76: #{cot_forward.11} parent=74 // loop_pre_header
                  _
                $region77: #{cot_forward.11} parent=74 // loop_header
                  %s824 = sphi 0, %s828
                  %p825 = scmp.ge.s32.totalorder %s824, 1
                  %s829 = sphi %s788, %s788
                  %s830 = sphi %s797, %s797
                $region78: #{cot_forward.11} parent=74 // loop_header_branch
                  %827 = sbr.rel (%p825) target = $region82
                $region79: #{cot_forward.11} parent=74 // loop_body
                  %v831 = vld [vmem:[%s829] sm:$0xff]
                  %832 = vst [vmem:[%s830] sm:$0xff] %v831
                  %v833 = vld [vmem:[%s829 + $0x8] sm:$0xff]
                  %834 = vst [vmem:[%s830 + $0x18] sm:$0xff] %v833
                  %v835 = vld [vmem:[%s829 + $0x10] sm:$0xff]
                  %836 = vst [vmem:[%s830 + $0x30] sm:$0xff] %v835
                  %v837 = vld [vmem:[%s829 + $0x18] sm:$0xff]
                  %838 = vst [vmem:[%s830 + $0x48] sm:$0xff] %v837
                $region80: #{cot_forward.11} parent=74 // loop_footer
                  %s828 = sadd.s32 1, %s824
                $region81: #{cot_forward.11} parent=74 // loop_footer_branch
                  %823 = sbr.rel target = $region77
                $region82: #{cot_forward.11} parent=74 // loop_exit
                  _
              $region75: #{cot_forward.11} parent=59 // pred_fallthru
                _
              // Predicated region
              $region83: #{cot_forward.11} parent=59 // pred_check
                _
              $region84: #{cot_forward.11} parent=59 // pred_check_branch
                %840 = sbr.rel target = $region86
              $region85: #{cot_forward.11} parent=59 // pred_region
                _
              $region86: #{cot_forward.11} parent=59 // pred_fallthru
                _
            $region60: #{cot_forward.11} parent=55 // pred_fallthru
              _
            // Predicated region
            $region61: #{cot_forward.11} parent=55 // pred_check
              _
            $region62: #{cot_forward.11} parent=55 // pred_check_branch
              %803 = sbr.rel target = $region64
            $region63: #{cot_forward.11} parent=55 // pred_region
              loop: start=0, step=1, limit=1
              $region65: #{cot_forward.11} parent=63 // loop_pre_header
                _
              $region66: #{cot_forward.11} parent=63 // loop_header
                %s806 = sphi 0, %s810
                %p807 = scmp.ge.s32.totalorder %s806, 1
                %s811 = sphi %s788, %s788
                %s812 = sphi %s797, %s797
              $region67: #{cot_forward.11} parent=63 // loop_header_branch
                %809 = sbr.rel (%p807) target = $region71
              $region68: #{cot_forward.11} parent=63 // loop_body
                %v813 = vld [vmem:[%s811] sm:$0xff]
                %814 = vst [vmem:[%s812] sm:$0xff] %v813
                %v815 = vld [vmem:[%s811 + $0x8] sm:$0xff]
                %816 = vst [vmem:[%s812 + $0x18] sm:$0xff] %v815
                %v817 = vld [vmem:[%s811 + $0x10] sm:$0xff]
                %818 = vst [vmem:[%s812 + $0x30] sm:$0xff] %v817
                %v819 = vld [vmem:[%s811 + $0x18] sm:$0xff]
                %820 = vst [vmem:[%s812 + $0x48] sm:$0xff] %v819
              $region69: #{cot_forward.11} parent=63 // loop_footer
                %s810 = sadd.s32 1, %s806
              $region70: #{cot_forward.11} parent=63 // loop_footer_branch
                %805 = sbr.rel target = $region66
              $region71: #{cot_forward.11} parent=63 // loop_exit
                _
            $region64: #{cot_forward.11} parent=55 // pred_fallthru
              _
          $region56: #{cot_forward.11} parent=51 // pred_fallthru
            _
          %841 = vnop
        $region52: #{cot_forward.11} parent=39 // pred_fallthru
          _
      $region40: #{cot_forward.11} parent=5 // pred_fallthru
        _
      %p842 = scmp.le.s32.totalorder 2, %s14
      // Predicated region
      $region87: #{cot_forward.11} parent=5 // pred_check
        %p843 = pneg %p842
      $region88: #{cot_forward.11} parent=5 // pred_check_branch
        %845 = sbr.rel (%p843) target = $region90
      $region89: #{cot_forward.11} parent=5 // pred_region
        %s846 = ssub.s32 %s14, 2
        // Predicated region
        $region91: #{cot_forward.11} parent=89 // pred_check
          %p847 = pneg %p198
        $region92: #{cot_forward.11} parent=89 // pred_check_branch
          %849 = sbr.rel (%p847) target = $region94
        $region93: #{cot_forward.11} parent=89 // pred_region
          %s850 = sand.u32 %s183, 1
          %s851 = sand.u32 %s183, 1
          %s852 = smul.addr %s851, 32
          %s853 = scalar_lea.vmem [#allocation5], %s852
        $region94: #{cot_forward.11} parent=89 // pred_fallthru
          _
      $region90: #{cot_forward.11} parent=5 // pred_fallthru
        _
    $region6: #{cot_forward.11} parent=1 // loop_footer
      %s18 = sadd.s32 1, %s14
    $region7: #{cot_forward.11} parent=1 // loop_footer_branch
      %13 = sbr.rel target = $region3
    $region8: #{cot_forward.11} parent=1 // loop_exit
      _
    %854 = vsyncpa [#allocation4], 1
    %s855 = scalar_lea.sflag [#allocation4], 1
    %856 = vsyncpa %s855, 1

// kernel: cot_forward.13
$region0: #{cot_forward.13}
  #allocation0 [shape = 'u32[]', space=smem, size = 0x4, offset = 0x4, fixed_abs, tag = 'smem constant byte address 0x4 - core index']
  #allocation1 [shape = 'u32[144,128]{1,0:T(1,128)}', space=vmem, size = 0x12000, scoped, tag = 'internal scratch']
  %s0 = inlined_call_operand.vmem [shape: bf16[32,256], index: 0, kind: input, shape index: {}]
  %s1 = inlined_call_operand.vmem [shape: bf16[256,256], index: 1, kind: input, shape index: {}]
  %s2 = inlined_call_operand.vmem [shape: f32[1,256], index: 2, kind: input, shape index: {}]
  %s3 = inlined_call_operand.vmem [shape: bf16[32,256], index: 3, kind: input, shape index: {}]
  %s4 = inlined_call_operand.vmem [shape: bf16[32,256], index: 4, kind: output, shape index: {}]
  %s5 = sld [smem:[#allocation0]]
  $region26: #{cot_forward.13} parent=0
    _
  %s7 = ssub.s32 1, %s5
  %s8 = scalar_select 0, %s7, %s5
  // Predicated region
  $region2: #{cot_forward.13} parent=0 // pred_check
    _
  $region3: #{cot_forward.13} parent=0 // pred_check_branch
    %10 = sbr.rel (0) target = $region5
  $region4: #{cot_forward.13} parent=0 // pred_region
    _
  $region5: #{cot_forward.13} parent=0 // pred_fallthru
    _
  // Predicated region
  $region6: #{cot_forward.13} parent=0 // pred_check
    _
  $region7: #{cot_forward.13} parent=0 // pred_check_branch
    %12 = sbr.rel (0) target = $region9
  $region8: #{cot_forward.13} parent=0 // pred_region
    _
  $region9: #{cot_forward.13} parent=0 // pred_fallthru
    _
  // Predicated region
  $region10: #{cot_forward.13} parent=0 // pred_check
    _
  $region11: #{cot_forward.13} parent=0 // pred_check_branch
    %14 = sbr.rel (0) target = $region13
  $region12: #{cot_forward.13} parent=0 // pred_region
    _
  $region13: #{cot_forward.13} parent=0 // pred_fallthru
    _
  // Predicated region
  $region14: #{cot_forward.13} parent=0 // pred_check
    _
  $region15: #{cot_forward.13} parent=0 // pred_check_branch
    %16 = sbr.rel (0) target = $region17
  $region16: #{cot_forward.13} parent=0 // pred_region
    _
  $region17: #{cot_forward.13} parent=0 // pred_fallthru
    _
  %v17 = vld [vmem:[%s0] sm:$0xff]
  %v18 = vld [vmem:[%s0 + $0x8] sm:$0xff]
  %v19 = vld [vmem:[%s0 + $0x10] sm:$0xff]
  %v20 = vld [vmem:[%s0 + $0x18] sm:$0xff]
  %v21 = vld [vmem:[%s1] sm:$0xff]
  %v22 = vld [vmem:[%s1 + $0x8] sm:$0xff]
  %v23 = vld [vmem:[%s1 + $0x10] sm:$0xff]
  %v24 = vld [vmem:[%s1 + $0x18] sm:$0xff]
  %v25 = vld [vmem:[%s1 + $0x20] sm:$0xff]
  %v26 = vld [vmem:[%s1 + $0x28] sm:$0xff]
  %v27 = vld [vmem:[%s1 + $0x30] sm:$0xff]
  %v28 = vld [vmem:[%s1 + $0x38] sm:$0xff]
  %v29 = vld [vmem:[%s1 + $0x40] sm:$0xff]
  %v30 = vld [vmem:[%s1 + $0x48] sm:$0xff]
  %v31 = vld [vmem:[%s1 + $0x50] sm:$0xff]
  %v32 = vld [vmem:[%s1 + $0x58] sm:$0xff]
  %v33 = vld [vmem:[%s1 + $0x60] sm:$0xff]
  %v34 = vld [vmem:[%s1 + $0x68] sm:$0xff]
  %v35 = vld [vmem:[%s1 + $0x70] sm:$0xff]
  %v36 = vld [vmem:[%s1 + $0x78] sm:$0xff]
  %v37 = vld [vmem:[%s1 + $0x80] sm:$0xff]
  %v38 = vld [vmem:[%s1 + $0x88] sm:$0xff]
  %v39 = vld [vmem:[%s1 + $0x90] sm:$0xff]
  %v40 = vld [vmem:[%s1 + $0x98] sm:$0xff]
  %v41 = vld [vmem:[%s1 + $0xa0] sm:$0xff]
  %v42 = vld [vmem:[%s1 + $0xa8] sm:$0xff]
  %v43 = vld [vmem:[%s1 + $0xb0] sm:$0xff]
  %v44 = vld [vmem:[%s1 + $0xb8] sm:$0xff]
  %v45 = vld [vmem:[%s1 + $0xc0] sm:$0xff]
  %v46 = vld [vmem:[%s1 + $0xc8] sm:$0xff]
  %v47 = vld [vmem:[%s1 + $0xd0] sm:$0xff]
  %v48 = vld [vmem:[%s1 + $0xd8] sm:$0xff]
  %v49 = vld [vmem:[%s1 + $0xe0] sm:$0xff]
  %v50 = vld [vmem:[%s1 + $0xe8] sm:$0xff]
  %v51 = vld [vmem:[%s1 + $0xf0] sm:$0xff]
  %v52 = vld [vmem:[%s1 + $0xf8] sm:$0xff]
  %v53 = vld [vmem:[%s2] sm:$0x3]
  %v55 = vlaneseq
  %v56 = vshrl.u32 %v55, 7
  %v57 = vsub.s32 0, %v56
  %v58 = vrot.slane %v53, %v57
  %v59 = vlaneseq
  %v60 = vshrl.u32 %v59, 7
  %v61 = vsub.s32 1, %v60
  %v62 = vrot.slane %v53, %v61
  %v69 = vunpack.c.l.b16 %v17
  %v70 = vunpack.c.h.b16 %v17
  %v71 = vunpack.c.l.b16 %v18
  %v72 = vunpack.c.h.b16 %v18
  %v73 = vunpack.c.l.b16 %v19
  %v74 = vunpack.c.h.b16 %v19
  %v75 = vunpack.c.l.b16 %v20
  %v76 = vunpack.c.h.b16 %v20
  %v77 = vpack.c.b16 %v71, %v69
  %v78 = vpack.c.b16 %v72, %v70
  %v79 = vpack.c.b16 %v75, %v73
  %v80 = vpack.c.b16 %v76, %v74
  %v117 = vunpack.c.l.b16 %v21
  %v118 = vunpack.c.h.b16 %v21
  %v119 = vunpack.c.l.b16 %v22
  %v120 = vunpack.c.h.b16 %v22
  %v121 = vunpack.c.l.b16 %v23
  %v122 = vunpack.c.h.b16 %v23
  %v123 = vunpack.c.l.b16 %v24
  %v124 = vunpack.c.h.b16 %v24
  %v125 = vunpack.c.l.b16 %v25
  %v126 = vunpack.c.h.b16 %v25
  %v127 = vunpack.c.l.b16 %v26
  %v128 = vunpack.c.h.b16 %v26
  %v129 = vunpack.c.l.b16 %v27
  %v130 = vunpack.c.h.b16 %v27
  %v131 = vunpack.c.l.b16 %v28
  %v132 = vunpack.c.h.b16 %v28
  %v133 = vunpack.c.l.b16 %v29
  %v134 = vunpack.c.h.b16 %v29
  %v135 = vunpack.c.l.b16 %v30
  %v136 = vunpack.c.h.b16 %v30
  %v137 = vunpack.c.l.b16 %v31
  %v138 = vunpack.c.h.b16 %v31
  %v139 = vunpack.c.l.b16 %v32
  %v140 = vunpack.c.h.b16 %v32
  %v141 = vunpack.c.l.b16 %v33
  %v142 = vunpack.c.h.b16 %v33
  %v143 = vunpack.c.l.b16 %v34
  %v144 = vunpack.c.h.b16 %v34
  %v145 = vunpack.c.l.b16 %v35
  %v146 = vunpack.c.h.b16 %v35
  %v147 = vunpack.c.l.b16 %v36
  %v148 = vunpack.c.h.b16 %v36
  %v149 = vunpack.c.l.b16 %v37
  %v150 = vunpack.c.h.b16 %v37
  %v151 = vunpack.c.l.b16 %v38
  %v152 = vunpack.c.h.b16 %v38
  %v153 = vunpack.c.l.b16 %v39
  %v154 = vunpack.c.h.b16 %v39
  %v155 = vunpack.c.l.b16 %v40
  %v156 = vunpack.c.h.b16 %v40
  %v157 = vunpack.c.l.b16 %v41
  %v158 = vunpack.c.h.b16 %v41
  %v159 = vunpack.c.l.b16 %v42
  %v160 = vunpack.c.h.b16 %v42
  %v161 = vunpack.c.l.b16 %v43
  %v162 = vunpack.c.h.b16 %v43
  %v163 = vunpack.c.l.b16 %v44
  %v164 = vunpack.c.h.b16 %v44
  %v165 = vunpack.c.l.b16 %v45
  %v166 = vunpack.c.h.b16 %v45
  %v167 = vunpack.c.l.b16 %v46
  %v168 = vunpack.c.h.b16 %v46
  %v169 = vunpack.c.l.b16 %v47
  %v170 = vunpack.c.h.b16 %v47
  %v171 = vunpack.c.l.b16 %v48
  %v172 = vunpack.c.h.b16 %v48
  %v173 = vunpack.c.l.b16 %v49
  %v174 = vunpack.c.h.b16 %v49
  %v175 = vunpack.c.l.b16 %v50
  %v176 = vunpack.c.h.b16 %v50
  %v177 = vunpack.c.l.b16 %v51
  %v178 = vunpack.c.h.b16 %v51
  %v179 = vunpack.c.l.b16 %v52
  %v180 = vunpack.c.h.b16 %v52
  %v181 = vpack.c.b16 %v119, %v117
  %v182 = vpack.c.b16 %v120, %v118
  %v183 = vpack.c.b16 %v123, %v121
  %v184 = vpack.c.b16 %v124, %v122
  %v185 = vpack.c.b16 %v127, %v125
  %v186 = vpack.c.b16 %v128, %v126
  %v187 = vpack.c.b16 %v131, %v129
  %v188 = vpack.c.b16 %v132, %v130
  %v189 = vpack.c.b16 %v135, %v133
  %v190 = vpack.c.b16 %v136, %v134
  %v191 = vpack.c.b16 %v139, %v137
  %v192 = vpack.c.b16 %v140, %v138
  %v193 = vpack.c.b16 %v143, %v141
  %v194 = vpack.c.b16 %v144, %v142
  %v195 = vpack.c.b16 %v147, %v145
  %v196 = vpack.c.b16 %v148, %v146
  %v197 = vpack.c.b16 %v151, %v149
  %v198 = vpack.c.b16 %v152, %v150
  %v199 = vpack.c.b16 %v155, %v153
  %v200 = vpack.c.b16 %v156, %v154
  %v201 = vpack.c.b16 %v159, %v157
  %v202 = vpack.c.b16 %v160, %v158
  %v203 = vpack.c.b16 %v163, %v161
  %v204 = vpack.c.b16 %v164, %v162
  %v205 = vpack.c.b16 %v167, %v165
  %v206 = vpack.c.b16 %v168, %v166
  %v207 = vpack.c.b16 %v171, %v169
  %v208 = vpack.c.b16 %v172, %v170
  %v209 = vpack.c.b16 %v175, %v173
  %v210 = vpack.c.b16 %v176, %v174
  %v211 = vpack.c.b16 %v179, %v177
  %v212 = vpack.c.b16 %v180, %v178
  %245 = vmatprep.subr.bf16.mxu0 %v182
  %246 = vmatpush1.bf16.msra.mxu0 %v181
  %247 = vmatprep.subr.bf16.mxu0 %v184
  %248 = vmatpush1.bf16.msra.mxu0 %v183
  %249 = vmatprep.subr.bf16.mxu0 %v186
  %250 = vmatpush1.bf16.msra.mxu0 %v185
  %251 = vmatprep.subr.bf16.mxu0 %v188
  %252 = vmatpush1.bf16.msra.mxu0 %v187
  %253 = vmatprep.subr.bf16.mxu0 %v190
  %254 = vmatpush1.bf16.msra.mxu0 %v189
  %255 = vmatprep.subr.bf16.mxu0 %v192
  %256 = vmatpush1.bf16.msra.mxu0 %v191
  %257 = vmatprep.subr.bf16.mxu0 %v194
  %258 = vmatpush1.bf16.msra.mxu0 %v193
  %259 = vmatprep.subr.bf16.mxu0 %v196
  %260 = vmatpush1.bf16.msra.mxu0 %v195
  %261 = vmatprep.subr.bf16.mxu0 %v198
  %262 = vmatpush1.bf16.msra.mxu0 %v197
  %263 = vmatprep.subr.bf16.mxu0 %v200
  %264 = vmatpush1.bf16.msra.mxu0 %v199
  %265 = vmatprep.subr.bf16.mxu0 %v202
  %266 = vmatpush1.bf16.msra.mxu0 %v201
  %267 = vmatprep.subr.bf16.mxu0 %v204
  %268 = vmatpush1.bf16.msra.mxu0 %v203
  %269 = vmatprep.subr.bf16.mxu0 %v206
  %270 = vmatpush1.bf16.msra.mxu0 %v205
  %271 = vmatprep.subr.bf16.mxu0 %v208
  %272 = vmatpush1.bf16.msra.mxu0 %v207
  %273 = vmatprep.subr.bf16.mxu0 %v210
  %274 = vmatpush1.bf16.msra.mxu0 %v209
  %275 = vmatprep.subr.bf16.mxu0 %v212
  %276 = vmatpush1.bf16.msra.mxu0 %v211
  %277 = vmatprep.mubr.bf16.mxu0 %v78
  %278 = vmatmul.mubr.bf16.gmra.mrb[0].mxu0 %v77
  %v279 = vpop.f32.mrb[0].mxu0
  %v280 = vadd.f32 %v58, %v279
  %v281 = vpop.f32.mrb[0].mxu0
  %v282 = vadd.f32 %v62, %v281
  %v283 = vpop.f32.mrb[0].mxu0
  %v284 = vadd.f32 %v58, %v283
  %v285 = vpop.f32.mrb[0].mxu0
  %v286 = vadd.f32 %v62, %v285
  %287 = vmatprep.mubr.bf16.mxu0 %v80
  %288 = vmatmul.mubr.bf16.gmra.mrb[0].mxu0 %v79
  %v289 = vpop.f32.mrb[0].mxu0
  %v290 = vadd.f32 %v58, %v289
  %v291 = vpop.f32.mrb[0].mxu0
  %v292 = vadd.f32 %v62, %v291
  %v293 = vpop.f32.mrb[0].mxu0
  %v294 = vadd.f32 %v58, %v293
  %v295 = vpop.f32.mrb[0].mxu0
  %v296 = vadd.f32 %v62, %v295
  %297 = vdwg.mxu0
  %v298 = vld [vmem:[%s3] sm:$0xff]
  %v299 = vld [vmem:[%s3 + $0x8] sm:$0xff]
  %v300 = vld [vmem:[%s3 + $0x10] sm:$0xff]
  %v301 = vld [vmem:[%s3 + $0x18] sm:$0xff]
  %v302 = vunpack.c.l.bf16 %v298
  %v303 = vunpack.c.h.bf16 %v298
  %v304 = vunpack.c.l.bf16 %v299
  %v305 = vunpack.c.h.bf16 %v299
  %v306 = vunpack.c.l.bf16 %v300
  %v307 = vunpack.c.h.bf16 %v300
  %v308 = vunpack.c.l.bf16 %v301
  %v309 = vunpack.c.h.bf16 %v301
  %v310 = vadd.f32 %v280, %v302
  %v311 = vadd.f32 %v282, %v303
  %v312 = vadd.f32 %v284, %v304
  %v313 = vadd.f32 %v286, %v305
  %v314 = vadd.f32 %v290, %v306
  %v315 = vadd.f32 %v292, %v307
  %v316 = vadd.f32 %v294, %v308
  %v317 = vadd.f32 %v296, %v309
  %v318 = vpack.c.bf16 %v312, %v310
  %v319 = vpack.c.bf16 %v313, %v311
  %v320 = vpack.c.bf16 %v316, %v314
  %v321 = vpack.c.bf16 %v317, %v315
  %v326 = vunpack.c.l.b16 %v318
  %v327 = vunpack.c.l.b16 %v319
  %v328 = vunpack.c.h.b16 %v318
  %v329 = vunpack.c.h.b16 %v319
  %v330 = vunpack.c.l.b16 %v320
  %v331 = vunpack.c.l.b16 %v321
  %v332 = vunpack.c.h.b16 %v320
  %v333 = vunpack.c.h.b16 %v321
  %v334 = vpack.c.b16 %v327, %v326
  %v335 = vpack.c.b16 %v329, %v328
  %v336 = vpack.c.b16 %v331, %v330
  %v337 = vpack.c.b16 %v333, %v332
  %342 = vst [vmem:[%s4] sm:$0xff] %v334
  %343 = vst [vmem:[%s4 + $0x8] sm:$0xff] %v335
  %344 = vst [vmem:[%s4 + $0x10] sm:$0xff] %v336
  %345 = vst [vmem:[%s4 + $0x18] sm:$0xff] %v337
  // Predicated region
  $region18: #{cot_forward.13} parent=0 // pred_check
    _
  $region19: #{cot_forward.13} parent=0 // pred_check_branch
    %347 = sbr.rel (0) target = $region21
  $region20: #{cot_forward.13} parent=0 // pred_region
    _
  $region21: #{cot_forward.13} parent=0 // pred_fallthru
    _
  // Predicated region
  $region22: #{cot_forward.13} parent=0 // pred_check
    _
  $region23: #{cot_forward.13} parent=0 // pred_check_branch
    %349 = sbr.rel (0) target = $region25
  $region24: #{cot_forward.13} parent=0 // pred_region
    _
  $region25: #{cot_forward.13} parent=0 // pred_fallthru
    _

// kernel: cot_forward.12
$region0: #{cot_forward.12}
  #allocation0 [shape = 'u32[]', space=smem, size = 0x4, offset = 0x4, fixed_abs, tag = 'smem constant byte address 0x4 - core index']
  #allocation1 [shape = 'u32[144,128]{1,0:T(1,128)}', space=vmem, size = 0x12000, scoped, tag = 'internal scratch']
  #allocation2 [shape = 'bf16[16,128]{1,0:T(16,128)(2,1)}', space=vmem, size = 0x1000, scoped, tag = 'scratch operand']
  #allocation3 [shape = 'f32[16,1]{1,0:T(8,128)}', space=vmem, size = 0x2000, scoped, tag = 'scratch operand']
  #allocation4 [shape = 'f32[16,1]{1,0:T(8,128)}', space=vmem, size = 0x2000, scoped, tag = 'scratch operand']
  #allocation5 [shape = 'f32[16,128]{1,0:T(8,128)}', space=vmem, size = 0x2000, scoped, tag = 'scratch operand']
  %s0 = inlined_call_operand.vmem [shape: bf16[2,16,768], index: 0, kind: input, shape index: {}, may-alias: {0,1,2}]
  %s1 = inlined_call_operand.vmem [shape: bf16[2,16,768], index: 1, kind: input, shape index: {}, may-alias: {0,1,2}]
  %s2 = inlined_call_operand.vmem [shape: bf16[2,16,768], index: 2, kind: input, shape index: {}, may-alias: {0,1,2}]
  %s3 = inlined_call_operand.vmem [shape: f32[16,128], index: 3, kind: input, shape index: {}, may-alias: {3,5}]
  %s4 = inlined_call_operand.vmem [shape: f32[16,128], index: 4, kind: input, shape index: {}, may-alias: {4,6}]
  %s5 = inlined_call_operand.vmem [shape: f32[16,128], index: 5, kind: input, shape index: {}, may-alias: {3,5}]
  %s6 = inlined_call_operand.vmem [shape: f32[16,128], index: 6, kind: input, shape index: {}, may-alias: {4,6}]
  %s7 = inlined_call_operand.vmem [shape: bf16[2,16,256], index: 7, kind: output, shape index: {}]
  %s8 = sld [smem:[#allocation0]]
  $region229: #{cot_forward.12} parent=0
    _
  %s10 = ssub.s32 1, %s8
  %s11 = scalar_select 0, %s10, %s8
  $region1: #{cot_forward.12} parent=0
    #allocation6 [shape = 'u8[8192]{0}', space=vmem, size = 0x2000, scoped, tag = 'input window, operand 0']
    #allocation7 [shape = 'u8[8192]{0}', space=vmem, size = 0x2000, scoped, tag = 'input window, operand 1']
    #allocation8 [shape = 'u8[8192]{0}', space=vmem, size = 0x2000, scoped, tag = 'input window, operand 2']
    #allocation9 [shape = 'u8[8192]{0}', space=vmem, size = 0x2000, scoped, tag = 'output window, operand 0']
    loop: start=0, step=1, limit=6
    $region2: #{cot_forward.12} parent=1 // loop_pre_header
      _
    $region3: #{cot_forward.12} parent=1 // loop_header
      %s13 = sphi 0, %s17
      %p14 = scmp.ge.s32.totalorder %s13, 6
      %s20 = sphi 0, %s39
      %s21 = sphi 0, %s35
      %s22 = sphi 0, %s31
      %s23 = sphi 0, %s20
      %s24 = sphi 0, %s21
      %s25 = sphi 0, %s22
      %s26 = sphi 0, %s23
      %s27 = sphi 0, %s24
      %s28 = sphi 0, %s25
      %s44 = sphi 0, %s46
      %s47 = sphi 0, %s44
      %s48 = sphi 0, %s47
      %s64 = sphi 0, %s48
      %s76 = sphi 0, %s78
      %s79 = sphi 0, %s76
      %s80 = sphi 0, %s79
      %s96 = sphi 0, %s80
      %s108 = sphi 0, %s110
      %s111 = sphi 0, %s108
      %s112 = sphi 0, %s111
      %s128 = sphi 0, %s112
      %s132 = sphi 0, %s132
      %s134 = sphi 0, %s132
      %s135 = sphi 0, %s134
      %s149 = sphi 0, %s135
      %s153 = sphi 0, %s153
      %s155 = sphi 0, %s153
      %s156 = sphi 0, %s155
      %s170 = sphi 0, %s156
      %s176 = sphi 0, %s178
      %s179 = sphi 0, %s176
      %s180 = sphi 0, %s179
      %s196 = sphi 0, %s180
      %s202 = sphi 0, %s204
      %s205 = sphi 0, %s202
      %s206 = sphi 0, %s205
      %s222 = sphi 0, %s206
      %s230 = sphi 0, %s232
      %s233 = sphi 0, %s230
      %s234 = sphi 0, %s233
      %s250 = sphi 0, %s234
    $region4: #{cot_forward.12} parent=1 // loop_header_branch
      %16 = sbr.rel (%p14) target = $region8
    $region5: #{cot_forward.12} parent=1 // loop_body
      %s18 = ssub.s32 %s13, 1
      %s19 = ssub.s32 %s13, 2
      %s29 = sadd.s32 1, %s22
      %p30 = scmp.ge.s32.totalorder %s29, 1
      %s31 = scalar_select %p30, 0, %s29
      %s32 = sadd.s32 1, %s21
      %s33 = scalar_select %p30, %s32, %s21
      %p34 = scmp.ge.s32.totalorder %s33, 2
      %s35 = scalar_select %p34, 0, %s33
      %s36 = sadd.s32 1, %s20
      %s37 = scalar_select %p34, %s36, %s20
      %p38 = scmp.ge.s32.totalorder %s37, 2
      %s39 = scalar_select %p38, 0, %s37
      %s40 = ssub.s32 %s20, %s39
      %s41 = ssub.s32 %s21, %s35
      %s42 = sor.u32 %s40, %s41
      %p43 = scmp.eq.s32.totalorder %s42, 0
      %s45 = sadd.s32 %s44, 1
      %s46 = scalar_select %p43, %s44, %s45
      %p49 = pneg %p43
      %p50 = scmp.eq.s32.totalorder %s13, 3
      %p51 = por %p49, %p50
      %p52 = scmp.ne.s32.totalorder %s44, %s47
      %p53 = scmp.eq.s32.totalorder %s13, 0
      %p54 = por %p52, %p53
      %p55 = scmp.ne.s32.totalorder %s44, %s47
      %p56 = scmp.eq.s32.totalorder %s18, 3
      %p57 = por %p55, %p56
      %p58 = scmp.ne.s32.totalorder %s47, %s48
      %p59 = scmp.eq.s32.totalorder %s18, 0
      %p60 = por %p58, %p59
      %p61 = scmp.ne.s32.totalorder %s47, %s48
      %p62 = scmp.eq.s32.totalorder %s19, 3
      %p63 = por %p61, %p62
      %p65 = scmp.ne.s32.totalorder %s48, %s64
      %p66 = scmp.eq.s32.totalorder %s19, 0
      %p67 = por %p65, %p66
      %s68 = sadd.s32 %s21, 2
      %s69 = sadd.s32 %s35, 2
      %s70 = ssub.s32 %s20, %s39
      %s71 = ssub.s32 %s22, %s31
      %s72 = sor.u32 %s70, %s71
      %s73 = ssub.s32 %s68, %s69
      %s74 = sor.u32 %s72, %s73
      %p75 = scmp.eq.s32.totalorder %s74, 0
      %s77 = sadd.s32 %s76, 1
      %s78 = scalar_select %p75, %s76, %s77
      %p81 = pneg %p75
      %p82 = scmp.eq.s32.totalorder %s13, 3
      %p83 = por %p81, %p82
      %p84 = scmp.ne.s32.totalorder %s76, %s79
      %p85 = scmp.eq.s32.totalorder %s13, 0
      %p86 = por %p84, %p85
      %p87 = scmp.ne.s32.totalorder %s76, %s79
      %p88 = scmp.eq.s32.totalorder %s18, 3
      %p89 = por %p87, %p88
      %p90 = scmp.ne.s32.totalorder %s79, %s80
      %p91 = scmp.eq.s32.totalorder %s18, 0
      %p92 = por %p90, %p91
      %p93 = scmp.ne.s32.totalorder %s79, %s80
      %p94 = scmp.eq.s32.totalorder %s19, 3
      %p95 = por %p93, %p94
      %p97 = scmp.ne.s32.totalorder %s80, %s96
      %p98 = scmp.eq.s32.totalorder %s19, 0
      %p99 = por %p97, %p98
      %s100 = sadd.s32 %s21, 4
      %s101 = sadd.s32 %s35, 4
      %s102 = ssub.s32 %s20, %s39
      %s103 = ssub.s32 %s22, %s31
      %s104 = sor.u32 %s102, %s103
      %s105 = ssub.s32 %s100, %s101
      %s106 = sor.u32 %s104, %s105
      %p107 = scmp.eq.s32.totalorder %s106, 0
      %s109 = sadd.s32 %s108, 1
      %s110 = scalar_select %p107, %s108, %s109
      %p113 = pneg %p107
      %p114 = scmp.eq.s32.totalorder %s13, 3
      %p115 = por %p113, %p114
      %p116 = scmp.ne.s32.totalorder %s108, %s111
      %p117 = scmp.eq.s32.totalorder %s13, 0
      %p118 = por %p116, %p117
      %p119 = scmp.ne.s32.totalorder %s108, %s111
      %p120 = scmp.eq.s32.totalorder %s18, 3
      %p121 = por %p119, %p120
      %p122 = scmp.ne.s32.totalorder %s111, %s112
      %p123 = scmp.eq.s32.totalorder %s18, 0
      %p124 = por %p122, %p123
      %p125 = scmp.ne.s32.totalorder %s111, %s112
      %p126 = scmp.eq.s32.totalorder %s19, 3
      %p127 = por %p125, %p126
      %p129 = scmp.ne.s32.totalorder %s112, %s128
      %p130 = scmp.eq.s32.totalorder %s19, 0
      %p131 = por %p129, %p130
      %s133 = sadd.s32 %s132, 1
      %p136 = scmp.eq.s32.totalorder %s13, 3
      %p137 = scmp.ne.s32.totalorder %s132, %s134
      %p138 = scmp.eq.s32.totalorder %s13, 0
      %p139 = por %p137, %p138
      %p140 = scmp.ne.s32.totalorder %s132, %s134
      %p141 = scmp.eq.s32.totalorder %s18, 3
      %p142 = por %p140, %p141
      %p143 = scmp.ne.s32.totalorder %s134, %s135
      %p144 = scmp.eq.s32.totalorder %s18, 0
      %p145 = por %p143, %p144
      %p146 = scmp.ne.s32.totalorder %s134, %s135
      %p147 = scmp.eq.s32.totalorder %s19, 3
      %p148 = por %p146, %p147
      %p150 = scmp.ne.s32.totalorder %s135, %s149
      %p151 = scmp.eq.s32.totalorder %s19, 0
      %p152 = por %p150, %p151
      %s154 = sadd.s32 %s153, 1
      %p157 = scmp.eq.s32.totalorder %s13, 3
      %p158 = scmp.ne.s32.totalorder %s153, %s155
      %p159 = scmp.eq.s32.totalorder %s13, 0
      %p160 = por %p158, %p159
      %p161 = scmp.ne.s32.totalorder %s153, %s155
      %p162 = scmp.eq.s32.totalorder %s18, 3
      %p163 = por %p161, %p162
      %p164 = scmp.ne.s32.totalorder %s155, %s156
      %p165 = scmp.eq.s32.totalorder %s18, 0
      %p166 = por %p164, %p165
      %p167 = scmp.ne.s32.totalorder %s155, %s156
      %p168 = scmp.eq.s32.totalorder %s19, 3
      %p169 = por %p167, %p168
      %p171 = scmp.ne.s32.totalorder %s156, %s170
      %p172 = scmp.eq.s32.totalorder %s19, 0
      %p173 = por %p171, %p172
      %s174 = ssub.s32 %s22, %s31
      %p175 = scmp.eq.s32.totalorder %s174, 0
      %s177 = sadd.s32 %s176, 1
      %s178 = scalar_select %p175, %s176, %s177
      %p181 = pneg %p175
      %p182 = scmp.eq.s32.totalorder %s13, 3
      %p183 = por %p181, %p182
      %p184 = scmp.ne.s32.totalorder %s176, %s179
      %p185 = scmp.eq.s32.totalorder %s13, 0
      %p186 = por %p184, %p185
      %p187 = scmp.ne.s32.totalorder %s176, %s179
      %p188 = scmp.eq.s32.totalorder %s18, 3
      %p189 = por %p187, %p188
      %p190 = scmp.ne.s32.totalorder %s179, %s180
      %p191 = scmp.eq.s32.totalorder %s18, 0
      %p192 = por %p190, %p191
      %p193 = scmp.ne.s32.totalorder %s179, %s180
      %p194 = scmp.eq.s32.totalorder %s19, 3
      %p195 = por %p193, %p194
      %p197 = scmp.ne.s32.totalorder %s180, %s196
      %p198 = scmp.eq.s32.totalorder %s19, 0
      %p199 = por %p197, %p198
      %s200 = ssub.s32 %s22, %s31
      %p201 = scmp.eq.s32.totalorder %s200, 0
      %s203 = sadd.s32 %s202, 1
      %s204 = scalar_select %p201, %s202, %s203
      %p207 = pneg %p201
      %p208 = scmp.eq.s32.totalorder %s13, 3
      %p209 = por %p207, %p208
      %p210 = scmp.ne.s32.totalorder %s202, %s205
      %p211 = scmp.eq.s32.totalorder %s13, 0
      %p212 = por %p210, %p211
      %p213 = scmp.ne.s32.totalorder %s202, %s205
      %p214 = scmp.eq.s32.totalorder %s18, 3
      %p215 = por %p213, %p214
      %p216 = scmp.ne.s32.totalorder %s205, %s206
      %p217 = scmp.eq.s32.totalorder %s18, 0
      %p218 = por %p216, %p217
      %p219 = scmp.ne.s32.totalorder %s205, %s206
      %p220 = scmp.eq.s32.totalorder %s19, 3
      %p221 = por %p219, %p220
      %p223 = scmp.ne.s32.totalorder %s206, %s222
      %p224 = scmp.eq.s32.totalorder %s19, 0
      %p225 = por %p223, %p224
      %s226 = ssub.s32 %s20, %s39
      %s227 = ssub.s32 %s21, %s35
      %s228 = sor.u32 %s226, %s227
      %p229 = scmp.eq.s32.totalorder %s228, 0
      %s231 = sadd.s32 %s230, 1
      %s232 = scalar_select %p229, %s230, %s231
      %p235 = pneg %p229
      %p236 = scmp.eq.s32.totalorder %s13, 3
      %p237 = por %p235, %p236
      %p238 = scmp.ne.s32.totalorder %s230, %s233
      %p239 = scmp.eq.s32.totalorder %s13, 0
      %p240 = por %p238, %p239
      %p241 = scmp.ne.s32.totalorder %s230, %s233
      %p242 = scmp.eq.s32.totalorder %s18, 3
      %p243 = por %p241, %p242
      %p244 = scmp.ne.s32.totalorder %s233, %s234
      %p245 = scmp.eq.s32.totalorder %s18, 0
      %p246 = por %p244, %p245
      %p247 = scmp.ne.s32.totalorder %s233, %s234
      %p248 = scmp.eq.s32.totalorder %s19, 3
      %p249 = por %p247, %p248
      %p251 = scmp.ne.s32.totalorder %s234, %s250
      %p252 = scmp.eq.s32.totalorder %s19, 0
      %p253 = por %p251, %p252
      %p254 = scmp.le.s32.totalorder 1, %s13
      %p255 = scmp.lt.s32.totalorder %s13, 5
      %p256 = pnand %p254, %p255
      %p257 = pneg %p256
      // Predicated region
      $region9: #{cot_forward.12} parent=5 // pred_check
        _
      $region10: #{cot_forward.12} parent=5 // pred_check_branch
        %259 = sbr.rel (%p256) target = $region12
      $region11: #{cot_forward.12} parent=5 // pred_region
        %s260 = ssub.s32 %s13, 1
        // Predicated region
        $region13: #{cot_forward.12} parent=11 // pred_check
          %p261 = pneg %p145
        $region14: #{cot_forward.12} parent=11 // pred_check_branch
          %263 = sbr.rel (%p261) target = $region16
        $region15: #{cot_forward.12} parent=11 // pred_region
          _
        $region16: #{cot_forward.12} parent=11 // pred_fallthru
          _
        // Predicated region
        $region17: #{cot_forward.12} parent=11 // pred_check
          %p264 = pneg %p166
        $region18: #{cot_forward.12} parent=11 // pred_check_branch
          %266 = sbr.rel (%p264) target = $region20
        $region19: #{cot_forward.12} parent=11 // pred_region
          _
        $region20: #{cot_forward.12} parent=11 // pred_fallthru
          _
        // Predicated region
        $region21: #{cot_forward.12} parent=11 // pred_check
          %p267 = pneg %p192
        $region22: #{cot_forward.12} parent=11 // pred_check_branch
          %269 = sbr.rel (%p267) target = $region24
        $region23: #{cot_forward.12} parent=11 // pred_region
          %s270 = smul.u32 2, %s25
          %p271 = scmp.lt.s32.totalorder %s270, 1
          %s272 = scalar_select %p271, %s270, 1
          %s273 = smul.addr %s272, 8
          %s274 = scalar_lea.vmem %s5, %s273
          %s275 = smul.u32 2, %s25
        $region24: #{cot_forward.12} parent=11 // pred_fallthru
          _
        // Predicated region
        $region25: #{cot_forward.12} parent=11 // pred_check
          %p276 = pneg %p218
        $region26: #{cot_forward.12} parent=11 // pred_check_branch
          %278 = sbr.rel (%p276) target = $region28
        $region27: #{cot_forward.12} parent=11 // pred_region
          %s279 = smul.u32 2, %s25
          %p280 = scmp.lt.s32.totalorder %s279, 1
          %s281 = scalar_select %p280, %s279, 1
          %s282 = smul.addr %s281, 8
          %s283 = scalar_lea.vmem %s6, %s282
          %s284 = smul.u32 2, %s25
        $region28: #{cot_forward.12} parent=11 // pred_fallthru
          _
      $region12: #{cot_forward.12} parent=5 // pred_fallthru
        _
      %p285 = scmp.lt.s32.totalorder %s13, 4
      // Predicated region
      $region29: #{cot_forward.12} parent=5 // pred_check
        %p286 = pneg %p285
      $region30: #{cot_forward.12} parent=5 // pred_check_branch
        %288 = sbr.rel (%p286) target = $region32
      $region31: #{cot_forward.12} parent=5 // pred_region
        // Predicated region
        $region33: #{cot_forward.12} parent=31 // pred_check
          %p289 = pneg %p54
        $region34: #{cot_forward.12} parent=31 // pred_check_branch
          %291 = sbr.rel (%p289) target = $region36
        $region35: #{cot_forward.12} parent=31 // pred_region
          %s292 = sand.u32 %s44, 1
          %s293 = sand.u32 %s44, 1
          %s294 = smul.addr %s293, 8
          %s295 = scalar_lea.vmem [#allocation6], %s294
          %s296 = smul.addr %s20, 12
          %s297 = sadd.s32 %s21, %s296
          %s298 = smul.addr %s297, 4
          %s299 = scalar_lea.vmem %s0, %s298
          // Predicated region
          $region37: #{cot_forward.12} parent=35 // pred_check
            _
          $region38: #{cot_forward.12} parent=35 // pred_check_branch
            %301 = sbr.rel (0) target = $region40
          $region39: #{cot_forward.12} parent=35 // pred_region
            // Predicated region
            $region41: #{cot_forward.12} parent=39 // pred_check
              _
            $region42: #{cot_forward.12} parent=39 // pred_check_branch
              %303 = sbr.rel target = $region44
            $region43: #{cot_forward.12} parent=39 // pred_region
              // Predicated region
              $region56: #{cot_forward.12} parent=43 // pred_check
                _
              $region57: #{cot_forward.12} parent=43 // pred_check_branch
                %320 = sbr.rel (0) target = $region59
              $region58: #{cot_forward.12} parent=43 // pred_region
                loop: start=0, step=1, limit=1
                $region60: #{cot_forward.12} parent=58 // loop_pre_header
                  _
                $region61: #{cot_forward.12} parent=58 // loop_header
                  %s322 = sphi 0, %s326
                  %p323 = scmp.ge.s32.totalorder %s322, 1
                  %s327 = sphi %s299, %s299
                  %s328 = sphi %s295, %s295
                $region62: #{cot_forward.12} parent=58 // loop_header_branch
                  %325 = sbr.rel (%p323) target = $region66
                $region63: #{cot_forward.12} parent=58 // loop_body
                  _
                $region64: #{cot_forward.12} parent=58 // loop_footer
                  %s326 = sadd.s32 1, %s322
                $region65: #{cot_forward.12} parent=58 // loop_footer_branch
                  %321 = sbr.rel target = $region61
                $region66: #{cot_forward.12} parent=58 // loop_exit
                  _
                loop: start=0, step=1, limit=1
                $region67: #{cot_forward.12} parent=58 // loop_pre_header
                  _
                $region68: #{cot_forward.12} parent=58 // loop_header
                  %s331 = sphi 0, %s335
                  %p332 = scmp.ge.s32.totalorder %s331, 1
                  %s336 = sphi %s299, %s299
                  %s337 = sphi %s295, %s295
                $region69: #{cot_forward.12} parent=58 // loop_header_branch
                  %334 = sbr.rel (%p332) target = $region73
                $region70: #{cot_forward.12} parent=58 // loop_body
                  %v338 = vld [vmem:[%s336] sm:$0xf]
                  %339 = vst [vmem:[%s337] sm:$0xf] %v338
                  %v340 = vld [vmem:[%s336 + $0x18] sm:$0xf]
                  %341 = vst [vmem:[%s337 + $0x4] sm:$0xf] %v340
                $region71: #{cot_forward.12} parent=58 // loop_footer
                  %s335 = sadd.s32 1, %s331
                $region72: #{cot_forward.12} parent=58 // loop_footer_branch
                  %330 = sbr.rel target = $region68
                $region73: #{cot_forward.12} parent=58 // loop_exit
                  _
              $region59: #{cot_forward.12} parent=43 // pred_fallthru
                _
            $region44: #{cot_forward.12} parent=39 // pred_fallthru
              _
            // Predicated region
            $region45: #{cot_forward.12} parent=39 // pred_check
              _
            $region46: #{cot_forward.12} parent=39 // pred_check_branch
              %305 = sbr.rel (0) target = $region48
            $region47: #{cot_forward.12} parent=39 // pred_region
              loop: start=0, step=1, limit=1
              $region49: #{cot_forward.12} parent=47 // loop_pre_header
                _
              $region50: #{cot_forward.12} parent=47 // loop_header
                %s308 = sphi 0, %s312
                %p309 = scmp.ge.s32.totalorder %s308, 1
                %s313 = sphi %s299, %s299
                %s314 = sphi %s295, %s295
              $region51: #{cot_forward.12} parent=47 // loop_header_branch
                %311 = sbr.rel (%p309) target = $region55
              $region52: #{cot_forward.12} parent=47 // loop_body
                %v315 = vld [vmem:[%s313] sm:$0xf]
                %316 = vst [vmem:[%s314] sm:$0xf] %v315
                %v317 = vld [vmem:[%s313 + $0x18] sm:$0xf]
                %318 = vst [vmem:[%s314 + $0x4] sm:$0xf] %v317
              $region53: #{cot_forward.12} parent=47 // loop_footer
                %s312 = sadd.s32 1, %s308
              $region54: #{cot_forward.12} parent=47 // loop_footer_branch
                %307 = sbr.rel target = $region50
              $region55: #{cot_forward.12} parent=47 // loop_exit
                _
            $region48: #{cot_forward.12} parent=39 // pred_fallthru
              _
          $region40: #{cot_forward.12} parent=35 // pred_fallthru
            _
          %342 = vnop
        $region36: #{cot_forward.12} parent=31 // pred_fallthru
          _
        // Predicated region
        $region74: #{cot_forward.12} parent=31 // pred_check
          %p343 = pneg %p86
        $region75: #{cot_forward.12} parent=31 // pred_check_branch
          %345 = sbr.rel (%p343) target = $region77
        $region76: #{cot_forward.12} parent=31 // pred_region
          %s346 = sand.u32 %s76, 1
          %s347 = sand.u32 %s76, 1
          %s348 = smul.addr %s347, 8
          %s349 = scalar_lea.vmem [#allocation7], %s348
          %s350 = sadd.s32 %s21, 2
          %s351 = smul.u32 2, %s22
          %s352 = smul.addr %s351, 6
          %s353 = sadd.s32 %s350, %s352
          %s354 = smul.addr %s20, 12
          %s355 = sadd.s32 %s353, %s354
          %s356 = smul.addr %s355, 4
          %s357 = scalar_lea.vmem %s1, %s356
          // Predicated region
          $region78: #{cot_forward.12} parent=76 // pred_check
            _
          $region79: #{cot_forward.12} parent=76 // pred_check_branch
            %359 = sbr.rel (0) target = $region81
          $region80: #{cot_forward.12} parent=76 // pred_region
            // Predicated region
            $region82: #{cot_forward.12} parent=80 // pred_check
              _
            $region83: #{cot_forward.12} parent=80 // pred_check_branch
              %361 = sbr.rel target = $region85
            $region84: #{cot_forward.12} parent=80 // pred_region
              // Predicated region
              $region97: #{cot_forward.12} parent=84 // pred_check
                _
              $region98: #{cot_forward.12} parent=84 // pred_check_branch
                %378 = sbr.rel (0) target = $region100
              $region99: #{cot_forward.12} parent=84 // pred_region
                loop: start=0, step=1, limit=1
                $region101: #{cot_forward.12} parent=99 // loop_pre_header
                  _
                $region102: #{cot_forward.12} parent=99 // loop_header
                  %s380 = sphi 0, %s384
                  %p381 = scmp.ge.s32.totalorder %s380, 1
                  %s385 = sphi %s357, %s357
                  %s386 = sphi %s349, %s349
                $region103: #{cot_forward.12} parent=99 // loop_header_branch
                  %383 = sbr.rel (%p381) target = $region107
                $region104: #{cot_forward.12} parent=99 // loop_body
                  _
                $region105: #{cot_forward.12} parent=99 // loop_footer
                  %s384 = sadd.s32 1, %s380
                $region106: #{cot_forward.12} parent=99 // loop_footer_branch
                  %379 = sbr.rel target = $region102
                $region107: #{cot_forward.12} parent=99 // loop_exit
                  _
                loop: start=0, step=1, limit=1
                $region108: #{cot_forward.12} parent=99 // loop_pre_header
                  _
                $region109: #{cot_forward.12} parent=99 // loop_header
                  %s389 = sphi 0, %s393
                  %p390 = scmp.ge.s32.totalorder %s389, 1
                  %s394 = sphi %s357, %s357
                  %s395 = sphi %s349, %s349
                $region110: #{cot_forward.12} parent=99 // loop_header_branch
                  %392 = sbr.rel (%p390) target = $region114
                $region111: #{cot_forward.12} parent=99 // loop_body
                  %v396 = vld [vmem:[%s394] sm:$0xf]
                  %397 = vst [vmem:[%s395] sm:$0xf] %v396
                  %v398 = vld [vmem:[%s394 + $0x18] sm:$0xf]
                  %399 = vst [vmem:[%s395 + $0x4] sm:$0xf] %v398
                $region112: #{cot_forward.12} parent=99 // loop_footer
                  %s393 = sadd.s32 1, %s389
                $region113: #{cot_forward.12} parent=99 // loop_footer_branch
                  %388 = sbr.rel target = $region109
                $region114: #{cot_forward.12} parent=99 // loop_exit
                  _
              $region100: #{cot_forward.12} parent=84 // pred_fallthru
                _
            $region85: #{cot_forward.12} parent=80 // pred_fallthru
              _
            // Predicated region
            $region86: #{cot_forward.12} parent=80 // pred_check
              _
            $region87: #{cot_forward.12} parent=80 // pred_check_branch
              %363 = sbr.rel (0) target = $region89
            $region88: #{cot_forward.12} parent=80 // pred_region
              loop: start=0, step=1, limit=1
              $region90: #{cot_forward.12} parent=88 // loop_pre_header
                _
              $region91: #{cot_forward.12} parent=88 // loop_header
                %s366 = sphi 0, %s370
                %p367 = scmp.ge.s32.totalorder %s366, 1
                %s371 = sphi %s357, %s357
                %s372 = sphi %s349, %s349
              $region92: #{cot_forward.12} parent=88 // loop_header_branch
                %369 = sbr.rel (%p367) target = $region96
              $region93: #{cot_forward.12} parent=88 // loop_body
                %v373 = vld [vmem:[%s371] sm:$0xf]
                %374 = vst [vmem:[%s372] sm:$0xf] %v373
                %v375 = vld [vmem:[%s371 + $0x18] sm:$0xf]
                %376 = vst [vmem:[%s372 + $0x4] sm:$0xf] %v375
              $region94: #{cot_forward.12} parent=88 // loop_footer
                %s370 = sadd.s32 1, %s366
              $region95: #{cot_forward.12} parent=88 // loop_footer_branch
                %365 = sbr.rel target = $region91
              $region96: #{cot_forward.12} parent=88 // loop_exit
                _
            $region89: #{cot_forward.12} parent=80 // pred_fallthru
              _
          $region81: #{cot_forward.12} parent=76 // pred_fallthru
            _
          %400 = vnop
        $region77: #{cot_forward.12} parent=31 // pred_fallthru
          _
        // Predicated region
        $region115: #{cot_forward.12} parent=31 // pred_check
          %p401 = pneg %p118
        $region116: #{cot_forward.12} parent=31 // pred_check_branch
          %403 = sbr.rel (%p401) target = $region118
        $region117: #{cot_forward.12} parent=31 // pred_region
          %s404 = sand.u32 %s108, 1
          %s405 = sand.u32 %s108, 1
          %s406 = smul.addr %s405, 8
          %s407 = scalar_lea.vmem [#allocation8], %s406
          %s408 = sadd.s32 %s21, 4
          %s409 = smul.u32 2, %s22
          %s410 = smul.addr %s409, 6
          %s411 = sadd.s32 %s408, %s410
          %s412 = smul.addr %s20, 12
          %s413 = sadd.s32 %s411, %s412
          %s414 = smul.addr %s413, 4
          %s415 = scalar_lea.vmem %s2, %s414
          // Predicated region
          $region119: #{cot_forward.12} parent=117 // pred_check
            _
          $region120: #{cot_forward.12} parent=117 // pred_check_branch
            %417 = sbr.rel (0) target = $region122
          $region121: #{cot_forward.12} parent=117 // pred_region
            // Predicated region
            $region123: #{cot_forward.12} parent=121 // pred_check
              _
            $region124: #{cot_forward.12} parent=121 // pred_check_branch
              %419 = sbr.rel target = $region126
            $region125: #{cot_forward.12} parent=121 // pred_region
              // Predicated region
              $region138: #{cot_forward.12} parent=125 // pred_check
                _
              $region139: #{cot_forward.12} parent=125 // pred_check_branch
                %436 = sbr.rel (0) target = $region141
              $region140: #{cot_forward.12} parent=125 // pred_region
                loop: start=0, step=1, limit=1
                $region142: #{cot_forward.12} parent=140 // loop_pre_header
                  _
                $region143: #{cot_forward.12} parent=140 // loop_header
                  %s438 = sphi 0, %s442
                  %p439 = scmp.ge.s32.totalorder %s438, 1
                  %s443 = sphi %s415, %s415
                  %s444 = sphi %s407, %s407
                $region144: #{cot_forward.12} parent=140 // loop_header_branch
                  %441 = sbr.rel (%p439) target = $region148
                $region145: #{cot_forward.12} parent=140 // loop_body
                  _
                $region146: #{cot_forward.12} parent=140 // loop_footer
                  %s442 = sadd.s32 1, %s438
                $region147: #{cot_forward.12} parent=140 // loop_footer_branch
                  %437 = sbr.rel target = $region143
                $region148: #{cot_forward.12} parent=140 // loop_exit
                  _
                loop: start=0, step=1, limit=1
                $region149: #{cot_forward.12} parent=140 // loop_pre_header
                  _
                $region150: #{cot_forward.12} parent=140 // loop_header
                  %s447 = sphi 0, %s451
                  %p448 = scmp.ge.s32.totalorder %s447, 1
                  %s452 = sphi %s415, %s415
                  %s453 = sphi %s407, %s407
                $region151: #{cot_forward.12} parent=140 // loop_header_branch
                  %450 = sbr.rel (%p448) target = $region155
                $region152: #{cot_forward.12} parent=140 // loop_body
                  %v454 = vld [vmem:[%s452] sm:$0xf]
                  %455 = vst [vmem:[%s453] sm:$0xf] %v454
                  %v456 = vld [vmem:[%s452 + $0x18] sm:$0xf]
                  %457 = vst [vmem:[%s453 + $0x4] sm:$0xf] %v456
                $region153: #{cot_forward.12} parent=140 // loop_footer
                  %s451 = sadd.s32 1, %s447
                $region154: #{cot_forward.12} parent=140 // loop_footer_branch
                  %446 = sbr.rel target = $region150
                $region155: #{cot_forward.12} parent=140 // loop_exit
                  _
              $region141: #{cot_forward.12} parent=125 // pred_fallthru
                _
            $region126: #{cot_forward.12} parent=121 // pred_fallthru
              _
            // Predicated region
            $region127: #{cot_forward.12} parent=121 // pred_check
              _
            $region128: #{cot_forward.12} parent=121 // pred_check_branch
              %421 = sbr.rel (0) target = $region130
            $region129: #{cot_forward.12} parent=121 // pred_region
              loop: start=0, step=1, limit=1
              $region131: #{cot_forward.12} parent=129 // loop_pre_header
                _
              $region132: #{cot_forward.12} parent=129 // loop_header
                %s424 = sphi 0, %s428
                %p425 = scmp.ge.s32.totalorder %s424, 1
                %s429 = sphi %s415, %s415
                %s430 = sphi %s407, %s407
              $region133: #{cot_forward.12} parent=129 // loop_header_branch
                %427 = sbr.rel (%p425) target = $region137
              $region134: #{cot_forward.12} parent=129 // loop_body
                %v431 = vld [vmem:[%s429] sm:$0xf]
                %432 = vst [vmem:[%s430] sm:$0xf] %v431
                %v433 = vld [vmem:[%s429 + $0x18] sm:$0xf]
                %434 = vst [vmem:[%s430 + $0x4] sm:$0xf] %v433
              $region135: #{cot_forward.12} parent=129 // loop_footer
                %s428 = sadd.s32 1, %s424
              $region136: #{cot_forward.12} parent=129 // loop_footer_branch
                %423 = sbr.rel target = $region132
              $region137: #{cot_forward.12} parent=129 // loop_exit
                _
            $region130: #{cot_forward.12} parent=121 // pred_fallthru
              _
          $region122: #{cot_forward.12} parent=117 // pred_fallthru
            _
          %458 = vnop
        $region118: #{cot_forward.12} parent=31 // pred_fallthru
          _
      $region32: #{cot_forward.12} parent=5 // pred_fallthru
        _
      %p459 = scmp.le.s32.totalorder 1, %s13
      %p460 = scmp.lt.s32.totalorder %s13, 5
      %p461 = pnand %p459, %p460
      %p462 = pneg %p461
      // Predicated region
      $region156: #{cot_forward.12} parent=5 // pred_check
        _
      $region157: #{cot_forward.12} parent=5 // pred_check_branch
        %464 = sbr.rel (%p461) target = $region159
      $region158: #{cot_forward.12} parent=5 // pred_region
        %s465 = ssub.s32 %s13, 1
        %s466 = sand.u32 %s47, 1
        %s467 = sand.u32 %s47, 1
        %s468 = smul.addr %s467, 8
        %s469 = scalar_lea.vmem [#allocation6], %s468
        // Predicated region
        $region160: #{cot_forward.12} parent=158 // pred_check
          %p470 = pneg %p60
        $region161: #{cot_forward.12} parent=158 // pred_check_branch
          %472 = sbr.rel (%p470) target = $region163
        $region162: #{cot_forward.12} parent=158 // pred_region
          _
        $region163: #{cot_forward.12} parent=158 // pred_fallthru
          _
        %s473 = sand.u32 %s79, 1
        %s474 = sand.u32 %s79, 1
        %s475 = smul.addr %s474, 8
        %s476 = scalar_lea.vmem [#allocation7], %s475
        // Predicated region
        $region164: #{cot_forward.12} parent=158 // pred_check
          %p477 = pneg %p92
        $region165: #{cot_forward.12} parent=158 // pred_check_branch
          %479 = sbr.rel (%p477) target = $region167
        $region166: #{cot_forward.12} parent=158 // pred_region
          _
        $region167: #{cot_forward.12} parent=158 // pred_fallthru
          _
        %s480 = sand.u32 %s111, 1
        %s481 = sand.u32 %s111, 1
        %s482 = smul.addr %s481, 8
        %s483 = scalar_lea.vmem [#allocation8], %s482
        // Predicated region
        $region168: #{cot_forward.12} parent=158 // pred_check
          %p484 = pneg %p124
        $region169: #{cot_forward.12} parent=158 // pred_check_branch
          %486 = sbr.rel (%p484) target = $region171
        $region170: #{cot_forward.12} parent=158 // pred_region
          _
        $region171: #{cot_forward.12} parent=158 // pred_fallthru
          _
        %s487 = sand.u32 %s47, 1
        %s488 = sand.u32 %s47, 1
        %s489 = smul.addr %s488, 8
        %s490 = scalar_lea.vmem [#allocation6], %s489
        %p491 = pneg %p60
        %p492 = pneg %p57
        %s493 = sand.u32 %s79, 1
        %s494 = sand.u32 %s79, 1
        %s495 = smul.addr %s494, 8
        %s496 = scalar_lea.vmem [#allocation7], %s495
        %p497 = pneg %p92
        %p498 = pneg %p89
        %s499 = sand.u32 %s111, 1
        %s500 = sand.u32 %s111, 1
        %s501 = smul.addr %s500, 8
        %s502 = scalar_lea.vmem [#allocation8], %s501
        %p503 = pneg %p124
        %p504 = pneg %p121
        %p505 = pneg %p145
        %p506 = pneg %p142
        %p507 = pneg %p166
        %p508 = pneg %p163
        %s509 = smul.u32 2, %s25
        %p510 = scmp.lt.s32.totalorder %s509, 1
        %s511 = scalar_select %p510, %s509, 1
        %s512 = smul.addr %s511, 8
        %s513 = scalar_lea.vmem %s5, %s512
        %p514 = pneg %p192
        %p515 = pneg %p189
        %s516 = smul.u32 2, %s25
        %p517 = scmp.lt.s32.totalorder %s516, 1
        %s518 = scalar_select %p517, %s516, 1
        %s519 = smul.addr %s518, 8
        %s520 = scalar_lea.vmem %s6, %s519
        %p521 = pneg %p218
        %p522 = pneg %p215
        %p523 = pneg %p246
        %p524 = pneg %p243
        %s525 = sand.u32 %s233, 1
        %s526 = sand.u32 %s233, 1
        %s527 = smul.addr %s526, 8
        %s528 = scalar_lea.vmem [#allocation9], %s527
        %s529 = sadd.s32 %s24, 2
        %s530 = smul.u32 2, %s25
        %s531 = sadd.s32 %s24, 4
        %s532 = smul.u32 2, %s25
        %s533 = smul.u32 2, %s25
        %p534 = scmp.lt.s32.totalorder %s533, 1
        %s535 = scalar_select %p534, %s533, 1
        %s536 = smul.addr %s535, 8
        %s537 = scalar_lea.vmem %s5, %s536
        %s538 = smul.u32 2, %s25
        %s539 = smul.u32 2, %s25
        %p540 = scmp.lt.s32.totalorder %s539, 1
        %s541 = scalar_select %p540, %s539, 1
        %s542 = smul.addr %s541, 8
        %s543 = scalar_lea.vmem %s6, %s542
        %s544 = smul.u32 2, %s25
        %p546 = scmp.eq.s32.totalorder %s25, 0
        // Predicated region
        $region172: #{cot_forward.12} parent=158 // pred_check
          %p547 = pneg %p546
        $region173: #{cot_forward.12} parent=158 // pred_check_branch
          %549 = sbr.rel (%p547) target = $region175
        $region174: #{cot_forward.12} parent=158 // pred_region
          %v550 = vld [vmem:[%s469] sm:$0xf]
          %v551 = vld [vmem:[%s469 + $0x4] sm:$0xf]
          %v552 = vunpack.c.l.bf16 %v550
          %v553 = vunpack.c.l.bf16 %v551
          %v554 = vld [vmem:[%s3] sm:$0xff]
          %v555 = vld [vmem:[%s3 + $0x8] sm:$0xff]
          %v556 = vmul.f32 %v552, %v554
          %v557 = vmul.f32 %v553, %v555
          %558 = vrot.lane.b32.xlu0 %v552, 64
          %v559 = vpop.permute.xlu0 %558
          %560 = vrot.lane.b32.xlu0 %v553, 64
          %v561 = vpop.permute.xlu0 %560
          %v562 = vld [vmem:[%s4] sm:$0xff]
          %v563 = vld [vmem:[%s4 + $0x8] sm:$0xff]
          %v564 = vmul.f32 %v559, %v562
          %v565 = vmul.f32 %v561, %v563
          %v566 = vadd.f32 %v556, %v564
          %v567 = vadd.f32 %v557, %v565
          %v568 = vmul.f32 %v566, 0.088388346
          %v569 = vmul.f32 %v567, 0.088388346
          %v570 = vpack.c.bf16 %v569, %v568
          %571 = vst [vmem:[#allocation2] sm:$0xff] %v570
          %vm572 = vcmask 7168
          %573 = vst.msk [vmem:[#allocation3] sm:$0xff] %vm572, -1e+30
          %574 = vst.msk [vmem:[#allocation3 + $0x8] sm:$0xff] %vm572, -1e+30
          %575 = vst.msk [vmem:[#allocation4] sm:$0xff] %vm572, 0.0
          %576 = vst.msk [vmem:[#allocation4 + $0x8] sm:$0xff] %vm572, 0.0
          %577 = vst [vmem:[#allocation5] sm:$0xff] 0.0
          %578 = vst [vmem:[#allocation5 + $0x8] sm:$0xff] 0.0
        $region175: #{cot_forward.12} parent=158 // pred_fallthru
          _
        %v579 = vld [vmem:[%s476] sm:$0xf]
        %v580 = vld [vmem:[%s476 + $0x4] sm:$0xf]
        %v581 = vunpack.c.l.bf16 %v579
        %v582 = vunpack.c.l.bf16 %v580
        %v583 = vld [vmem:[%s537] sm:$0xff]
        %v584 = vld [vmem:[%s537 + $0x8] sm:$0xff]
        %v585 = vmul.f32 %v581, %v583
        %v586 = vmul.f32 %v582, %v584
        %587 = vrot.lane.b32.xlu0 %v581, 64
        %v588 = vpop.permute.xlu0 %587
        %589 = vrot.lane.b32.xlu0 %v582, 64
        %v590 = vpop.permute.xlu0 %589
        %v591 = vld [vmem:[%s543] sm:$0xff]
        %v592 = vld [vmem:[%s543 + $0x8] sm:$0xff]
        %v593 = vmul.f32 %v588, %v591
        %v594 = vmul.f32 %v590, %v592
        %v595 = vadd.f32 %v585, %v593
        %v596 = vadd.f32 %v586, %v594
        %v597 = vld [vmem:[#allocation2] sm:$0xff]
        %v598 = vpack.c.bf16 %v596, %v595
        %599 = vmatprep.subr.bf16.mxu0 0
        %600 = vmatpush1.bf16.xpose.msra.mxu0 %v598
        %601 = vmatprep.subr.bf16.mxu0 0
        %602 = vmatpush1.bf16.xpose.msra.mxu0 0
        %603 = vmatprep.subr.bf16.mxu0 0
        %604 = vmatpush1.bf16.xpose.msra.mxu0 0
        %605 = vmatprep.subr.bf16.mxu0 0
        %606 = vmatpush1.bf16.xpose.msra.mxu0 0
        %607 = vmatprep.subr.bf16.mxu0 0
        %608 = vmatpush1.bf16.xpose.msra.mxu0 0
        %609 = vmatprep.subr.bf16.mxu0 0
        %610 = vmatpush1.bf16.xpose.msra.mxu0 0
        %611 = vmatprep.subr.bf16.mxu0 0
        %612 = vmatpush1.bf16.xpose.msra.mxu0 0
        %613 = vmatprep.subr.bf16.mxu0 0
        %614 = vmatpush1.bf16.xpose.msra.mxu0 0
        %615 = vmatprep.subr.bf16.mxu0 0
        %616 = vmatpush1.bf16.xpose.msra.mxu0 0
        %617 = vmatprep.subr.bf16.mxu0 0
        %618 = vmatpush1.bf16.xpose.msra.mxu0 0
        %619 = vmatprep.subr.bf16.mxu0 0
        %620 = vmatpush1.bf16.xpose.msra.mxu0 0
        %621 = vmatprep.subr.bf16.mxu0 0
        %622 = vmatpush1.bf16.xpose.msra.mxu0 0
        %623 = vmatprep.subr.bf16.mxu0 0
        %624 = vmatpush1.bf16.xpose.msra.mxu0 0
        %625 = vmatprep.subr.bf16.mxu0 0
        %626 = vmatpush1.bf16.xpose.msra.mxu0 0
        %627 = vmatprep.subr.bf16.mxu0 0
        %628 = vmatpush1.bf16.xpose.msra.mxu0 0
        %629 = vmatprep.subr.bf16.mxu0 0
        %630 = vmatpush1.bf16.xpose.msra.mxu0 0
        %631 = vmatprep.mubr.bf16.mxu0 0
        %632 = vmatmul.mubr.bf16.gmra.mrb[0].mxu0 %v597
        %v633 = vpop.f32.mrb[0].mxu0
        %v634 = vadd.f32 0.0, %v633
        %v635 = vpop.f32.mrb[0].mxu0
        %v636 = vpop.f32.mrb[0].mxu0
        %v637 = vadd.f32 0.0, %v636
        %v638 = vpop.f32.mrb[0].mxu0
        %639 = vdwg.mxu0
        %v640 = vlaneseq
        %v641 = vshrl.u32 %v640, 7
        %v642 = vadd.s32 %v641, 8
        %v643 = vlaneseq
        %v644 = vand.u32 %v643, 127
        %s645 = smul.u32 %s25, 16
        %v646 = vstv %s645
        %v647 = vadd.s32 %v644, %v646
        %vm648 = vcmp.le.s32.totalorder %v647, %v641
        %vm649 = vcmp.le.s32.totalorder %v647, %v642
        %v650 = vsel %vm648, %v634, -1e+30
        %v651 = vsel %vm649, %v637, -1e+30
        %v652 = vld [vmem:[#allocation3] sm:$0xff]
        %v653 = vld [vmem:[#allocation3 + $0x8] sm:$0xff]
        %vm654 = vcmask 130048
        %v655 = vsel %vm654, %v650, -inf
        %656 = vmax.xlane.f32.xlu0 %v655
        %v657 = vpop.xlane.xlu0 %656
        %v658 = vsel %vm654, %v651, -inf
        %659 = vmax.xlane.f32.xlu0 %v658
        %v660 = vpop.xlane.xlu0 %659
        %v661 = vmax.f32 %v652, %v657
        %v662 = vmax.f32 %v653, %v660
        %v663 = vsub.f32 %v652, %v661
        %v664 = vsub.f32 %v653, %v662
        %v665 = vmul.f32 %v663, 1.442695
        %v666 = vpow.pop %v665
        %v667 = vmul.f32 %v664, 1.442695
        %v668 = vpow.pop %v667
        %670 = vset.pattern.permute.xlu0 0
        %671 = vperm.xlu0 %670, %v661
        %v672 = vpop.permute.xlu0 %671
        %675 = vset.pattern.permute.xlu0 0
        %676 = vperm.xlu0 %675, %v662
        %v677 = vpop.permute.xlu0 %676
        %v679 = vsub.f32 %v650, %v672
        %v680 = vsub.f32 %v651, %v677
        %v681 = vmul.f32 %v679, 1.442695
        %v682 = vpow.pop %v681
        %v683 = vmul.f32 %v680, 1.442695
        %v684 = vpow.pop %v683
        %v685 = vld [vmem:[#allocation4] sm:$0xff]
        %v686 = vld [vmem:[#allocation4 + $0x8] sm:$0xff]
        %v687 = vmul.f32 %v666, %v685
        %v688 = vmul.f32 %v668, %v686
        %v689 = vsel %vm654, %v682, 0.0
        %690 = vadd.xlane.f32.xlu0 %v689
        %v691 = vpop.xlane.xlu0 %690
        %v692 = vsel %vm654, %v684, 0.0
        %693 = vadd.xlane.f32.xlu0 %v692
        %v694 = vpop.xlane.xlu0 %693
        %v695 = vadd.f32 %v687, %v691
        %v696 = vadd.f32 %v688, %v694
        %vm697 = vcmask 7168
        %698 = vst.msk [vmem:[#allocation4] sm:$0xff] %vm697, %v695
        %699 = vst.msk [vmem:[#allocation4 + $0x8] sm:$0xff] %vm697, %v696
        %v700 = vld [vmem:[#allocation5] sm:$0xff]
        %v701 = vld [vmem:[#allocation5 + $0x8] sm:$0xff]
        %703 = vset.pattern.permute.xlu0 0
        %704 = vperm.xlu0 %703, %v666
        %v705 = vpop.permute.xlu0 %704
        %708 = vset.pattern.permute.xlu0 0
        %709 = vperm.xlu0 %708, %v668
        %v710 = vpop.permute.xlu0 %709
        %v712 = vmul.f32 %v705, %v700
        %v713 = vmul.f32 %v710, %v701
        %v714 = vpack.c.bf16 %v684, %v682
        %v715 = vld [vmem:[%s483] sm:$0xf]
        %v716 = vld [vmem:[%s483 + $0x4] sm:$0xf]
        %v719 = vunpack.c.l.b16 %v715
        %v720 = vunpack.c.l.b16 %v716
        %v721 = vpack.c.b16 %v720, %v719
        %v724 = vsel %vm654, %v714, 0
        %726 = vmatprep.subr.bf16.mxu0 0
        %727 = vmatpush1.bf16.msra.mxu0 %v721
        %728 = vmatprep.subr.bf16.mxu0 0
        %729 = vmatpush1.bf16.msra.mxu0 0
        %730 = vmatprep.subr.bf16.mxu0 0
        %731 = vmatpush1.bf16.msra.mxu0 0
        %732 = vmatprep.subr.bf16.mxu0 0
        %733 = vmatpush1.bf16.msra.mxu0 0
        %734 = vmatprep.subr.bf16.mxu0 0
        %735 = vmatpush1.bf16.msra.mxu0 0
        %736 = vmatprep.subr.bf16.mxu0 0
        %737 = vmatpush1.bf16.msra.mxu0 0
        %738 = vmatprep.subr.bf16.mxu0 0
        %739 = vmatpush1.bf16.msra.mxu0 0
        %740 = vmatprep.subr.bf16.mxu0 0
        %741 = vmatpush1.bf16.msra.mxu0 0
        %742 = vmatprep.subr.bf16.mxu0 0
        %743 = vmatpush1.bf16.msra.mxu0 0
        %744 = vmatprep.subr.bf16.mxu0 0
        %745 = vmatpush1.bf16.msra.mxu0 0
        %746 = vmatprep.subr.bf16.mxu0 0
        %747 = vmatpush1.bf16.msra.mxu0 0
        %748 = vmatprep.subr.bf16.mxu0 0
        %749 = vmatpush1.bf16.msra.mxu0 0
        %750 = vmatprep.subr.bf16.mxu0 0
        %751 = vmatpush1.bf16.msra.mxu0 0
        %752 = vmatprep.subr.bf16.mxu0 0
        %753 = vmatpush1.bf16.msra.mxu0 0
        %754 = vmatprep.subr.bf16.mxu0 0
        %755 = vmatpush1.bf16.msra.mxu0 0
        %756 = vmatprep.subr.bf16.mxu0 0
        %757 = vmatpush1.bf16.msra.mxu0 0
        %758 = vmatprep.mubr.bf16.mxu0 0
        %759 = vmatmul.mubr.bf16.gmra.mrb[0].mxu0 %v724
        %v760 = vpop.f32.mrb[0].mxu0
        %v761 = vadd.f32 0.0, %v760
        %v762 = vpop.f32.mrb[0].mxu0
        %v763 = vpop.f32.mrb[0].mxu0
        %v764 = vadd.f32 0.0, %v763
        %v765 = vpop.f32.mrb[0].mxu0
        %766 = vdwg.mxu0
        %v767 = vadd.f32 %v712, %v761
        %v768 = vadd.f32 %v713, %v764
        %769 = vst [vmem:[#allocation5] sm:$0xff] %v767
        %770 = vst [vmem:[#allocation5 + $0x8] sm:$0xff] %v768
        %771 = vst.msk [vmem:[#allocation3] sm:$0xff] %vm697, %v661
        %772 = vst.msk [vmem:[#allocation3 + $0x8] sm:$0xff] %vm697, %v662
        // Predicated region
        $region176: #{cot_forward.12} parent=158 // pred_check
          %p773 = pneg %p546
        $region177: #{cot_forward.12} parent=158 // pred_check_branch
          %775 = sbr.rel (%p773) target = $region179
        $region178: #{cot_forward.12} parent=158 // pred_region
          %v776 = vld [vmem:[#allocation5] sm:$0xff]
          %v777 = vld [vmem:[#allocation5 + $0x8] sm:$0xff]
          %v778 = vld [vmem:[#allocation4] sm:$0xff]
          %v779 = vld [vmem:[#allocation4 + $0x8] sm:$0xff]
          %781 = vset.pattern.permute.xlu0 0
          %782 = vperm.xlu0 %781, %v778
          %v783 = vpop.permute.xlu0 %782
          %786 = vset.pattern.permute.xlu0 0
          %787 = vperm.xlu0 %786, %v779
          %v788 = vpop.permute.xlu0 %787
          %v790 = vrcp.pop %v783
          %v791 = vmul.f32 %v776, %v790
          %v792 = vrcp.pop %v788
          %v793 = vmul.f32 %v777, %v792
          %v794 = vpack.c.bf16 %v793, %v791
          %v796 = vunpack.c.l.b16 %v794
          %v797 = vunpack.c.h.b16 %v794
          %v798 = vpack.c.b16 %v796, %v796
          %v799 = vpack.c.b16 %v797, %v797
          %802 = vst [vmem:[%s528] sm:$0xf] %v798
          %803 = vst [vmem:[%s528 + $0x4] sm:$0xf] %v799
        $region179: #{cot_forward.12} parent=158 // pred_fallthru
          _
        %s804 = sand.u32 %s233, 1
        %s805 = sand.u32 %s233, 1
        %s806 = smul.addr %s805, 8
        %s807 = scalar_lea.vmem [#allocation9], %s806
        // Predicated region
        $region180: #{cot_forward.12} parent=158 // pred_check
          %p808 = pneg %p243
        $region181: #{cot_forward.12} parent=158 // pred_check_branch
          %810 = sbr.rel (%p808) target = $region183
        $region182: #{cot_forward.12} parent=158 // pred_region
          %s811 = smul.addr %s23, 4
          %s812 = sadd.s32 %s24, %s811
          %s813 = smul.addr %s812, 4
          %s814 = scalar_lea.vmem %s7, %s813
          // Predicated region
          $region184: #{cot_forward.12} parent=182 // pred_check
            _
          $region185: #{cot_forward.12} parent=182 // pred_check_branch
            %816 = sbr.rel (0) target = $region187
          $region186: #{cot_forward.12} parent=182 // pred_region
            // Predicated region
            $region188: #{cot_forward.12} parent=186 // pred_check
              _
            $region189: #{cot_forward.12} parent=186 // pred_check_branch
              %818 = sbr.rel target = $region191
            $region190: #{cot_forward.12} parent=186 // pred_region
              // Predicated region
              $region203: #{cot_forward.12} parent=190 // pred_check
                _
              $region204: #{cot_forward.12} parent=190 // pred_check_branch
                %835 = sbr.rel (0) target = $region206
              $region205: #{cot_forward.12} parent=190 // pred_region
                loop: start=0, step=1, limit=1
                $region207: #{cot_forward.12} parent=205 // loop_pre_header
                  _
                $region208: #{cot_forward.12} parent=205 // loop_header
                  %s837 = sphi 0, %s841
                  %p838 = scmp.ge.s32.totalorder %s837, 1
                  %s842 = sphi %s807, %s807
                  %s843 = sphi %s814, %s814
                $region209: #{cot_forward.12} parent=205 // loop_header_branch
                  %840 = sbr.rel (%p838) target = $region213
                $region210: #{cot_forward.12} parent=205 // loop_body
                  _
                $region211: #{cot_forward.12} parent=205 // loop_footer
                  %s841 = sadd.s32 1, %s837
                $region212: #{cot_forward.12} parent=205 // loop_footer_branch
                  %836 = sbr.rel target = $region208
                $region213: #{cot_forward.12} parent=205 // loop_exit
                  _
                loop: start=0, step=1, limit=1
                $region214: #{cot_forward.12} parent=205 // loop_pre_header
                  _
                $region215: #{cot_forward.12} parent=205 // loop_header
                  %s846 = sphi 0, %s850
                  %p847 = scmp.ge.s32.totalorder %s846, 1
                  %s851 = sphi %s807, %s807
                  %s852 = sphi %s814, %s814
                $region216: #{cot_forward.12} parent=205 // loop_header_branch
                  %849 = sbr.rel (%p847) target = $region220
                $region217: #{cot_forward.12} parent=205 // loop_body
                  %v853 = vld [vmem:[%s851] sm:$0xf]
                  %854 = vst [vmem:[%s852] sm:$0xf] %v853
                  %v855 = vld [vmem:[%s851 + $0x4] sm:$0xf]
                  %856 = vst [vmem:[%s852 + $0x8] sm:$0xf] %v855
                $region218: #{cot_forward.12} parent=205 // loop_footer
                  %s850 = sadd.s32 1, %s846
                $region219: #{cot_forward.12} parent=205 // loop_footer_branch
                  %845 = sbr.rel target = $region215
                $region220: #{cot_forward.12} parent=205 // loop_exit
                  _
              $region206: #{cot_forward.12} parent=190 // pred_fallthru
                _
            $region191: #{cot_forward.12} parent=186 // pred_fallthru
              _
            // Predicated region
            $region192: #{cot_forward.12} parent=186 // pred_check
              _
            $region193: #{cot_forward.12} parent=186 // pred_check_branch
              %820 = sbr.rel (0) target = $region195
            $region194: #{cot_forward.12} parent=186 // pred_region
              loop: start=0, step=1, limit=1
              $region196: #{cot_forward.12} parent=194 // loop_pre_header
                _
              $region197: #{cot_forward.12} parent=194 // loop_header
                %s823 = sphi 0, %s827
                %p824 = scmp.ge.s32.totalorder %s823, 1
                %s828 = sphi %s807, %s807
                %s829 = sphi %s814, %s814
              $region198: #{cot_forward.12} parent=194 // loop_header_branch
                %826 = sbr.rel (%p824) target = $region202
              $region199: #{cot_forward.12} parent=194 // loop_body
                %v830 = vld [vmem:[%s828] sm:$0xf]
                %831 = vst [vmem:[%s829] sm:$0xf] %v830
                %v832 = vld [vmem:[%s828 + $0x4] sm:$0xf]
                %833 = vst [vmem:[%s829 + $0x8] sm:$0xf] %v832
              $region200: #{cot_forward.12} parent=194 // loop_footer
                %s827 = sadd.s32 1, %s823
              $region201: #{cot_forward.12} parent=194 // loop_footer_branch
                %822 = sbr.rel target = $region197
              $region202: #{cot_forward.12} parent=194 // loop_exit
                _
            $region195: #{cot_forward.12} parent=186 // pred_fallthru
              _
          $region187: #{cot_forward.12} parent=182 // pred_fallthru
            _
          %857 = vnop
        $region183: #{cot_forward.12} parent=158 // pred_fallthru
          _
      $region159: #{cot_forward.12} parent=5 // pred_fallthru
        _
      %p858 = scmp.le.s32.totalorder 2, %s13
      // Predicated region
      $region221: #{cot_forward.12} parent=5 // pred_check
        %p859 = pneg %p858
      $region222: #{cot_forward.12} parent=5 // pred_check_branch
        %861 = sbr.rel (%p859) target = $region224
      $region223: #{cot_forward.12} parent=5 // pred_region
        %s862 = ssub.s32 %s13, 2
        // Predicated region
        $region225: #{cot_forward.12} parent=223 // pred_check
          %p863 = pneg %p249
        $region226: #{cot_forward.12} parent=223 // pred_check_branch
          %865 = sbr.rel (%p863) target = $region228
        $region227: #{cot_forward.12} parent=223 // pred_region
          %s866 = sand.u32 %s234, 1
          %s867 = sand.u32 %s234, 1
          %s868 = smul.addr %s867, 8
          %s869 = scalar_lea.vmem [#allocation9], %s868
        $region228: #{cot_forward.12} parent=223 // pred_fallthru
          _
      $region224: #{cot_forward.12} parent=5 // pred_fallthru
        _
    $region6: #{cot_forward.12} parent=1 // loop_footer
      %s17 = sadd.s32 1, %s13
    $region7: #{cot_forward.12} parent=1 // loop_footer_branch
      %12 = sbr.rel target = $region3
    $region8: #{cot_forward.12} parent=1 // loop_exit
      _

// kernel: cot_forward.14
$region0: #{cot_forward.14}
  #allocation0 [shape = 'u32[]', space=smem, size = 0x4, offset = 0x4, fixed_abs, tag = 'smem constant byte address 0x4 - core index']
  #allocation1 [shape = 'u32[144,128]{1,0:T(1,128)}', space=vmem, size = 0x12000, scoped, tag = 'internal scratch']
  #allocation2 [shape = 'bf16[32,256]{1,0:T(16,128)(2,1)}', space=vmem, size = 0x4000, scoped, tag = 'scratch operand']
  %s0 = inlined_call_operand.vmem [shape: bf16[32,256], index: 0, kind: input, shape index: {}]
  %s1 = inlined_call_operand.vmem [shape: bf16[256,1024], index: 1, kind: input, shape index: {}]
  %s2 = inlined_call_operand.vmem [shape: f32[1,1024], index: 2, kind: input, shape index: {}]
  %s3 = inlined_call_operand.vmem [shape: f32[1,256], index: 3, kind: input, shape index: {}]
  %s4 = inlined_call_operand.vmem [shape: f32[1,256], index: 4, kind: input, shape index: {}]
  %s5 = inlined_call_operand.vmem [shape: bf16[32,1024], index: 5, kind: output, shape index: {}]
  %s6 = sld [smem:[#allocation0]]
  $region129: #{cot_forward.14} parent=0
    _
  %s8 = ssub.s32 1, %s6
  %s9 = scalar_select 0, %s8, %s6
  $region1: #{cot_forward.14} parent=0
    #allocation3 [shape = 'u8[262144]{0}', space=vmem, size = 0x40000, scoped, tag = 'input window, operand 1']
    #allocation4 [shape = 'u8[32768]{0}', space=vmem, size = 0x8000, scoped, tag = 'output window, operand 0']
    loop: start=0, step=1, limit=6
    $region2: #{cot_forward.14} parent=1 // loop_pre_header
      _
    $region3: #{cot_forward.14} parent=1 // loop_header
      %s11 = sphi 0, %s15
      %p12 = scmp.ge.s32.totalorder %s11, 6
      %s18 = sphi 0, %s37
      %s19 = sphi 0, %s33
      %s20 = sphi 0, %s29
      %s21 = sphi 0, %s18
      %s22 = sphi 0, %s19
      %s23 = sphi 0, %s20
      %s24 = sphi 0, %s21
      %s25 = sphi 0, %s22
      %s26 = sphi 0, %s23
      %s42 = sphi 0, %s44
      %s45 = sphi 0, %s42
      %s46 = sphi 0, %s45
      %s62 = sphi 0, %s46
      %s70 = sphi 0, %s72
      %s73 = sphi 0, %s70
      %s74 = sphi 0, %s73
      %s90 = sphi 0, %s74
      %s96 = sphi 0, %s98
      %s99 = sphi 0, %s96
      %s100 = sphi 0, %s99
      %s116 = sphi 0, %s100
      %s122 = sphi 0, %s124
      %s125 = sphi 0, %s122
      %s126 = sphi 0, %s125
      %s142 = sphi 0, %s126
      %s148 = sphi 0, %s150
      %s151 = sphi 0, %s148
      %s152 = sphi 0, %s151
      %s168 = sphi 0, %s152
      %s176 = sphi 0, %s178
      %s179 = sphi 0, %s176
      %s180 = sphi 0, %s179
      %s196 = sphi 0, %s180
    $region4: #{cot_forward.14} parent=1 // loop_header_branch
      %14 = sbr.rel (%p12) target = $region8
    $region5: #{cot_forward.14} parent=1 // loop_body
      %s16 = ssub.s32 %s11, 1
      %s17 = ssub.s32 %s11, 2
      %s27 = sadd.s32 1, %s20
      %p28 = scmp.ge.s32.totalorder %s27, 1
      %s29 = scalar_select %p28, 0, %s27
      %s30 = sadd.s32 1, %s19
      %s31 = scalar_select %p28, %s30, %s19
      %p32 = scmp.ge.s32.totalorder %s31, 4
      %s33 = scalar_select %p32, 0, %s31
      %s34 = sadd.s32 1, %s18
      %s35 = scalar_select %p32, %s34, %s18
      %p36 = scmp.ge.s32.totalorder %s35, 1
      %s37 = scalar_select %p36, 0, %s35
      %s38 = ssub.s32 %s18, %s37
      %s39 = ssub.s32 %s20, %s29
      %s40 = sor.u32 %s38, %s39
      %p41 = scmp.eq.s32.totalorder %s40, 0
      %s43 = sadd.s32 %s42, 1
      %s44 = scalar_select %p41, %s42, %s43
      %p47 = pneg %p41
      %p48 = scmp.eq.s32.totalorder %s11, 3
      %p49 = por %p47, %p48
      %p50 = scmp.ne.s32.totalorder %s42, %s45
      %p51 = scmp.eq.s32.totalorder %s11, 0
      %p52 = por %p50, %p51
      %p53 = scmp.ne.s32.totalorder %s42, %s45
      %p54 = scmp.eq.s32.totalorder %s16, 3
      %p55 = por %p53, %p54
      %p56 = scmp.ne.s32.totalorder %s45, %s46
      %p57 = scmp.eq.s32.totalorder %s16, 0
      %p58 = por %p56, %p57
      %p59 = scmp.ne.s32.totalorder %s45, %s46
      %p60 = scmp.eq.s32.totalorder %s17, 3
      %p61 = por %p59, %p60
      %p63 = scmp.ne.s32.totalorder %s46, %s62
      %p64 = scmp.eq.s32.totalorder %s17, 0
      %p65 = por %p63, %p64
      %s66 = ssub.s32 %s20, %s29
      %s67 = ssub.s32 %s19, %s33
      %s68 = sor.u32 %s66, %s67
      %p69 = scmp.eq.s32.totalorder %s68, 0
      %s71 = sadd.s32 %s70, 1
      %s72 = scalar_select %p69, %s70, %s71
      %p75 = pneg %p69
      %p76 = scmp.eq.s32.totalorder %s11, 3
      %p77 = por %p75, %p76
      %p78 = scmp.ne.s32.totalorder %s70, %s73
      %p79 = scmp.eq.s32.totalorder %s11, 0
      %p80 = por %p78, %p79
      %p81 = scmp.ne.s32.totalorder %s70, %s73
      %p82 = scmp.eq.s32.totalorder %s16, 3
      %p83 = por %p81, %p82
      %p84 = scmp.ne.s32.totalorder %s73, %s74
      %p85 = scmp.eq.s32.totalorder %s16, 0
      %p86 = por %p84, %p85
      %p87 = scmp.ne.s32.totalorder %s73, %s74
      %p88 = scmp.eq.s32.totalorder %s17, 3
      %p89 = por %p87, %p88
      %p91 = scmp.ne.s32.totalorder %s74, %s90
      %p92 = scmp.eq.s32.totalorder %s17, 0
      %p93 = por %p91, %p92
      %s94 = ssub.s32 %s19, %s33
      %p95 = scmp.eq.s32.totalorder %s94, 0
      %s97 = sadd.s32 %s96, 1
      %s98 = scalar_select %p95, %s96, %s97
      %p101 = pneg %p95
      %p102 = scmp.eq.s32.totalorder %s11, 3
      %p103 = por %p101, %p102
      %p104 = scmp.ne.s32.totalorder %s96, %s99
      %p105 = scmp.eq.s32.totalorder %s11, 0
      %p106 = por %p104, %p105
      %p107 = scmp.ne.s32.totalorder %s96, %s99
      %p108 = scmp.eq.s32.totalorder %s16, 3
      %p109 = por %p107, %p108
      %p110 = scmp.ne.s32.totalorder %s99, %s100
      %p111 = scmp.eq.s32.totalorder %s16, 0
      %p112 = por %p110, %p111
      %p113 = scmp.ne.s32.totalorder %s99, %s100
      %p114 = scmp.eq.s32.totalorder %s17, 3
      %p115 = por %p113, %p114
      %p117 = scmp.ne.s32.totalorder %s100, %s116
      %p118 = scmp.eq.s32.totalorder %s17, 0
      %p119 = por %p117, %p118
      %s120 = ssub.s32 %s20, %s29
      %p121 = scmp.eq.s32.totalorder %s120, 0
      %s123 = sadd.s32 %s122, 1
      %s124 = scalar_select %p121, %s122, %s123
      %p127 = pneg %p121
      %p128 = scmp.eq.s32.totalorder %s11, 3
      %p129 = por %p127, %p128
      %p130 = scmp.ne.s32.totalorder %s122, %s125
      %p131 = scmp.eq.s32.totalorder %s11, 0
      %p132 = por %p130, %p131
      %p133 = scmp.ne.s32.totalorder %s122, %s125
      %p134 = scmp.eq.s32.totalorder %s16, 3
      %p135 = por %p133, %p134
      %p136 = scmp.ne.s32.totalorder %s125, %s126
      %p137 = scmp.eq.s32.totalorder %s16, 0
      %p138 = por %p136, %p137
      %p139 = scmp.ne.s32.totalorder %s125, %s126
      %p140 = scmp.eq.s32.totalorder %s17, 3
      %p141 = por %p139, %p140
      %p143 = scmp.ne.s32.totalorder %s126, %s142
      %p144 = scmp.eq.s32.totalorder %s17, 0
      %p145 = por %p143, %p144
      %s146 = ssub.s32 %s20, %s29
      %p147 = scmp.eq.s32.totalorder %s146, 0
      %s149 = sadd.s32 %s148, 1
      %s150 = scalar_select %p147, %s148, %s149
      %p153 = pneg %p147
      %p154 = scmp.eq.s32.totalorder %s11, 3
      %p155 = por %p153, %p154
      %p156 = scmp.ne.s32.totalorder %s148, %s151
      %p157 = scmp.eq.s32.totalorder %s11, 0
      %p158 = por %p156, %p157
      %p159 = scmp.ne.s32.totalorder %s148, %s151
      %p160 = scmp.eq.s32.totalorder %s16, 3
      %p161 = por %p159, %p160
      %p162 = scmp.ne.s32.totalorder %s151, %s152
      %p163 = scmp.eq.s32.totalorder %s16, 0
      %p164 = por %p162, %p163
      %p165 = scmp.ne.s32.totalorder %s151, %s152
      %p166 = scmp.eq.s32.totalorder %s17, 3
      %p167 = por %p165, %p166
      %p169 = scmp.ne.s32.totalorder %s152, %s168
      %p170 = scmp.eq.s32.totalorder %s17, 0
      %p171 = por %p169, %p170
      %s172 = ssub.s32 %s18, %s37
      %s173 = ssub.s32 %s19, %s33
      %s174 = sor.u32 %s172, %s173
      %p175 = scmp.eq.s32.totalorder %s174, 0
      %s177 = sadd.s32 %s176, 1
      %s178 = scalar_select %p175, %s176, %s177
      %p181 = pneg %p175
      %p182 = scmp.eq.s32.totalorder %s11, 3
      %p183 = por %p181, %p182
      %p184 = scmp.ne.s32.totalorder %s176, %s179
      %p185 = scmp.eq.s32.totalorder %s11, 0
      %p186 = por %p184, %p185
      %p187 = scmp.ne.s32.totalorder %s176, %s179
      %p188 = scmp.eq.s32.totalorder %s16, 3
      %p189 = por %p187, %p188
      %p190 = scmp.ne.s32.totalorder %s179, %s180
      %p191 = scmp.eq.s32.totalorder %s16, 0
      %p192 = por %p190, %p191
      %p193 = scmp.ne.s32.totalorder %s179, %s180
      %p194 = scmp.eq.s32.totalorder %s17, 3
      %p195 = por %p193, %p194
      %p197 = scmp.ne.s32.totalorder %s180, %s196
      %p198 = scmp.eq.s32.totalorder %s17, 0
      %p199 = por %p197, %p198
      %p200 = scmp.le.s32.totalorder 1, %s11
      %p201 = scmp.lt.s32.totalorder %s11, 5
      %p202 = pnand %p200, %p201
      %p203 = pneg %p202
      // Predicated region
      $region9: #{cot_forward.14} parent=5 // pred_check
        _
      $region10: #{cot_forward.14} parent=5 // pred_check_branch
        %205 = sbr.rel (%p202) target = $region12
      $region11: #{cot_forward.14} parent=5 // pred_region
        %s206 = ssub.s32 %s11, 1
        // Predicated region
        $region13: #{cot_forward.14} parent=11 // pred_check
          %p207 = pneg %p58
        $region14: #{cot_forward.14} parent=11 // pred_check_branch
          %209 = sbr.rel (%p207) target = $region16
        $region15: #{cot_forward.14} parent=11 // pred_region
          %s210 = smul.u32 4, %s21
          %s211 = smul.u32 2, %s23
          %p212 = scmp.lt.s32.totalorder %s210, 3
          %s213 = scalar_select %p212, %s210, 3
          %p214 = scmp.lt.s32.totalorder %s211, 1
          %s215 = scalar_select %p214, %s211, 1
          %s216 = smul.addr %s213, 2
          %s217 = sadd.s32 %s215, %s216
          %s218 = smul.addr %s217, 4
          %s219 = scalar_lea.vmem %s0, %s218
          %s220 = smul.u32 4, %s21
          %s221 = smul.u32 2, %s23
        $region16: #{cot_forward.14} parent=11 // pred_fallthru
          _
        // Predicated region
        $region17: #{cot_forward.14} parent=11 // pred_check
          %p222 = pneg %p138
        $region18: #{cot_forward.14} parent=11 // pred_check_branch
          %224 = sbr.rel (%p222) target = $region20
        $region19: #{cot_forward.14} parent=11 // pred_region
          %s225 = smul.u32 2, %s23
          %p226 = scmp.lt.s32.totalorder %s225, 1
          %s227 = scalar_select %p226, %s225, 1
          %s228 = scalar_lea.vmem %s3, %s227
          %s229 = smul.u32 2, %s23
        $region20: #{cot_forward.14} parent=11 // pred_fallthru
          _
        // Predicated region
        $region21: #{cot_forward.14} parent=11 // pred_check
          %p230 = pneg %p164
        $region22: #{cot_forward.14} parent=11 // pred_check_branch
          %232 = sbr.rel (%p230) target = $region24
        $region23: #{cot_forward.14} parent=11 // pred_region
          %s233 = smul.u32 2, %s23
          %p234 = scmp.lt.s32.totalorder %s233, 1
          %s235 = scalar_select %p234, %s233, 1
          %s236 = scalar_lea.vmem %s4, %s235
          %s237 = smul.u32 2, %s23
        $region24: #{cot_forward.14} parent=11 // pred_fallthru
          _
      $region12: #{cot_forward.14} parent=5 // pred_fallthru
        _
      %p238 = scmp.lt.s32.totalorder %s11, 4
      // Predicated region
      $region25: #{cot_forward.14} parent=5 // pred_check
        %p239 = pneg %p238
      $region26: #{cot_forward.14} parent=5 // pred_check_branch
        %241 = sbr.rel (%p239) target = $region28
      $region27: #{cot_forward.14} parent=5 // pred_region
        // Predicated region
        $region29: #{cot_forward.14} parent=27 // pred_check
          %p242 = pneg %p80
        $region30: #{cot_forward.14} parent=27 // pred_check_branch
          %244 = sbr.rel (%p242) target = $region32
        $region31: #{cot_forward.14} parent=27 // pred_region
          %s245 = sand.u32 %s70, 1
          %s246 = sand.u32 %s70, 1
          %s247 = smul.addr %s246, 256
          %s248 = scalar_lea.vmem [#allocation3], %s247
          %s249 = smul.u32 32, %s20
          %s250 = smul.u32 2, %s19
          %s251 = smul.addr %s249, 8
          %s252 = sadd.s32 %s250, %s251
          %s253 = smul.addr %s252, 4
          %s254 = scalar_lea.vmem %s1, %s253
          // Predicated region
          $region33: #{cot_forward.14} parent=31 // pred_check
            _
          $region34: #{cot_forward.14} parent=31 // pred_check_branch
            %256 = sbr.rel (0) target = $region36
          $region35: #{cot_forward.14} parent=31 // pred_region
            // Predicated region
            $region37: #{cot_forward.14} parent=35 // pred_check
              _
            $region38: #{cot_forward.14} parent=35 // pred_check_branch
              %258 = sbr.rel (0) target = $region40
            $region39: #{cot_forward.14} parent=35 // pred_region
              // Predicated region
              $region52: #{cot_forward.14} parent=39 // pred_check
                _
              $region53: #{cot_forward.14} parent=39 // pred_check_branch
                %335 = sbr.rel (0) target = $region55
              $region54: #{cot_forward.14} parent=39 // pred_region
                loop: start=0, step=1, limit=1
                $region56: #{cot_forward.14} parent=54 // loop_pre_header
                  _
                $region57: #{cot_forward.14} parent=54 // loop_header
                  %s337 = sphi 0, %s341
                  %p338 = scmp.ge.s32.totalorder %s337, 1
                  %s342 = sphi %s254, %s254
                  %s343 = sphi %s248, %s248
                $region58: #{cot_forward.14} parent=54 // loop_header_branch
                  %340 = sbr.rel (%p338) target = $region62
                $region59: #{cot_forward.14} parent=54 // loop_body
                  %v344 = vld [vmem:[%s342] sm:$0xff]
                  %345 = vst [vmem:[%s343] sm:$0xff] %v344
                  %v346 = vld [vmem:[%s342 + $0x20] sm:$0xff]
                  %347 = vst [vmem:[%s343 + $0x8] sm:$0xff] %v346
                  %v348 = vld [vmem:[%s342 + $0x40] sm:$0xff]
                  %349 = vst [vmem:[%s343 + $0x10] sm:$0xff] %v348
                  %v350 = vld [vmem:[%s342 + $0x60] sm:$0xff]
                  %351 = vst [vmem:[%s343 + $0x18] sm:$0xff] %v350
                  %v352 = vld [vmem:[%s342 + $0x80] sm:$0xff]
                  %353 = vst [vmem:[%s343 + $0x20] sm:$0xff] %v352
                  %v354 = vld [vmem:[%s342 + $0xa0] sm:$0xff]
                  %355 = vst [vmem:[%s343 + $0x28] sm:$0xff] %v354
                  %v356 = vld [vmem:[%s342 + $0xc0] sm:$0xff]
                  %357 = vst [vmem:[%s343 + $0x30] sm:$0xff] %v356
                  %v358 = vld [vmem:[%s342 + $0xe0] sm:$0xff]
                  %359 = vst [vmem:[%s343 + $0x38] sm:$0xff] %v358
                  %v360 = vld [vmem:[%s342 + $0x100] sm:$0xff]
                  %361 = vst [vmem:[%s343 + $0x40] sm:$0xff] %v360
                  %v362 = vld [vmem:[%s342 + $0x120] sm:$0xff]
                  %363 = vst [vmem:[%s343 + $0x48] sm:$0xff] %v362
                  %v364 = vld [vmem:[%s342 + $0x140] sm:$0xff]
                  %365 = vst [vmem:[%s343 + $0x50] sm:$0xff] %v364
                  %v366 = vld [vmem:[%s342 + $0x160] sm:$0xff]
                  %367 = vst [vmem:[%s343 + $0x58] sm:$0xff] %v366
                  %v368 = vld [vmem:[%s342 + $0x180] sm:$0xff]
                  %369 = vst [vmem:[%s343 + $0x60] sm:$0xff] %v368
                  %v370 = vld [vmem:[%s342 + $0x1a0] sm:$0xff]
                  %371 = vst [vmem:[%s343 + $0x68] sm:$0xff] %v370
                  %v372 = vld [vmem:[%s342 + $0x1c0] sm:$0xff]
                  %373 = vst [vmem:[%s343 + $0x70] sm:$0xff] %v372
                  %v374 = vld [vmem:[%s342 + $0x1e0] sm:$0xff]
                  %375 = vst [vmem:[%s343 + $0x78] sm:$0xff] %v374
                  %v376 = vld [vmem:[%s342 + $0x200] sm:$0xff]
                  %377 = vst [vmem:[%s343 + $0x80] sm:$0xff] %v376
                  %v378 = vld [vmem:[%s342 + $0x220] sm:$0xff]
                  %379 = vst [vmem:[%s343 + $0x88] sm:$0xff] %v378
                  %v380 = vld [vmem:[%s342 + $0x240] sm:$0xff]
                  %381 = vst [vmem:[%s343 + $0x90] sm:$0xff] %v380
                  %v382 = vld [vmem:[%s342 + $0x260] sm:$0xff]
                  %383 = vst [vmem:[%s343 + $0x98] sm:$0xff] %v382
                  %v384 = vld [vmem:[%s342 + $0x280] sm:$0xff]
                  %385 = vst [vmem:[%s343 + $0xa0] sm:$0xff] %v384
                  %v386 = vld [vmem:[%s342 + $0x2a0] sm:$0xff]
                  %387 = vst [vmem:[%s343 + $0xa8] sm:$0xff] %v386
                  %v388 = vld [vmem:[%s342 + $0x2c0] sm:$0xff]
                  %389 = vst [vmem:[%s343 + $0xb0] sm:$0xff] %v388
                  %v390 = vld [vmem:[%s342 + $0x2e0] sm:$0xff]
                  %391 = vst [vmem:[%s343 + $0xb8] sm:$0xff] %v390
                  %v392 = vld [vmem:[%s342 + $0x300] sm:$0xff]
                  %393 = vst [vmem:[%s343 + $0xc0] sm:$0xff] %v392
                  %v394 = vld [vmem:[%s342 + $0x320] sm:$0xff]
                  %395 = vst [vmem:[%s343 + $0xc8] sm:$0xff] %v394
                  %v396 = vld [vmem:[%s342 + $0x340] sm:$0xff]
                  %397 = vst [vmem:[%s343 + $0xd0] sm:$0xff] %v396
                  %v398 = vld [vmem:[%s342 + $0x360] sm:$0xff]
                  %399 = vst [vmem:[%s343 + $0xd8] sm:$0xff] %v398
                  %v400 = vld [vmem:[%s342 + $0x380] sm:$0xff]
                  %401 = vst [vmem:[%s343 + $0xe0] sm:$0xff] %v400
                  %v402 = vld [vmem:[%s342 + $0x3a0] sm:$0xff]
                  %403 = vst [vmem:[%s343 + $0xe8] sm:$0xff] %v402
                  %v404 = vld [vmem:[%s342 + $0x3c0] sm:$0xff]
                  %405 = vst [vmem:[%s343 + $0xf0] sm:$0xff] %v404
                  %v406 = vld [vmem:[%s342 + $0x3e0] sm:$0xff]
                  %407 = vst [vmem:[%s343 + $0xf8] sm:$0xff] %v406
                $region60: #{cot_forward.14} parent=54 // loop_footer
                  %s341 = sadd.s32 1, %s337
                $region61: #{cot_forward.14} parent=54 // loop_footer_branch
                  %336 = sbr.rel target = $region57
                $region62: #{cot_forward.14} parent=54 // loop_exit
                  _
              $region55: #{cot_forward.14} parent=39 // pred_fallthru
                _
              // Predicated region
              $region63: #{cot_forward.14} parent=39 // pred_check
                _
              $region64: #{cot_forward.14} parent=39 // pred_check_branch
                %409 = sbr.rel target = $region66
              $region65: #{cot_forward.14} parent=39 // pred_region
                _
              $region66: #{cot_forward.14} parent=39 // pred_fallthru
                _
            $region40: #{cot_forward.14} parent=35 // pred_fallthru
              _
            // Predicated region
            $region41: #{cot_forward.14} parent=35 // pred_check
              _
            $region42: #{cot_forward.14} parent=35 // pred_check_branch
              %260 = sbr.rel target = $region44
            $region43: #{cot_forward.14} parent=35 // pred_region
              loop: start=0, step=1, limit=1
              $region45: #{cot_forward.14} parent=43 // loop_pre_header
                _
              $region46: #{cot_forward.14} parent=43 // loop_header
                %s263 = sphi 0, %s267
                %p264 = scmp.ge.s32.totalorder %s263, 1
                %s268 = sphi %s254, %s254
                %s269 = sphi %s248, %s248
              $region47: #{cot_forward.14} parent=43 // loop_header_branch
                %266 = sbr.rel (%p264) target = $region51
              $region48: #{cot_forward.14} parent=43 // loop_body
                %v270 = vld [vmem:[%s268] sm:$0xff]
                %271 = vst [vmem:[%s269] sm:$0xff] %v270
                %v272 = vld [vmem:[%s268 + $0x20] sm:$0xff]
                %273 = vst [vmem:[%s269 + $0x8] sm:$0xff] %v272
                %v274 = vld [vmem:[%s268 + $0x40] sm:$0xff]
                %275 = vst [vmem:[%s269 + $0x10] sm:$0xff] %v274
                %v276 = vld [vmem:[%s268 + $0x60] sm:$0xff]
                %277 = vst [vmem:[%s269 + $0x18] sm:$0xff] %v276
                %v278 = vld [vmem:[%s268 + $0x80] sm:$0xff]
                %279 = vst [vmem:[%s269 + $0x20] sm:$0xff] %v278
                %v280 = vld [vmem:[%s268 + $0xa0] sm:$0xff]
                %281 = vst [vmem:[%s269 + $0x28] sm:$0xff] %v280
                %v282 = vld [vmem:[%s268 + $0xc0] sm:$0xff]
                %283 = vst [vmem:[%s269 + $0x30] sm:$0xff] %v282
                %v284 = vld [vmem:[%s268 + $0xe0] sm:$0xff]
                %285 = vst [vmem:[%s269 + $0x38] sm:$0xff] %v284
                %v286 = vld [vmem:[%s268 + $0x100] sm:$0xff]
                %287 = vst [vmem:[%s269 + $0x40] sm:$0xff] %v286
                %v288 = vld [vmem:[%s268 + $0x120] sm:$0xff]
                %289 = vst [vmem:[%s269 + $0x48] sm:$0xff] %v288
                %v290 = vld [vmem:[%s268 + $0x140] sm:$0xff]
                %291 = vst [vmem:[%s269 + $0x50] sm:$0xff] %v290
                %v292 = vld [vmem:[%s268 + $0x160] sm:$0xff]
                %293 = vst [vmem:[%s269 + $0x58] sm:$0xff] %v292
                %v294 = vld [vmem:[%s268 + $0x180] sm:$0xff]
                %295 = vst [vmem:[%s269 + $0x60] sm:$0xff] %v294
                %v296 = vld [vmem:[%s268 + $0x1a0] sm:$0xff]
                %297 = vst [vmem:[%s269 + $0x68] sm:$0xff] %v296
                %v298 = vld [vmem:[%s268 + $0x1c0] sm:$0xff]
                %299 = vst [vmem:[%s269 + $0x70] sm:$0xff] %v298
                %v300 = vld [vmem:[%s268 + $0x1e0] sm:$0xff]
                %301 = vst [vmem:[%s269 + $0x78] sm:$0xff] %v300
                %v302 = vld [vmem:[%s268 + $0x200] sm:$0xff]
                %303 = vst [vmem:[%s269 + $0x80] sm:$0xff] %v302
                %v304 = vld [vmem:[%s268 + $0x220] sm:$0xff]
                %305 = vst [vmem:[%s269 + $0x88] sm:$0xff] %v304
                %v306 = vld [vmem:[%s268 + $0x240] sm:$0xff]
                %307 = vst [vmem:[%s269 + $0x90] sm:$0xff] %v306
                %v308 = vld [vmem:[%s268 + $0x260] sm:$0xff]
                %309 = vst [vmem:[%s269 + $0x98] sm:$0xff] %v308
                %v310 = vld [vmem:[%s268 + $0x280] sm:$0xff]
                %311 = vst [vmem:[%s269 + $0xa0] sm:$0xff] %v310
                %v312 = vld [vmem:[%s268 + $0x2a0] sm:$0xff]
                %313 = vst [vmem:[%s269 + $0xa8] sm:$0xff] %v312
                %v314 = vld [vmem:[%s268 + $0x2c0] sm:$0xff]
                %315 = vst [vmem:[%s269 + $0xb0] sm:$0xff] %v314
                %v316 = vld [vmem:[%s268 + $0x2e0] sm:$0xff]
                %317 = vst [vmem:[%s269 + $0xb8] sm:$0xff] %v316
                %v318 = vld [vmem:[%s268 + $0x300] sm:$0xff]
                %319 = vst [vmem:[%s269 + $0xc0] sm:$0xff] %v318
                %v320 = vld [vmem:[%s268 + $0x320] sm:$0xff]
                %321 = vst [vmem:[%s269 + $0xc8] sm:$0xff] %v320
                %v322 = vld [vmem:[%s268 + $0x340] sm:$0xff]
                %323 = vst [vmem:[%s269 + $0xd0] sm:$0xff] %v322
                %v324 = vld [vmem:[%s268 + $0x360] sm:$0xff]
                %325 = vst [vmem:[%s269 + $0xd8] sm:$0xff] %v324
                %v326 = vld [vmem:[%s268 + $0x380] sm:$0xff]
                %327 = vst [vmem:[%s269 + $0xe0] sm:$0xff] %v326
                %v328 = vld [vmem:[%s268 + $0x3a0] sm:$0xff]
                %329 = vst [vmem:[%s269 + $0xe8] sm:$0xff] %v328
                %v330 = vld [vmem:[%s268 + $0x3c0] sm:$0xff]
                %331 = vst [vmem:[%s269 + $0xf0] sm:$0xff] %v330
                %v332 = vld [vmem:[%s268 + $0x3e0] sm:$0xff]
                %333 = vst [vmem:[%s269 + $0xf8] sm:$0xff] %v332
              $region49: #{cot_forward.14} parent=43 // loop_footer
                %s267 = sadd.s32 1, %s263
              $region50: #{cot_forward.14} parent=43 // loop_footer_branch
                %262 = sbr.rel target = $region46
              $region51: #{cot_forward.14} parent=43 // loop_exit
                _
            $region44: #{cot_forward.14} parent=35 // pred_fallthru
              _
          $region36: #{cot_forward.14} parent=31 // pred_fallthru
            _
          %410 = vnop
        $region32: #{cot_forward.14} parent=27 // pred_fallthru
          _
        // Predicated region
        $region67: #{cot_forward.14} parent=27 // pred_check
          %p411 = pneg %p106
        $region68: #{cot_forward.14} parent=27 // pred_check_branch
          %413 = sbr.rel (%p411) target = $region70
        $region69: #{cot_forward.14} parent=27 // pred_region
          %s414 = smul.u32 2, %s19
          %p415 = scmp.lt.s32.totalorder %s414, 7
          %s416 = scalar_select %p415, %s414, 7
          %s417 = scalar_lea.vmem %s2, %s416
          %s418 = smul.u32 2, %s19
        $region70: #{cot_forward.14} parent=27 // pred_fallthru
          _
      $region28: #{cot_forward.14} parent=5 // pred_fallthru
        _
      %p419 = scmp.le.s32.totalorder 1, %s11
      %p420 = scmp.lt.s32.totalorder %s11, 5
      %p421 = pnand %p419, %p420
      %p422 = pneg %p421
      // Predicated region
      $region71: #{cot_forward.14} parent=5 // pred_check
        _
      $region72: #{cot_forward.14} parent=5 // pred_check_branch
        %424 = sbr.rel (%p421) target = $region74
      $region73: #{cot_forward.14} parent=5 // pred_region
        %s425 = ssub.s32 %s11, 1
        %s426 = sand.u32 %s73, 1
        %s427 = sand.u32 %s73, 1
        %s428 = smul.addr %s427, 256
        %s429 = scalar_lea.vmem [#allocation3], %s428
        // Predicated region
        $region75: #{cot_forward.14} parent=73 // pred_check
          %p430 = pneg %p86
        $region76: #{cot_forward.14} parent=73 // pred_check_branch
          %432 = sbr.rel (%p430) target = $region78
        $region77: #{cot_forward.14} parent=73 // pred_region
          _
        $region78: #{cot_forward.14} parent=73 // pred_fallthru
          _
        %s433 = smul.u32 4, %s21
        %s434 = smul.u32 2, %s23
        %p435 = scmp.lt.s32.totalorder %s433, 3
        %s436 = scalar_select %p435, %s433, 3
        %p437 = scmp.lt.s32.totalorder %s434, 1
        %s438 = scalar_select %p437, %s434, 1
        %s439 = smul.addr %s436, 2
        %s440 = sadd.s32 %s438, %s439
        %s441 = smul.addr %s440, 4
        %s442 = scalar_lea.vmem %s0, %s441
        %p443 = pneg %p58
        %p444 = pneg %p55
        %s445 = sand.u32 %s73, 1
        %s446 = sand.u32 %s73, 1
        %s447 = smul.addr %s446, 256
        %s448 = scalar_lea.vmem [#allocation3], %s447
        %p449 = pneg %p86
        %p450 = pneg %p83
        %s451 = smul.u32 2, %s22
        %p452 = scmp.lt.s32.totalorder %s451, 7
        %s453 = scalar_select %p452, %s451, 7
        %s454 = scalar_lea.vmem %s2, %s453
        %p455 = pneg %p112
        %p456 = pneg %p109
        %s457 = smul.u32 2, %s23
        %p458 = scmp.lt.s32.totalorder %s457, 1
        %s459 = scalar_select %p458, %s457, 1
        %s460 = scalar_lea.vmem %s3, %s459
        %p461 = pneg %p138
        %p462 = pneg %p135
        %s463 = smul.u32 2, %s23
        %p464 = scmp.lt.s32.totalorder %s463, 1
        %s465 = scalar_select %p464, %s463, 1
        %s466 = scalar_lea.vmem %s4, %s465
        %p467 = pneg %p164
        %p468 = pneg %p161
        %p469 = pneg %p192
        %p470 = pneg %p189
        %s471 = sand.u32 %s179, 1
        %s472 = sand.u32 %s179, 1
        %s473 = smul.addr %s472, 32
        %s474 = scalar_lea.vmem [#allocation4], %s473
        %s475 = smul.u32 4, %s21
        %s476 = smul.u32 2, %s23
        %p477 = scmp.lt.s32.totalorder %s475, 3
        %s478 = scalar_select %p477, %s475, 3
        %p479 = scmp.lt.s32.totalorder %s476, 1
        %s480 = scalar_select %p479, %s476, 1
        %s481 = smul.addr %s478, 2
        %s482 = sadd.s32 %s480, %s481
        %s483 = smul.addr %s482, 4
        %s484 = scalar_lea.vmem %s0, %s483
        %s485 = smul.u32 4, %s21
        %s486 = smul.u32 2, %s23
        %s487 = smul.u32 32, %s23
        %s488 = smul.u32 2, %s22
        %s489 = smul.u32 2, %s22
        %p490 = scmp.lt.s32.totalorder %s489, 7
        %s491 = scalar_select %p490, %s489, 7
        %s492 = scalar_lea.vmem %s2, %s491
        %s493 = smul.u32 2, %s22
        %s494 = smul.u32 2, %s23
        %p495 = scmp.lt.s32.totalorder %s494, 1
        %s496 = scalar_select %p495, %s494, 1
        %s497 = scalar_lea.vmem %s3, %s496
        %s498 = smul.u32 2, %s23
        %s499 = smul.u32 2, %s23
        %p500 = scmp.lt.s32.totalorder %s499, 1
        %s501 = scalar_select %p500, %s499, 1
        %s502 = scalar_lea.vmem %s4, %s501
        %s503 = smul.u32 2, %s23
        %s504 = smul.u32 4, %s21
        %s505 = smul.u32 2, %s22
        %p506 = scmp.eq.s32.totalorder %s22, 0
        // Predicated region
        $region79: #{cot_forward.14} parent=73 // pred_check
          %p507 = pneg %p506
        $region80: #{cot_forward.14} parent=73 // pred_check_branch
          %509 = sbr.rel (%p507) target = $region82
        $region81: #{cot_forward.14} parent=73 // pred_region
          %v510 = vld [vmem:[%s484] sm:$0xff]
          %v511 = vld [vmem:[%s484 + $0x8] sm:$0xff]
          %v512 = vld [vmem:[%s484 + $0x10] sm:$0xff]
          %v513 = vld [vmem:[%s484 + $0x18] sm:$0xff]
          %v514 = vunpack.c.l.bf16 %v510
          %v515 = vunpack.c.h.bf16 %v510
          %v516 = vunpack.c.l.bf16 %v511
          %v517 = vunpack.c.h.bf16 %v511
          %v518 = vunpack.c.l.bf16 %v512
          %v519 = vunpack.c.h.bf16 %v512
          %v520 = vunpack.c.l.bf16 %v513
          %v521 = vunpack.c.h.bf16 %v513
          %v522 = vadd.f32 %v514, %v515
          %523 = vadd.xlane.f32.xlu0 %v522
          %v524 = vpop.xlane.xlu0 %523
          %v525 = vadd.f32 %v516, %v517
          %526 = vadd.xlane.f32.xlu0 %v525
          %v527 = vpop.xlane.xlu0 %526
          %v528 = vadd.f32 %v518, %v519
          %529 = vadd.xlane.f32.xlu0 %v528
          %v530 = vpop.xlane.xlu0 %529
          %v531 = vadd.f32 %v520, %v521
          %532 = vadd.xlane.f32.xlu0 %v531
          %v533 = vpop.xlane.xlu0 %532
          %v534 = vrcp.pop 256.0
          %v535 = vmul.f32 %v524, %v534
          %v536 = vmul.f32 %v527, %v534
          %v537 = vmul.f32 %v530, %v534
          %v538 = vmul.f32 %v533, %v534
          %v539 = vsub.f32 %v514, %v535
          %v540 = vsub.f32 %v515, %v535
          %v541 = vsub.f32 %v516, %v536
          %v542 = vsub.f32 %v517, %v536
          %v543 = vsub.f32 %v518, %v537
          %v544 = vsub.f32 %v519, %v537
          %v545 = vsub.f32 %v520, %v538
          %v546 = vsub.f32 %v521, %v538
          %v547 = vmul.f32 %v539, %v539
          %v548 = vmul.f32 %v540, %v540
          %v549 = vmul.f32 %v541, %v541
          %v550 = vmul.f32 %v542, %v542
          %v551 = vmul.f32 %v543, %v543
          %v552 = vmul.f32 %v544, %v544
          %v553 = vmul.f32 %v545, %v545
          %v554 = vmul.f32 %v546, %v546
          %v555 = vadd.f32 %v547, %v548
          %556 = vadd.xlane.f32.xlu0 %v555
          %v557 = vpop.xlane.xlu0 %556
          %v558 = vadd.f32 %v549, %v550
          %559 = vadd.xlane.f32.xlu0 %v558
          %v560 = vpop.xlane.xlu0 %559
          %v561 = vadd.f32 %v551, %v552
          %562 = vadd.xlane.f32.xlu0 %v561
          %v563 = vpop.xlane.xlu0 %562
          %v564 = vadd.f32 %v553, %v554
          %565 = vadd.xlane.f32.xlu0 %v564
          %v566 = vpop.xlane.xlu0 %565
          %v567 = vmul.f32 %v557, %v534
          %v568 = vmul.f32 %v560, %v534
          %v569 = vmul.f32 %v563, %v534
          %v570 = vmul.f32 %v566, %v534
          %v571 = vadd.f32 %v567, 1e-05
          %v572 = vadd.f32 %v568, 1e-05
          %v573 = vadd.f32 %v569, 1e-05
          %v574 = vadd.f32 %v570, 1e-05
          %v575 = vrsqrt.pop %v571
          %v576 = vrsqrt.pop %v572
          %v577 = vrsqrt.pop %v573
          %v578 = vrsqrt.pop %v574
          %v579 = vmul.f32 %v539, %v575
          %v580 = vmul.f32 %v540, %v575
          %v581 = vmul.f32 %v541, %v576
          %v582 = vmul.f32 %v542, %v576
          %v583 = vmul.f32 %v543, %v577
          %v584 = vmul.f32 %v544, %v577
          %v585 = vmul.f32 %v545, %v578
          %v586 = vmul.f32 %v546, %v578
          %v587 = vld [vmem:[%s497] sm:$0x3]
          %v589 = vlaneseq
          %v590 = vshrl.u32 %v589, 7
          %v591 = vsub.s32 0, %v590
          %v592 = vrot.slane %v587, %v591
          %v593 = vlaneseq
          %v594 = vshrl.u32 %v593, 7
          %v595 = vsub.s32 1, %v594
          %v596 = vrot.slane %v587, %v595
          %v599 = vmul.f32 %v579, %v592
          %v600 = vmul.f32 %v580, %v596
          %v601 = vmul.f32 %v581, %v592
          %v602 = vmul.f32 %v582, %v596
          %v603 = vmul.f32 %v583, %v592
          %v604 = vmul.f32 %v584, %v596
          %v605 = vmul.f32 %v585, %v592
          %v606 = vmul.f32 %v586, %v596
          %v607 = vld [vmem:[%s502] sm:$0x3]
          %v609 = vlaneseq
          %v610 = vshrl.u32 %v609, 7
          %v611 = vsub.s32 0, %v610
          %v612 = vrot.slane %v607, %v611
          %v613 = vlaneseq
          %v614 = vshrl.u32 %v613, 7
          %v615 = vsub.s32 1, %v614
          %v616 = vrot.slane %v607, %v615
          %v619 = vadd.f32 %v599, %v612
          %v620 = vadd.f32 %v600, %v616
          %v621 = vadd.f32 %v601, %v612
          %v622 = vadd.f32 %v602, %v616
          %v623 = vadd.f32 %v603, %v612
          %v624 = vadd.f32 %v604, %v616
          %v625 = vadd.f32 %v605, %v612
          %v626 = vadd.f32 %v606, %v616
          %v627 = vpack.c.bf16 %v621, %v619
          %v628 = vpack.c.bf16 %v622, %v620
          %v629 = vpack.c.bf16 %v625, %v623
          %v630 = vpack.c.bf16 %v626, %v624
          %631 = vst [vmem:[#allocation2] sm:$0xff] %v627
          %632 = vst [vmem:[#allocation2 + $0x8] sm:$0xff] %v628
          %633 = vst [vmem:[#allocation2 + $0x10] sm:$0xff] %v629
          %634 = vst [vmem:[#allocation2 + $0x18] sm:$0xff] %v630
        $region82: #{cot_forward.14} parent=73 // pred_fallthru
          _
        %v635 = vld [vmem:[#allocation2] sm:$0xff]
        %v636 = vld [vmem:[#allocation2 + $0x8] sm:$0xff]
        %v637 = vld [vmem:[#allocation2 + $0x10] sm:$0xff]
        %v638 = vld [vmem:[#allocation2 + $0x18] sm:$0xff]
        %v639 = vld [vmem:[%s429] sm:$0xff]
        %v640 = vld [vmem:[%s429 + $0x8] sm:$0xff]
        %v641 = vld [vmem:[%s429 + $0x10] sm:$0xff]
        %v642 = vld [vmem:[%s429 + $0x18] sm:$0xff]
        %v643 = vld [vmem:[%s429 + $0x20] sm:$0xff]
        %v644 = vld [vmem:[%s429 + $0x28] sm:$0xff]
        %v645 = vld [vmem:[%s429 + $0x30] sm:$0xff]
        %v646 = vld [vmem:[%s429 + $0x38] sm:$0xff]
        %v647 = vld [vmem:[%s429 + $0x40] sm:$0xff]
        %v648 = vld [vmem:[%s429 + $0x48] sm:$0xff]
        %v649 = vld [vmem:[%s429 + $0x50] sm:$0xff]
        %v650 = vld [vmem:[%s429 + $0x58] sm:$0xff]
        %v651 = vld [vmem:[%s429 + $0x60] sm:$0xff]
        %v652 = vld [vmem:[%s429 + $0x68] sm:$0xff]
        %v653 = vld [vmem:[%s429 + $0x70] sm:$0xff]
        %v654 = vld [vmem:[%s429 + $0x78] sm:$0xff]
        %v655 = vld [vmem:[%s429 + $0x80] sm:$0xff]
        %v656 = vld [vmem:[%s429 + $0x88] sm:$0xff]
        %v657 = vld [vmem:[%s429 + $0x90] sm:$0xff]
        %v658 = vld [vmem:[%s429 + $0x98] sm:$0xff]
        %v659 = vld [vmem:[%s429 + $0xa0] sm:$0xff]
        %v660 = vld [vmem:[%s429 + $0xa8] sm:$0xff]
        %v661 = vld [vmem:[%s429 + $0xb0] sm:$0xff]
        %v662 = vld [vmem:[%s429 + $0xb8] sm:$0xff]
        %v663 = vld [vmem:[%s429 + $0xc0] sm:$0xff]
        %v664 = vld [vmem:[%s429 + $0xc8] sm:$0xff]
        %v665 = vld [vmem:[%s429 + $0xd0] sm:$0xff]
        %v666 = vld [vmem:[%s429 + $0xd8] sm:$0xff]
        %v667 = vld [vmem:[%s429 + $0xe0] sm:$0xff]
        %v668 = vld [vmem:[%s429 + $0xe8] sm:$0xff]
        %v669 = vld [vmem:[%s429 + $0xf0] sm:$0xff]
        %v670 = vld [vmem:[%s429 + $0xf8] sm:$0xff]
        %v671 = vld [vmem:[%s492] sm:$0x3]
        %v673 = vlaneseq
        %v674 = vshrl.u32 %v673, 7
        %v675 = vsub.s32 0, %v674
        %v676 = vrot.slane %v671, %v675
        %v677 = vlaneseq
        %v678 = vshrl.u32 %v677, 7
        %v679 = vsub.s32 1, %v678
        %v680 = vrot.slane %v671, %v679
        %v715 = vunpack.c.l.b16 %v639
        %v716 = vunpack.c.h.b16 %v639
        %v717 = vunpack.c.l.b16 %v640
        %v718 = vunpack.c.h.b16 %v640
        %v719 = vunpack.c.l.b16 %v641
        %v720 = vunpack.c.h.b16 %v641
        %v721 = vunpack.c.l.b16 %v642
        %v722 = vunpack.c.h.b16 %v642
        %v723 = vunpack.c.l.b16 %v643
        %v724 = vunpack.c.h.b16 %v643
        %v725 = vunpack.c.l.b16 %v644
        %v726 = vunpack.c.h.b16 %v644
        %v727 = vunpack.c.l.b16 %v645
        %v728 = vunpack.c.h.b16 %v645
        %v729 = vunpack.c.l.b16 %v646
        %v730 = vunpack.c.h.b16 %v646
        %v731 = vunpack.c.l.b16 %v647
        %v732 = vunpack.c.h.b16 %v647
        %v733 = vunpack.c.l.b16 %v648
        %v734 = vunpack.c.h.b16 %v648
        %v735 = vunpack.c.l.b16 %v649
        %v736 = vunpack.c.h.b16 %v649
        %v737 = vunpack.c.l.b16 %v650
        %v738 = vunpack.c.h.b16 %v650
        %v739 = vunpack.c.l.b16 %v651
        %v740 = vunpack.c.h.b16 %v651
        %v741 = vunpack.c.l.b16 %v652
        %v742 = vunpack.c.h.b16 %v652
        %v743 = vunpack.c.l.b16 %v653
        %v744 = vunpack.c.h.b16 %v653
        %v745 = vunpack.c.l.b16 %v654
        %v746 = vunpack.c.h.b16 %v654
        %v747 = vunpack.c.l.b16 %v655
        %v748 = vunpack.c.h.b16 %v655
        %v749 = vunpack.c.l.b16 %v656
        %v750 = vunpack.c.h.b16 %v656
        %v751 = vunpack.c.l.b16 %v657
        %v752 = vunpack.c.h.b16 %v657
        %v753 = vunpack.c.l.b16 %v658
        %v754 = vunpack.c.h.b16 %v658
        %v755 = vunpack.c.l.b16 %v659
        %v756 = vunpack.c.h.b16 %v659
        %v757 = vunpack.c.l.b16 %v660
        %v758 = vunpack.c.h.b16 %v660
        %v759 = vunpack.c.l.b16 %v661
        %v760 = vunpack.c.h.b16 %v661
        %v761 = vunpack.c.l.b16 %v662
        %v762 = vunpack.c.h.b16 %v662
        %v763 = vunpack.c.l.b16 %v663
        %v764 = vunpack.c.h.b16 %v663
        %v765 = vunpack.c.l.b16 %v664
        %v766 = vunpack.c.h.b16 %v664
        %v767 = vunpack.c.l.b16 %v665
        %v768 = vunpack.c.h.b16 %v665
        %v769 = vunpack.c.l.b16 %v666
        %v770 = vunpack.c.h.b16 %v666
        %v771 = vunpack.c.l.b16 %v667
        %v772 = vunpack.c.h.b16 %v667
        %v773 = vunpack.c.l.b16 %v668
        %v774 = vunpack.c.h.b16 %v668
        %v775 = vunpack.c.l.b16 %v669
        %v776 = vunpack.c.h.b16 %v669
        %v777 = vunpack.c.l.b16 %v670
        %v778 = vunpack.c.h.b16 %v670
        %v779 = vpack.c.b16 %v717, %v715
        %v780 = vpack.c.b16 %v718, %v716
        %v781 = vpack.c.b16 %v721, %v719
        %v782 = vpack.c.b16 %v722, %v720
        %v783 = vpack.c.b16 %v725, %v723
        %v784 = vpack.c.b16 %v726, %v724
        %v785 = vpack.c.b16 %v729, %v727
        %v786 = vpack.c.b16 %v730, %v728
        %v787 = vpack.c.b16 %v733, %v731
        %v788 = vpack.c.b16 %v734, %v732
        %v789 = vpack.c.b16 %v737, %v735
        %v790 = vpack.c.b16 %v738, %v736
        %v791 = vpack.c.b16 %v741, %v739
        %v792 = vpack.c.b16 %v742, %v740
        %v793 = vpack.c.b16 %v745, %v743
        %v794 = vpack.c.b16 %v746, %v744
        %v795 = vpack.c.b16 %v749, %v747
        %v796 = vpack.c.b16 %v750, %v748
        %v797 = vpack.c.b16 %v753, %v751
        %v798 = vpack.c.b16 %v754, %v752
        %v799 = vpack.c.b16 %v757, %v755
        %v800 = vpack.c.b16 %v758, %v756
        %v801 = vpack.c.b16 %v761, %v759
        %v802 = vpack.c.b16 %v762, %v760
        %v803 = vpack.c.b16 %v765, %v763
        %v804 = vpack.c.b16 %v766, %v764
        %v805 = vpack.c.b16 %v769, %v767
        %v806 = vpack.c.b16 %v770, %v768
        %v807 = vpack.c.b16 %v773, %v771
        %v808 = vpack.c.b16 %v774, %v772
        %v809 = vpack.c.b16 %v777, %v775
        %v810 = vpack.c.b16 %v778, %v776
        %843 = vmatprep.subr.bf16.mxu0 %v780
        %844 = vmatpush1.bf16.msra.mxu0 %v779
        %845 = vmatprep.subr.bf16.mxu0 %v782
        %846 = vmatpush1.bf16.msra.mxu0 %v781
        %847 = vmatprep.subr.bf16.mxu0 %v784
        %848 = vmatpush1.bf16.msra.mxu0 %v783
        %849 = vmatprep.subr.bf16.mxu0 %v786
        %850 = vmatpush1.bf16.msra.mxu0 %v785
        %851 = vmatprep.subr.bf16.mxu0 %v788
        %852 = vmatpush1.bf16.msra.mxu0 %v787
        %853 = vmatprep.subr.bf16.mxu0 %v790
        %854 = vmatpush1.bf16.msra.mxu0 %v789
        %855 = vmatprep.subr.bf16.mxu0 %v792
        %856 = vmatpush1.bf16.msra.mxu0 %v791
        %857 = vmatprep.subr.bf16.mxu0 %v794
        %858 = vmatpush1.bf16.msra.mxu0 %v793
        %859 = vmatprep.subr.bf16.mxu0 %v796
        %860 = vmatpush1.bf16.msra.mxu0 %v795
        %861 = vmatprep.subr.bf16.mxu0 %v798
        %862 = vmatpush1.bf16.msra.mxu0 %v797
        %863 = vmatprep.subr.bf16.mxu0 %v800
        %864 = vmatpush1.bf16.msra.mxu0 %v799
        %865 = vmatprep.subr.bf16.mxu0 %v802
        %866 = vmatpush1.bf16.msra.mxu0 %v801
        %867 = vmatprep.subr.bf16.mxu0 %v804
        %868 = vmatpush1.bf16.msra.mxu0 %v803
        %869 = vmatprep.subr.bf16.mxu0 %v806
        %870 = vmatpush1.bf16.msra.mxu0 %v805
        %871 = vmatprep.subr.bf16.mxu0 %v808
        %872 = vmatpush1.bf16.msra.mxu0 %v807
        %873 = vmatprep.subr.bf16.mxu0 %v810
        %874 = vmatpush1.bf16.msra.mxu0 %v809
        %875 = vmatprep.mubr.bf16.mxu0 %v636
        %876 = vmatmul.mubr.bf16.gmra.mrb[0].mxu0 %v635
        %v877 = vpop.f32.mrb[0].mxu0
        %v878 = vadd.f32 %v676, %v877
        %v879 = vpop.f32.mrb[0].mxu0
        %v880 = vadd.f32 %v680, %v879
        %v881 = vpop.f32.mrb[0].mxu0
        %v882 = vadd.f32 %v676, %v881
        %v883 = vpop.f32.mrb[0].mxu0
        %v884 = vadd.f32 %v680, %v883
        %885 = vmatprep.mubr.bf16.mxu0 %v638
        %886 = vmatmul.mubr.bf16.gmra.mrb[0].mxu0 %v637
        %v887 = vpop.f32.mrb[0].mxu0
        %v888 = vadd.f32 %v676, %v887
        %v889 = vpop.f32.mrb[0].mxu0
        %v890 = vadd.f32 %v680, %v889
        %v891 = vpop.f32.mrb[0].mxu0
        %v892 = vadd.f32 %v676, %v891
        %v893 = vpop.f32.mrb[0].mxu0
        %v894 = vadd.f32 %v680, %v893
        %895 = vdwg.mxu0
        %v896 = vmul.f32 %v878, %v878
        %v897 = vmul.f32 %v880, %v880
        %v898 = vmul.f32 %v882, %v882
        %v899 = vmul.f32 %v884, %v884
        %v900 = vmul.f32 %v888, %v888
        %v901 = vmul.f32 %v890, %v890
        %v902 = vmul.f32 %v892, %v892
        %v903 = vmul.f32 %v894, %v894
        %v904 = vmul.f32 %v878, %v896
        %v905 = vmul.f32 %v880, %v897
        %v906 = vmul.f32 %v882, %v898
        %v907 = vmul.f32 %v884, %v899
        %v908 = vmul.f32 %v888, %v900
        %v909 = vmul.f32 %v890, %v901
        %v910 = vmul.f32 %v892, %v902
        %v911 = vmul.f32 %v894, %v903
        %v912 = vmul.f32 %v904, 0.044715
        %v913 = vmul.f32 %v905, 0.044715
        %v914 = vmul.f32 %v906, 0.044715
        %v915 = vmul.f32 %v907, 0.044715
        %v916 = vmul.f32 %v908, 0.044715
        %v917 = vmul.f32 %v909, 0.044715
        %v918 = vmul.f32 %v910, 0.044715
        %v919 = vmul.f32 %v911, 0.044715
        %v920 = vadd.f32 %v878, %v912
        %v921 = vadd.f32 %v880, %v913
        %v922 = vadd.f32 %v882, %v914
        %v923 = vadd.f32 %v884, %v915
        %v924 = vadd.f32 %v888, %v916
        %v925 = vadd.f32 %v890, %v917
        %v926 = vadd.f32 %v892, %v918
        %v927 = vadd.f32 %v894, %v919
        %v928 = vmul.f32 %v920, 0.7978846
        %v929 = vmul.f32 %v921, 0.7978846
        %v930 = vmul.f32 %v922, 0.7978846
        %v931 = vmul.f32 %v923, 0.7978846
        %v932 = vmul.f32 %v924, 0.7978846
        %v933 = vmul.f32 %v925, 0.7978846
        %v934 = vmul.f32 %v926, 0.7978846
        %v935 = vmul.f32 %v927, 0.7978846
        %v936 = vtanh.pop %v928
        %v937 = vtanh.pop %v929
        %v938 = vtanh.pop %v930
        %v939 = vtanh.pop %v931
        %v940 = vtanh.pop %v932
        %v941 = vtanh.pop %v933
        %v942 = vtanh.pop %v934
        %v943 = vtanh.pop %v935
        %v944 = vadd.f32 %v936, 1.0
        %v945 = vadd.f32 %v937, 1.0
        %v946 = vadd.f32 %v938, 1.0
        %v947 = vadd.f32 %v939, 1.0
        %v948 = vadd.f32 %v940, 1.0
        %v949 = vadd.f32 %v941, 1.0
        %v950 = vadd.f32 %v942, 1.0
        %v951 = vadd.f32 %v943, 1.0
        %v952 = vmul.f32 %v944, 0.5
        %v953 = vmul.f32 %v945, 0.5
        %v954 = vmul.f32 %v946, 0.5
        %v955 = vmul.f32 %v947, 0.5
        %v956 = vmul.f32 %v948, 0.5
        %v957 = vmul.f32 %v949, 0.5
        %v958 = vmul.f32 %v950, 0.5
        %v959 = vmul.f32 %v951, 0.5
        %v960 = vmul.f32 %v878, %v952
        %v961 = vmul.f32 %v880, %v953
        %v962 = vmul.f32 %v882, %v954
        %v963 = vmul.f32 %v884, %v955
        %v964 = vmul.f32 %v888, %v956
        %v965 = vmul.f32 %v890, %v957
        %v966 = vmul.f32 %v892, %v958
        %v967 = vmul.f32 %v894, %v959
        %v968 = vpack.c.bf16 %v962, %v960
        %v969 = vpack.c.bf16 %v963, %v961
        %v970 = vpack.c.bf16 %v966, %v964
        %v971 = vpack.c.bf16 %v967, %v965
        %v976 = vunpack.c.l.b16 %v968
        %v977 = vunpack.c.l.b16 %v969
        %v978 = vunpack.c.h.b16 %v968
        %v979 = vunpack.c.h.b16 %v969
        %v980 = vunpack.c.l.b16 %v970
        %v981 = vunpack.c.l.b16 %v971
        %v982 = vunpack.c.h.b16 %v970
        %v983 = vunpack.c.h.b16 %v971
        %v984 = vpack.c.b16 %v977, %v976
        %v985 = vpack.c.b16 %v979, %v978
        %v986 = vpack.c.b16 %v981, %v980
        %v987 = vpack.c.b16 %v983, %v982
        %992 = vst [vmem:[%s474] sm:$0xff] %v984
        %993 = vst [vmem:[%s474 + $0x8] sm:$0xff] %v985
        %994 = vst [vmem:[%s474 + $0x10] sm:$0xff] %v986
        %995 = vst [vmem:[%s474 + $0x18] sm:$0xff] %v987
        %s996 = sand.u32 %s179, 1
        %s997 = sand.u32 %s179, 1
        %s998 = smul.addr %s997, 32
        %s999 = scalar_lea.vmem [#allocation4], %s998
        // Predicated region
        $region83: #{cot_forward.14} parent=73 // pred_check
          %p1000 = pneg %p189
        $region84: #{cot_forward.14} parent=73 // pred_check_branch
          %1002 = sbr.rel (%p1000) target = $region86
        $region85: #{cot_forward.14} parent=73 // pred_region
          %s1003 = smul.u32 4, %s21
          %s1004 = smul.u32 2, %s22
          %s1005 = smul.addr %s1003, 8
          %s1006 = sadd.s32 %s1004, %s1005
          %s1007 = smul.addr %s1006, 4
          %s1008 = scalar_lea.vmem %s5, %s1007
          // Predicated region
          $region87: #{cot_forward.14} parent=85 // pred_check
            _
          $region88: #{cot_forward.14} parent=85 // pred_check_branch
            %1010 = sbr.rel (0) target = $region90
          $region89: #{cot_forward.14} parent=85 // pred_region
            // Predicated region
            $region91: #{cot_forward.14} parent=89 // pred_check
              _
            $region92: #{cot_forward.14} parent=89 // pred_check_branch
              %1012 = sbr.rel (0) target = $region94
            $region93: #{cot_forward.14} parent=89 // pred_region
              // Predicated region
              $region106: #{cot_forward.14} parent=93 // pred_check
                _
              $region107: #{cot_forward.14} parent=93 // pred_check_branch
                %1033 = sbr.rel (0) target = $region109
              $region108: #{cot_forward.14} parent=93 // pred_region
                loop: start=0, step=1, limit=1
                $region110: #{cot_forward.14} parent=108 // loop_pre_header
                  _
                $region111: #{cot_forward.14} parent=108 // loop_header
                  %s1035 = sphi 0, %s1039
                  %p1036 = scmp.ge.s32.totalorder %s1035, 1
                  %s1040 = sphi %s999, %s999
                  %s1041 = sphi %s1008, %s1008
                $region112: #{cot_forward.14} parent=108 // loop_header_branch
                  %1038 = sbr.rel (%p1036) target = $region116
                $region113: #{cot_forward.14} parent=108 // loop_body
                  %v1042 = vld [vmem:[%s1040] sm:$0xff]
                  %1043 = vst [vmem:[%s1041] sm:$0xff] %v1042
                  %v1044 = vld [vmem:[%s1040 + $0x8] sm:$0xff]
                  %1045 = vst [vmem:[%s1041 + $0x20] sm:$0xff] %v1044
                  %v1046 = vld [vmem:[%s1040 + $0x10] sm:$0xff]
                  %1047 = vst [vmem:[%s1041 + $0x40] sm:$0xff] %v1046
                  %v1048 = vld [vmem:[%s1040 + $0x18] sm:$0xff]
                  %1049 = vst [vmem:[%s1041 + $0x60] sm:$0xff] %v1048
                $region114: #{cot_forward.14} parent=108 // loop_footer
                  %s1039 = sadd.s32 1, %s1035
                $region115: #{cot_forward.14} parent=108 // loop_footer_branch
                  %1034 = sbr.rel target = $region111
                $region116: #{cot_forward.14} parent=108 // loop_exit
                  _
              $region109: #{cot_forward.14} parent=93 // pred_fallthru
                _
              // Predicated region
              $region117: #{cot_forward.14} parent=93 // pred_check
                _
              $region118: #{cot_forward.14} parent=93 // pred_check_branch
                %1051 = sbr.rel target = $region120
              $region119: #{cot_forward.14} parent=93 // pred_region
                _
              $region120: #{cot_forward.14} parent=93 // pred_fallthru
                _
            $region94: #{cot_forward.14} parent=89 // pred_fallthru
              _
            // Predicated region
            $region95: #{cot_forward.14} parent=89 // pred_check
              _
            $region96: #{cot_forward.14} parent=89 // pred_check_branch
              %1014 = sbr.rel target = $region98
            $region97: #{cot_forward.14} parent=89 // pred_region
              loop: start=0, step=1, limit=1
              $region99: #{cot_forward.14} parent=97 // loop_pre_header
                _
              $region100: #{cot_forward.14} parent=97 // loop_header
                %s1017 = sphi 0, %s1021
                %p1018 = scmp.ge.s32.totalorder %s1017, 1
                %s1022 = sphi %s999, %s999
                %s1023 = sphi %s1008, %s1008
              $region101: #{cot_forward.14} parent=97 // loop_header_branch
                %1020 = sbr.rel (%p1018) target = $region105
              $region102: #{cot_forward.14} parent=97 // loop_body
                %v1024 = vld [vmem:[%s1022] sm:$0xff]
                %1025 = vst [vmem:[%s1023] sm:$0xff] %v1024
                %v1026 = vld [vmem:[%s1022 + $0x8] sm:$0xff]
                %1027 = vst [vmem:[%s1023 + $0x20] sm:$0xff] %v1026
                %v1028 = vld [vmem:[%s1022 + $0x10] sm:$0xff]
                %1029 = vst [vmem:[%s1023 + $0x40] sm:$0xff] %v1028
                %v1030 = vld [vmem:[%s1022 + $0x18] sm:$0xff]
                %1031 = vst [vmem:[%s1023 + $0x60] sm:$0xff] %v1030
              $region103: #{cot_forward.14} parent=97 // loop_footer
                %s1021 = sadd.s32 1, %s1017
              $region104: #{cot_forward.14} parent=97 // loop_footer_branch
                %1016 = sbr.rel target = $region100
              $region105: #{cot_forward.14} parent=97 // loop_exit
                _
            $region98: #{cot_forward.14} parent=89 // pred_fallthru
              _
          $region90: #{cot_forward.14} parent=85 // pred_fallthru
            _
          %1052 = vnop
        $region86: #{cot_forward.14} parent=73 // pred_fallthru
          _
      $region74: #{cot_forward.14} parent=5 // pred_fallthru
        _
      %p1053 = scmp.le.s32.totalorder 2, %s11
      // Predicated region
      $region121: #{cot_forward.14} parent=5 // pred_check
        %p1054 = pneg %p1053
      $region122: #{cot_forward.14} parent=5 // pred_check_branch
        %1056 = sbr.rel (%p1054) target = $region124
      $region123: #{cot_forward.14} parent=5 // pred_region
        %s1057 = ssub.s32 %s11, 2
        // Predicated region
        $region125: #{cot_forward.14} parent=123 // pred_check
          %p1058 = pneg %p195
        $region126: #{cot_forward.14} parent=123 // pred_check_branch
          %1060 = sbr.rel (%p1058) target = $region128
        $region127: #{cot_forward.14} parent=123 // pred_region
          %s1061 = sand.u32 %s180, 1
          %s1062 = sand.u32 %s180, 1
          %s1063 = smul.addr %s1062, 32
          %s1064 = scalar_lea.vmem [#allocation4], %s1063
        $region128: #{cot_forward.14} parent=123 // pred_fallthru
          _
      $region124: #{cot_forward.14} parent=5 // pred_fallthru
        _
    $region6: #{cot_forward.14} parent=1 // loop_footer
      %s15 = sadd.s32 1, %s11
    $region7: #{cot_forward.14} parent=1 // loop_footer_branch
      %10 = sbr.rel target = $region3
    $region8: #{cot_forward.14} parent=1 // loop_exit
      _

// kernel: cot_forward.15
$region0: #{cot_forward.15}
  #allocation0 [shape = 'u32[]', space=smem, size = 0x4, offset = 0x4, fixed_abs, tag = 'smem constant byte address 0x4 - core index']
  #allocation1 [shape = 'u32[144,128]{1,0:T(1,128)}', space=vmem, size = 0x12000, scoped, tag = 'internal scratch']
  #allocation2 [shape = 'f32[32,256]{1,0:T(8,128)}', space=vmem, size = 0x8000, scoped, tag = 'scratch operand']
  %s0 = inlined_call_operand.vmem [shape: bf16[32,1024], index: 0, kind: input, shape index: {}]
  %s1 = inlined_call_operand.vmem [shape: bf16[1024,256], index: 1, kind: input, shape index: {}]
  %s2 = inlined_call_operand.vmem [shape: f32[1,256], index: 2, kind: input, shape index: {}]
  %s3 = inlined_call_operand.vmem [shape: bf16[32,256], index: 3, kind: input, shape index: {}]
  %s4 = inlined_call_operand.vmem [shape: bf16[32,256], index: 4, kind: output, shape index: {}]
  %s5 = sld [smem:[#allocation0]]
  $region80: #{cot_forward.15} parent=0
    _
  %s7 = ssub.s32 1, %s5
  %s8 = scalar_select 0, %s7, %s5
  $region1: #{cot_forward.15} parent=0
    #allocation3 [shape = 'u8[65536]{0}', space=vmem, size = 0x10000, scoped, tag = 'input window, operand 0']
    loop: start=0, step=1, limit=4
    $region2: #{cot_forward.15} parent=1 // loop_pre_header
      _
    $region3: #{cot_forward.15} parent=1 // loop_header
      %s10 = sphi 0, %s14
      %p11 = scmp.ge.s32.totalorder %s10, 4
      %s17 = sphi 0, %s36
      %s18 = sphi 0, %s32
      %s19 = sphi 0, %s28
      %s20 = sphi 0, %s17
      %s21 = sphi 0, %s18
      %s22 = sphi 0, %s19
      %s23 = sphi 0, %s20
      %s24 = sphi 0, %s21
      %s25 = sphi 0, %s22
      %s41 = sphi 0, %s43
      %s44 = sphi 0, %s41
      %s45 = sphi 0, %s44
      %s61 = sphi 0, %s45
      %s69 = sphi 0, %s71
      %s72 = sphi 0, %s69
      %s73 = sphi 0, %s72
      %s89 = sphi 0, %s73
      %s95 = sphi 0, %s97
      %s98 = sphi 0, %s95
      %s99 = sphi 0, %s98
      %s115 = sphi 0, %s99
      %s123 = sphi 0, %s125
      %s126 = sphi 0, %s123
      %s127 = sphi 0, %s126
      %s143 = sphi 0, %s127
      %s151 = sphi 0, %s153
      %s154 = sphi 0, %s151
      %s155 = sphi 0, %s154
      %s171 = sphi 0, %s155
    $region4: #{cot_forward.15} parent=1 // loop_header_branch
      %13 = sbr.rel (%p11) target = $region8
    $region5: #{cot_forward.15} parent=1 // loop_body
      %s15 = ssub.s32 %s10, 1
      %s16 = ssub.s32 %s10, 2
      %s26 = sadd.s32 1, %s19
      %p27 = scmp.ge.s32.totalorder %s26, 2
      %s28 = scalar_select %p27, 0, %s26
      %s29 = sadd.s32 1, %s18
      %s30 = scalar_select %p27, %s29, %s18
      %p31 = scmp.ge.s32.totalorder %s30, 1
      %s32 = scalar_select %p31, 0, %s30
      %s33 = sadd.s32 1, %s17
      %s34 = scalar_select %p31, %s33, %s17
      %p35 = scmp.ge.s32.totalorder %s34, 1
      %s36 = scalar_select %p35, 0, %s34
      %s37 = ssub.s32 %s17, %s36
      %s38 = ssub.s32 %s19, %s28
      %s39 = sor.u32 %s37, %s38
      %p40 = scmp.eq.s32.totalorder %s39, 0
      %s42 = sadd.s32 %s41, 1
      %s43 = scalar_select %p40, %s41, %s42
      %p46 = pneg %p40
      %p47 = scmp.eq.s32.totalorder %s10, 1
      %p48 = por %p46, %p47
      %p49 = scmp.ne.s32.totalorder %s41, %s44
      %p50 = scmp.eq.s32.totalorder %s10, 0
      %p51 = por %p49, %p50
      %p52 = scmp.ne.s32.totalorder %s41, %s44
      %p53 = scmp.eq.s32.totalorder %s15, 1
      %p54 = por %p52, %p53
      %p55 = scmp.ne.s32.totalorder %s44, %s45
      %p56 = scmp.eq.s32.totalorder %s15, 0
      %p57 = por %p55, %p56
      %p58 = scmp.ne.s32.totalorder %s44, %s45
      %p59 = scmp.eq.s32.totalorder %s16, 1
      %p60 = por %p58, %p59
      %p62 = scmp.ne.s32.totalorder %s45, %s61
      %p63 = scmp.eq.s32.totalorder %s16, 0
      %p64 = por %p62, %p63
      %s65 = ssub.s32 %s19, %s28
      %s66 = ssub.s32 %s18, %s32
      %s67 = sor.u32 %s65, %s66
      %p68 = scmp.eq.s32.totalorder %s67, 0
      %s70 = sadd.s32 %s69, 1
      %s71 = scalar_select %p68, %s69, %s70
      %p74 = pneg %p68
      %p75 = scmp.eq.s32.totalorder %s10, 1
      %p76 = por %p74, %p75
      %p77 = scmp.ne.s32.totalorder %s69, %s72
      %p78 = scmp.eq.s32.totalorder %s10, 0
      %p79 = por %p77, %p78
      %p80 = scmp.ne.s32.totalorder %s69, %s72
      %p81 = scmp.eq.s32.totalorder %s15, 1
      %p82 = por %p80, %p81
      %p83 = scmp.ne.s32.totalorder %s72, %s73
      %p84 = scmp.eq.s32.totalorder %s15, 0
      %p85 = por %p83, %p84
      %p86 = scmp.ne.s32.totalorder %s72, %s73
      %p87 = scmp.eq.s32.totalorder %s16, 1
      %p88 = por %p86, %p87
      %p90 = scmp.ne.s32.totalorder %s73, %s89
      %p91 = scmp.eq.s32.totalorder %s16, 0
      %p92 = por %p90, %p91
      %s93 = ssub.s32 %s18, %s32
      %p94 = scmp.eq.s32.totalorder %s93, 0
      %s96 = sadd.s32 %s95, 1
      %s97 = scalar_select %p94, %s95, %s96
      %p100 = pneg %p94
      %p101 = scmp.eq.s32.totalorder %s10, 1
      %p102 = por %p100, %p101
      %p103 = scmp.ne.s32.totalorder %s95, %s98
      %p104 = scmp.eq.s32.totalorder %s10, 0
      %p105 = por %p103, %p104
      %p106 = scmp.ne.s32.totalorder %s95, %s98
      %p107 = scmp.eq.s32.totalorder %s15, 1
      %p108 = por %p106, %p107
      %p109 = scmp.ne.s32.totalorder %s98, %s99
      %p110 = scmp.eq.s32.totalorder %s15, 0
      %p111 = por %p109, %p110
      %p112 = scmp.ne.s32.totalorder %s98, %s99
      %p113 = scmp.eq.s32.totalorder %s16, 1
      %p114 = por %p112, %p113
      %p116 = scmp.ne.s32.totalorder %s99, %s115
      %p117 = scmp.eq.s32.totalorder %s16, 0
      %p118 = por %p116, %p117
      %s119 = ssub.s32 %s17, %s36
      %s120 = ssub.s32 %s18, %s32
      %s121 = sor.u32 %s119, %s120
      %p122 = scmp.eq.s32.totalorder %s121, 0
      %s124 = sadd.s32 %s123, 1
      %s125 = scalar_select %p122, %s123, %s124
      %p128 = pneg %p122
      %p129 = scmp.eq.s32.totalorder %s10, 1
      %p130 = por %p128, %p129
      %p131 = scmp.ne.s32.totalorder %s123, %s126
      %p132 = scmp.eq.s32.totalorder %s10, 0
      %p133 = por %p131, %p132
      %p134 = scmp.ne.s32.totalorder %s123, %s126
      %p135 = scmp.eq.s32.totalorder %s15, 1
      %p136 = por %p134, %p135
      %p137 = scmp.ne.s32.totalorder %s126, %s127
      %p138 = scmp.eq.s32.totalorder %s15, 0
      %p139 = por %p137, %p138
      %p140 = scmp.ne.s32.totalorder %s126, %s127
      %p141 = scmp.eq.s32.totalorder %s16, 1
      %p142 = por %p140, %p141
      %p144 = scmp.ne.s32.totalorder %s127, %s143
      %p145 = scmp.eq.s32.totalorder %s16, 0
      %p146 = por %p144, %p145
      %s147 = ssub.s32 %s17, %s36
      %s148 = ssub.s32 %s18, %s32
      %s149 = sor.u32 %s147, %s148
      %p150 = scmp.eq.s32.totalorder %s149, 0
      %s152 = sadd.s32 %s151, 1
      %s153 = scalar_select %p150, %s151, %s152
      %p156 = pneg %p150
      %p157 = scmp.eq.s32.totalorder %s10, 1
      %p158 = por %p156, %p157
      %p159 = scmp.ne.s32.totalorder %s151, %s154
      %p160 = scmp.eq.s32.totalorder %s10, 0
      %p161 = por %p159, %p160
      %p162 = scmp.ne.s32.totalorder %s151, %s154
      %p163 = scmp.eq.s32.totalorder %s15, 1
      %p164 = por %p162, %p163
      %p165 = scmp.ne.s32.totalorder %s154, %s155
      %p166 = scmp.eq.s32.totalorder %s15, 0
      %p167 = por %p165, %p166
      %p168 = scmp.ne.s32.totalorder %s154, %s155
      %p169 = scmp.eq.s32.totalorder %s16, 1
      %p170 = por %p168, %p169
      %p172 = scmp.ne.s32.totalorder %s155, %s171
      %p173 = scmp.eq.s32.totalorder %s16, 0
      %p174 = por %p172, %p173
      %p175 = scmp.le.s32.totalorder 1, %s10
      %p176 = scmp.lt.s32.totalorder %s10, 3
      %p177 = pnand %p175, %p176
      %p178 = pneg %p177
      // Predicated region
      $region9: #{cot_forward.15} parent=5 // pred_check
        _
      $region10: #{cot_forward.15} parent=5 // pred_check_branch
        %180 = sbr.rel (%p177) target = $region12
      $region11: #{cot_forward.15} parent=5 // pred_region
        %s181 = ssub.s32 %s10, 1
        // Predicated region
        $region13: #{cot_forward.15} parent=11 // pred_check
          %p182 = pneg %p111
        $region14: #{cot_forward.15} parent=11 // pred_check_branch
          %184 = sbr.rel (%p182) target = $region16
        $region15: #{cot_forward.15} parent=11 // pred_region
          %s185 = smul.u32 2, %s21
          %p186 = scmp.lt.s32.totalorder %s185, 1
          %s187 = scalar_select %p186, %s185, 1
          %s188 = scalar_lea.vmem %s2, %s187
          %s189 = smul.u32 2, %s21
        $region16: #{cot_forward.15} parent=11 // pred_fallthru
          _
        // Predicated region
        $region17: #{cot_forward.15} parent=11 // pred_check
          %p190 = pneg %p139
        $region18: #{cot_forward.15} parent=11 // pred_check_branch
          %192 = sbr.rel (%p190) target = $region20
        $region19: #{cot_forward.15} parent=11 // pred_region
          %s193 = smul.u32 4, %s20
          %s194 = smul.u32 2, %s21
          %p195 = scmp.lt.s32.totalorder %s193, 3
          %s196 = scalar_select %p195, %s193, 3
          %p197 = scmp.lt.s32.totalorder %s194, 1
          %s198 = scalar_select %p197, %s194, 1
          %s199 = smul.addr %s196, 2
          %s200 = sadd.s32 %s198, %s199
          %s201 = smul.addr %s200, 4
          %s202 = scalar_lea.vmem %s3, %s201
          %s203 = smul.u32 4, %s20
          %s204 = smul.u32 2, %s21
        $region20: #{cot_forward.15} parent=11 // pred_fallthru
          _
      $region12: #{cot_forward.15} parent=5 // pred_fallthru
        _
      %p205 = scmp.lt.s32.totalorder %s10, 2
      // Predicated region
      $region21: #{cot_forward.15} parent=5 // pred_check
        %p206 = pneg %p205
      $region22: #{cot_forward.15} parent=5 // pred_check_branch
        %208 = sbr.rel (%p206) target = $region24
      $region23: #{cot_forward.15} parent=5 // pred_region
        // Predicated region
        $region25: #{cot_forward.15} parent=23 // pred_check
          %p209 = pneg %p51
        $region26: #{cot_forward.15} parent=23 // pred_check_branch
          %211 = sbr.rel (%p209) target = $region28
        $region27: #{cot_forward.15} parent=23 // pred_region
          %s212 = sand.u32 %s41, 1
          %s213 = sand.u32 %s41, 1
          %s214 = smul.addr %s213, 64
          %s215 = scalar_lea.vmem [#allocation3], %s214
          %s216 = smul.u32 4, %s17
          %s217 = smul.u32 4, %s19
          %s218 = smul.addr %s216, 8
          %s219 = sadd.s32 %s217, %s218
          %s220 = smul.addr %s219, 4
          %s221 = scalar_lea.vmem %s0, %s220
          // Predicated region
          $region29: #{cot_forward.15} parent=27 // pred_check
            _
          $region30: #{cot_forward.15} parent=27 // pred_check_branch
            %223 = sbr.rel (0) target = $region32
          $region31: #{cot_forward.15} parent=27 // pred_region
            // Predicated region
            $region33: #{cot_forward.15} parent=31 // pred_check
              _
            $region34: #{cot_forward.15} parent=31 // pred_check_branch
              %225 = sbr.rel (0) target = $region36
            $region35: #{cot_forward.15} parent=31 // pred_region
              loop: start=0, step=1, limit=1
              $region37: #{cot_forward.15} parent=35 // loop_pre_header
                _
              $region38: #{cot_forward.15} parent=35 // loop_header
                %s227 = sphi 0, %s231
                %p228 = scmp.ge.s32.totalorder %s227, 1
                %s232 = sphi %s221, %s221
                %s233 = sphi %s215, %s215
              $region39: #{cot_forward.15} parent=35 // loop_header_branch
                %230 = sbr.rel (%p228) target = $region43
              $region40: #{cot_forward.15} parent=35 // loop_body
                %v234 = vld [vmem:[%s232] sm:$0xff]
                %235 = vst [vmem:[%s233] sm:$0xff] %v234
                %v236 = vld [vmem:[%s232 + $0x8] sm:$0xff]
                %237 = vst [vmem:[%s233 + $0x8] sm:$0xff] %v236
                %v238 = vld [vmem:[%s232 + $0x20] sm:$0xff]
                %239 = vst [vmem:[%s233 + $0x10] sm:$0xff] %v238
                %v240 = vld [vmem:[%s232 + $0x28] sm:$0xff]
                %241 = vst [vmem:[%s233 + $0x18] sm:$0xff] %v240
                %v242 = vld [vmem:[%s232 + $0x40] sm:$0xff]
                %243 = vst [vmem:[%s233 + $0x20] sm:$0xff] %v242
                %v244 = vld [vmem:[%s232 + $0x48] sm:$0xff]
                %245 = vst [vmem:[%s233 + $0x28] sm:$0xff] %v244
                %v246 = vld [vmem:[%s232 + $0x60] sm:$0xff]
                %247 = vst [vmem:[%s233 + $0x30] sm:$0xff] %v246
                %v248 = vld [vmem:[%s232 + $0x68] sm:$0xff]
                %249 = vst [vmem:[%s233 + $0x38] sm:$0xff] %v248
              $region41: #{cot_forward.15} parent=35 // loop_footer
                %s231 = sadd.s32 1, %s227
              $region42: #{cot_forward.15} parent=35 // loop_footer_branch
                %226 = sbr.rel target = $region38
              $region43: #{cot_forward.15} parent=35 // loop_exit
                _
            $region36: #{cot_forward.15} parent=31 // pred_fallthru
              _
            // Predicated region
            $region44: #{cot_forward.15} parent=31 // pred_check
              _
            $region45: #{cot_forward.15} parent=31 // pred_check_branch
              %251 = sbr.rel target = $region47
            $region46: #{cot_forward.15} parent=31 // pred_region
              _
            $region47: #{cot_forward.15} parent=31 // pred_fallthru
              _
          $region32: #{cot_forward.15} parent=27 // pred_fallthru
            _
          %252 = vnop
        $region28: #{cot_forward.15} parent=23 // pred_fallthru
          _
        // Predicated region
        $region48: #{cot_forward.15} parent=23 // pred_check
          %p253 = pneg %p79
        $region49: #{cot_forward.15} parent=23 // pred_check_branch
          %255 = sbr.rel (%p253) target = $region51
        $region50: #{cot_forward.15} parent=23 // pred_region
          %s256 = smul.u32 64, %s19
          %s257 = smul.u32 2, %s18
          %p258 = scmp.lt.s32.totalorder %s256, 127
          %s259 = scalar_select %p258, %s256, 127
          %p260 = scmp.lt.s32.totalorder %s257, 1
          %s261 = scalar_select %p260, %s257, 1
          %s262 = smul.addr %s259, 2
          %s263 = sadd.s32 %s261, %s262
          %s264 = smul.addr %s263, 4
          %s265 = scalar_lea.vmem %s1, %s264
          %s266 = smul.u32 64, %s19
          %s267 = smul.u32 2, %s18
        $region51: #{cot_forward.15} parent=23 // pred_fallthru
          _
      $region24: #{cot_forward.15} parent=5 // pred_fallthru
        _
      %p268 = scmp.le.s32.totalorder 1, %s10
      %p269 = scmp.lt.s32.totalorder %s10, 3
      %p270 = pnand %p268, %p269
      %p271 = pneg %p270
      // Predicated region
      $region52: #{cot_forward.15} parent=5 // pred_check
        _
      $region53: #{cot_forward.15} parent=5 // pred_check_branch
        %273 = sbr.rel (%p270) target = $region55
      $region54: #{cot_forward.15} parent=5 // pred_region
        %s274 = ssub.s32 %s10, 1
        %s275 = sand.u32 %s44, 1
        %s276 = sand.u32 %s44, 1
        %s277 = smul.addr %s276, 64
        %s278 = scalar_lea.vmem [#allocation3], %s277
        // Predicated region
        $region56: #{cot_forward.15} parent=54 // pred_check
          %p279 = pneg %p57
        $region57: #{cot_forward.15} parent=54 // pred_check_branch
          %281 = sbr.rel (%p279) target = $region59
        $region58: #{cot_forward.15} parent=54 // pred_region
          _
        $region59: #{cot_forward.15} parent=54 // pred_fallthru
          _
        %s282 = sand.u32 %s44, 1
        %s283 = sand.u32 %s44, 1
        %s284 = smul.addr %s283, 64
        %s285 = scalar_lea.vmem [#allocation3], %s284
        %p286 = pneg %p57
        %p287 = pneg %p54
        %s288 = smul.u32 64, %s22
        %s289 = smul.u32 2, %s21
        %p290 = scmp.lt.s32.totalorder %s288, 127
        %s291 = scalar_select %p290, %s288, 127
        %p292 = scmp.lt.s32.totalorder %s289, 1
        %s293 = scalar_select %p292, %s289, 1
        %s294 = smul.addr %s291, 2
        %s295 = sadd.s32 %s293, %s294
        %s296 = smul.addr %s295, 4
        %s297 = scalar_lea.vmem %s1, %s296
        %p298 = pneg %p85
        %p299 = pneg %p82
        %s300 = smul.u32 2, %s21
        %p301 = scmp.lt.s32.totalorder %s300, 1
        %s302 = scalar_select %p301, %s300, 1
        %s303 = scalar_lea.vmem %s2, %s302
        %p304 = pneg %p111
        %p305 = pneg %p108
        %s306 = smul.u32 4, %s20
        %s307 = smul.u32 2, %s21
        %p308 = scmp.lt.s32.totalorder %s306, 3
        %s309 = scalar_select %p308, %s306, 3
        %p310 = scmp.lt.s32.totalorder %s307, 1
        %s311 = scalar_select %p310, %s307, 1
        %s312 = smul.addr %s309, 2
        %s313 = sadd.s32 %s311, %s312
        %s314 = smul.addr %s313, 4
        %s315 = scalar_lea.vmem %s3, %s314
        %p316 = pneg %p139
        %p317 = pneg %p136
        %p318 = pneg %p167
        %p319 = pneg %p164
        %s320 = smul.u32 4, %s20
        %s321 = smul.u32 2, %s21
        %p322 = scmp.lt.s32.totalorder %s320, 3
        %s323 = scalar_select %p322, %s320, 3
        %p324 = scmp.lt.s32.totalorder %s321, 1
        %s325 = scalar_select %p324, %s321, 1
        %s326 = smul.addr %s323, 2
        %s327 = sadd.s32 %s325, %s326
        %s328 = smul.addr %s327, 4
        %s329 = scalar_lea.vmem %s4, %s328
        %s330 = smul.u32 4, %s20
        %s331 = smul.u32 4, %s22
        %s332 = smul.u32 64, %s22
        %s333 = smul.u32 2, %s21
        %p334 = scmp.lt.s32.totalorder %s332, 127
        %s335 = scalar_select %p334, %s332, 127
        %p336 = scmp.lt.s32.totalorder %s333, 1
        %s337 = scalar_select %p336, %s333, 1
        %s338 = smul.addr %s335, 2
        %s339 = sadd.s32 %s337, %s338
        %s340 = smul.addr %s339, 4
        %s341 = scalar_lea.vmem %s1, %s340
        %s342 = smul.u32 64, %s22
        %s343 = smul.u32 2, %s21
        %s344 = smul.u32 2, %s21
        %p345 = scmp.lt.s32.totalorder %s344, 1
        %s346 = scalar_select %p345, %s344, 1
        %s347 = scalar_lea.vmem %s2, %s346
        %s348 = smul.u32 2, %s21
        %s349 = smul.u32 4, %s20
        %s350 = smul.u32 2, %s21
        %p351 = scmp.lt.s32.totalorder %s349, 3
        %s352 = scalar_select %p351, %s349, 3
        %p353 = scmp.lt.s32.totalorder %s350, 1
        %s354 = scalar_select %p353, %s350, 1
        %s355 = smul.addr %s352, 2
        %s356 = sadd.s32 %s354, %s355
        %s357 = smul.addr %s356, 4
        %s358 = scalar_lea.vmem %s3, %s357
        %s359 = smul.u32 4, %s20
        %s360 = smul.u32 2, %s21
        %s361 = smul.u32 4, %s20
        %s362 = smul.u32 2, %s21
        %p363 = scmp.lt.s32.totalorder %s361, 3
        %s364 = scalar_select %p363, %s361, 3
        %p365 = scmp.lt.s32.totalorder %s362, 1
        %s366 = scalar_select %p365, %s362, 1
        %s367 = smul.addr %s364, 2
        %s368 = sadd.s32 %s366, %s367
        %s369 = smul.addr %s368, 4
        %s370 = scalar_lea.vmem %s4, %s369
        %s371 = smul.u32 4, %s20
        %s372 = smul.u32 2, %s21
        %v373 = vld [vmem:[%s278] sm:$0xff]
        %v374 = vld [vmem:[%s278 + $0x8] sm:$0xff]
        %v375 = vld [vmem:[%s278 + $0x10] sm:$0xff]
        %v376 = vld [vmem:[%s278 + $0x18] sm:$0xff]
        %v377 = vld [vmem:[%s278 + $0x20] sm:$0xff]
        %v378 = vld [vmem:[%s278 + $0x28] sm:$0xff]
        %v379 = vld [vmem:[%s278 + $0x30] sm:$0xff]
        %v380 = vld [vmem:[%s278 + $0x38] sm:$0xff]
        %v381 = vld [vmem:[%s341] sm:$0xff]
        %v382 = vld [vmem:[%s341 + $0x8] sm:$0xff]
        %v383 = vld [vmem:[%s341 + $0x10] sm:$0xff]
        %v384 = vld [vmem:[%s341 + $0x18] sm:$0xff]
        %v385 = vld [vmem:[%s341 + $0x20] sm:$0xff]
        %v386 = vld [vmem:[%s341 + $0x28] sm:$0xff]
        %v387 = vld [vmem:[%s341 + $0x30] sm:$0xff]
        %v388 = vld [vmem:[%s341 + $0x38] sm:$0xff]
        %v389 = vld [vmem:[%s341 + $0x40] sm:$0xff]
        %v390 = vld [vmem:[%s341 + $0x48] sm:$0xff]
        %v391 = vld [vmem:[%s341 + $0x50] sm:$0xff]
        %v392 = vld [vmem:[%s341 + $0x58] sm:$0xff]
        %v393 = vld [vmem:[%s341 + $0x60] sm:$0xff]
        %v394 = vld [vmem:[%s341 + $0x68] sm:$0xff]
        %v395 = vld [vmem:[%s341 + $0x70] sm:$0xff]
        %v396 = vld [vmem:[%s341 + $0x78] sm:$0xff]
        %v397 = vld [vmem:[%s341 + $0x80] sm:$0xff]
        %v398 = vld [vmem:[%s341 + $0x88] sm:$0xff]
        %v399 = vld [vmem:[%s341 + $0x90] sm:$0xff]
        %v400 = vld [vmem:[%s341 + $0x98] sm:$0xff]
        %v401 = vld [vmem:[%s341 + $0xa0] sm:$0xff]
        %v402 = vld [vmem:[%s341 + $0xa8] sm:$0xff]
        %v403 = vld [vmem:[%s341 + $0xb0] sm:$0xff]
        %v404 = vld [vmem:[%s341 + $0xb8] sm:$0xff]
        %v405 = vld [vmem:[%s341 + $0xc0] sm:$0xff]
        %v406 = vld [vmem:[%s341 + $0xc8] sm:$0xff]
        %v407 = vld [vmem:[%s341 + $0xd0] sm:$0xff]
        %v408 = vld [vmem:[%s341 + $0xd8] sm:$0xff]
        %v409 = vld [vmem:[%s341 + $0xe0] sm:$0xff]
        %v410 = vld [vmem:[%s341 + $0xe8] sm:$0xff]
        %v411 = vld [vmem:[%s341 + $0xf0] sm:$0xff]
        %v412 = vld [vmem:[%s341 + $0xf8] sm:$0xff]
        %v413 = vld [vmem:[%s341 + $0x100] sm:$0xff]
        %v414 = vld [vmem:[%s341 + $0x108] sm:$0xff]
        %v415 = vld [vmem:[%s341 + $0x110] sm:$0xff]
        %v416 = vld [vmem:[%s341 + $0x118] sm:$0xff]
        %v417 = vld [vmem:[%s341 + $0x120] sm:$0xff]
        %v418 = vld [vmem:[%s341 + $0x128] sm:$0xff]
        %v419 = vld [vmem:[%s341 + $0x130] sm:$0xff]
        %v420 = vld [vmem:[%s341 + $0x138] sm:$0xff]
        %v421 = vld [vmem:[%s341 + $0x140] sm:$0xff]
        %v422 = vld [vmem:[%s341 + $0x148] sm:$0xff]
        %v423 = vld [vmem:[%s341 + $0x150] sm:$0xff]
        %v424 = vld [vmem:[%s341 + $0x158] sm:$0xff]
        %v425 = vld [vmem:[%s341 + $0x160] sm:$0xff]
        %v426 = vld [vmem:[%s341 + $0x168] sm:$0xff]
        %v427 = vld [vmem:[%s341 + $0x170] sm:$0xff]
        %v428 = vld [vmem:[%s341 + $0x178] sm:$0xff]
        %v429 = vld [vmem:[%s341 + $0x180] sm:$0xff]
        %v430 = vld [vmem:[%s341 + $0x188] sm:$0xff]
        %v431 = vld [vmem:[%s341 + $0x190] sm:$0xff]
        %v432 = vld [vmem:[%s341 + $0x198] sm:$0xff]
        %v433 = vld [vmem:[%s341 + $0x1a0] sm:$0xff]
        %v434 = vld [vmem:[%s341 + $0x1a8] sm:$0xff]
        %v435 = vld [vmem:[%s341 + $0x1b0] sm:$0xff]
        %v436 = vld [vmem:[%s341 + $0x1b8] sm:$0xff]
        %v437 = vld [vmem:[%s341 + $0x1c0] sm:$0xff]
        %v438 = vld [vmem:[%s341 + $0x1c8] sm:$0xff]
        %v439 = vld [vmem:[%s341 + $0x1d0] sm:$0xff]
        %v440 = vld [vmem:[%s341 + $0x1d8] sm:$0xff]
        %v441 = vld [vmem:[%s341 + $0x1e0] sm:$0xff]
        %v442 = vld [vmem:[%s341 + $0x1e8] sm:$0xff]
        %v443 = vld [vmem:[%s341 + $0x1f0] sm:$0xff]
        %v444 = vld [vmem:[%s341 + $0x1f8] sm:$0xff]
        %v453 = vunpack.c.l.b16 %v373
        %v454 = vunpack.c.h.b16 %v373
        %v455 = vunpack.c.l.b16 %v374
        %v456 = vunpack.c.h.b16 %v374
        %v457 = vunpack.c.l.b16 %v375
        %v458 = vunpack.c.h.b16 %v375
        %v459 = vunpack.c.l.b16 %v376
        %v460 = vunpack.c.h.b16 %v376
        %v461 = vunpack.c.l.b16 %v377
        %v462 = vunpack.c.h.b16 %v377
        %v463 = vunpack.c.l.b16 %v378
        %v464 = vunpack.c.h.b16 %v378
        %v465 = vunpack.c.l.b16 %v379
        %v466 = vunpack.c.h.b16 %v379
        %v467 = vunpack.c.l.b16 %v380
        %v468 = vunpack.c.h.b16 %v380
        %v469 = vpack.c.b16 %v457, %v453
        %v470 = vpack.c.b16 %v458, %v454
        %v471 = vpack.c.b16 %v459, %v455
        %v472 = vpack.c.b16 %v460, %v456
        %v473 = vpack.c.b16 %v465, %v461
        %v474 = vpack.c.b16 %v466, %v462
        %v475 = vpack.c.b16 %v467, %v463
        %v476 = vpack.c.b16 %v468, %v464
        %v549 = vunpack.c.l.b16 %v381
        %v550 = vunpack.c.h.b16 %v381
        %v551 = vunpack.c.l.b16 %v382
        %v552 = vunpack.c.h.b16 %v382
        %v553 = vunpack.c.l.b16 %v383
        %v554 = vunpack.c.h.b16 %v383
        %v555 = vunpack.c.l.b16 %v384
        %v556 = vunpack.c.h.b16 %v384
        %v557 = vunpack.c.l.b16 %v385
        %v558 = vunpack.c.h.b16 %v385
        %v559 = vunpack.c.l.b16 %v386
        %v560 = vunpack.c.h.b16 %v386
        %v561 = vunpack.c.l.b16 %v387
        %v562 = vunpack.c.h.b16 %v387
        %v563 = vunpack.c.l.b16 %v388
        %v564 = vunpack.c.h.b16 %v388
        %v565 = vunpack.c.l.b16 %v389
        %v566 = vunpack.c.h.b16 %v389
        %v567 = vunpack.c.l.b16 %v390
        %v568 = vunpack.c.h.b16 %v390
        %v569 = vunpack.c.l.b16 %v391
        %v570 = vunpack.c.h.b16 %v391
        %v571 = vunpack.c.l.b16 %v392
        %v572 = vunpack.c.h.b16 %v392
        %v573 = vunpack.c.l.b16 %v393
        %v574 = vunpack.c.h.b16 %v393
        %v575 = vunpack.c.l.b16 %v394
        %v576 = vunpack.c.h.b16 %v394
        %v577 = vunpack.c.l.b16 %v395
        %v578 = vunpack.c.h.b16 %v395
        %v579 = vunpack.c.l.b16 %v396
        %v580 = vunpack.c.h.b16 %v396
        %v581 = vunpack.c.l.b16 %v397
        %v582 = vunpack.c.h.b16 %v397
        %v583 = vunpack.c.l.b16 %v398
        %v584 = vunpack.c.h.b16 %v398
        %v585 = vunpack.c.l.b16 %v399
        %v586 = vunpack.c.h.b16 %v399
        %v587 = vunpack.c.l.b16 %v400
        %v588 = vunpack.c.h.b16 %v400
        %v589 = vunpack.c.l.b16 %v401
        %v590 = vunpack.c.h.b16 %v401
        %v591 = vunpack.c.l.b16 %v402
        %v592 = vunpack.c.h.b16 %v402
        %v593 = vunpack.c.l.b16 %v403
        %v594 = vunpack.c.h.b16 %v403
        %v595 = vunpack.c.l.b16 %v404
        %v596 = vunpack.c.h.b16 %v404
        %v597 = vunpack.c.l.b16 %v405
        %v598 = vunpack.c.h.b16 %v405
        %v599 = vunpack.c.l.b16 %v406
        %v600 = vunpack.c.h.b16 %v406
        %v601 = vunpack.c.l.b16 %v407
        %v602 = vunpack.c.h.b16 %v407
        %v603 = vunpack.c.l.b16 %v408
        %v604 = vunpack.c.h.b16 %v408
        %v605 = vunpack.c.l.b16 %v409
        %v606 = vunpack.c.h.b16 %v409
        %v607 = vunpack.c.l.b16 %v410
        %v608 = vunpack.c.h.b16 %v410
        %v609 = vunpack.c.l.b16 %v411
        %v610 = vunpack.c.h.b16 %v411
        %v611 = vunpack.c.l.b16 %v412
        %v612 = vunpack.c.h.b16 %v412
        %v613 = vunpack.c.l.b16 %v413
        %v614 = vunpack.c.h.b16 %v413
        %v615 = vunpack.c.l.b16 %v414
        %v616 = vunpack.c.h.b16 %v414
        %v617 = vunpack.c.l.b16 %v415
        %v618 = vunpack.c.h.b16 %v415
        %v619 = vunpack.c.l.b16 %v416
        %v620 = vunpack.c.h.b16 %v416
        %v621 = vunpack.c.l.b16 %v417
        %v622 = vunpack.c.h.b16 %v417
        %v623 = vunpack.c.l.b16 %v418
        %v624 = vunpack.c.h.b16 %v418
        %v625 = vunpack.c.l.b16 %v419
        %v626 = vunpack.c.h.b16 %v419
        %v627 = vunpack.c.l.b16 %v420
        %v628 = vunpack.c.h.b16 %v420
        %v629 = vunpack.c.l.b16 %v421
        %v630 = vunpack.c.h.b16 %v421
        %v631 = vunpack.c.l.b16 %v422
        %v632 = vunpack.c.h.b16 %v422
        %v633 = vunpack.c.l.b16 %v423
        %v634 = vunpack.c.h.b16 %v423
        %v635 = vunpack.c.l.b16 %v424
        %v636 = vunpack.c.h.b16 %v424
        %v637 = vunpack.c.l.b16 %v425
        %v638 = vunpack.c.h.b16 %v425
        %v639 = vunpack.c.l.b16 %v426
        %v640 = vunpack.c.h.b16 %v426
        %v641 = vunpack.c.l.b16 %v427
        %v642 = vunpack.c.h.b16 %v427
        %v643 = vunpack.c.l.b16 %v428
        %v644 = vunpack.c.h.b16 %v428
        %v645 = vunpack.c.l.b16 %v429
        %v646 = vunpack.c.h.b16 %v429
        %v647 = vunpack.c.l.b16 %v430
        %v648 = vunpack.c.h.b16 %v430
        %v649 = vunpack.c.l.b16 %v431
        %v650 = vunpack.c.h.b16 %v431
        %v651 = vunpack.c.l.b16 %v432
        %v652 = vunpack.c.h.b16 %v432
        %v653 = vunpack.c.l.b16 %v433
        %v654 = vunpack.c.h.b16 %v433
        %v655 = vunpack.c.l.b16 %v434
        %v656 = vunpack.c.h.b16 %v434
        %v657 = vunpack.c.l.b16 %v435
        %v658 = vunpack.c.h.b16 %v435
        %v659 = vunpack.c.l.b16 %v436
        %v660 = vunpack.c.h.b16 %v436
        %v661 = vunpack.c.l.b16 %v437
        %v662 = vunpack.c.h.b16 %v437
        %v663 = vunpack.c.l.b16 %v438
        %v664 = vunpack.c.h.b16 %v438
        %v665 = vunpack.c.l.b16 %v439
        %v666 = vunpack.c.h.b16 %v439
        %v667 = vunpack.c.l.b16 %v440
        %v668 = vunpack.c.h.b16 %v440
        %v669 = vunpack.c.l.b16 %v441
        %v670 = vunpack.c.h.b16 %v441
        %v671 = vunpack.c.l.b16 %v442
        %v672 = vunpack.c.h.b16 %v442
        %v673 = vunpack.c.l.b16 %v443
        %v674 = vunpack.c.h.b16 %v443
        %v675 = vunpack.c.l.b16 %v444
        %v676 = vunpack.c.h.b16 %v444
        %v677 = vpack.c.b16 %v551, %v549
        %v678 = vpack.c.b16 %v552, %v550
        %v679 = vpack.c.b16 %v555, %v553
        %v680 = vpack.c.b16 %v556, %v554
        %v681 = vpack.c.b16 %v559, %v557
        %v682 = vpack.c.b16 %v560, %v558
        %v683 = vpack.c.b16 %v563, %v561
        %v684 = vpack.c.b16 %v564, %v562
        %v685 = vpack.c.b16 %v567, %v565
        %v686 = vpack.c.b16 %v568, %v566
        %v687 = vpack.c.b16 %v571, %v569
        %v688 = vpack.c.b16 %v572, %v570
        %v689 = vpack.c.b16 %v575, %v573
        %v690 = vpack.c.b16 %v576, %v574
        %v691 = vpack.c.b16 %v579, %v577
        %v692 = vpack.c.b16 %v580, %v578
        %v693 = vpack.c.b16 %v583, %v581
        %v694 = vpack.c.b16 %v584, %v582
        %v695 = vpack.c.b16 %v587, %v585
        %v696 = vpack.c.b16 %v588, %v586
        %v697 = vpack.c.b16 %v591, %v589
        %v698 = vpack.c.b16 %v592, %v590
        %v699 = vpack.c.b16 %v595, %v593
        %v700 = vpack.c.b16 %v596, %v594
        %v701 = vpack.c.b16 %v599, %v597
        %v702 = vpack.c.b16 %v600, %v598
        %v703 = vpack.c.b16 %v603, %v601
        %v704 = vpack.c.b16 %v604, %v602
        %v705 = vpack.c.b16 %v607, %v605
        %v706 = vpack.c.b16 %v608, %v606
        %v707 = vpack.c.b16 %v611, %v609
        %v708 = vpack.c.b16 %v612, %v610
        %v709 = vpack.c.b16 %v615, %v613
        %v710 = vpack.c.b16 %v616, %v614
        %v711 = vpack.c.b16 %v619, %v617
        %v712 = vpack.c.b16 %v620, %v618
        %v713 = vpack.c.b16 %v623, %v621
        %v714 = vpack.c.b16 %v624, %v622
        %v715 = vpack.c.b16 %v627, %v625
        %v716 = vpack.c.b16 %v628, %v626
        %v717 = vpack.c.b16 %v631, %v629
        %v718 = vpack.c.b16 %v632, %v630
        %v719 = vpack.c.b16 %v635, %v633
        %v720 = vpack.c.b16 %v636, %v634
        %v721 = vpack.c.b16 %v639, %v637
        %v722 = vpack.c.b16 %v640, %v638
        %v723 = vpack.c.b16 %v643, %v641
        %v724 = vpack.c.b16 %v644, %v642
        %v725 = vpack.c.b16 %v647, %v645
        %v726 = vpack.c.b16 %v648, %v646
        %v727 = vpack.c.b16 %v651, %v649
        %v728 = vpack.c.b16 %v652, %v650
        %v729 = vpack.c.b16 %v655, %v653
        %v730 = vpack.c.b16 %v656, %v654
        %v731 = vpack.c.b16 %v659, %v657
        %v732 = vpack.c.b16 %v660, %v658
        %v733 = vpack.c.b16 %v663, %v661
        %v734 = vpack.c.b16 %v664, %v662
        %v735 = vpack.c.b16 %v667, %v665
        %v736 = vpack.c.b16 %v668, %v666
        %v737 = vpack.c.b16 %v671, %v669
        %v738 = vpack.c.b16 %v672, %v670
        %v739 = vpack.c.b16 %v675, %v673
        %v740 = vpack.c.b16 %v676, %v674
        %805 = vmatprep.subr.bf16.mxu0 %v678
        %806 = vmatpush1.bf16.msra.mxu0 %v677
        %807 = vmatprep.subr.bf16.mxu0 %v680
        %808 = vmatpush1.bf16.msra.mxu0 %v679
        %809 = vmatprep.subr.bf16.mxu0 %v682
        %810 = vmatpush1.bf16.msra.mxu0 %v681
        %811 = vmatprep.subr.bf16.mxu0 %v684
        %812 = vmatpush1.bf16.msra.mxu0 %v683
        %813 = vmatprep.subr.bf16.mxu0 %v686
        %814 = vmatpush1.bf16.msra.mxu0 %v685
        %815 = vmatprep.subr.bf16.mxu0 %v688
        %816 = vmatpush1.bf16.msra.mxu0 %v687
        %817 = vmatprep.subr.bf16.mxu0 %v690
        %818 = vmatpush1.bf16.msra.mxu0 %v689
        %819 = vmatprep.subr.bf16.mxu0 %v692
        %820 = vmatpush1.bf16.msra.mxu0 %v691
        %821 = vmatprep.subr.bf16.mxu0 %v694
        %822 = vmatpush1.bf16.msra.mxu0 %v693
        %823 = vmatprep.subr.bf16.mxu0 %v696
        %824 = vmatpush1.bf16.msra.mxu0 %v695
        %825 = vmatprep.subr.bf16.mxu0 %v698
        %826 = vmatpush1.bf16.msra.mxu0 %v697
        %827 = vmatprep.subr.bf16.mxu0 %v700
        %828 = vmatpush1.bf16.msra.mxu0 %v699
        %829 = vmatprep.subr.bf16.mxu0 %v702
        %830 = vmatpush1.bf16.msra.mxu0 %v701
        %831 = vmatprep.subr.bf16.mxu0 %v704
        %832 = vmatpush1.bf16.msra.mxu0 %v703
        %833 = vmatprep.subr.bf16.mxu0 %v706
        %834 = vmatpush1.bf16.msra.mxu0 %v705
        %835 = vmatprep.subr.bf16.mxu0 %v708
        %836 = vmatpush1.bf16.msra.mxu0 %v707
        %837 = vmatprep.mubr.bf16.mxu0 %v470
        %838 = vmatmul.mubr.bf16.gmra.mrb[0].mxu0 %v469
        %v839 = vpop.f32.mrb[0].mxu0
        %v840 = vadd.f32 0.0, %v839
        %v841 = vpop.f32.mrb[0].mxu0
        %v842 = vadd.f32 0.0, %v841
        %v843 = vpop.f32.mrb[0].mxu0
        %v844 = vadd.f32 0.0, %v843
        %v845 = vpop.f32.mrb[0].mxu0
        %v846 = vadd.f32 0.0, %v845
        %847 = vmatprep.mubr.bf16.mxu0 %v474
        %848 = vmatmul.mubr.bf16.gmra.mrb[0].mxu0 %v473
        %v849 = vpop.f32.mrb[0].mxu0
        %v850 = vadd.f32 0.0, %v849
        %v851 = vpop.f32.mrb[0].mxu0
        %v852 = vadd.f32 0.0, %v851
        %v853 = vpop.f32.mrb[0].mxu0
        %v854 = vadd.f32 0.0, %v853
        %v855 = vpop.f32.mrb[0].mxu0
        %v856 = vadd.f32 0.0, %v855
        %857 = vdwg.mxu0
        %858 = vmatprep.subr.bf16.mxu0 %v710
        %859 = vmatpush1.bf16.msra.mxu0 %v709
        %860 = vmatprep.subr.bf16.mxu0 %v712
        %861 = vmatpush1.bf16.msra.mxu0 %v711
        %862 = vmatprep.subr.bf16.mxu0 %v714
        %863 = vmatpush1.bf16.msra.mxu0 %v713
        %864 = vmatprep.subr.bf16.mxu0 %v716
        %865 = vmatpush1.bf16.msra.mxu0 %v715
        %866 = vmatprep.subr.bf16.mxu0 %v718
        %867 = vmatpush1.bf16.msra.mxu0 %v717
        %868 = vmatprep.subr.bf16.mxu0 %v720
        %869 = vmatpush1.bf16.msra.mxu0 %v719
        %870 = vmatprep.subr.bf16.mxu0 %v722
        %871 = vmatpush1.bf16.msra.mxu0 %v721
        %872 = vmatprep.subr.bf16.mxu0 %v724
        %873 = vmatpush1.bf16.msra.mxu0 %v723
        %874 = vmatprep.subr.bf16.mxu0 %v726
        %875 = vmatpush1.bf16.msra.mxu0 %v725
        %876 = vmatprep.subr.bf16.mxu0 %v728
        %877 = vmatpush1.bf16.msra.mxu0 %v727
        %878 = vmatprep.subr.bf16.mxu0 %v730
        %879 = vmatpush1.bf16.msra.mxu0 %v729
        %880 = vmatprep.subr.bf16.mxu0 %v732
        %881 = vmatpush1.bf16.msra.mxu0 %v731
        %882 = vmatprep.subr.bf16.mxu0 %v734
        %883 = vmatpush1.bf16.msra.mxu0 %v733
        %884 = vmatprep.subr.bf16.mxu0 %v736
        %885 = vmatpush1.bf16.msra.mxu0 %v735
        %886 = vmatprep.subr.bf16.mxu0 %v738
        %887 = vmatpush1.bf16.msra.mxu0 %v737
        %888 = vmatprep.subr.bf16.mxu0 %v740
        %889 = vmatpush1.bf16.msra.mxu0 %v739
        %890 = vmatprep.mubr.bf16.mxu0 %v472
        %891 = vmatmul.mubr.bf16.gmra.mrb[0].mxu0 %v471
        %v892 = vpop.f32.mrb[0].mxu0
        %v893 = vadd.f32 %v840, %v892
        %v894 = vpop.f32.mrb[0].mxu0
        %v895 = vadd.f32 %v842, %v894
        %v896 = vpop.f32.mrb[0].mxu0
        %v897 = vadd.f32 %v844, %v896
        %v898 = vpop.f32.mrb[0].mxu0
        %v899 = vadd.f32 %v846, %v898
        %900 = vmatprep.mubr.bf16.mxu0 %v476
        %901 = vmatmul.mubr.bf16.gmra.mrb[0].mxu0 %v475
        %v902 = vpop.f32.mrb[0].mxu0
        %v903 = vadd.f32 %v850, %v902
        %v904 = vpop.f32.mrb[0].mxu0
        %v905 = vadd.f32 %v852, %v904
        %v906 = vpop.f32.mrb[0].mxu0
        %v907 = vadd.f32 %v854, %v906
        %v908 = vpop.f32.mrb[0].mxu0
        %v909 = vadd.f32 %v856, %v908
        %910 = vdwg.mxu0
        %p911 = scmp.eq.s32.totalorder %s22, 0
        // Predicated region
        $region60: #{cot_forward.15} parent=54 // pred_check
          %p912 = pneg %p911
        $region61: #{cot_forward.15} parent=54 // pred_check_branch
          %914 = sbr.rel (%p912) target = $region63
        $region62: #{cot_forward.15} parent=54 // pred_region
          %915 = vst [vmem:[#allocation2] sm:$0xff] 0.0
          %916 = vst [vmem:[#allocation2 + $0x8] sm:$0xff] 0.0
          %917 = vst [vmem:[#allocation2 + $0x10] sm:$0xff] 0.0
          %918 = vst [vmem:[#allocation2 + $0x18] sm:$0xff] 0.0
          %919 = vst [vmem:[#allocation2 + $0x20] sm:$0xff] 0.0
          %920 = vst [vmem:[#allocation2 + $0x28] sm:$0xff] 0.0
          %921 = vst [vmem:[#allocation2 + $0x30] sm:$0xff] 0.0
          %922 = vst [vmem:[#allocation2 + $0x38] sm:$0xff] 0.0
        $region63: #{cot_forward.15} parent=54 // pred_fallthru
          _
        %v923 = vld [vmem:[#allocation2] sm:$0xff]
        %v924 = vld [vmem:[#allocation2 + $0x8] sm:$0xff]
        %v925 = vld [vmem:[#allocation2 + $0x10] sm:$0xff]
        %v926 = vld [vmem:[#allocation2 + $0x18] sm:$0xff]
        %v927 = vld [vmem:[#allocation2 + $0x20] sm:$0xff]
        %v928 = vld [vmem:[#allocation2 + $0x28] sm:$0xff]
        %v929 = vld [vmem:[#allocation2 + $0x30] sm:$0xff]
        %v930 = vld [vmem:[#allocation2 + $0x38] sm:$0xff]
        %v931 = vadd.f32 %v923, %v893
        %v932 = vadd.f32 %v924, %v895
        %v933 = vadd.f32 %v925, %v897
        %v934 = vadd.f32 %v926, %v899
        %v935 = vadd.f32 %v927, %v903
        %v936 = vadd.f32 %v928, %v905
        %v937 = vadd.f32 %v929, %v907
        %v938 = vadd.f32 %v930, %v909
        %939 = vst [vmem:[#allocation2] sm:$0xff] %v931
        %940 = vst [vmem:[#allocation2 + $0x8] sm:$0xff] %v932
        %941 = vst [vmem:[#allocation2 + $0x10] sm:$0xff] %v933
        %942 = vst [vmem:[#allocation2 + $0x18] sm:$0xff] %v934
        %943 = vst [vmem:[#allocation2 + $0x20] sm:$0xff] %v935
        %944 = vst [vmem:[#allocation2 + $0x28] sm:$0xff] %v936
        %945 = vst [vmem:[#allocation2 + $0x30] sm:$0xff] %v937
        %946 = vst [vmem:[#allocation2 + $0x38] sm:$0xff] %v938
        %p947 = scmp.eq.s32.totalorder %s22, 1
        // Predicated region
        $region64: #{cot_forward.15} parent=54 // pred_check
          %p948 = pneg %p947
        $region65: #{cot_forward.15} parent=54 // pred_check_branch
          %950 = sbr.rel (%p948) target = $region67
        $region66: #{cot_forward.15} parent=54 // pred_region
          %v951 = vld [vmem:[#allocation2] sm:$0xff]
          %v952 = vld [vmem:[#allocation2 + $0x8] sm:$0xff]
          %v953 = vld [vmem:[#allocation2 + $0x10] sm:$0xff]
          %v954 = vld [vmem:[#allocation2 + $0x18] sm:$0xff]
          %v955 = vld [vmem:[#allocation2 + $0x20] sm:$0xff]
          %v956 = vld [vmem:[#allocation2 + $0x28] sm:$0xff]
          %v957 = vld [vmem:[#allocation2 + $0x30] sm:$0xff]
          %v958 = vld [vmem:[#allocation2 + $0x38] sm:$0xff]
          %v959 = vld [vmem:[%s347] sm:$0x3]
          %v961 = vlaneseq
          %v962 = vshrl.u32 %v961, 7
          %v963 = vsub.s32 0, %v962
          %v964 = vrot.slane %v959, %v963
          %v965 = vlaneseq
          %v966 = vshrl.u32 %v965, 7
          %v967 = vsub.s32 1, %v966
          %v968 = vrot.slane %v959, %v967
          %v971 = vadd.f32 %v951, %v964
          %v972 = vadd.f32 %v952, %v968
          %v973 = vadd.f32 %v953, %v964
          %v974 = vadd.f32 %v954, %v968
          %v975 = vadd.f32 %v955, %v964
          %v976 = vadd.f32 %v956, %v968
          %v977 = vadd.f32 %v957, %v964
          %v978 = vadd.f32 %v958, %v968
          %v979 = vld [vmem:[%s358] sm:$0xff]
          %v980 = vld [vmem:[%s358 + $0x8] sm:$0xff]
          %v981 = vld [vmem:[%s358 + $0x10] sm:$0xff]
          %v982 = vld [vmem:[%s358 + $0x18] sm:$0xff]
          %v983 = vunpack.c.l.bf16 %v979
          %v984 = vunpack.c.h.bf16 %v979
          %v985 = vunpack.c.l.bf16 %v980
          %v986 = vunpack.c.h.bf16 %v980
          %v987 = vunpack.c.l.bf16 %v981
          %v988 = vunpack.c.h.bf16 %v981
          %v989 = vunpack.c.l.bf16 %v982
          %v990 = vunpack.c.h.bf16 %v982
          %v991 = vadd.f32 %v971, %v983
          %v992 = vadd.f32 %v972, %v984
          %v993 = vadd.f32 %v973, %v985
          %v994 = vadd.f32 %v974, %v986
          %v995 = vadd.f32 %v975, %v987
          %v996 = vadd.f32 %v976, %v988
          %v997 = vadd.f32 %v977, %v989
          %v998 = vadd.f32 %v978, %v990
          %v999 = vpack.c.bf16 %v993, %v991
          %v1000 = vpack.c.bf16 %v994, %v992
          %v1001 = vpack.c.bf16 %v997, %v995
          %v1002 = vpack.c.bf16 %v998, %v996
          %v1007 = vunpack.c.l.b16 %v999
          %v1008 = vunpack.c.l.b16 %v1000
          %v1009 = vunpack.c.h.b16 %v999
          %v1010 = vunpack.c.h.b16 %v1000
          %v1011 = vunpack.c.l.b16 %v1001
          %v1012 = vunpack.c.l.b16 %v1002
          %v1013 = vunpack.c.h.b16 %v1001
          %v1014 = vunpack.c.h.b16 %v1002
          %v1015 = vpack.c.b16 %v1008, %v1007
          %v1016 = vpack.c.b16 %v1010, %v1009
          %v1017 = vpack.c.b16 %v1012, %v1011
          %v1018 = vpack.c.b16 %v1014, %v1013
          %1023 = vst [vmem:[%s370] sm:$0xff] %v1015
          %1024 = vst [vmem:[%s370 + $0x8] sm:$0xff] %v1016
          %1025 = vst [vmem:[%s370 + $0x10] sm:$0xff] %v1017
          %1026 = vst [vmem:[%s370 + $0x18] sm:$0xff] %v1018
        $region67: #{cot_forward.15} parent=54 // pred_fallthru
          _
        %s1027 = smul.u32 4, %s20
        %s1028 = smul.u32 2, %s21
        %p1029 = scmp.lt.s32.totalorder %s1027, 3
        %s1030 = scalar_select %p1029, %s1027, 3
        %p1031 = scmp.lt.s32.totalorder %s1028, 1
        %s1032 = scalar_select %p1031, %s1028, 1
        %s1033 = smul.addr %s1030, 2
        %s1034 = sadd.s32 %s1032, %s1033
        %s1035 = smul.addr %s1034, 4
        %s1036 = scalar_lea.vmem %s4, %s1035
        // Predicated region
        $region68: #{cot_forward.15} parent=54 // pred_check
          %p1037 = pneg %p164
        $region69: #{cot_forward.15} parent=54 // pred_check_branch
          %1039 = sbr.rel (%p1037) target = $region71
        $region70: #{cot_forward.15} parent=54 // pred_region
          %s1040 = smul.u32 4, %s20
          %s1041 = smul.u32 2, %s21
        $region71: #{cot_forward.15} parent=54 // pred_fallthru
          _
        // Predicated region
        $region72: #{cot_forward.15} parent=54 // pred_check
          %p1042 = pneg %p164
        $region73: #{cot_forward.15} parent=54 // pred_check_branch
          %1044 = sbr.rel (%p1042) target = $region75
        $region74: #{cot_forward.15} parent=54 // pred_region
          %s1045 = smul.u32 4, %s20
          %s1046 = smul.u32 2, %s21
          %p1047 = scmp.lt.s32.totalorder %s1045, 3
          %s1048 = scalar_select %p1047, %s1045, 3
          %p1049 = scmp.lt.s32.totalorder %s1046, 1
          %s1050 = scalar_select %p1049, %s1046, 1
          %s1051 = smul.addr %s1048, 2
          %s1052 = sadd.s32 %s1050, %s1051
          %s1053 = smul.addr %s1052, 4
          %s1054 = scalar_lea.vmem %s4, %s1053
        $region75: #{cot_forward.15} parent=54 // pred_fallthru
          _
      $region55: #{cot_forward.15} parent=5 // pred_fallthru
        _
      %p1055 = scmp.le.s32.totalorder 2, %s10
      // Predicated region
      $region76: #{cot_forward.15} parent=5 // pred_check
        %p1056 = pneg %p1055
      $region77: #{cot_forward.15} parent=5 // pred_check_branch
        %1058 = sbr.rel (%p1056) target = $region79
      $region78: #{cot_forward.15} parent=5 // pred_region
        %s1059 = ssub.s32 %s10, 2
      $region79: #{cot_forward.15} parent=5 // pred_fallthru
        _
    $region6: #{cot_forward.15} parent=1 // loop_footer
      %s14 = sadd.s32 1, %s10
    $region7: #{cot_forward.15} parent=1 // loop_footer_branch
      %9 = sbr.rel target = $region3
    $region8: #{cot_forward.15} parent=1 // loop_exit
      _

// kernel: cot_forward.16
$region0: #{cot_forward.16}
  #allocation0 [shape = 'u32[]', space=smem, size = 0x4, offset = 0x4, fixed_abs, tag = 'smem constant byte address 0x4 - core index']
  #allocation1 [shape = 'u32[144,128]{1,0:T(1,128)}', space=vmem, size = 0x12000, scoped, tag = 'internal scratch']
  #allocation2 [shape = 'bf16[32,256]{1,0:T(16,128)(2,1)}', space=vmem, size = 0x4000, scoped, tag = 'scratch operand']
  %s0 = inlined_call_operand.vmem [shape: bf16[32,256], index: 0, kind: input, shape index: {}]
  %s1 = inlined_call_operand.vmem [shape: bf16[256,768], index: 1, kind: input, shape index: {}]
  %s2 = inlined_call_operand.vmem [shape: f32[1,768], index: 2, kind: input, shape index: {}]
  %s3 = inlined_call_operand.vmem [shape: f32[1,256], index: 3, kind: input, shape index: {}]
  %s4 = inlined_call_operand.vmem [shape: f32[1,256], index: 4, kind: input, shape index: {}]
  %s5 = inlined_call_operand.vmem [shape: bf16[32,768], index: 5, kind: output, shape index: {}]
  %s6 = sld [smem:[#allocation0]]
  $region129: #{cot_forward.16} parent=0
    _
  %s8 = ssub.s32 1, %s6
  %s9 = scalar_select 0, %s8, %s6
  $region1: #{cot_forward.16} parent=0
    #allocation3 [shape = 'u8[262144]{0}', space=vmem, size = 0x40000, scoped, tag = 'input window, operand 1']
    #allocation4 [shape = 'u8[32768]{0}', space=vmem, size = 0x8000, scoped, tag = 'output window, operand 0']
    loop: start=0, step=1, limit=5
    $region2: #{cot_forward.16} parent=1 // loop_pre_header
      _
    $region3: #{cot_forward.16} parent=1 // loop_header
      %s11 = sphi 0, %s15
      %p12 = scmp.ge.s32.totalorder %s11, 5
      %s18 = sphi 0, %s37
      %s19 = sphi 0, %s33
      %s20 = sphi 0, %s29
      %s21 = sphi 0, %s18
      %s22 = sphi 0, %s19
      %s23 = sphi 0, %s20
      %s24 = sphi 0, %s21
      %s25 = sphi 0, %s22
      %s26 = sphi 0, %s23
      %s42 = sphi 0, %s44
      %s45 = sphi 0, %s42
      %s46 = sphi 0, %s45
      %s62 = sphi 0, %s46
      %s70 = sphi 0, %s72
      %s73 = sphi 0, %s70
      %s74 = sphi 0, %s73
      %s90 = sphi 0, %s74
      %s96 = sphi 0, %s98
      %s99 = sphi 0, %s96
      %s100 = sphi 0, %s99
      %s116 = sphi 0, %s100
      %s122 = sphi 0, %s124
      %s125 = sphi 0, %s122
      %s126 = sphi 0, %s125
      %s142 = sphi 0, %s126
      %s148 = sphi 0, %s150
      %s151 = sphi 0, %s148
      %s152 = sphi 0, %s151
      %s168 = sphi 0, %s152
      %s176 = sphi 0, %s178
      %s179 = sphi 0, %s176
      %s180 = sphi 0, %s179
      %s196 = sphi 0, %s180
    $region4: #{cot_forward.16} parent=1 // loop_header_branch
      %14 = sbr.rel (%p12) target = $region8
    $region5: #{cot_forward.16} parent=1 // loop_body
      %s16 = ssub.s32 %s11, 1
      %s17 = ssub.s32 %s11, 2
      %s27 = sadd.s32 1, %s20
      %p28 = scmp.ge.s32.totalorder %s27, 1
      %s29 = scalar_select %p28, 0, %s27
      %s30 = sadd.s32 1, %s19
      %s31 = scalar_select %p28, %s30, %s19
      %p32 = scmp.ge.s32.totalorder %s31, 3
      %s33 = scalar_select %p32, 0, %s31
      %s34 = sadd.s32 1, %s18
      %s35 = scalar_select %p32, %s34, %s18
      %p36 = scmp.ge.s32.totalorder %s35, 1
      %s37 = scalar_select %p36, 0, %s35
      %s38 = ssub.s32 %s18, %s37
      %s39 = ssub.s32 %s20, %s29
      %s40 = sor.u32 %s38, %s39
      %p41 = scmp.eq.s32.totalorder %s40, 0
      %s43 = sadd.s32 %s42, 1
      %s44 = scalar_select %p41, %s42, %s43
      %p47 = pneg %p41
      %p48 = scmp.eq.s32.totalorder %s11, 2
      %p49 = por %p47, %p48
      %p50 = scmp.ne.s32.totalorder %s42, %s45
      %p51 = scmp.eq.s32.totalorder %s11, 0
      %p52 = por %p50, %p51
      %p53 = scmp.ne.s32.totalorder %s42, %s45
      %p54 = scmp.eq.s32.totalorder %s16, 2
      %p55 = por %p53, %p54
      %p56 = scmp.ne.s32.totalorder %s45, %s46
      %p57 = scmp.eq.s32.totalorder %s16, 0
      %p58 = por %p56, %p57
      %p59 = scmp.ne.s32.totalorder %s45, %s46
      %p60 = scmp.eq.s32.totalorder %s17, 2
      %p61 = por %p59, %p60
      %p63 = scmp.ne.s32.totalorder %s46, %s62
      %p64 = scmp.eq.s32.totalorder %s17, 0
      %p65 = por %p63, %p64
      %s66 = ssub.s32 %s20, %s29
      %s67 = ssub.s32 %s19, %s33
      %s68 = sor.u32 %s66, %s67
      %p69 = scmp.eq.s32.totalorder %s68, 0
      %s71 = sadd.s32 %s70, 1
      %s72 = scalar_select %p69, %s70, %s71
      %p75 = pneg %p69
      %p76 = scmp.eq.s32.totalorder %s11, 2
      %p77 = por %p75, %p76
      %p78 = scmp.ne.s32.totalorder %s70, %s73
      %p79 = scmp.eq.s32.totalorder %s11, 0
      %p80 = por %p78, %p79
      %p81 = scmp.ne.s32.totalorder %s70, %s73
      %p82 = scmp.eq.s32.totalorder %s16, 2
      %p83 = por %p81, %p82
      %p84 = scmp.ne.s32.totalorder %s73, %s74
      %p85 = scmp.eq.s32.totalorder %s16, 0
      %p86 = por %p84, %p85
      %p87 = scmp.ne.s32.totalorder %s73, %s74
      %p88 = scmp.eq.s32.totalorder %s17, 2
      %p89 = por %p87, %p88
      %p91 = scmp.ne.s32.totalorder %s74, %s90
      %p92 = scmp.eq.s32.totalorder %s17, 0
      %p93 = por %p91, %p92
      %s94 = ssub.s32 %s19, %s33
      %p95 = scmp.eq.s32.totalorder %s94, 0
      %s97 = sadd.s32 %s96, 1
      %s98 = scalar_select %p95, %s96, %s97
      %p101 = pneg %p95
      %p102 = scmp.eq.s32.totalorder %s11, 2
      %p103 = por %p101, %p102
      %p104 = scmp.ne.s32.totalorder %s96, %s99
      %p105 = scmp.eq.s32.totalorder %s11, 0
      %p106 = por %p104, %p105
      %p107 = scmp.ne.s32.totalorder %s96, %s99
      %p108 = scmp.eq.s32.totalorder %s16, 2
      %p109 = por %p107, %p108
      %p110 = scmp.ne.s32.totalorder %s99, %s100
      %p111 = scmp.eq.s32.totalorder %s16, 0
      %p112 = por %p110, %p111
      %p113 = scmp.ne.s32.totalorder %s99, %s100
      %p114 = scmp.eq.s32.totalorder %s17, 2
      %p115 = por %p113, %p114
      %p117 = scmp.ne.s32.totalorder %s100, %s116
      %p118 = scmp.eq.s32.totalorder %s17, 0
      %p119 = por %p117, %p118
      %s120 = ssub.s32 %s20, %s29
      %p121 = scmp.eq.s32.totalorder %s120, 0
      %s123 = sadd.s32 %s122, 1
      %s124 = scalar_select %p121, %s122, %s123
      %p127 = pneg %p121
      %p128 = scmp.eq.s32.totalorder %s11, 2
      %p129 = por %p127, %p128
      %p130 = scmp.ne.s32.totalorder %s122, %s125
      %p131 = scmp.eq.s32.totalorder %s11, 0
      %p132 = por %p130, %p131
      %p133 = scmp.ne.s32.totalorder %s122, %s125
      %p134 = scmp.eq.s32.totalorder %s16, 2
      %p135 = por %p133, %p134
      %p136 = scmp.ne.s32.totalorder %s125, %s126
      %p137 = scmp.eq.s32.totalorder %s16, 0
      %p138 = por %p136, %p137
      %p139 = scmp.ne.s32.totalorder %s125, %s126
      %p140 = scmp.eq.s32.totalorder %s17, 2
      %p141 = por %p139, %p140
      %p143 = scmp.ne.s32.totalorder %s126, %s142
      %p144 = scmp.eq.s32.totalorder %s17, 0
      %p145 = por %p143, %p144
      %s146 = ssub.s32 %s20, %s29
      %p147 = scmp.eq.s32.totalorder %s146, 0
      %s149 = sadd.s32 %s148, 1
      %s150 = scalar_select %p147, %s148, %s149
      %p153 = pneg %p147
      %p154 = scmp.eq.s32.totalorder %s11, 2
      %p155 = por %p153, %p154
      %p156 = scmp.ne.s32.totalorder %s148, %s151
      %p157 = scmp.eq.s32.totalorder %s11, 0
      %p158 = por %p156, %p157
      %p159 = scmp.ne.s32.totalorder %s148, %s151
      %p160 = scmp.eq.s32.totalorder %s16, 2
      %p161 = por %p159, %p160
      %p162 = scmp.ne.s32.totalorder %s151, %s152
      %p163 = scmp.eq.s32.totalorder %s16, 0
      %p164 = por %p162, %p163
      %p165 = scmp.ne.s32.totalorder %s151, %s152
      %p166 = scmp.eq.s32.totalorder %s17, 2
      %p167 = por %p165, %p166
      %p169 = scmp.ne.s32.totalorder %s152, %s168
      %p170 = scmp.eq.s32.totalorder %s17, 0
      %p171 = por %p169, %p170
      %s172 = ssub.s32 %s18, %s37
      %s173 = ssub.s32 %s19, %s33
      %s174 = sor.u32 %s172, %s173
      %p175 = scmp.eq.s32.totalorder %s174, 0
      %s177 = sadd.s32 %s176, 1
      %s178 = scalar_select %p175, %s176, %s177
      %p181 = pneg %p175
      %p182 = scmp.eq.s32.totalorder %s11, 2
      %p183 = por %p181, %p182
      %p184 = scmp.ne.s32.totalorder %s176, %s179
      %p185 = scmp.eq.s32.totalorder %s11, 0
      %p186 = por %p184, %p185
      %p187 = scmp.ne.s32.totalorder %s176, %s179
      %p188 = scmp.eq.s32.totalorder %s16, 2
      %p189 = por %p187, %p188
      %p190 = scmp.ne.s32.totalorder %s179, %s180
      %p191 = scmp.eq.s32.totalorder %s16, 0
      %p192 = por %p190, %p191
      %p193 = scmp.ne.s32.totalorder %s179, %s180
      %p194 = scmp.eq.s32.totalorder %s17, 2
      %p195 = por %p193, %p194
      %p197 = scmp.ne.s32.totalorder %s180, %s196
      %p198 = scmp.eq.s32.totalorder %s17, 0
      %p199 = por %p197, %p198
      %p200 = scmp.le.s32.totalorder 1, %s11
      %p201 = scmp.lt.s32.totalorder %s11, 4
      %p202 = pnand %p200, %p201
      %p203 = pneg %p202
      // Predicated region
      $region9: #{cot_forward.16} parent=5 // pred_check
        _
      $region10: #{cot_forward.16} parent=5 // pred_check_branch
        %205 = sbr.rel (%p202) target = $region12
      $region11: #{cot_forward.16} parent=5 // pred_region
        %s206 = ssub.s32 %s11, 1
        // Predicated region
        $region13: #{cot_forward.16} parent=11 // pred_check
          %p207 = pneg %p58
        $region14: #{cot_forward.16} parent=11 // pred_check_branch
          %209 = sbr.rel (%p207) target = $region16
        $region15: #{cot_forward.16} parent=11 // pred_region
          %s210 = smul.u32 4, %s21
          %s211 = smul.u32 2, %s23
          %p212 = scmp.lt.s32.totalorder %s210, 3
          %s213 = scalar_select %p212, %s210, 3
          %p214 = scmp.lt.s32.totalorder %s211, 1
          %s215 = scalar_select %p214, %s211, 1
          %s216 = smul.addr %s213, 2
          %s217 = sadd.s32 %s215, %s216
          %s218 = smul.addr %s217, 4
          %s219 = scalar_lea.vmem %s0, %s218
          %s220 = smul.u32 4, %s21
          %s221 = smul.u32 2, %s23
        $region16: #{cot_forward.16} parent=11 // pred_fallthru
          _
        // Predicated region
        $region17: #{cot_forward.16} parent=11 // pred_check
          %p222 = pneg %p138
        $region18: #{cot_forward.16} parent=11 // pred_check_branch
          %224 = sbr.rel (%p222) target = $region20
        $region19: #{cot_forward.16} parent=11 // pred_region
          %s225 = smul.u32 2, %s23
          %p226 = scmp.lt.s32.totalorder %s225, 1
          %s227 = scalar_select %p226, %s225, 1
          %s228 = scalar_lea.vmem %s3, %s227
          %s229 = smul.u32 2, %s23
        $region20: #{cot_forward.16} parent=11 // pred_fallthru
          _
        // Predicated region
        $region21: #{cot_forward.16} parent=11 // pred_check
          %p230 = pneg %p164
        $region22: #{cot_forward.16} parent=11 // pred_check_branch
          %232 = sbr.rel (%p230) target = $region24
        $region23: #{cot_forward.16} parent=11 // pred_region
          %s233 = smul.u32 2, %s23
          %p234 = scmp.lt.s32.totalorder %s233, 1
          %s235 = scalar_select %p234, %s233, 1
          %s236 = scalar_lea.vmem %s4, %s235
          %s237 = smul.u32 2, %s23
        $region24: #{cot_forward.16} parent=11 // pred_fallthru
          _
      $region12: #{cot_forward.16} parent=5 // pred_fallthru
        _
      %p238 = scmp.lt.s32.totalorder %s11, 3
      // Predicated region
      $region25: #{cot_forward.16} parent=5 // pred_check
        %p239 = pneg %p238
      $region26: #{cot_forward.16} parent=5 // pred_check_branch
        %241 = sbr.rel (%p239) target = $region28
      $region27: #{cot_forward.16} parent=5 // pred_region
        // Predicated region
        $region29: #{cot_forward.16} parent=27 // pred_check
          %p242 = pneg %p80
        $region30: #{cot_forward.16} parent=27 // pred_check_branch
          %244 = sbr.rel (%p242) target = $region32
        $region31: #{cot_forward.16} parent=27 // pred_region
          %s245 = sand.u32 %s70, 1
          %s246 = sand.u32 %s70, 1
          %s247 = smul.addr %s246, 256
          %s248 = scalar_lea.vmem [#allocation3], %s247
          %s249 = smul.u32 32, %s20
          %s250 = smul.u32 2, %s19
          %s251 = smul.addr %s249, 6
          %s252 = sadd.s32 %s250, %s251
          %s253 = smul.addr %s252, 4
          %s254 = scalar_lea.vmem %s1, %s253
          // Predicated region
          $region33: #{cot_forward.16} parent=31 // pred_check
            _
          $region34: #{cot_forward.16} parent=31 // pred_check_branch
            %256 = sbr.rel (0) target = $region36
          $region35: #{cot_forward.16} parent=31 // pred_region
            // Predicated region
            $region37: #{cot_forward.16} parent=35 // pred_check
              _
            $region38: #{cot_forward.16} parent=35 // pred_check_branch
              %258 = sbr.rel (0) target = $region40
            $region39: #{cot_forward.16} parent=35 // pred_region
              // Predicated region
              $region52: #{cot_forward.16} parent=39 // pred_check
                _
              $region53: #{cot_forward.16} parent=39 // pred_check_branch
                %335 = sbr.rel (0) target = $region55
              $region54: #{cot_forward.16} parent=39 // pred_region
                loop: start=0, step=1, limit=1
                $region56: #{cot_forward.16} parent=54 // loop_pre_header
                  _
                $region57: #{cot_forward.16} parent=54 // loop_header
                  %s337 = sphi 0, %s341
                  %p338 = scmp.ge.s32.totalorder %s337, 1
                  %s342 = sphi %s254, %s254
                  %s343 = sphi %s248, %s248
                $region58: #{cot_forward.16} parent=54 // loop_header_branch
                  %340 = sbr.rel (%p338) target = $region62
                $region59: #{cot_forward.16} parent=54 // loop_body
                  %v344 = vld [vmem:[%s342] sm:$0xff]
                  %345 = vst [vmem:[%s343] sm:$0xff] %v344
                  %v346 = vld [vmem:[%s342 + $0x18] sm:$0xff]
                  %347 = vst [vmem:[%s343 + $0x8] sm:$0xff] %v346
                  %v348 = vld [vmem:[%s342 + $0x30] sm:$0xff]
                  %349 = vst [vmem:[%s343 + $0x10] sm:$0xff] %v348
                  %v350 = vld [vmem:[%s342 + $0x48] sm:$0xff]
                  %351 = vst [vmem:[%s343 + $0x18] sm:$0xff] %v350
                  %v352 = vld [vmem:[%s342 + $0x60] sm:$0xff]
                  %353 = vst [vmem:[%s343 + $0x20] sm:$0xff] %v352
                  %v354 = vld [vmem:[%s342 + $0x78] sm:$0xff]
                  %355 = vst [vmem:[%s343 + $0x28] sm:$0xff] %v354
                  %v356 = vld [vmem:[%s342 + $0x90] sm:$0xff]
                  %357 = vst [vmem:[%s343 + $0x30] sm:$0xff] %v356
                  %v358 = vld [vmem:[%s342 + $0xa8] sm:$0xff]
                  %359 = vst [vmem:[%s343 + $0x38] sm:$0xff] %v358
                  %v360 = vld [vmem:[%s342 + $0xc0] sm:$0xff]
                  %361 = vst [vmem:[%s343 + $0x40] sm:$0xff] %v360
                  %v362 = vld [vmem:[%s342 + $0xd8] sm:$0xff]
                  %363 = vst [vmem:[%s343 + $0x48] sm:$0xff] %v362
                  %v364 = vld [vmem:[%s342 + $0xf0] sm:$0xff]
                  %365 = vst [vmem:[%s343 + $0x50] sm:$0xff] %v364
                  %v366 = vld [vmem:[%s342 + $0x108] sm:$0xff]
                  %367 = vst [vmem:[%s343 + $0x58] sm:$0xff] %v366
                  %v368 = vld [vmem:[%s342 + $0x120] sm:$0xff]
                  %369 = vst [vmem:[%s343 + $0x60] sm:$0xff] %v368
                  %v370 = vld [vmem:[%s342 + $0x138] sm:$0xff]
                  %371 = vst [vmem:[%s343 + $0x68] sm:$0xff] %v370
                  %v372 = vld [vmem:[%s342 + $0x150] sm:$0xff]
                  %373 = vst [vmem:[%s343 + $0x70] sm:$0xff] %v372
                  %v374 = vld [vmem:[%s342 + $0x168] sm:$0xff]
                  %375 = vst [vmem:[%s343 + $0x78] sm:$0xff] %v374
                  %v376 = vld [vmem:[%s342 + $0x180] sm:$0xff]
                  %377 = vst [vmem:[%s343 + $0x80] sm:$0xff] %v376
                  %v378 = vld [vmem:[%s342 + $0x198] sm:$0xff]
                  %379 = vst [vmem:[%s343 + $0x88] sm:$0xff] %v378
                  %v380 = vld [vmem:[%s342 + $0x1b0] sm:$0xff]
                  %381 = vst [vmem:[%s343 + $0x90] sm:$0xff] %v380
                  %v382 = vld [vmem:[%s342 + $0x1c8] sm:$0xff]
                  %383 = vst [vmem:[%s343 + $0x98] sm:$0xff] %v382
                  %v384 = vld [vmem:[%s342 + $0x1e0] sm:$0xff]
                  %385 = vst [vmem:[%s343 + $0xa0] sm:$0xff] %v384
                  %v386 = vld [vmem:[%s342 + $0x1f8] sm:$0xff]
                  %387 = vst [vmem:[%s343 + $0xa8] sm:$0xff] %v386
                  %v388 = vld [vmem:[%s342 + $0x210] sm:$0xff]
                  %389 = vst [vmem:[%s343 + $0xb0] sm:$0xff] %v388
                  %v390 = vld [vmem:[%s342 + $0x228] sm:$0xff]
                  %391 = vst [vmem:[%s343 + $0xb8] sm:$0xff] %v390
                  %v392 = vld [vmem:[%s342 + $0x240] sm:$0xff]
                  %393 = vst [vmem:[%s343 + $0xc0] sm:$0xff] %v392
                  %v394 = vld [vmem:[%s342 + $0x258] sm:$0xff]
                  %395 = vst [vmem:[%s343 + $0xc8] sm:$0xff] %v394
                  %v396 = vld [vmem:[%s342 + $0x270] sm:$0xff]
                  %397 = vst [vmem:[%s343 + $0xd0] sm:$0xff] %v396
                  %v398 = vld [vmem:[%s342 + $0x288] sm:$0xff]
                  %399 = vst [vmem:[%s343 + $0xd8] sm:$0xff] %v398
                  %v400 = vld [vmem:[%s342 + $0x2a0] sm:$0xff]
                  %401 = vst [vmem:[%s343 + $0xe0] sm:$0xff] %v400
                  %v402 = vld [vmem:[%s342 + $0x2b8] sm:$0xff]
                  %403 = vst [vmem:[%s343 + $0xe8] sm:$0xff] %v402
                  %v404 = vld [vmem:[%s342 + $0x2d0] sm:$0xff]
                  %405 = vst [vmem:[%s343 + $0xf0] sm:$0xff] %v404
                  %v406 = vld [vmem:[%s342 + $0x2e8] sm:$0xff]
                  %407 = vst [vmem:[%s343 + $0xf8] sm:$0xff] %v406
                $region60: #{cot_forward.16} parent=54 // loop_footer
                  %s341 = sadd.s32 1, %s337
                $region61: #{cot_forward.16} parent=54 // loop_footer_branch
                  %336 = sbr.rel target = $region57
                $region62: #{cot_forward.16} parent=54 // loop_exit
                  _
              $region55: #{cot_forward.16} parent=39 // pred_fallthru
                _
              // Predicated region
              $region63: #{cot_forward.16} parent=39 // pred_check
                _
              $region64: #{cot_forward.16} parent=39 // pred_check_branch
                %409 = sbr.rel target = $region66
              $region65: #{cot_forward.16} parent=39 // pred_region
                _
              $region66: #{cot_forward.16} parent=39 // pred_fallthru
                _
            $region40: #{cot_forward.16} parent=35 // pred_fallthru
              _
            // Predicated region
            $region41: #{cot_forward.16} parent=35 // pred_check
              _
            $region42: #{cot_forward.16} parent=35 // pred_check_branch
              %260 = sbr.rel target = $region44
            $region43: #{cot_forward.16} parent=35 // pred_region
              loop: start=0, step=1, limit=1
              $region45: #{cot_forward.16} parent=43 // loop_pre_header
                _
              $region46: #{cot_forward.16} parent=43 // loop_header
                %s263 = sphi 0, %s267
                %p264 = scmp.ge.s32.totalorder %s263, 1
                %s268 = sphi %s254, %s254
                %s269 = sphi %s248, %s248
              $region47: #{cot_forward.16} parent=43 // loop_header_branch
                %266 = sbr.rel (%p264) target = $region51
              $region48: #{cot_forward.16} parent=43 // loop_body
                %v270 = vld [vmem:[%s268] sm:$0xff]
                %271 = vst [vmem:[%s269] sm:$0xff] %v270
                %v272 = vld [vmem:[%s268 + $0x18] sm:$0xff]
                %273 = vst [vmem:[%s269 + $0x8] sm:$0xff] %v272
                %v274 = vld [vmem:[%s268 + $0x30] sm:$0xff]
                %275 = vst [vmem:[%s269 + $0x10] sm:$0xff] %v274
                %v276 = vld [vmem:[%s268 + $0x48] sm:$0xff]
                %277 = vst [vmem:[%s269 + $0x18] sm:$0xff] %v276
                %v278 = vld [vmem:[%s268 + $0x60] sm:$0xff]
                %279 = vst [vmem:[%s269 + $0x20] sm:$0xff] %v278
                %v280 = vld [vmem:[%s268 + $0x78] sm:$0xff]
                %281 = vst [vmem:[%s269 + $0x28] sm:$0xff] %v280
                %v282 = vld [vmem:[%s268 + $0x90] sm:$0xff]
                %283 = vst [vmem:[%s269 + $0x30] sm:$0xff] %v282
                %v284 = vld [vmem:[%s268 + $0xa8] sm:$0xff]
                %285 = vst [vmem:[%s269 + $0x38] sm:$0xff] %v284
                %v286 = vld [vmem:[%s268 + $0xc0] sm:$0xff]
                %287 = vst [vmem:[%s269 + $0x40] sm:$0xff] %v286
                %v288 = vld [vmem:[%s268 + $0xd8] sm:$0xff]
                %289 = vst [vmem:[%s269 + $0x48] sm:$0xff] %v288
                %v290 = vld [vmem:[%s268 + $0xf0] sm:$0xff]
                %291 = vst [vmem:[%s269 + $0x50] sm:$0xff] %v290
                %v292 = vld [vmem:[%s268 + $0x108] sm:$0xff]
                %293 = vst [vmem:[%s269 + $0x58] sm:$0xff] %v292
                %v294 = vld [vmem:[%s268 + $0x120] sm:$0xff]
                %295 = vst [vmem:[%s269 + $0x60] sm:$0xff] %v294
                %v296 = vld [vmem:[%s268 + $0x138] sm:$0xff]
                %297 = vst [vmem:[%s269 + $0x68] sm:$0xff] %v296
                %v298 = vld [vmem:[%s268 + $0x150] sm:$0xff]
                %299 = vst [vmem:[%s269 + $0x70] sm:$0xff] %v298
                %v300 = vld [vmem:[%s268 + $0x168] sm:$0xff]
                %301 = vst [vmem:[%s269 + $0x78] sm:$0xff] %v300
                %v302 = vld [vmem:[%s268 + $0x180] sm:$0xff]
                %303 = vst [vmem:[%s269 + $0x80] sm:$0xff] %v302
                %v304 = vld [vmem:[%s268 + $0x198] sm:$0xff]
                %305 = vst [vmem:[%s269 + $0x88] sm:$0xff] %v304
                %v306 = vld [vmem:[%s268 + $0x1b0] sm:$0xff]
                %307 = vst [vmem:[%s269 + $0x90] sm:$0xff] %v306
                %v308 = vld [vmem:[%s268 + $0x1c8] sm:$0xff]
                %309 = vst [vmem:[%s269 + $0x98] sm:$0xff] %v308
                %v310 = vld [vmem:[%s268 + $0x1e0] sm:$0xff]
                %311 = vst [vmem:[%s269 + $0xa0] sm:$0xff] %v310
                %v312 = vld [vmem:[%s268 + $0x1f8] sm:$0xff]
                %313 = vst [vmem:[%s269 + $0xa8] sm:$0xff] %v312
                %v314 = vld [vmem:[%s268 + $0x210] sm:$0xff]
                %315 = vst [vmem:[%s269 + $0xb0] sm:$0xff] %v314
                %v316 = vld [vmem:[%s268 + $0x228] sm:$0xff]
                %317 = vst [vmem:[%s269 + $0xb8] sm:$0xff] %v316
                %v318 = vld [vmem:[%s268 + $0x240] sm:$0xff]
                %319 = vst [vmem:[%s269 + $0xc0] sm:$0xff] %v318
                %v320 = vld [vmem:[%s268 + $0x258] sm:$0xff]
                %321 = vst [vmem:[%s269 + $0xc8] sm:$0xff] %v320
                %v322 = vld [vmem:[%s268 + $0x270] sm:$0xff]
                %323 = vst [vmem:[%s269 + $0xd0] sm:$0xff] %v322
                %v324 = vld [vmem:[%s268 + $0x288] sm:$0xff]
                %325 = vst [vmem:[%s269 + $0xd8] sm:$0xff] %v324
                %v326 = vld [vmem:[%s268 + $0x2a0] sm:$0xff]
                %327 = vst [vmem:[%s269 + $0xe0] sm:$0xff] %v326
                %v328 = vld [vmem:[%s268 + $0x2b8] sm:$0xff]
                %329 = vst [vmem:[%s269 + $0xe8] sm:$0xff] %v328
                %v330 = vld [vmem:[%s268 + $0x2d0] sm:$0xff]
                %331 = vst [vmem:[%s269 + $0xf0] sm:$0xff] %v330
                %v332 = vld [vmem:[%s268 + $0x2e8] sm:$0xff]
                %333 = vst [vmem:[%s269 + $0xf8] sm:$0xff] %v332
              $region49: #{cot_forward.16} parent=43 // loop_footer
                %s267 = sadd.s32 1, %s263
              $region50: #{cot_forward.16} parent=43 // loop_footer_branch
                %262 = sbr.rel target = $region46
              $region51: #{cot_forward.16} parent=43 // loop_exit
                _
            $region44: #{cot_forward.16} parent=35 // pred_fallthru
              _
          $region36: #{cot_forward.16} parent=31 // pred_fallthru
            _
          %410 = vnop
        $region32: #{cot_forward.16} parent=27 // pred_fallthru
          _
        // Predicated region
        $region67: #{cot_forward.16} parent=27 // pred_check
          %p411 = pneg %p106
        $region68: #{cot_forward.16} parent=27 // pred_check_branch
          %413 = sbr.rel (%p411) target = $region70
        $region69: #{cot_forward.16} parent=27 // pred_region
          %s414 = smul.u32 2, %s19
          %p415 = scmp.lt.s32.totalorder %s414, 5
          %s416 = scalar_select %p415, %s414, 5
          %s417 = scalar_lea.vmem %s2, %s416
          %s418 = smul.u32 2, %s19
        $region70: #{cot_forward.16} parent=27 // pred_fallthru
          _
      $region28: #{cot_forward.16} parent=5 // pred_fallthru
        _
      %p419 = scmp.le.s32.totalorder 1, %s11
      %p420 = scmp.lt.s32.totalorder %s11, 4
      %p421 = pnand %p419, %p420
      %p422 = pneg %p421
      // Predicated region
      $region71: #{cot_forward.16} parent=5 // pred_check
        _
      $region72: #{cot_forward.16} parent=5 // pred_check_branch
        %424 = sbr.rel (%p421) target = $region74
      $region73: #{cot_forward.16} parent=5 // pred_region
        %s425 = ssub.s32 %s11, 1
        %s426 = sand.u32 %s73, 1
        %s427 = sand.u32 %s73, 1
        %s428 = smul.addr %s427, 256
        %s429 = scalar_lea.vmem [#allocation3], %s428
        // Predicated region
        $region75: #{cot_forward.16} parent=73 // pred_check
          %p430 = pneg %p86
        $region76: #{cot_forward.16} parent=73 // pred_check_branch
          %432 = sbr.rel (%p430) target = $region78
        $region77: #{cot_forward.16} parent=73 // pred_region
          _
        $region78: #{cot_forward.16} parent=73 // pred_fallthru
          _
        %s433 = smul.u32 4, %s21
        %s434 = smul.u32 2, %s23
        %p435 = scmp.lt.s32.totalorder %s433, 3
        %s436 = scalar_select %p435, %s433, 3
        %p437 = scmp.lt.s32.totalorder %s434, 1
        %s438 = scalar_select %p437, %s434, 1
        %s439 = smul.addr %s436, 2
        %s440 = sadd.s32 %s438, %s439
        %s441 = smul.addr %s440, 4
        %s442 = scalar_lea.vmem %s0, %s441
        %p443 = pneg %p58
        %p444 = pneg %p55
        %s445 = sand.u32 %s73, 1
        %s446 = sand.u32 %s73, 1
        %s447 = smul.addr %s446, 256
        %s448 = scalar_lea.vmem [#allocation3], %s447
        %p449 = pneg %p86
        %p450 = pneg %p83
        %s451 = smul.u32 2, %s22
        %p452 = scmp.lt.s32.totalorder %s451, 5
        %s453 = scalar_select %p452, %s451, 5
        %s454 = scalar_lea.vmem %s2, %s453
        %p455 = pneg %p112
        %p456 = pneg %p109
        %s457 = smul.u32 2, %s23
        %p458 = scmp.lt.s32.totalorder %s457, 1
        %s459 = scalar_select %p458, %s457, 1
        %s460 = scalar_lea.vmem %s3, %s459
        %p461 = pneg %p138
        %p462 = pneg %p135
        %s463 = smul.u32 2, %s23
        %p464 = scmp.lt.s32.totalorder %s463, 1
        %s465 = scalar_select %p464, %s463, 1
        %s466 = scalar_lea.vmem %s4, %s465
        %p467 = pneg %p164
        %p468 = pneg %p161
        %p469 = pneg %p192
        %p470 = pneg %p189
        %s471 = sand.u32 %s179, 1
        %s472 = sand.u32 %s179, 1
        %s473 = smul.addr %s472, 32
        %s474 = scalar_lea.vmem [#allocation4], %s473
        %s475 = smul.u32 4, %s21
        %s476 = smul.u32 2, %s23
        %p477 = scmp.lt.s32.totalorder %s475, 3
        %s478 = scalar_select %p477, %s475, 3
        %p479 = scmp.lt.s32.totalorder %s476, 1
        %s480 = scalar_select %p479, %s476, 1
        %s481 = smul.addr %s478, 2
        %s482 = sadd.s32 %s480, %s481
        %s483 = smul.addr %s482, 4
        %s484 = scalar_lea.vmem %s0, %s483
        %s485 = smul.u32 4, %s21
        %s486 = smul.u32 2, %s23
        %s487 = smul.u32 32, %s23
        %s488 = smul.u32 2, %s22
        %s489 = smul.u32 2, %s22
        %p490 = scmp.lt.s32.totalorder %s489, 5
        %s491 = scalar_select %p490, %s489, 5
        %s492 = scalar_lea.vmem %s2, %s491
        %s493 = smul.u32 2, %s22
        %s494 = smul.u32 2, %s23
        %p495 = scmp.lt.s32.totalorder %s494, 1
        %s496 = scalar_select %p495, %s494, 1
        %s497 = scalar_lea.vmem %s3, %s496
        %s498 = smul.u32 2, %s23
        %s499 = smul.u32 2, %s23
        %p500 = scmp.lt.s32.totalorder %s499, 1
        %s501 = scalar_select %p500, %s499, 1
        %s502 = scalar_lea.vmem %s4, %s501
        %s503 = smul.u32 2, %s23
        %s504 = smul.u32 4, %s21
        %s505 = smul.u32 2, %s22
        %p506 = scmp.eq.s32.totalorder %s22, 0
        // Predicated region
        $region79: #{cot_forward.16} parent=73 // pred_check
          %p507 = pneg %p506
        $region80: #{cot_forward.16} parent=73 // pred_check_branch
          %509 = sbr.rel (%p507) target = $region82
        $region81: #{cot_forward.16} parent=73 // pred_region
          %v510 = vld [vmem:[%s484] sm:$0xff]
          %v511 = vld [vmem:[%s484 + $0x8] sm:$0xff]
          %v512 = vld [vmem:[%s484 + $0x10] sm:$0xff]
          %v513 = vld [vmem:[%s484 + $0x18] sm:$0xff]
          %v514 = vunpack.c.l.bf16 %v510
          %v515 = vunpack.c.h.bf16 %v510
          %v516 = vunpack.c.l.bf16 %v511
          %v517 = vunpack.c.h.bf16 %v511
          %v518 = vunpack.c.l.bf16 %v512
          %v519 = vunpack.c.h.bf16 %v512
          %v520 = vunpack.c.l.bf16 %v513
          %v521 = vunpack.c.h.bf16 %v513
          %v522 = vadd.f32 %v514, %v515
          %523 = vadd.xlane.f32.xlu0 %v522
          %v524 = vpop.xlane.xlu0 %523
          %v525 = vadd.f32 %v516, %v517
          %526 = vadd.xlane.f32.xlu0 %v525
          %v527 = vpop.xlane.xlu0 %526
          %v528 = vadd.f32 %v518, %v519
          %529 = vadd.xlane.f32.xlu0 %v528
          %v530 = vpop.xlane.xlu0 %529
          %v531 = vadd.f32 %v520, %v521
          %532 = vadd.xlane.f32.xlu0 %v531
          %v533 = vpop.xlane.xlu0 %532
          %v534 = vrcp.pop 256.0
          %v535 = vmul.f32 %v524, %v534
          %v536 = vmul.f32 %v527, %v534
          %v537 = vmul.f32 %v530, %v534
          %v538 = vmul.f32 %v533, %v534
          %v539 = vsub.f32 %v514, %v535
          %v540 = vsub.f32 %v515, %v535
          %v541 = vsub.f32 %v516, %v536
          %v542 = vsub.f32 %v517, %v536
          %v543 = vsub.f32 %v518, %v537
          %v544 = vsub.f32 %v519, %v537
          %v545 = vsub.f32 %v520, %v538
          %v546 = vsub.f32 %v521, %v538
          %v547 = vmul.f32 %v539, %v539
          %v548 = vmul.f32 %v540, %v540
          %v549 = vmul.f32 %v541, %v541
          %v550 = vmul.f32 %v542, %v542
          %v551 = vmul.f32 %v543, %v543
          %v552 = vmul.f32 %v544, %v544
          %v553 = vmul.f32 %v545, %v545
          %v554 = vmul.f32 %v546, %v546
          %v555 = vadd.f32 %v547, %v548
          %556 = vadd.xlane.f32.xlu0 %v555
          %v557 = vpop.xlane.xlu0 %556
          %v558 = vadd.f32 %v549, %v550
          %559 = vadd.xlane.f32.xlu0 %v558
          %v560 = vpop.xlane.xlu0 %559
          %v561 = vadd.f32 %v551, %v552
          %562 = vadd.xlane.f32.xlu0 %v561
          %v563 = vpop.xlane.xlu0 %562
          %v564 = vadd.f32 %v553, %v554
          %565 = vadd.xlane.f32.xlu0 %v564
          %v566 = vpop.xlane.xlu0 %565
          %v567 = vmul.f32 %v557, %v534
          %v568 = vmul.f32 %v560, %v534
          %v569 = vmul.f32 %v563, %v534
          %v570 = vmul.f32 %v566, %v534
          %v571 = vadd.f32 %v567, 1e-05
          %v572 = vadd.f32 %v568, 1e-05
          %v573 = vadd.f32 %v569, 1e-05
          %v574 = vadd.f32 %v570, 1e-05
          %v575 = vrsqrt.pop %v571
          %v576 = vrsqrt.pop %v572
          %v577 = vrsqrt.pop %v573
          %v578 = vrsqrt.pop %v574
          %v579 = vmul.f32 %v539, %v575
          %v580 = vmul.f32 %v540, %v575
          %v581 = vmul.f32 %v541, %v576
          %v582 = vmul.f32 %v542, %v576
          %v583 = vmul.f32 %v543, %v577
          %v584 = vmul.f32 %v544, %v577
          %v585 = vmul.f32 %v545, %v578
          %v586 = vmul.f32 %v546, %v578
          %v587 = vld [vmem:[%s497] sm:$0x3]
          %v589 = vlaneseq
          %v590 = vshrl.u32 %v589, 7
          %v591 = vsub.s32 0, %v590
          %v592 = vrot.slane %v587, %v591
          %v593 = vlaneseq
          %v594 = vshrl.u32 %v593, 7
          %v595 = vsub.s32 1, %v594
          %v596 = vrot.slane %v587, %v595
          %v599 = vmul.f32 %v579, %v592
          %v600 = vmul.f32 %v580, %v596
          %v601 = vmul.f32 %v581, %v592
          %v602 = vmul.f32 %v582, %v596
          %v603 = vmul.f32 %v583, %v592
          %v604 = vmul.f32 %v584, %v596
          %v605 = vmul.f32 %v585, %v592
          %v606 = vmul.f32 %v586, %v596
          %v607 = vld [vmem:[%s502] sm:$0x3]
          %v609 = vlaneseq
          %v610 = vshrl.u32 %v609, 7
          %v611 = vsub.s32 0, %v610
          %v612 = vrot.slane %v607, %v611
          %v613 = vlaneseq
          %v614 = vshrl.u32 %v613, 7
          %v615 = vsub.s32 1, %v614
          %v616 = vrot.slane %v607, %v615
          %v619 = vadd.f32 %v599, %v612
          %v620 = vadd.f32 %v600, %v616
          %v621 = vadd.f32 %v601, %v612
          %v622 = vadd.f32 %v602, %v616
          %v623 = vadd.f32 %v603, %v612
          %v624 = vadd.f32 %v604, %v616
          %v625 = vadd.f32 %v605, %v612
          %v626 = vadd.f32 %v606, %v616
          %v627 = vpack.c.bf16 %v621, %v619
          %v628 = vpack.c.bf16 %v622, %v620
          %v629 = vpack.c.bf16 %v625, %v623
          %v630 = vpack.c.bf16 %v626, %v624
          %631 = vst [vmem:[#allocation2] sm:$0xff] %v627
          %632 = vst [vmem:[#allocation2 + $0x8] sm:$0xff] %v628
          %633 = vst [vmem:[#allocation2 + $0x10] sm:$0xff] %v629
          %634 = vst [vmem:[#allocation2 + $0x18] sm:$0xff] %v630
        $region82: #{cot_forward.16} parent=73 // pred_fallthru
          _
        %v635 = vld [vmem:[#allocation2] sm:$0xff]
        %v636 = vld [vmem:[#allocation2 + $0x8] sm:$0xff]
        %v637 = vld [vmem:[#allocation2 + $0x10] sm:$0xff]
        %v638 = vld [vmem:[#allocation2 + $0x18] sm:$0xff]
        %v639 = vld [vmem:[%s429] sm:$0xff]
        %v640 = vld [vmem:[%s429 + $0x8] sm:$0xff]
        %v641 = vld [vmem:[%s429 + $0x10] sm:$0xff]
        %v642 = vld [vmem:[%s429 + $0x18] sm:$0xff]
        %v643 = vld [vmem:[%s429 + $0x20] sm:$0xff]
        %v644 = vld [vmem:[%s429 + $0x28] sm:$0xff]
        %v645 = vld [vmem:[%s429 + $0x30] sm:$0xff]
        %v646 = vld [vmem:[%s429 + $0x38] sm:$0xff]
        %v647 = vld [vmem:[%s429 + $0x40] sm:$0xff]
        %v648 = vld [vmem:[%s429 + $0x48] sm:$0xff]
        %v649 = vld [vmem:[%s429 + $0x50] sm:$0xff]
        %v650 = vld [vmem:[%s429 + $0x58] sm:$0xff]
        %v651 = vld [vmem:[%s429 + $0x60] sm:$0xff]
        %v652 = vld [vmem:[%s429 + $0x68] sm:$0xff]
        %v653 = vld [vmem:[%s429 + $0x70] sm:$0xff]
        %v654 = vld [vmem:[%s429 + $0x78] sm:$0xff]
        %v655 = vld [vmem:[%s429 + $0x80] sm:$0xff]
        %v656 = vld [vmem:[%s429 + $0x88] sm:$0xff]
        %v657 = vld [vmem:[%s429 + $0x90] sm:$0xff]
        %v658 = vld [vmem:[%s429 + $0x98] sm:$0xff]
        %v659 = vld [vmem:[%s429 + $0xa0] sm:$0xff]
        %v660 = vld [vmem:[%s429 + $0xa8] sm:$0xff]
        %v661 = vld [vmem:[%s429 + $0xb0] sm:$0xff]
        %v662 = vld [vmem:[%s429 + $0xb8] sm:$0xff]
        %v663 = vld [vmem:[%s429 + $0xc0] sm:$0xff]
        %v664 = vld [vmem:[%s429 + $0xc8] sm:$0xff]
        %v665 = vld [vmem:[%s429 + $0xd0] sm:$0xff]
        %v666 = vld [vmem:[%s429 + $0xd8] sm:$0xff]
        %v667 = vld [vmem:[%s429 + $0xe0] sm:$0xff]
        %v668 = vld [vmem:[%s429 + $0xe8] sm:$0xff]
        %v669 = vld [vmem:[%s429 + $0xf0] sm:$0xff]
        %v670 = vld [vmem:[%s429 + $0xf8] sm:$0xff]
        %v671 = vld [vmem:[%s492] sm:$0x3]
        %v673 = vlaneseq
        %v674 = vshrl.u32 %v673, 7
        %v675 = vsub.s32 0, %v674
        %v676 = vrot.slane %v671, %v675
        %v677 = vlaneseq
        %v678 = vshrl.u32 %v677, 7
        %v679 = vsub.s32 1, %v678
        %v680 = vrot.slane %v671, %v679
        %v715 = vunpack.c.l.b16 %v639
        %v716 = vunpack.c.h.b16 %v639
        %v717 = vunpack.c.l.b16 %v640
        %v718 = vunpack.c.h.b16 %v640
        %v719 = vunpack.c.l.b16 %v641
        %v720 = vunpack.c.h.b16 %v641
        %v721 = vunpack.c.l.b16 %v642
        %v722 = vunpack.c.h.b16 %v642
        %v723 = vunpack.c.l.b16 %v643
        %v724 = vunpack.c.h.b16 %v643
        %v725 = vunpack.c.l.b16 %v644
        %v726 = vunpack.c.h.b16 %v644
        %v727 = vunpack.c.l.b16 %v645
        %v728 = vunpack.c.h.b16 %v645
        %v729 = vunpack.c.l.b16 %v646
        %v730 = vunpack.c.h.b16 %v646
        %v731 = vunpack.c.l.b16 %v647
        %v732 = vunpack.c.h.b16 %v647
        %v733 = vunpack.c.l.b16 %v648
        %v734 = vunpack.c.h.b16 %v648
        %v735 = vunpack.c.l.b16 %v649
        %v736 = vunpack.c.h.b16 %v649
        %v737 = vunpack.c.l.b16 %v650
        %v738 = vunpack.c.h.b16 %v650
        %v739 = vunpack.c.l.b16 %v651
        %v740 = vunpack.c.h.b16 %v651
        %v741 = vunpack.c.l.b16 %v652
        %v742 = vunpack.c.h.b16 %v652
        %v743 = vunpack.c.l.b16 %v653
        %v744 = vunpack.c.h.b16 %v653
        %v745 = vunpack.c.l.b16 %v654
        %v746 = vunpack.c.h.b16 %v654
        %v747 = vunpack.c.l.b16 %v655
        %v748 = vunpack.c.h.b16 %v655
        %v749 = vunpack.c.l.b16 %v656
        %v750 = vunpack.c.h.b16 %v656
        %v751 = vunpack.c.l.b16 %v657
        %v752 = vunpack.c.h.b16 %v657
        %v753 = vunpack.c.l.b16 %v658
        %v754 = vunpack.c.h.b16 %v658
        %v755 = vunpack.c.l.b16 %v659
        %v756 = vunpack.c.h.b16 %v659
        %v757 = vunpack.c.l.b16 %v660
        %v758 = vunpack.c.h.b16 %v660
        %v759 = vunpack.c.l.b16 %v661
        %v760 = vunpack.c.h.b16 %v661
        %v761 = vunpack.c.l.b16 %v662
        %v762 = vunpack.c.h.b16 %v662
        %v763 = vunpack.c.l.b16 %v663
        %v764 = vunpack.c.h.b16 %v663
        %v765 = vunpack.c.l.b16 %v664
        %v766 = vunpack.c.h.b16 %v664
        %v767 = vunpack.c.l.b16 %v665
        %v768 = vunpack.c.h.b16 %v665
        %v769 = vunpack.c.l.b16 %v666
        %v770 = vunpack.c.h.b16 %v666
        %v771 = vunpack.c.l.b16 %v667
        %v772 = vunpack.c.h.b16 %v667
        %v773 = vunpack.c.l.b16 %v668
        %v774 = vunpack.c.h.b16 %v668
        %v775 = vunpack.c.l.b16 %v669
        %v776 = vunpack.c.h.b16 %v669
        %v777 = vunpack.c.l.b16 %v670
        %v778 = vunpack.c.h.b16 %v670
        %v779 = vpack.c.b16 %v717, %v715
        %v780 = vpack.c.b16 %v718, %v716
        %v781 = vpack.c.b16 %v721, %v719
        %v782 = vpack.c.b16 %v722, %v720
        %v783 = vpack.c.b16 %v725, %v723
        %v784 = vpack.c.b16 %v726, %v724
        %v785 = vpack.c.b16 %v729, %v727
        %v786 = vpack.c.b16 %v730, %v728
        %v787 = vpack.c.b16 %v733, %v731
        %v788 = vpack.c.b16 %v734, %v732
        %v789 = vpack.c.b16 %v737, %v735
        %v790 = vpack.c.b16 %v738, %v736
        %v791 = vpack.c.b16 %v741, %v739
        %v792 = vpack.c.b16 %v742, %v740
        %v793 = vpack.c.b16 %v745, %v743
        %v794 = vpack.c.b16 %v746, %v744
        %v795 = vpack.c.b16 %v749, %v747
        %v796 = vpack.c.b16 %v750, %v748
        %v797 = vpack.c.b16 %v753, %v751
        %v798 = vpack.c.b16 %v754, %v752
        %v799 = vpack.c.b16 %v757, %v755
        %v800 = vpack.c.b16 %v758, %v756
        %v801 = vpack.c.b16 %v761, %v759
        %v802 = vpack.c.b16 %v762, %v760
        %v803 = vpack.c.b16 %v765, %v763
        %v804 = vpack.c.b16 %v766, %v764
        %v805 = vpack.c.b16 %v769, %v767
        %v806 = vpack.c.b16 %v770, %v768
        %v807 = vpack.c.b16 %v773, %v771
        %v808 = vpack.c.b16 %v774, %v772
        %v809 = vpack.c.b16 %v777, %v775
        %v810 = vpack.c.b16 %v778, %v776
        %843 = vmatprep.subr.bf16.mxu0 %v780
        %844 = vmatpush1.bf16.msra.mxu0 %v779
        %845 = vmatprep.subr.bf16.mxu0 %v782
        %846 = vmatpush1.bf16.msra.mxu0 %v781
        %847 = vmatprep.subr.bf16.mxu0 %v784
        %848 = vmatpush1.bf16.msra.mxu0 %v783
        %849 = vmatprep.subr.bf16.mxu0 %v786
        %850 = vmatpush1.bf16.msra.mxu0 %v785
        %851 = vmatprep.subr.bf16.mxu0 %v788
        %852 = vmatpush1.bf16.msra.mxu0 %v787
        %853 = vmatprep.subr.bf16.mxu0 %v790
        %854 = vmatpush1.bf16.msra.mxu0 %v789
        %855 = vmatprep.subr.bf16.mxu0 %v792
        %856 = vmatpush1.bf16.msra.mxu0 %v791
        %857 = vmatprep.subr.bf16.mxu0 %v794
        %858 = vmatpush1.bf16.msra.mxu0 %v793
        %859 = vmatprep.subr.bf16.mxu0 %v796
        %860 = vmatpush1.bf16.msra.mxu0 %v795
        %861 = vmatprep.subr.bf16.mxu0 %v798
        %862 = vmatpush1.bf16.msra.mxu0 %v797
        %863 = vmatprep.subr.bf16.mxu0 %v800
        %864 = vmatpush1.bf16.msra.mxu0 %v799
        %865 = vmatprep.subr.bf16.mxu0 %v802
        %866 = vmatpush1.bf16.msra.mxu0 %v801
        %867 = vmatprep.subr.bf16.mxu0 %v804
        %868 = vmatpush1.bf16.msra.mxu0 %v803
        %869 = vmatprep.subr.bf16.mxu0 %v806
        %870 = vmatpush1.bf16.msra.mxu0 %v805
        %871 = vmatprep.subr.bf16.mxu0 %v808
        %872 = vmatpush1.bf16.msra.mxu0 %v807
        %873 = vmatprep.subr.bf16.mxu0 %v810
        %874 = vmatpush1.bf16.msra.mxu0 %v809
        %875 = vmatprep.mubr.bf16.mxu0 %v636
        %876 = vmatmul.mubr.bf16.gmra.mrb[0].mxu0 %v635
        %v877 = vpop.f32.mrb[0].mxu0
        %v878 = vadd.f32 %v676, %v877
        %v879 = vpop.f32.mrb[0].mxu0
        %v880 = vadd.f32 %v680, %v879
        %v881 = vpop.f32.mrb[0].mxu0
        %v882 = vadd.f32 %v676, %v881
        %v883 = vpop.f32.mrb[0].mxu0
        %v884 = vadd.f32 %v680, %v883
        %885 = vmatprep.mubr.bf16.mxu0 %v638
        %886 = vmatmul.mubr.bf16.gmra.mrb[0].mxu0 %v637
        %v887 = vpop.f32.mrb[0].mxu0
        %v888 = vadd.f32 %v676, %v887
        %v889 = vpop.f32.mrb[0].mxu0
        %v890 = vadd.f32 %v680, %v889
        %v891 = vpop.f32.mrb[0].mxu0
        %v892 = vadd.f32 %v676, %v891
        %v893 = vpop.f32.mrb[0].mxu0
        %v894 = vadd.f32 %v680, %v893
        %895 = vdwg.mxu0
        %v896 = vpack.c.bf16 %v882, %v878
        %v897 = vpack.c.bf16 %v884, %v880
        %v898 = vpack.c.bf16 %v892, %v888
        %v899 = vpack.c.bf16 %v894, %v890
        %v904 = vunpack.c.l.b16 %v896
        %v905 = vunpack.c.l.b16 %v897
        %v906 = vunpack.c.h.b16 %v896
        %v907 = vunpack.c.h.b16 %v897
        %v908 = vunpack.c.l.b16 %v898
        %v909 = vunpack.c.l.b16 %v899
        %v910 = vunpack.c.h.b16 %v898
        %v911 = vunpack.c.h.b16 %v899
        %v912 = vpack.c.b16 %v905, %v904
        %v913 = vpack.c.b16 %v907, %v906
        %v914 = vpack.c.b16 %v909, %v908
        %v915 = vpack.c.b16 %v911, %v910
        %920 = vst [vmem:[%s474] sm:$0xff] %v912
        %921 = vst [vmem:[%s474 + $0x8] sm:$0xff] %v913
        %922 = vst [vmem:[%s474 + $0x10] sm:$0xff] %v914
        %923 = vst [vmem:[%s474 + $0x18] sm:$0xff] %v915
        %s924 = sand.u32 %s179, 1
        %s925 = sand.u32 %s179, 1
        %s926 = smul.addr %s925, 32
        %s927 = scalar_lea.vmem [#allocation4], %s926
        // Predicated region
        $region83: #{cot_forward.16} parent=73 // pred_check
          %p928 = pneg %p189
        $region84: #{cot_forward.16} parent=73 // pred_check_branch
          %930 = sbr.rel (%p928) target = $region86
        $region85: #{cot_forward.16} parent=73 // pred_region
          %s931 = smul.u32 4, %s21
          %s932 = smul.u32 2, %s22
          %s933 = smul.addr %s931, 6
          %s934 = sadd.s32 %s932, %s933
          %s935 = smul.addr %s934, 4
          %s936 = scalar_lea.vmem %s5, %s935
          // Predicated region
          $region87: #{cot_forward.16} parent=85 // pred_check
            _
          $region88: #{cot_forward.16} parent=85 // pred_check_branch
            %938 = sbr.rel (0) target = $region90
          $region89: #{cot_forward.16} parent=85 // pred_region
            // Predicated region
            $region91: #{cot_forward.16} parent=89 // pred_check
              _
            $region92: #{cot_forward.16} parent=89 // pred_check_branch
              %940 = sbr.rel (0) target = $region94
            $region93: #{cot_forward.16} parent=89 // pred_region
              // Predicated region
              $region106: #{cot_forward.16} parent=93 // pred_check
                _
              $region107: #{cot_forward.16} parent=93 // pred_check_branch
                %961 = sbr.rel (0) target = $region109
              $region108: #{cot_forward.16} parent=93 // pred_region
                loop: start=0, step=1, limit=1
                $region110: #{cot_forward.16} parent=108 // loop_pre_header
                  _
                $region111: #{cot_forward.16} parent=108 // loop_header
                  %s963 = sphi 0, %s967
                  %p964 = scmp.ge.s32.totalorder %s963, 1
                  %s968 = sphi %s927, %s927
                  %s969 = sphi %s936, %s936
                $region112: #{cot_forward.16} parent=108 // loop_header_branch
                  %966 = sbr.rel (%p964) target = $region116
                $region113: #{cot_forward.16} parent=108 // loop_body
                  %v970 = vld [vmem:[%s968] sm:$0xff]
                  %971 = vst [vmem:[%s969] sm:$0xff] %v970
                  %v972 = vld [vmem:[%s968 + $0x8] sm:$0xff]
                  %973 = vst [vmem:[%s969 + $0x18] sm:$0xff] %v972
                  %v974 = vld [vmem:[%s968 + $0x10] sm:$0xff]
                  %975 = vst [vmem:[%s969 + $0x30] sm:$0xff] %v974
                  %v976 = vld [vmem:[%s968 + $0x18] sm:$0xff]
                  %977 = vst [vmem:[%s969 + $0x48] sm:$0xff] %v976
                $region114: #{cot_forward.16} parent=108 // loop_footer
                  %s967 = sadd.s32 1, %s963
                $region115: #{cot_forward.16} parent=108 // loop_footer_branch
                  %962 = sbr.rel target = $region111
                $region116: #{cot_forward.16} parent=108 // loop_exit
                  _
              $region109: #{cot_forward.16} parent=93 // pred_fallthru
                _
              // Predicated region
              $region117: #{cot_forward.16} parent=93 // pred_check
                _
              $region118: #{cot_forward.16} parent=93 // pred_check_branch
                %979 = sbr.rel target = $region120
              $region119: #{cot_forward.16} parent=93 // pred_region
                _
              $region120: #{cot_forward.16} parent=93 // pred_fallthru
                _
            $region94: #{cot_forward.16} parent=89 // pred_fallthru
              _
            // Predicated region
            $region95: #{cot_forward.16} parent=89 // pred_check
              _
            $region96: #{cot_forward.16} parent=89 // pred_check_branch
              %942 = sbr.rel target = $region98
            $region97: #{cot_forward.16} parent=89 // pred_region
              loop: start=0, step=1, limit=1
              $region99: #{cot_forward.16} parent=97 // loop_pre_header
                _
              $region100: #{cot_forward.16} parent=97 // loop_header
                %s945 = sphi 0, %s949
                %p946 = scmp.ge.s32.totalorder %s945, 1
                %s950 = sphi %s927, %s927
                %s951 = sphi %s936, %s936
              $region101: #{cot_forward.16} parent=97 // loop_header_branch
                %948 = sbr.rel (%p946) target = $region105
              $region102: #{cot_forward.16} parent=97 // loop_body
                %v952 = vld [vmem:[%s950] sm:$0xff]
                %953 = vst [vmem:[%s951] sm:$0xff] %v952
                %v954 = vld [vmem:[%s950 + $0x8] sm:$0xff]
                %955 = vst [vmem:[%s951 + $0x18] sm:$0xff] %v954
                %v956 = vld [vmem:[%s950 + $0x10] sm:$0xff]
                %957 = vst [vmem:[%s951 + $0x30] sm:$0xff] %v956
                %v958 = vld [vmem:[%s950 + $0x18] sm:$0xff]
                %959 = vst [vmem:[%s951 + $0x48] sm:$0xff] %v958
              $region103: #{cot_forward.16} parent=97 // loop_footer
                %s949 = sadd.s32 1, %s945
              $region104: #{cot_forward.16} parent=97 // loop_footer_branch
                %944 = sbr.rel target = $region100
              $region105: #{cot_forward.16} parent=97 // loop_exit
                _
            $region98: #{cot_forward.16} parent=89 // pred_fallthru
              _
          $region90: #{cot_forward.16} parent=85 // pred_fallthru
            _
          %980 = vnop
        $region86: #{cot_forward.16} parent=73 // pred_fallthru
          _
      $region74: #{cot_forward.16} parent=5 // pred_fallthru
        _
      %p981 = scmp.le.s32.totalorder 2, %s11
      // Predicated region
      $region121: #{cot_forward.16} parent=5 // pred_check
        %p982 = pneg %p981
      $region122: #{cot_forward.16} parent=5 // pred_check_branch
        %984 = sbr.rel (%p982) target = $region124
      $region123: #{cot_forward.16} parent=5 // pred_region
        %s985 = ssub.s32 %s11, 2
        // Predicated region
        $region125: #{cot_forward.16} parent=123 // pred_check
          %p986 = pneg %p195
        $region126: #{cot_forward.16} parent=123 // pred_check_branch
          %988 = sbr.rel (%p986) target = $region128
        $region127: #{cot_forward.16} parent=123 // pred_region
          %s989 = sand.u32 %s180, 1
          %s990 = sand.u32 %s180, 1
          %s991 = smul.addr %s990, 32
          %s992 = scalar_lea.vmem [#allocation4], %s991
        $region128: #{cot_forward.16} parent=123 // pred_fallthru
          _
      $region124: #{cot_forward.16} parent=5 // pred_fallthru
        _
    $region6: #{cot_forward.16} parent=1 // loop_footer
      %s15 = sadd.s32 1, %s11
    $region7: #{cot_forward.16} parent=1 // loop_footer_branch
      %10 = sbr.rel target = $region3
    $region8: #{cot_forward.16} parent=1 // loop_exit
      _

// kernel: cot_forward.21
$region0: #{cot_forward.21}
  #allocation0 [shape = 'u32[]', space=smem, size = 0x4, offset = 0x4, fixed_abs, tag = 'smem constant byte address 0x4 - core index']
  #allocation1 [shape = 'u32[144,128]{1,0:T(1,128)}', space=vmem, size = 0x12000, scoped, tag = 'internal scratch']
  #allocation2 [shape = 'bf16[32,256]{1,0:T(16,128)(2,1)}', space=vmem, size = 0x4000, scoped, tag = 'scratch operand']
  %s0 = inlined_call_operand.vmem [shape: bf16[32,256], index: 0, kind: input, shape index: {}]
  %s1 = inlined_call_operand.vmem [shape: bf16[256,256], index: 1, kind: input, shape index: {}]
  %s2 = inlined_call_operand.vmem [shape: f32[1,256], index: 2, kind: input, shape index: {}]
  %s3 = inlined_call_operand.vmem [shape: f32[1,256], index: 3, kind: input, shape index: {}]
  %s4 = inlined_call_operand.vmem [shape: f32[1,256], index: 4, kind: input, shape index: {}]
  %s5 = inlined_call_operand.hbm [shape: f32[32,256], index: 5, kind: output, shape index: {}]
  %s6 = sld [smem:[#allocation0]]
  $region34: #{cot_forward.21} parent=0
    _
  %s8 = ssub.s32 1, %s6
  %s9 = scalar_select 0, %s8, %s6
  $region1: #{cot_forward.21} parent=0
    #allocation3 [shape = 'u8[32768]{0}', space=vmem, size = 0x8000, scoped, tag = 'output window, operand 0, single buffered']
    #allocation4 [shape = 's32[1]{0}', space=sflag, size = 0x4, scoped, tag = 'scoped memory for cot_forward.21']
    %10 = vsyncpa [#allocation4], 0
    // Predicated region
    $region2: #{cot_forward.21} parent=1 // pred_check
      _
    $region3: #{cot_forward.21} parent=1 // pred_check_branch
      %12 = sbr.rel (0) target = $region5
    $region4: #{cot_forward.21} parent=1 // pred_region
      _
    $region5: #{cot_forward.21} parent=1 // pred_fallthru
      _
    // Predicated region
    $region6: #{cot_forward.21} parent=1 // pred_check
      _
    $region7: #{cot_forward.21} parent=1 // pred_check_branch
      %14 = sbr.rel (0) target = $region9
    $region8: #{cot_forward.21} parent=1 // pred_region
      _
    $region9: #{cot_forward.21} parent=1 // pred_fallthru
      _
    // Predicated region
    $region10: #{cot_forward.21} parent=1 // pred_check
      _
    $region11: #{cot_forward.21} parent=1 // pred_check_branch
      %16 = sbr.rel (0) target = $region13
    $region12: #{cot_forward.21} parent=1 // pred_region
      _
    $region13: #{cot_forward.21} parent=1 // pred_fallthru
      _
    // Predicated region
    $region14: #{cot_forward.21} parent=1 // pred_check
      _
    $region15: #{cot_forward.21} parent=1 // pred_check_branch
      %18 = sbr.rel (0) target = $region17
    $region16: #{cot_forward.21} parent=1 // pred_region
      _
    $region17: #{cot_forward.21} parent=1 // pred_fallthru
      _
    // Predicated region
    $region18: #{cot_forward.21} parent=1 // pred_check
      _
    $region19: #{cot_forward.21} parent=1 // pred_check_branch
      %20 = sbr.rel (0) target = $region21
    $region20: #{cot_forward.21} parent=1 // pred_region
      _
    $region21: #{cot_forward.21} parent=1 // pred_fallthru
      _
    %p21 = scmp.eq.s32.totalorder 0, 0
    // Predicated region
    $region22: #{cot_forward.21} parent=1 // pred_check
      %p22 = pneg %p21
    $region23: #{cot_forward.21} parent=1 // pred_check_branch
      %24 = sbr.rel (%p22) target = $region25
    $region24: #{cot_forward.21} parent=1 // pred_region
      %v25 = vld [vmem:[%s0] sm:$0xff]
      %v26 = vld [vmem:[%s0 + $0x8] sm:$0xff]
      %v27 = vld [vmem:[%s0 + $0x10] sm:$0xff]
      %v28 = vld [vmem:[%s0 + $0x18] sm:$0xff]
      %v29 = vunpack.c.l.bf16 %v25
      %v30 = vunpack.c.h.bf16 %v25
      %v31 = vunpack.c.l.bf16 %v26
      %v32 = vunpack.c.h.bf16 %v26
      %v33 = vunpack.c.l.bf16 %v27
      %v34 = vunpack.c.h.bf16 %v27
      %v35 = vunpack.c.l.bf16 %v28
      %v36 = vunpack.c.h.bf16 %v28
      %v37 = vadd.f32 %v29, %v30
      %38 = vadd.xlane.f32.xlu0 %v37
      %v39 = vpop.xlane.xlu0 %38
      %v40 = vadd.f32 %v31, %v32
      %41 = vadd.xlane.f32.xlu0 %v40
      %v42 = vpop.xlane.xlu0 %41
      %v43 = vadd.f32 %v33, %v34
      %44 = vadd.xlane.f32.xlu0 %v43
      %v45 = vpop.xlane.xlu0 %44
      %v46 = vadd.f32 %v35, %v36
      %47 = vadd.xlane.f32.xlu0 %v46
      %v48 = vpop.xlane.xlu0 %47
      %v49 = vrcp.pop 256.0
      %v50 = vmul.f32 %v39, %v49
      %v51 = vmul.f32 %v42, %v49
      %v52 = vmul.f32 %v45, %v49
      %v53 = vmul.f32 %v48, %v49
      %v54 = vsub.f32 %v29, %v50
      %v55 = vsub.f32 %v30, %v50
      %v56 = vsub.f32 %v31, %v51
      %v57 = vsub.f32 %v32, %v51
      %v58 = vsub.f32 %v33, %v52
      %v59 = vsub.f32 %v34, %v52
      %v60 = vsub.f32 %v35, %v53
      %v61 = vsub.f32 %v36, %v53
      %v62 = vmul.f32 %v54, %v54
      %v63 = vmul.f32 %v55, %v55
      %v64 = vmul.f32 %v56, %v56
      %v65 = vmul.f32 %v57, %v57
      %v66 = vmul.f32 %v58, %v58
      %v67 = vmul.f32 %v59, %v59
      %v68 = vmul.f32 %v60, %v60
      %v69 = vmul.f32 %v61, %v61
      %v70 = vadd.f32 %v62, %v63
      %71 = vadd.xlane.f32.xlu0 %v70
      %v72 = vpop.xlane.xlu0 %71
      %v73 = vadd.f32 %v64, %v65
      %74 = vadd.xlane.f32.xlu0 %v73
      %v75 = vpop.xlane.xlu0 %74
      %v76 = vadd.f32 %v66, %v67
      %77 = vadd.xlane.f32.xlu0 %v76
      %v78 = vpop.xlane.xlu0 %77
      %v79 = vadd.f32 %v68, %v69
      %80 = vadd.xlane.f32.xlu0 %v79
      %v81 = vpop.xlane.xlu0 %80
      %v82 = vmul.f32 %v72, %v49
      %v83 = vmul.f32 %v75, %v49
      %v84 = vmul.f32 %v78, %v49
      %v85 = vmul.f32 %v81, %v49
      %v86 = vadd.f32 %v82, 1e-05
      %v87 = vadd.f32 %v83, 1e-05
      %v88 = vadd.f32 %v84, 1e-05
      %v89 = vadd.f32 %v85, 1e-05
      %v90 = vrsqrt.pop %v86
      %v91 = vrsqrt.pop %v87
      %v92 = vrsqrt.pop %v88
      %v93 = vrsqrt.pop %v89
      %v94 = vmul.f32 %v54, %v90
      %v95 = vmul.f32 %v55, %v90
      %v96 = vmul.f32 %v56, %v91
      %v97 = vmul.f32 %v57, %v91
      %v98 = vmul.f32 %v58, %v92
      %v99 = vmul.f32 %v59, %v92
      %v100 = vmul.f32 %v60, %v93
      %v101 = vmul.f32 %v61, %v93
      %v102 = vld [vmem:[%s3] sm:$0x3]
      %v104 = vlaneseq
      %v105 = vshrl.u32 %v104, 7
      %v106 = vsub.s32 0, %v105
      %v107 = vrot.slane %v102, %v106
      %v108 = vlaneseq
      %v109 = vshrl.u32 %v108, 7
      %v110 = vsub.s32 1, %v109
      %v111 = vrot.slane %v102, %v110
      %v114 = vmul.f32 %v94, %v107
      %v115 = vmul.f32 %v95, %v111
      %v116 = vmul.f32 %v96, %v107
      %v117 = vmul.f32 %v97, %v111
      %v118 = vmul.f32 %v98, %v107
      %v119 = vmul.f32 %v99, %v111
      %v120 = vmul.f32 %v100, %v107
      %v121 = vmul.f32 %v101, %v111
      %v122 = vld [vmem:[%s4] sm:$0x3]
      %v124 = vlaneseq
      %v125 = vshrl.u32 %v124, 7
      %v126 = vsub.s32 0, %v125
      %v127 = vrot.slane %v122, %v126
      %v128 = vlaneseq
      %v129 = vshrl.u32 %v128, 7
      %v130 = vsub.s32 1, %v129
      %v131 = vrot.slane %v122, %v130
      %v134 = vadd.f32 %v114, %v127
      %v135 = vadd.f32 %v115, %v131
      %v136 = vadd.f32 %v116, %v127
      %v137 = vadd.f32 %v117, %v131
      %v138 = vadd.f32 %v118, %v127
      %v139 = vadd.f32 %v119, %v131
      %v140 = vadd.f32 %v120, %v127
      %v141 = vadd.f32 %v121, %v131
      %v142 = vpack.c.bf16 %v136, %v134
      %v143 = vpack.c.bf16 %v137, %v135
      %v144 = vpack.c.bf16 %v140, %v138
      %v145 = vpack.c.bf16 %v141, %v139
      %146 = vst [vmem:[#allocation2] sm:$0xff] %v142
      %147 = vst [vmem:[#allocation2 + $0x8] sm:$0xff] %v143
      %148 = vst [vmem:[#allocation2 + $0x10] sm:$0xff] %v144
      %149 = vst [vmem:[#allocation2 + $0x18] sm:$0xff] %v145
    $region25: #{cot_forward.21} parent=1 // pred_fallthru
      _
    %v150 = vld [vmem:[#allocation2] sm:$0xff]
    %v151 = vld [vmem:[#allocation2 + $0x8] sm:$0xff]
    %v152 = vld [vmem:[#allocation2 + $0x10] sm:$0xff]
    %v153 = vld [vmem:[#allocation2 + $0x18] sm:$0xff]
    %v154 = vld [vmem:[%s1] sm:$0xff]
    %v155 = vld [vmem:[%s1 + $0x8] sm:$0xff]
    %v156 = vld [vmem:[%s1 + $0x10] sm:$0xff]
    %v157 = vld [vmem:[%s1 + $0x18] sm:$0xff]
    %v158 = vld [vmem:[%s1 + $0x20] sm:$0xff]
    %v159 = vld [vmem:[%s1 + $0x28] sm:$0xff]
    %v160 = vld [vmem:[%s1 + $0x30] sm:$0xff]
    %v161 = vld [vmem:[%s1 + $0x38] sm:$0xff]
    %v162 = vld [vmem:[%s1 + $0x40] sm:$0xff]
    %v163 = vld [vmem:[%s1 + $0x48] sm:$0xff]
    %v164 = vld [vmem:[%s1 + $0x50] sm:$0xff]
    %v165 = vld [vmem:[%s1 + $0x58] sm:$0xff]
    %v166 = vld [vmem:[%s1 + $0x60] sm:$0xff]
    %v167 = vld [vmem:[%s1 + $0x68] sm:$0xff]
    %v168 = vld [vmem:[%s1 + $0x70] sm:$0xff]
    %v169 = vld [vmem:[%s1 + $0x78] sm:$0xff]
    %v170 = vld [vmem:[%s1 + $0x80] sm:$0xff]
    %v171 = vld [vmem:[%s1 + $0x88] sm:$0xff]
    %v172 = vld [vmem:[%s1 + $0x90] sm:$0xff]
    %v173 = vld [vmem:[%s1 + $0x98] sm:$0xff]
    %v174 = vld [vmem:[%s1 + $0xa0] sm:$0xff]
    %v175 = vld [vmem:[%s1 + $0xa8] sm:$0xff]
    %v176 = vld [vmem:[%s1 + $0xb0] sm:$0xff]
    %v177 = vld [vmem:[%s1 + $0xb8] sm:$0xff]
    %v178 = vld [vmem:[%s1 + $0xc0] sm:$0xff]
    %v179 = vld [vmem:[%s1 + $0xc8] sm:$0xff]
    %v180 = vld [vmem:[%s1 + $0xd0] sm:$0xff]
    %v181 = vld [vmem:[%s1 + $0xd8] sm:$0xff]
    %v182 = vld [vmem:[%s1 + $0xe0] sm:$0xff]
    %v183 = vld [vmem:[%s1 + $0xe8] sm:$0xff]
    %v184 = vld [vmem:[%s1 + $0xf0] sm:$0xff]
    %v185 = vld [vmem:[%s1 + $0xf8] sm:$0xff]
    %v186 = vld [vmem:[%s2] sm:$0x3]
    %v188 = vlaneseq
    %v189 = vshrl.u32 %v188, 7
    %v190 = vsub.s32 0, %v189
    %v191 = vrot.slane %v186, %v190
    %v192 = vlaneseq
    %v193 = vshrl.u32 %v192, 7
    %v194 = vsub.s32 1, %v193
    %v195 = vrot.slane %v186, %v194
    %v230 = vunpack.c.l.b16 %v154
    %v231 = vunpack.c.h.b16 %v154
    %v232 = vunpack.c.l.b16 %v155
    %v233 = vunpack.c.h.b16 %v155
    %v234 = vunpack.c.l.b16 %v156
    %v235 = vunpack.c.h.b16 %v156
    %v236 = vunpack.c.l.b16 %v157
    %v237 = vunpack.c.h.b16 %v157
    %v238 = vunpack.c.l.b16 %v158
    %v239 = vunpack.c.h.b16 %v158
    %v240 = vunpack.c.l.b16 %v159
    %v241 = vunpack.c.h.b16 %v159
    %v242 = vunpack.c.l.b16 %v160
    %v243 = vunpack.c.h.b16 %v160
    %v244 = vunpack.c.l.b16 %v161
    %v245 = vunpack.c.h.b16 %v161
    %v246 = vunpack.c.l.b16 %v162
    %v247 = vunpack.c.h.b16 %v162
    %v248 = vunpack.c.l.b16 %v163
    %v249 = vunpack.c.h.b16 %v163
    %v250 = vunpack.c.l.b16 %v164
    %v251 = vunpack.c.h.b16 %v164
    %v252 = vunpack.c.l.b16 %v165
    %v253 = vunpack.c.h.b16 %v165
    %v254 = vunpack.c.l.b16 %v166
    %v255 = vunpack.c.h.b16 %v166
    %v256 = vunpack.c.l.b16 %v167
    %v257 = vunpack.c.h.b16 %v167
    %v258 = vunpack.c.l.b16 %v168
    %v259 = vunpack.c.h.b16 %v168
    %v260 = vunpack.c.l.b16 %v169
    %v261 = vunpack.c.h.b16 %v169
    %v262 = vunpack.c.l.b16 %v170
    %v263 = vunpack.c.h.b16 %v170
    %v264 = vunpack.c.l.b16 %v171
    %v265 = vunpack.c.h.b16 %v171
    %v266 = vunpack.c.l.b16 %v172
    %v267 = vunpack.c.h.b16 %v172
    %v268 = vunpack.c.l.b16 %v173
    %v269 = vunpack.c.h.b16 %v173
    %v270 = vunpack.c.l.b16 %v174
    %v271 = vunpack.c.h.b16 %v174
    %v272 = vunpack.c.l.b16 %v175
    %v273 = vunpack.c.h.b16 %v175
    %v274 = vunpack.c.l.b16 %v176
    %v275 = vunpack.c.h.b16 %v176
    %v276 = vunpack.c.l.b16 %v177
    %v277 = vunpack.c.h.b16 %v177
    %v278 = vunpack.c.l.b16 %v178
    %v279 = vunpack.c.h.b16 %v178
    %v280 = vunpack.c.l.b16 %v179
    %v281 = vunpack.c.h.b16 %v179
    %v282 = vunpack.c.l.b16 %v180
    %v283 = vunpack.c.h.b16 %v180
    %v284 = vunpack.c.l.b16 %v181
    %v285 = vunpack.c.h.b16 %v181
    %v286 = vunpack.c.l.b16 %v182
    %v287 = vunpack.c.h.b16 %v182
    %v288 = vunpack.c.l.b16 %v183
    %v289 = vunpack.c.h.b16 %v183
    %v290 = vunpack.c.l.b16 %v184
    %v291 = vunpack.c.h.b16 %v184
    %v292 = vunpack.c.l.b16 %v185
    %v293 = vunpack.c.h.b16 %v185
    %v294 = vpack.c.b16 %v232, %v230
    %v295 = vpack.c.b16 %v233, %v231
    %v296 = vpack.c.b16 %v236, %v234
    %v297 = vpack.c.b16 %v237, %v235
    %v298 = vpack.c.b16 %v240, %v238
    %v299 = vpack.c.b16 %v241, %v239
    %v300 = vpack.c.b16 %v244, %v242
    %v301 = vpack.c.b16 %v245, %v243
    %v302 = vpack.c.b16 %v248, %v246
    %v303 = vpack.c.b16 %v249, %v247
    %v304 = vpack.c.b16 %v252, %v250
    %v305 = vpack.c.b16 %v253, %v251
    %v306 = vpack.c.b16 %v256, %v254
    %v307 = vpack.c.b16 %v257, %v255
    %v308 = vpack.c.b16 %v260, %v258
    %v309 = vpack.c.b16 %v261, %v259
    %v310 = vpack.c.b16 %v264, %v262
    %v311 = vpack.c.b16 %v265, %v263
    %v312 = vpack.c.b16 %v268, %v266
    %v313 = vpack.c.b16 %v269, %v267
    %v314 = vpack.c.b16 %v272, %v270
    %v315 = vpack.c.b16 %v273, %v271
    %v316 = vpack.c.b16 %v276, %v274
    %v317 = vpack.c.b16 %v277, %v275
    %v318 = vpack.c.b16 %v280, %v278
    %v319 = vpack.c.b16 %v281, %v279
    %v320 = vpack.c.b16 %v284, %v282
    %v321 = vpack.c.b16 %v285, %v283
    %v322 = vpack.c.b16 %v288, %v286
    %v323 = vpack.c.b16 %v289, %v287
    %v324 = vpack.c.b16 %v292, %v290
    %v325 = vpack.c.b16 %v293, %v291
    %358 = vmatprep.subr.bf16.mxu0 %v295
    %359 = vmatpush1.bf16.msra.mxu0 %v294
    %360 = vmatprep.subr.bf16.mxu0 %v297
    %361 = vmatpush1.bf16.msra.mxu0 %v296
    %362 = vmatprep.subr.bf16.mxu0 %v299
    %363 = vmatpush1.bf16.msra.mxu0 %v298
    %364 = vmatprep.subr.bf16.mxu0 %v301
    %365 = vmatpush1.bf16.msra.mxu0 %v300
    %366 = vmatprep.subr.bf16.mxu0 %v303
    %367 = vmatpush1.bf16.msra.mxu0 %v302
    %368 = vmatprep.subr.bf16.mxu0 %v305
    %369 = vmatpush1.bf16.msra.mxu0 %v304
    %370 = vmatprep.subr.bf16.mxu0 %v307
    %371 = vmatpush1.bf16.msra.mxu0 %v306
    %372 = vmatprep.subr.bf16.mxu0 %v309
    %373 = vmatpush1.bf16.msra.mxu0 %v308
    %374 = vmatprep.subr.bf16.mxu0 %v311
    %375 = vmatpush1.bf16.msra.mxu0 %v310
    %376 = vmatprep.subr.bf16.mxu0 %v313
    %377 = vmatpush1.bf16.msra.mxu0 %v312
    %378 = vmatprep.subr.bf16.mxu0 %v315
    %379 = vmatpush1.bf16.msra.mxu0 %v314
    %380 = vmatprep.subr.bf16.mxu0 %v317
    %381 = vmatpush1.bf16.msra.mxu0 %v316
    %382 = vmatprep.subr.bf16.mxu0 %v319
    %383 = vmatpush1.bf16.msra.mxu0 %v318
    %384 = vmatprep.subr.bf16.mxu0 %v321
    %385 = vmatpush1.bf16.msra.mxu0 %v320
    %386 = vmatprep.subr.bf16.mxu0 %v323
    %387 = vmatpush1.bf16.msra.mxu0 %v322
    %388 = vmatprep.subr.bf16.mxu0 %v325
    %389 = vmatpush1.bf16.msra.mxu0 %v324
    %390 = vmatprep.mubr.bf16.mxu0 %v151
    %391 = vmatmul.mubr.bf16.gmra.mrb[0].mxu0 %v150
    %v392 = vpop.f32.mrb[0].mxu0
    %v393 = vadd.f32 %v191, %v392
    %v394 = vpop.f32.mrb[0].mxu0
    %v395 = vadd.f32 %v195, %v394
    %v396 = vpop.f32.mrb[0].mxu0
    %v397 = vadd.f32 %v191, %v396
    %v398 = vpop.f32.mrb[0].mxu0
    %v399 = vadd.f32 %v195, %v398
    %400 = vmatprep.mubr.bf16.mxu0 %v153
    %401 = vmatmul.mubr.bf16.gmra.mrb[0].mxu0 %v152
    %v402 = vpop.f32.mrb[0].mxu0
    %v403 = vadd.f32 %v191, %v402
    %v404 = vpop.f32.mrb[0].mxu0
    %v405 = vadd.f32 %v195, %v404
    %v406 = vpop.f32.mrb[0].mxu0
    %v407 = vadd.f32 %v191, %v406
    %v408 = vpop.f32.mrb[0].mxu0
    %v409 = vadd.f32 %v195, %v408
    %410 = vdwg.mxu0
    %411 = vst [vmem:[#allocation3] sm:$0xff] %v393
    %412 = vst [vmem:[#allocation3 + $0x8] sm:$0xff] %v395
    %413 = vst [vmem:[#allocation3 + $0x10] sm:$0xff] %v397
    %414 = vst [vmem:[#allocation3 + $0x18] sm:$0xff] %v399
    %415 = vst [vmem:[#allocation3 + $0x20] sm:$0xff] %v403
    %416 = vst [vmem:[#allocation3 + $0x28] sm:$0xff] %v405
    %417 = vst [vmem:[#allocation3 + $0x30] sm:$0xff] %v407
    %418 = vst [vmem:[#allocation3 + $0x38] sm:$0xff] %v409
    // Predicated region
    $region26: #{cot_forward.21} parent=1 // pred_check
      _
    $region27: #{cot_forward.21} parent=1 // pred_check_branch
      %420 = sbr.rel (0) target = $region29
    $region28: #{cot_forward.21} parent=1 // pred_region
      %s422 = ssub.s32 1024, 1024
      %423 = vsyncadd [#allocation4], %s422
      %s424 = sshll.u32 [#allocation3], 4
      %s425 = int_to_ptr.vmem [resolvable:$true] %s424
      %430 = dma.vmem_to_hbm [thread:$0]  %s425, 1024, %s5, [#allocation4], 256, 256, 16
    $region29: #{cot_forward.21} parent=1 // pred_fallthru
      _
    // Predicated region
    $region30: #{cot_forward.21} parent=1 // pred_check
      _
    $region31: #{cot_forward.21} parent=1 // pred_check_branch
      %432 = sbr.rel (0) target = $region33
    $region32: #{cot_forward.21} parent=1 // pred_region
      %433 = dma.done [#allocation4], 1024
    $region33: #{cot_forward.21} parent=1 // pred_fallthru
      _
    %434 = vsyncpa [#allocation4], 1

</llo_original>
